<compile_context>
chip_gen: v7x
topology: tpu7x:2x2x1
jax: 0.10.0
libtpu: 0.0.40
codegen_flags: <defaults>
</compile_context>

<pallas_src>
import functools

import jax
import jax.numpy as jnp
from jax import lax
from jax.experimental import pallas as pl
from jax.experimental.pallas import tpu as pltpu


# Matmul operand dtype.  Flip to jnp.bfloat16 on v6e/v7x to halve operand HBM
# traffic and feed the 256-wide bf16 MXU (accumulation stays f32 via
# preferred_element_type; BN stats / elementwise math stay f32).  Kept f32 by
# default to match PyTorch numerics exactly.
MATMUL_DTYPE = jnp.float32
_SUBLANE = 16 if MATMUL_DTYPE == jnp.bfloat16 else 8   # dtype-aware row rounding

_BN_EPS = 1e-5
_LRELU_SLOPE = 0.2


def _round_up(x, m):
    return (x + m - 1) // m * m


def _pad_rows(a, rows):
    if a.shape[0] == rows:
        return a
    pad = [(0, rows - a.shape[0])] + [(0, 0)] * (a.ndim - 1)
    return jnp.pad(a, pad)


def _vmem_capacity_bytes():
    try:
        return int(pltpu.get_tpu_info().vmem_capacity_bytes)
    except Exception:
        return 64 << 20                      # conservative (v7x per-core VMEM)


def _vmem_limit(need_bytes):
    # Raise the scoped-VMEM limit above the per-generation default (16/32 MiB)
    # when the tiles need it, but never above v7x's 64 MiB physical VMEM.
    return int(min(max(need_bytes + (8 << 20), 32 << 20), 64 << 20))


def _auto_tm_max(K, N):
    """Row-tile cap derived from this chip's VMEM (per-generation tm cap)."""
    itemsize = jnp.dtype(MATMUL_DTYPE).itemsize
    budget = _vmem_capacity_bytes() // 6     # double-buffered A tile + headroom
    tm = budget // max(K * itemsize + 4 * N, 1)
    tm = max(256, min(2048, int(tm)))
    return (tm // 128) * 128


# ----------------------------------------------------------------------------
# Pallas kernels
# ----------------------------------------------------------------------------
def _conv_rows_stats_kernel(a_ref, w_ref, b_ref, y_ref, s_ref, ss_ref, *,
                            m_true, tm):
    """One M-tile of y = A @ W + bias.  Also writes PER-TILE partial channel
    sums / sum-of-squares (folded onto 8 sublanes), so the M grid axis can be
    marked 'parallel' (megacore-shardable on v7x); the tiny partials are
    reduced in the wrapper.  Row masking only runs on the last tile."""
    i = pl.program_id(0)
    last = pl.num_programs(0) - 1
    y = jnp.dot(a_ref[...], w_ref[...],
                preferred_element_type=jnp.float32) + b_ref[...]
    y_ref[...] = y

    def write_stats(yv):
        r = yv.reshape(tm // 8, 8, yv.shape[-1])
        s_ref[...] = jnp.sum(r, axis=0)
        ss_ref[...] = jnp.sum(r * r, axis=0)

    @pl.when(i < last)                 # unmasked fast path for interior tiles
    def _():
        write_stats(y)

    @pl.when(i == last)                # only the last tile may hold padded rows
    def _():
        row = i * tm + lax.broadcasted_iota(jnp.int32, (tm, 1), 0)
        write_stats(jnp.where(row < m_true, y, 0.0))


def _bn_lrelu_kernel(y_ref, s_ref, ss_ref, g_ref, b_ref, o_ref, *, inv_m):
    """Training-mode BatchNorm (biased variance) fused with LeakyReLU(0.2)."""
    mean = s_ref[...] * inv_m
    var = jnp.maximum(ss_ref[...] * inv_m - mean * mean, 0.0)
    y = (y_ref[...] - mean) * lax.rsqrt(var + _BN_EPS) * g_ref[...] + b_ref[...]
    o_ref[...] = jnp.where(y >= 0.0, y, _LRELU_SLOPE * y)


def _matmul_bias_act_kernel(a_ref, w_ref, b_ref, o_ref, *, act, transpose_out):
    y = jnp.dot(a_ref[...], w_ref[...],
                preferred_element_type=jnp.float32) + b_ref[...]
    if act == "relu":
        y = jnp.maximum(y, 0.0)
    elif act == "sigmoid":
        y = jax.nn.sigmoid(y)
    # transpose_out: lane-dense stores along M for very narrow N (final layer).
    o_ref[...] = y.T if transpose_out else y


def _head_reparam_kernel(x_ref, eps_ref, w_ref, b_ref, mu_ref, lv_ref, z_ref, *,
                         latent_dim):
    """Fused [fc_mu | fc_logvar] (single concatenated matmul) + reparameterize."""
    y = jnp.dot(x_ref[...], w_ref[...],
                preferred_element_type=jnp.float32) + b_ref[...]
    mu = y[:, :latent_dim]
    lv = y[:, latent_dim:]
    mu_ref[...] = mu
    lv_ref[...] = lv
    z_ref[...] = mu + eps_ref[...] * jnp.exp(0.5 * lv)


# ----------------------------------------------------------------------------
# pallas_call wrappers
# ----------------------------------------------------------------------------
def conv_rows_bn_lrelu(A, Wm, bias, gamma, beta, *, tm_max=512):
    """A: (M, K) im2col rows.  LeakyReLU(BatchNorm(A @ Wm + bias)) -> (M, C)."""
    M, K = A.shape
    C = Wm.shape[1]
    tm = min(tm_max, _round_up(M, _SUBLANE))
    Mp = _round_up(M, tm)
    A = _pad_rows(A, Mp).astype(MATMUL_DTYPE)
    Wc = Wm.astype(MATMUL_DTYPE)
    nm = Mp // tm

    y, s_p, ss_p = pl.pallas_call(
        functools.partial(_conv_rows_stats_kernel, m_true=M, tm=tm),
        out_shape=(jax.ShapeDtypeStruct((Mp, C), jnp.float32),
                   jax.ShapeDtypeStruct((nm * 8, C), jnp.float32),
                   jax.ShapeDtypeStruct((nm * 8, C), jnp.float32)),
        grid_spec=pltpu.PrefetchScalarGridSpec(
            num_scalar_prefetch=0,
            grid=(nm,),
            in_specs=[pl.BlockSpec((tm, K), lambda i: (i, 0)),
                      pl.BlockSpec((K, C), lambda i: (0, 0)),
                      pl.BlockSpec((1, C), lambda i: (0, 0))],
            out_specs=[pl.BlockSpec((tm, C), lambda i: (i, 0)),
                       pl.BlockSpec((8, C), lambda i: (i, 0)),
                       pl.BlockSpec((8, C), lambda i: (i, 0))]),
        compiler_params=pltpu.CompilerParams(
            dimension_semantics=("parallel",),
            vmem_limit_bytes=_vmem_limit(
                2 * 4 * (tm * K + K * C + tm * C + 24 * C))),
    )(A, Wc, bias.reshape(1, C).astype(jnp.float32))

    # Tiny (nm*8, C) partial reductions in plain JAX.
    s = jnp.sum(s_p, axis=0, keepdims=True)
    ss = jnp.sum(ss_p, axis=0, keepdims=True)

    out = pl.pallas_call(
        functools.partial(_bn_lrelu_kernel, inv_m=1.0 / float(M)),
        out_shape=jax.ShapeDtypeStruct((Mp, C), jnp.float32),
        grid_spec=pltpu.PrefetchScalarGridSpec(
            num_scalar_prefetch=0,
            grid=(nm,),
            in_specs=[pl.BlockSpec((tm, C), lambda i: (i, 0)),
                      pl.BlockSpec((1, C), lambda i: (0, 0)),
                      pl.BlockSpec((1, C), lambda i: (0, 0)),
                      pl.BlockSpec((1, C), lambda i: (0, 0)),
                      pl.BlockSpec((1, C), lambda i: (0, 0))],
            out_specs=pl.BlockSpec((tm, C), lambda i: (i, 0))),
        input_output_aliases={0: 0},            # write BN output in place of y
        compiler_params=pltpu.CompilerParams(
            dimension_semantics=("parallel",),
            vmem_limit_bytes=_vmem_limit(2 * 4 * (2 * tm * C + 8 * C))),
    )(y, s, ss, gamma.reshape(1, C), beta.reshape(1, C))
    return out[:M]


def matmul_bias_act(A, W, bias, act="none", *, transpose_out=False, tm_max=None):
    """act(A @ W + bias), tiled over M.  transpose_out stores (N, M) instead of
    (M, N) so the stores are lane-dense along M when N is very narrow."""
    M, K = A.shape
    N = W.shape[1]
    if tm_max is None:
        tm_max = _auto_tm_max(K, N)
    tm = min(tm_max, _round_up(M, _SUBLANE))
    Mp = _round_up(M, tm)
    A = _pad_rows(A, Mp).astype(MATMUL_DTYPE)
    Wc = W.astype(MATMUL_DTYPE)
    nm = Mp // tm

    if transpose_out:
        out_shape = jax.ShapeDtypeStruct((N, Mp), jnp.float32)
        out_spec = pl.BlockSpec((N, tm), lambda i: (0, i))
    else:
        out_shape = jax.ShapeDtypeStruct((Mp, N), jnp.float32)
        out_spec = pl.BlockSpec((tm, N), lambda i: (i, 0))

    out = pl.pallas_call(
        functools.partial(_matmul_bias_act_kernel, act=act,
                          transpose_out=transpose_out),
        out_shape=out_shape,
        grid_spec=pltpu.PrefetchScalarGridSpec(
            num_scalar_prefetch=0,
            grid=(nm,),
            in_specs=[pl.BlockSpec((tm, K), lambda i: (i, 0)),
                      pl.BlockSpec((K, N), lambda i: (0, 0)),
                      pl.BlockSpec((1, N), lambda i: (0, 0))],
            out_specs=out_spec),
        compiler_params=pltpu.CompilerParams(
            dimension_semantics=("parallel",),
            vmem_limit_bytes=_vmem_limit(
                2 * 4 * (tm * K + K * N + tm * N + N))),
    )(A, Wc, bias.reshape(1, N).astype(jnp.float32))
    if transpose_out:
        return out[:, :M]
    return out[:M]


def encode_head_reparam(flat, eps, w_head, b_head, latent_dim):
    """Single concatenated [mu | logvar] matmul fused with reparameterize."""
    B = flat.shape[0]
    sds = jax.ShapeDtypeStruct((B, latent_dim), jnp.float32)
    return pl.pallas_call(
        functools.partial(_head_reparam_kernel, latent_dim=latent_dim),
        out_shape=(sds, sds, sds),
    )(flat, eps, w_head, b_head.reshape(1, -1))


# ----------------------------------------------------------------------------
# Conv lowering glue (channels-last, tap-major im2col / 27-tap parity fold)
# ----------------------------------------------------------------------------
def conv2d_bn_lrelu(x, w_mat, bias, gamma, beta):
    """x: (B, H, W, Cin).  Conv2d(k=4, s=2, p=1) + BN(train) + LeakyReLU(0.2)."""
    B, H, W, Cin = x.shape
    Cout = w_mat.shape[1]
    Ho, Wo = H // 2, W // 2
    xp = jnp.pad(x.astype(MATMUL_DTYPE), ((0, 0), (1, 1), (1, 1), (0, 0)))
    # Tap-major im2col: columns ordered (kh, kw, ci) so each tap is one
    # contiguous slab copy (no interleaved small writes in the XLA gather).
    taps = [xp[:, kh:kh + 2 * Ho - 1:2, kw:kw + 2 * Wo - 1:2, :]
            for kh in range(4) for kw in range(4)]
    A = jnp.concatenate(taps, axis=-1).reshape(B * Ho * Wo, 16 * Cin)
    y = conv_rows_bn_lrelu(A, w_mat, bias, gamma, beta)
    return y.reshape(B, Ho, Wo, Cout)


def conv_transpose3d_s2(x, w27, bias8, act, *, transpose_out=False):
    """x: (B, D, H, W, Cin).  ConvTranspose3d(k=4, s=2, p=1) via the 27-tap /
    parity-in-N decomposition (single matmul, see _prep_convT3d_w27)."""
    B, D, H, W, Cin = x.shape
    N = w27.shape[1]
    Cout = N // 8
    xp = jnp.pad(x.astype(MATMUL_DTYPE),
                 ((0, 0), (1, 1), (1, 1), (1, 1), (0, 0)))
    # TODO(synk): stream this tap gather through the kernel grid (manual DMA of
    # haloed slabs + shifted pl.ds slices) instead of materializing A in HBM.
    taps = [xp[:, td:td + D, th:th + H, tw:tw + W, :]
            for td in range(3) for th in range(3) for tw in range(3)]
    A = jnp.concatenate(taps, axis=-1).reshape(B * D * H * W, 27 * Cin)
    o = matmul_bias_act(A, w27, bias8, act, transpose_out=transpose_out)
    if transpose_out:
        # o: (8*Cout, M), rows ordered (rd, rh, rw, co).
        o = o.reshape(2, 2, 2, Cout, B, D, H, W).transpose(4, 5, 0, 6, 1, 7, 2, 3)
    else:
        # o: (M, 8*Cout), columns ordered (rd, rh, rw, co).
        o = o.reshape(B, D, H, W, 2, 2, 2, Cout).transpose(0, 1, 4, 2, 5, 3, 6, 7)
    # TODO(synk): fold this parity de-interleave into the next layer's tap
    # gather (index the parity-blocked layout directly) for the middle layers.
    return o.reshape(B, 2 * D, 2 * H, 2 * W, Cout)


# ----------------------------------------------------------------------------
# Parameters (PyTorch layouts) + one-time preprocessing (hoisted out of forward)
# ----------------------------------------------------------------------------
def init_params(key, input_dim, hidden_dim, latent_dim, flatten_size):
    def lin_init(k, shape, fan_in):
        bound = 1.0 / jnp.sqrt(fan_in)
        return jax.random.uniform(k, shape, jnp.float32, -bound, bound)

    ks = list(jax.random.split(key, 18))
    p = {}
    p["c1_w"] = lin_init(ks[0], (hidden_dim, input_dim, 4, 4), input_dim * 16)
    p["c1_b"] = lin_init(ks[1], (hidden_dim,), input_dim * 16)
    p["c2_w"] = lin_init(ks[2], (hidden_dim * 2, hidden_dim, 4, 4), hidden_dim * 16)
    p["c2_b"] = lin_init(ks[3], (hidden_dim * 2,), hidden_dim * 16)
    p["c3_w"] = lin_init(ks[4], (hidden_dim * 4, hidden_dim * 2, 4, 4), hidden_dim * 32)
    p["c3_b"] = lin_init(ks[5], (hidden_dim * 4,), hidden_dim * 32)
    p["bn1_g"], p["bn1_b"] = jnp.ones(hidden_dim), jnp.zeros(hidden_dim)
    p["bn2_g"], p["bn2_b"] = jnp.ones(hidden_dim * 2), jnp.zeros(hidden_dim * 2)
    p["bn3_g"], p["bn3_b"] = jnp.ones(hidden_dim * 4), jnp.zeros(hidden_dim * 4)
    p["mu_w"] = lin_init(ks[6], (latent_dim, flatten_size), flatten_size)
    p["mu_b"] = lin_init(ks[7], (latent_dim,), flatten_size)
    p["lv_w"] = lin_init(ks[8], (latent_dim, flatten_size), flatten_size)
    p["lv_b"] = lin_init(ks[9], (latent_dim,), flatten_size)
    dec_fc_out = hidden_dim * 4 * 4 * 4
    p["dfc_w"] = lin_init(ks[10], (dec_fc_out, latent_dim), latent_dim)
    p["dfc_b"] = lin_init(ks[11], (dec_fc_out,), latent_dim)
    p["t1_w"] = lin_init(ks[12], (hidden_dim, hidden_dim // 2, 4, 4, 4), hidden_dim * 64)
    p["t1_b"] = lin_init(ks[13], (hidden_dim // 2,), hidden_dim * 64)
    p["t2_w"] = lin_init(ks[14], (hidden_dim // 2, hidden_dim // 4, 4, 4, 4), hidden_dim // 2 * 64)
    p["t2_b"] = lin_init(ks[15], (hidden_dim // 4,), hidden_dim // 2 * 64)
    p["t3_w"] = lin_init(ks[16], (hidden_dim // 4, 1, 4, 4, 4), hidden_dim // 4 * 64)
    p["t3_b"] = lin_init(ks[17], (1,), hidden_dim // 4 * 64)
    return p


def _prep_conv2d_w(w):
    # (Cout, Cin, 4, 4) -> (16*Cin, Cout) with rows ordered (kh, kw, ci),
    # matching the tap-major im2col.
    cout, cin = w.shape[0], w.shape[1]
    return w.transpose(2, 3, 1, 0).reshape(16 * cin, cout).astype(MATMUL_DTYPE)


def _prep_convT3d_w27(w):
    """(Cin, Cout, 4, 4, 4) PyTorch ConvTranspose3d weight -> (27*Cin, 8*Cout).

    Rows are (tap td,th,tw in {0,1,2}; ci) matching the 27-tap im2col of the
    1-padded input; columns are (output parity rd,rh,rw in {0,1}; co).  For
    parity r and tap t, the contributing kernel index per axis is
    k = 3 - r - 2*(t - r) when t - r in {0,1}; other (t, r) pairs are
    structural zeros.  Folding the 8 parities into N replaces the previous
    (8, M, 8*Cin) batched matmul by one (M, 27*Cin) @ (27*Cin, 8*Cout) matmul.
    """
    cin, cout = w.shape[0], w.shape[1]
    zero = jnp.zeros((cin, cout), w.dtype)
    blocks = []
    for td in range(3):
        for th in range(3):
            for tw in range(3):
                cols = []
                for rd in range(2):
                    for rh in range(2):
                        for rw in range(2):
                            od, oh, ow = td - rd, th - rh, tw - rw
                            if 0 <= od <= 1 and 0 <= oh <= 1 and 0 <= ow <= 1:
                                cols.append(w[:, :, 3 - rd - 2 * od,
                                              3 - rh - 2 * oh,
                                              3 - rw - 2 * ow])
                            else:
                                cols.append(zero)
                blocks.append(jnp.stack(cols, axis=1).reshape(cin, 8 * cout))
    return jnp.concatenate(blocks, axis=0).astype(MATMUL_DTYPE)


def prepare_params(raw, hidden_dim, latent_dim, feat_hw):
    """Hoist all weight preprocessing out of the per-call forward pass."""
    hf, wf = feat_hw
    c3 = hidden_dim * 4
    p = dict(raw)
    p["c1_wm"] = _prep_conv2d_w(raw["c1_w"])
    p["c2_wm"] = _prep_conv2d_w(raw["c2_w"])
    p["c3_wm"] = _prep_conv2d_w(raw["c3_w"])

    # fc_mu / fc_logvar consume the (H, W, C)-ordered flatten of channels-last
    # features; permute the PyTorch (C, H, W)-ordered columns once here, and
    # concatenate the two heads along N (single matmul, 2L-wide stores).
    def head_w(w):
        L = w.shape[0]
        return (w.reshape(L, c3, hf, wf).transpose(0, 2, 3, 1)
                .reshape(L, -1).T.astype(jnp.float32))

    p["head_w"] = jnp.concatenate([head_w(raw["mu_w"]), head_w(raw["lv_w"])],
                                  axis=1)
    p["head_b"] = jnp.concatenate([raw["mu_b"], raw["lv_b"]])

    # Decoder fc: emit (D, H, W, C)-ordered columns so its output reshapes
    # directly into a channels-last volume.
    p["dfc_wm"] = (raw["dfc_w"].reshape(hidden_dim, 4, 4, 4, latent_dim)
                   .transpose(1, 2, 3, 0, 4).reshape(-1, latent_dim).T
                   .astype(MATMUL_DTYPE))

    for name in ("t1", "t2", "t3"):
        p[name + "_w27"] = _prep_convT3d_w27(raw[name + "_w"])
        p[name + "_b8"] = jnp.tile(raw[name + "_b"], 8)   # (parity, co) order
    return p


# ----------------------------------------------------------------------------
# VAE forward
# ----------------------------------------------------------------------------
def vae_forward(params, x_nchw, eps, *, hidden_dim, latent_dim,
                output_shape=(1, 32, 32, 32)):
    B = x_nchw.shape[0]

    # ---------------- Encoder (channels-last throughout) ----------------
    h = jnp.transpose(x_nchw, (0, 2, 3, 1))                       # NHWC, once
    h = conv2d_bn_lrelu(h, params["c1_wm"], params["c1_b"],
                        params["bn1_g"], params["bn1_b"])
    h = conv2d_bn_lrelu(h, params["c2_wm"], params["c2_b"],
                        params["bn2_g"], params["bn2_b"])
    h = conv2d_bn_lrelu(h, params["c3_wm"], params["c3_b"],
                        params["bn3_g"], params["bn3_b"])
    flat = h.reshape(B, -1)                                       # (H, W, C) order

    # ------------- [fc_mu | fc_logvar] + reparameterize (fused) ---------
    mu, logvar, z = encode_head_reparam(flat, eps, params["head_w"],
                                        params["head_b"], latent_dim)

    # ---------------- Decoder ----------------
    v = matmul_bias_act(z, params["dfc_wm"], params["dfc_b"], "none")
    v = v.reshape(B, 4, 4, 4, hidden_dim)                         # channels-last
    v = conv_transpose3d_s2(v, params["t1_w27"], params["t1_b8"], "relu")
    v = conv_transpose3d_s2(v, params["t2_w27"], params["t2_b8"], "relu")
    v = conv_transpose3d_s2(v, params["t3_w27"], params["t3_b8"], "sigmoid",
                            transpose_out=True)                   # Cout=1: lane-dense
    recon = jnp.moveaxis(v, -1, 1).reshape((-1,) + tuple(output_shape))
    return recon, mu, logvar


# ----------------------------------------------------------------------------
# Pure-JAX reference (lax.conv) for a numerical cross-check of the kernels.
# ----------------------------------------------------------------------------
def reference_forward(raw, x, eps, hidden_dim, output_shape=(1, 32, 32, 32)):
    hp = lax.Precision.HIGHEST

    def conv2d(x, w, b):
        y = lax.conv_general_dilated(
            x, w, window_strides=(2, 2), padding=((1, 1), (1, 1)),
            dimension_numbers=("NCHW", "OIHW", "NCHW"), precision=hp)
        return y + b.reshape(1, -1, 1, 1)

    def bn_lrelu(y, g, bt):
        mean = jnp.mean(y, axis=(0, 2, 3), keepdims=True)
        var = jnp.mean((y - mean) ** 2, axis=(0, 2, 3), keepdims=True)
        yn = ((y - mean) * lax.rsqrt(var + _BN_EPS) * g.reshape(1, -1, 1, 1)
              + bt.reshape(1, -1, 1, 1))
        return jnp.where(yn >= 0, yn, _LRELU_SLOPE * yn)

    def convT3d(x, w, b):
        wf = jnp.flip(w, axis=(2, 3, 4)).transpose(1, 0, 2, 3, 4)
        y = lax.conv_general_dilated(
            x, wf, window_strides=(1, 1, 1), padding=((2, 2),) * 3,
            lhs_dilation=(2, 2, 2),
            dimension_numbers=("NCDHW", "OIDHW", "NCDHW"), precision=hp)
        return y + b.reshape(1, -1, 1, 1, 1)

    B = x.shape[0]
    h = bn_lrelu(conv2d(x, raw["c1_w"], raw["c1_b"]), raw["bn1_g"], raw["bn1_b"])
    h = bn_lrelu(conv2d(h, raw["c2_w"], raw["c2_b"]), raw["bn2_g"], raw["bn2_b"])
    h = bn_lrelu(conv2d(h, raw["c3_w"], raw["c3_b"]), raw["bn3_g"], raw["bn3_b"])
    flat = h.reshape(B, -1)
    mu = jnp.dot(flat, raw["mu_w"].T, precision=hp) + raw["mu_b"]
    logvar = jnp.dot(flat, raw["lv_w"].T, precision=hp) + raw["lv_b"]
    z = mu + eps * jnp.exp(0.5 * logvar)
    v = (jnp.dot(z, raw["dfc_w"].T, precision=hp) + raw["dfc_b"])
    v = v.reshape(B, hidden_dim, 4, 4, 4)
    v = jax.nn.relu(convT3d(v, raw["t1_w"], raw["t1_b"]))
    v = jax.nn.relu(convT3d(v, raw["t2_w"], raw["t2_b"]))
    v = jax.nn.sigmoid(convT3d(v, raw["t3_w"], raw["t3_b"]))
    return v.reshape((-1,) + tuple(output_shape)), mu, logvar


# ----------------------------------------------------------------------------
if __name__ == "__main__":
    # Small config consistent with the module: 32x32 input so the decoder's
    # fixed 4->8->16->32 upsampling matches output_shape=(1,32,32,32).
    B, input_dim, hidden_dim, latent_dim = 2, 1, 8, 16
    H = W = 32
    flatten_size = (hidden_dim * 4) * (H // 8) * (W // 8)         # 32 * 4 * 4 = 512
    output_shape = (1, 32, 32, 32)

    key = jax.random.PRNGKey(0)
    kx, keps, kp = jax.random.split(key, 3)
    x = jax.random.normal(kx, (B, input_dim, H, W), jnp.float32)  # NCHW like PyTorch
    eps = jax.random.normal(keps, (B, latent_dim), jnp.float32)   # randn_like(std)

    raw = init_params(kp, input_dim, hidden_dim, latent_dim, flatten_size)
    params = prepare_params(raw, hidden_dim, latent_dim, (H // 8, W // 8))

    fwd = jax.jit(functools.partial(vae_forward, hidden_dim=hidden_dim,
                                    latent_dim=latent_dim,
                                    output_shape=output_shape))
    recon, mu, logvar = fwd(params, x, eps)
    jax.block_until_ready((recon, mu, logvar))

    assert recon.shape == (B,) + output_shape, recon.shape
    assert mu.shape == (B, latent_dim) and logvar.shape == (B, latent_dim)
    assert bool(jnp.isfinite(recon).all() & jnp.isfinite(mu).all()
                & jnp.isfinite(logvar).all())

    # Cross-check against a pure-JAX (lax.conv) reference of the same forward.
    r_recon, r_mu, r_logvar = reference_forward(raw, x, eps, hidden_dim,
                                                output_shape)
    for got, want in ((recon, r_recon), (mu, r_mu), (logvar, r_logvar)):
        err = float(jnp.max(jnp.abs(got - want)))
        assert err < 5e-2, f"mismatch vs reference: max |diff| = {err}"

    print("KERNEL_OK")
</pallas_src>

<mosaic_0001>
module attributes {stable_mosaic.version = 11 : i64} {
  func.func @_bn_lrelu_kernel(%arg0: i32, %arg1: memref<512x8xf32, #tpu.memory_space<vmem>>, %arg2: memref<1x8xf32, #tpu.memory_space<vmem>>, %arg3: memref<1x8xf32, #tpu.memory_space<vmem>>, %arg4: memref<1x8xf32, #tpu.memory_space<vmem>>, %arg5: memref<1x8xf32, #tpu.memory_space<vmem>>, %arg6: memref<512x8xf32, #tpu.memory_space<vmem>>) attributes {dimension_semantics = [#tpu.dimension_semantics<parallel>], iteration_bounds = array<i64: 1>, scalar_prefetch = 0 : i64, scratch_operands = 0 : i64, tpu.core_type = #tpu.core_type<tc>, window_params = [{transform_indices = @transform_0, window_bounds = array<i64: 512, 8>}, {pipeline_mode = #tpu.pipeline_mode<synchronous>, transform_indices = @transform_1, window_bounds = array<i64: 1, 8>}, {pipeline_mode = #tpu.pipeline_mode<synchronous>, transform_indices = @transform_2, window_bounds = array<i64: 1, 8>}, {pipeline_mode = #tpu.pipeline_mode<synchronous>, transform_indices = @transform_3, window_bounds = array<i64: 1, 8>}, {pipeline_mode = #tpu.pipeline_mode<synchronous>, transform_indices = @transform_4, window_bounds = array<i64: 1, 8>}, {transform_indices = @transform_5, window_bounds = array<i64: 512, 8>}]} {
    %c0 = arith.constant 0 : index
    %c0_0 = arith.constant 0 : index
    %0 = vector.load %arg2[%c0, %c0_0] : memref<1x8xf32, #tpu.memory_space<vmem>>, vector<1x8xf32>
    %cst = arith.constant 0.001953125 : f32
    %1 = vector.broadcast %cst : f32 to vector<1x8xf32>
    %2 = arith.mulf %0, %1 : vector<1x8xf32>
    %c0_1 = arith.constant 0 : index
    %c0_2 = arith.constant 0 : index
    %3 = vector.load %arg3[%c0_1, %c0_2] : memref<1x8xf32, #tpu.memory_space<vmem>>, vector<1x8xf32>
    %cst_3 = arith.constant 0.001953125 : f32
    %4 = vector.broadcast %cst_3 : f32 to vector<1x8xf32>
    %5 = arith.mulf %3, %4 : vector<1x8xf32>
    %6 = arith.mulf %2, %2 : vector<1x8xf32>
    %7 = arith.subf %5, %6 : vector<1x8xf32>
    %cst_4 = arith.constant 0.000000e+00 : f32
    %8 = vector.broadcast %cst_4 : f32 to vector<1x8xf32>
    %9 = arith.maximumf %7, %8 : vector<1x8xf32>
    %c0_5 = arith.constant 0 : index
    %c0_6 = arith.constant 0 : index
    %10 = vector.load %arg1[%c0_5, %c0_6] : memref<512x8xf32, #tpu.memory_space<vmem>>, vector<512x8xf32>
    %11 = vector.broadcast %2 : vector<1x8xf32> to vector<512x8xf32>
    %12 = arith.subf %10, %11 : vector<512x8xf32>
    %cst_7 = arith.constant 9.99999974E-6 : f32
    %13 = vector.broadcast %cst_7 : f32 to vector<1x8xf32>
    %14 = arith.addf %9, %13 : vector<1x8xf32>
    %15 = math.rsqrt %14 : vector<1x8xf32>
    %16 = vector.broadcast %15 : vector<1x8xf32> to vector<512x8xf32>
    %17 = arith.mulf %12, %16 : vector<512x8xf32>
    %c0_8 = arith.constant 0 : index
    %c0_9 = arith.constant 0 : index
    %18 = vector.load %arg4[%c0_8, %c0_9] : memref<1x8xf32, #tpu.memory_space<vmem>>, vector<1x8xf32>
    %19 = vector.broadcast %18 : vector<1x8xf32> to vector<512x8xf32>
    %20 = arith.mulf %17, %19 : vector<512x8xf32>
    %c0_10 = arith.constant 0 : index
    %c0_11 = arith.constant 0 : index
    %21 = vector.load %arg5[%c0_10, %c0_11] : memref<1x8xf32, #tpu.memory_space<vmem>>, vector<1x8xf32>
    %22 = vector.broadcast %21 : vector<1x8xf32> to vector<512x8xf32>
    %23 = arith.addf %20, %22 : vector<512x8xf32>
    %cst_12 = arith.constant 0.000000e+00 : f32
    %24 = vector.broadcast %cst_12 : f32 to vector<512x8xf32>
    %25 = arith.cmpf oge, %23, %24 : vector<512x8xf32>
    %cst_13 = arith.constant 2.000000e-01 : f32
    %26 = vector.broadcast %cst_13 : f32 to vector<512x8xf32>
    %27 = arith.mulf %26, %23 : vector<512x8xf32>
    %28 = arith.select %25, %23, %27 : vector<512x8xi1>, vector<512x8xf32>
    %c0_14 = arith.constant 0 : index
    %c0_15 = arith.constant 0 : index
    %29 = vector.load %arg6[%c0_14, %c0_15] : memref<512x8xf32, #tpu.memory_space<vmem>>, vector<512x8xf32>
    tpu.vector_store %arg6[%c0_14, %c0_15], %28 {strides = array<i32>} : memref<512x8xf32, #tpu.memory_space<vmem>>, vector<512x8xf32>,
    return
  }
  func.func @transform_0(%arg0: i32) -> (i32, i32) {
    %c0_i32 = arith.constant 0 : i32
    %c0_i32_0 = arith.constant 0 : i32
    return %arg0, %c0_i32 : i32, i32
  }
  func.func @transform_1(%arg0: i32) -> (i32, i32) {
    %c0_i32 = arith.constant 0 : i32
    %c0_i32_0 = arith.constant 0 : i32
    %c0_i32_1 = arith.constant 0 : i32
    return %c0_i32, %c0_i32_0 : i32, i32
  }
  func.func @transform_2(%arg0: i32) -> (i32, i32) {
    %c0_i32 = arith.constant 0 : i32
    %c0_i32_0 = arith.constant 0 : i32
    %c0_i32_1 = arith.constant 0 : i32
    return %c0_i32, %c0_i32_0 : i32, i32
  }
  func.func @transform_3(%arg0: i32) -> (i32, i32) {
    %c0_i32 = arith.constant 0 : i32
    %c0_i32_0 = arith.constant 0 : i32
    %c0_i32_1 = arith.constant 0 : i32
    return %c0_i32, %c0_i32_0 : i32, i32
  }
  func.func @transform_4(%arg0: i32) -> (i32, i32) {
    %c0_i32 = arith.constant 0 : i32
    %c0_i32_0 = arith.constant 0 : i32
    %c0_i32_1 = arith.constant 0 : i32
    return %c0_i32, %c0_i32_0 : i32, i32
  }
  func.func @transform_5(%arg0: i32) -> (i32, i32) {
    %c0_i32 = arith.constant 0 : i32
    %c0_i32_0 = arith.constant 0 : i32
    return %arg0, %c0_i32 : i32, i32
  }
}

module attributes {stable_mosaic.version = 11 : i64} {
  func.func @_conv_rows_stats_kernel(%arg0: i32, %arg1: memref<512x16xf32, #tpu.memory_space<vmem>>, %arg2: memref<16x8xf32, #tpu.memory_space<vmem>>, %arg3: memref<1x8xf32, #tpu.memory_space<vmem>>, %arg4: memref<512x8xf32, #tpu.memory_space<vmem>>, %arg5: memref<8x8xf32, #tpu.memory_space<vmem>>, %arg6: memref<8x8xf32, #tpu.memory_space<vmem>>) attributes {dimension_semantics = [#tpu.dimension_semantics<parallel>], iteration_bounds = array<i64: 1>, scalar_prefetch = 0 : i64, scratch_operands = 0 : i64, tpu.core_type = #tpu.core_type<tc>, window_params = [{transform_indices = @transform_0, window_bounds = array<i64: 512, 16>}, {pipeline_mode = #tpu.pipeline_mode<synchronous>, transform_indices = @transform_1, window_bounds = array<i64: 16, 8>}, {pipeline_mode = #tpu.pipeline_mode<synchronous>, transform_indices = @transform_2, window_bounds = array<i64: 1, 8>}, {transform_indices = @transform_3, window_bounds = array<i64: 512, 8>}, {transform_indices = @transform_4, window_bounds = array<i64: 8, 8>}, {transform_indices = @transform_5, window_bounds = array<i64: 8, 8>}]} {
    %c0 = arith.constant 0 : index
    %c0_0 = arith.constant 0 : index
    %0 = vector.load %arg1[%c0, %c0_0] : memref<512x16xf32, #tpu.memory_space<vmem>>, vector<512x16xf32>
    %c0_1 = arith.constant 0 : index
    %c0_2 = arith.constant 0 : index
    %1 = vector.load %arg2[%c0_1, %c0_2] : memref<16x8xf32, #tpu.memory_space<vmem>>, vector<16x8xf32>
    %cst = arith.constant dense<0.000000e+00> : vector<512x8xf32>
    %2 = tpu.matmul %0, %1, %cst {dimension_numbers = #tpu.dot_dimension_numbers<[1], [0], [0], [1], [0, 0, 1, 1], [], []>} : vector<512x16xf32>, vector<16x8xf32>, vector<512x8xf32> -> vector<512x8xf32>
    %c0_3 = arith.constant 0 : index
    %c0_4 = arith.constant 0 : index
    %3 = vector.load %arg3[%c0_3, %c0_4] : memref<1x8xf32, #tpu.memory_space<vmem>>, vector<1x8xf32>
    %4 = vector.broadcast %3 : vector<1x8xf32> to vector<512x8xf32>
    %5 = arith.addf %2, %4 : vector<512x8xf32>
    %c0_5 = arith.constant 0 : index
    %c0_6 = arith.constant 0 : index
    %6 = vector.load %arg4[%c0_5, %c0_6] : memref<512x8xf32, #tpu.memory_space<vmem>>, vector<512x8xf32>
    tpu.vector_store %arg4[%c0_5, %c0_6], %5 {strides = array<i32>} : memref<512x8xf32, #tpu.memory_space<vmem>>, vector<512x8xf32>,
    %c0_i32 = arith.constant 0 : i32
    %7 = arith.cmpi slt, %arg0, %c0_i32 : i32
    %8 = arith.extui %7 : i1 to i32
    %c0_i32_7 = arith.constant 0 : i32
    %9 = arith.cmpi ne, %8, %c0_i32_7 : i32
    scf.if %9 {
      %13 = vector.shape_cast %5 : vector<512x8xf32> to vector<64x8x8xf32>
      %cst_10 = arith.constant dense<0.000000e+00> : vector<8x8xf32>
      %14 = vector.multi_reduction <add>, %13, %cst_10 [0] : vector<64x8x8xf32> to vector<8x8xf32>
      %c0_11 = arith.constant 0 : index
      %c0_12 = arith.constant 0 : index
      %15 = vector.load %arg5[%c0_11, %c0_12] : memref<8x8xf32, #tpu.memory_space<vmem>>, vector<8x8xf32>
      tpu.vector_store %arg5[%c0_11, %c0_12], %14 {strides = array<i32>} : memref<8x8xf32, #tpu.memory_space<vmem>>, vector<8x8xf32>,
      %16 = arith.mulf %13, %13 : vector<64x8x8xf32>
      %cst_13 = arith.constant dense<0.000000e+00> : vector<8x8xf32>
      %17 = vector.multi_reduction <add>, %16, %cst_13 [0] : vector<64x8x8xf32> to vector<8x8xf32>
      %c0_14 = arith.constant 0 : index
      %c0_15 = arith.constant 0 : index
      %18 = vector.load %arg6[%c0_14, %c0_15] : memref<8x8xf32, #tpu.memory_space<vmem>>, vector<8x8xf32>
      tpu.vector_store %arg6[%c0_14, %c0_15], %17 {strides = array<i32>} : memref<8x8xf32, #tpu.memory_space<vmem>>, vector<8x8xf32>,
    } else {
    }
    %c0_i32_8 = arith.constant 0 : i32
    %10 = arith.cmpi eq, %arg0, %c0_i32_8 : i32
    %11 = arith.extui %10 : i1 to i32
    %c0_i32_9 = arith.constant 0 : i32
    %12 = arith.cmpi ne, %11, %c0_i32_9 : i32
    scf.if %12 {
      %c512_i32 = arith.constant 512 : i32
      %13 = arith.muli %arg0, %c512_i32 : i32
      %14 = tpu.iota {dimensions = array<i32: 0>} : vector<512x1xi32>
      %15 = vector.broadcast %13 : i32 to vector<512x1xi32>
      %16 = arith.addi %15, %14 : vector<512x1xi32>
      %c512_i32_10 = arith.constant 512 : i32
      %17 = vector.broadcast %c512_i32_10 : i32 to vector<512x1xi32>
      %18 = arith.cmpi slt, %16, %17 : vector<512x1xi32>
      %cst_11 = arith.constant 0.000000e+00 : f32
      %19 = vector.shape_cast %18 : vector<512x1xi1> to vector<512x1xi1>
      %20 = vector.broadcast %19 : vector<512x1xi1> to vector<512x8xi1>
      %21 = vector.broadcast %cst_11 : f32 to vector<512x8xf32>
      %22 = arith.select %20, %5, %21 : vector<512x8xi1>, vector<512x8xf32>
      %23 = vector.shape_cast %22 : vector<512x8xf32> to vector<64x8x8xf32>
      %cst_12 = arith.constant dense<0.000000e+00> : vector<8x8xf32>
      %24 = vector.multi_reduction <add>, %23, %cst_12 [0] : vector<64x8x8xf32> to vector<8x8xf32>
      %c0_13 = arith.constant 0 : index
      %c0_14 = arith.constant 0 : index
      %25 = vector.load %arg5[%c0_13, %c0_14] : memref<8x8xf32, #tpu.memory_space<vmem>>, vector<8x8xf32>
      tpu.vector_store %arg5[%c0_13, %c0_14], %24 {strides = array<i32>} : memref<8x8xf32, #tpu.memory_space<vmem>>, vector<8x8xf32>,
      %26 = arith.mulf %23, %23 : vector<64x8x8xf32>
      %cst_15 = arith.constant dense<0.000000e+00> : vector<8x8xf32>
      %27 = vector.multi_reduction <add>, %26, %cst_15 [0] : vector<64x8x8xf32> to vector<8x8xf32>
      %c0_16 = arith.constant 0 : index
      %c0_17 = arith.constant 0 : index
      %28 = vector.load %arg6[%c0_16, %c0_17] : memref<8x8xf32, #tpu.memory_space<vmem>>, vector<8x8xf32>
      tpu.vector_store %arg6[%c0_16, %c0_17], %27 {strides = array<i32>} : memref<8x8xf32, #tpu.memory_space<vmem>>, vector<8x8xf32>,
    } else {
    }
    return
  }
  func.func @transform_0(%arg0: i32) -> (i32, i32) {
    %c0_i32 = arith.constant 0 : i32
    %c0_i32_0 = arith.constant 0 : i32
    return %arg0, %c0_i32 : i32, i32
  }
  func.func @transform_1(%arg0: i32) -> (i32, i32) {
    %c0_i32 = arith.constant 0 : i32
    %c0_i32_0 = arith.constant 0 : i32
    %c0_i32_1 = arith.constant 0 : i32
    return %c0_i32, %c0_i32_0 : i32, i32
  }
  func.func @transform_2(%arg0: i32) -> (i32, i32) {
    %c0_i32 = arith.constant 0 : i32
    %c0_i32_0 = arith.constant 0 : i32
    %c0_i32_1 = arith.constant 0 : i32
    return %c0_i32, %c0_i32_0 : i32, i32
  }
  func.func @transform_3(%arg0: i32) -> (i32, i32) {
    %c0_i32 = arith.constant 0 : i32
    %c0_i32_0 = arith.constant 0 : i32
    return %arg0, %c0_i32 : i32, i32
  }
  func.func @transform_4(%arg0: i32) -> (i32, i32) {
    %c0_i32 = arith.constant 0 : i32
    %c0_i32_0 = arith.constant 0 : i32
    return %arg0, %c0_i32 : i32, i32
  }
  func.func @transform_5(%arg0: i32) -> (i32, i32) {
    %c0_i32 = arith.constant 0 : i32
    %c0_i32_0 = arith.constant 0 : i32
    return %arg0, %c0_i32 : i32, i32
  }
}

module attributes {stable_mosaic.version = 11 : i64} {
  func.func @_conv_rows_stats_kernel(%arg0: i32, %arg1: memref<128x128xf32, #tpu.memory_space<vmem>>, %arg2: memref<128x16xf32, #tpu.memory_space<vmem>>, %arg3: memref<1x16xf32, #tpu.memory_space<vmem>>, %arg4: memref<128x16xf32, #tpu.memory_space<vmem>>, %arg5: memref<8x16xf32, #tpu.memory_space<vmem>>, %arg6: memref<8x16xf32, #tpu.memory_space<vmem>>) attributes {dimension_semantics = [#tpu.dimension_semantics<parallel>], iteration_bounds = array<i64: 1>, scalar_prefetch = 0 : i64, scratch_operands = 0 : i64, tpu.core_type = #tpu.core_type<tc>, window_params = [{transform_indices = @transform_0, window_bounds = array<i64: 128, 128>}, {pipeline_mode = #tpu.pipeline_mode<synchronous>, transform_indices = @transform_1, window_bounds = array<i64: 128, 16>}, {pipeline_mode = #tpu.pipeline_mode<synchronous>, transform_indices = @transform_2, window_bounds = array<i64: 1, 16>}, {transform_indices = @transform_3, window_bounds = array<i64: 128, 16>}, {transform_indices = @transform_4, window_bounds = array<i64: 8, 16>}, {transform_indices = @transform_5, window_bounds = array<i64: 8, 16>}]} {
    %c0 = arith.constant 0 : index
    %c0_0 = arith.constant 0 : index
    %0 = vector.load %arg1[%c0, %c0_0] : memref<128x128xf32, #tpu.memory_space<vmem>>, vector<128x128xf32>
    %c0_1 = arith.constant 0 : index
    %c0_2 = arith.constant 0 : index
    %1 = vector.load %arg2[%c0_1, %c0_2] : memref<128x16xf32, #tpu.memory_space<vmem>>, vector<128x16xf32>
    %cst = arith.constant dense<0.000000e+00> : vector<128x16xf32>
    %2 = tpu.matmul %0, %1, %cst {dimension_numbers = #tpu.dot_dimension_numbers<[1], [0], [0], [1], [0, 0, 1, 1], [], []>} : vector<128x128xf32>, vector<128x16xf32>, vector<128x16xf32> -> vector<128x16xf32>
    %c0_3 = arith.constant 0 : index
    %c0_4 = arith.constant 0 : index
    %3 = vector.load %arg3[%c0_3, %c0_4] : memref<1x16xf32, #tpu.memory_space<vmem>>, vector<1x16xf32>
    %4 = vector.broadcast %3 : vector<1x16xf32> to vector<128x16xf32>
    %5 = arith.addf %2, %4 : vector<128x16xf32>
    %c0_5 = arith.constant 0 : index
    %c0_6 = arith.constant 0 : index
    %6 = vector.load %arg4[%c0_5, %c0_6] : memref<128x16xf32, #tpu.memory_space<vmem>>, vector<128x16xf32>
    tpu.vector_store %arg4[%c0_5, %c0_6], %5 {strides = array<i32>} : memref<128x16xf32, #tpu.memory_space<vmem>>, vector<128x16xf32>,
    %c0_i32 = arith.constant 0 : i32
    %7 = arith.cmpi slt, %arg0, %c0_i32 : i32
    %8 = arith.extui %7 : i1 to i32
    %c0_i32_7 = arith.constant 0 : i32
    %9 = arith.cmpi ne, %8, %c0_i32_7 : i32
    scf.if %9 {
      %13 = vector.shape_cast %5 : vector<128x16xf32> to vector<16x8x16xf32>
      %cst_10 = arith.constant dense<0.000000e+00> : vector<8x16xf32>
      %14 = vector.multi_reduction <add>, %13, %cst_10 [0] : vector<16x8x16xf32> to vector<8x16xf32>
      %c0_11 = arith.constant 0 : index
      %c0_12 = arith.constant 0 : index
      %15 = vector.load %arg5[%c0_11, %c0_12] : memref<8x16xf32, #tpu.memory_space<vmem>>, vector<8x16xf32>
      tpu.vector_store %arg5[%c0_11, %c0_12], %14 {strides = array<i32>} : memref<8x16xf32, #tpu.memory_space<vmem>>, vector<8x16xf32>,
      %16 = arith.mulf %13, %13 : vector<16x8x16xf32>
      %cst_13 = arith.constant dense<0.000000e+00> : vector<8x16xf32>
      %17 = vector.multi_reduction <add>, %16, %cst_13 [0] : vector<16x8x16xf32> to vector<8x16xf32>
      %c0_14 = arith.constant 0 : index
      %c0_15 = arith.constant 0 : index
      %18 = vector.load %arg6[%c0_14, %c0_15] : memref<8x16xf32, #tpu.memory_space<vmem>>, vector<8x16xf32>
      tpu.vector_store %arg6[%c0_14, %c0_15], %17 {strides = array<i32>} : memref<8x16xf32, #tpu.memory_space<vmem>>, vector<8x16xf32>,
    } else {
    }
    %c0_i32_8 = arith.constant 0 : i32
    %10 = arith.cmpi eq, %arg0, %c0_i32_8 : i32
    %11 = arith.extui %10 : i1 to i32
    %c0_i32_9 = arith.constant 0 : i32
    %12 = arith.cmpi ne, %11, %c0_i32_9 : i32
    scf.if %12 {
      %c128_i32 = arith.constant 128 : i32
      %13 = arith.muli %arg0, %c128_i32 : i32
      %14 = tpu.iota {dimensions = array<i32: 0>} : vector<128x1xi32>
      %15 = vector.broadcast %13 : i32 to vector<128x1xi32>
      %16 = arith.addi %15, %14 : vector<128x1xi32>
      %c128_i32_10 = arith.constant 128 : i32
      %17 = vector.broadcast %c128_i32_10 : i32 to vector<128x1xi32>
      %18 = arith.cmpi slt, %16, %17 : vector<128x1xi32>
      %cst_11 = arith.constant 0.000000e+00 : f32
      %19 = vector.shape_cast %18 : vector<128x1xi1> to vector<128x1xi1>
      %20 = vector.broadcast %19 : vector<128x1xi1> to vector<128x16xi1>
      %21 = vector.broadcast %cst_11 : f32 to vector<128x16xf32>
      %22 = arith.select %20, %5, %21 : vector<128x16xi1>, vector<128x16xf32>
      %23 = vector.shape_cast %22 : vector<128x16xf32> to vector<16x8x16xf32>
      %cst_12 = arith.constant dense<0.000000e+00> : vector<8x16xf32>
      %24 = vector.multi_reduction <add>, %23, %cst_12 [0] : vector<16x8x16xf32> to vector<8x16xf32>
      %c0_13 = arith.constant 0 : index
      %c0_14 = arith.constant 0 : index
      %25 = vector.load %arg5[%c0_13, %c0_14] : memref<8x16xf32, #tpu.memory_space<vmem>>, vector<8x16xf32>
      tpu.vector_store %arg5[%c0_13, %c0_14], %24 {strides = array<i32>} : memref<8x16xf32, #tpu.memory_space<vmem>>, vector<8x16xf32>,
      %26 = arith.mulf %23, %23 : vector<16x8x16xf32>
      %cst_15 = arith.constant dense<0.000000e+00> : vector<8x16xf32>
      %27 = vector.multi_reduction <add>, %26, %cst_15 [0] : vector<16x8x16xf32> to vector<8x16xf32>
      %c0_16 = arith.constant 0 : index
      %c0_17 = arith.constant 0 : index
      %28 = vector.load %arg6[%c0_16, %c0_17] : memref<8x16xf32, #tpu.memory_space<vmem>>, vector<8x16xf32>
      tpu.vector_store %arg6[%c0_16, %c0_17], %27 {strides = array<i32>} : memref<8x16xf32, #tpu.memory_space<vmem>>, vector<8x16xf32>,
    } else {
    }
    return
  }
  func.func @transform_0(%arg0: i32) -> (i32, i32) {
    %c0_i32 = arith.constant 0 : i32
    %c0_i32_0 = arith.constant 0 : i32
    return %arg0, %c0_i32 : i32, i32
  }
  func.func @transform_1(%arg0: i32) -> (i32, i32) {
    %c0_i32 = arith.constant 0 : i32
    %c0_i32_0 = arith.constant 0 : i32
    %c0_i32_1 = arith.constant 0 : i32
    return %c0_i32, %c0_i32_0 : i32, i32
  }
  func.func @transform_2(%arg0: i32) -> (i32, i32) {
    %c0_i32 = arith.constant 0 : i32
    %c0_i32_0 = arith.constant 0 : i32
    %c0_i32_1 = arith.constant 0 : i32
    return %c0_i32, %c0_i32_0 : i32, i32
  }
  func.func @transform_3(%arg0: i32) -> (i32, i32) {
    %c0_i32 = arith.constant 0 : i32
    %c0_i32_0 = arith.constant 0 : i32
    return %arg0, %c0_i32 : i32, i32
  }
  func.func @transform_4(%arg0: i32) -> (i32, i32) {
    %c0_i32 = arith.constant 0 : i32
    %c0_i32_0 = arith.constant 0 : i32
    return %arg0, %c0_i32 : i32, i32
  }
  func.func @transform_5(%arg0: i32) -> (i32, i32) {
    %c0_i32 = arith.constant 0 : i32
    %c0_i32_0 = arith.constant 0 : i32
    return %arg0, %c0_i32 : i32, i32
  }
}

module attributes {stable_mosaic.version = 11 : i64} {
  func.func @_bn_lrelu_kernel(%arg0: i32, %arg1: memref<128x16xf32, #tpu.memory_space<vmem>>, %arg2: memref<1x16xf32, #tpu.memory_space<vmem>>, %arg3: memref<1x16xf32, #tpu.memory_space<vmem>>, %arg4: memref<1x16xf32, #tpu.memory_space<vmem>>, %arg5: memref<1x16xf32, #tpu.memory_space<vmem>>, %arg6: memref<128x16xf32, #tpu.memory_space<vmem>>) attributes {dimension_semantics = [#tpu.dimension_semantics<parallel>], iteration_bounds = array<i64: 1>, scalar_prefetch = 0 : i64, scratch_operands = 0 : i64, tpu.core_type = #tpu.core_type<tc>, window_params = [{transform_indices = @transform_0, window_bounds = array<i64: 128, 16>}, {pipeline_mode = #tpu.pipeline_mode<synchronous>, transform_indices = @transform_1, window_bounds = array<i64: 1, 16>}, {pipeline_mode = #tpu.pipeline_mode<synchronous>, transform_indices = @transform_2, window_bounds = array<i64: 1, 16>}, {pipeline_mode = #tpu.pipeline_mode<synchronous>, transform_indices = @transform_3, window_bounds = array<i64: 1, 16>}, {pipeline_mode = #tpu.pipeline_mode<synchronous>, transform_indices = @transform_4, window_bounds = array<i64: 1, 16>}, {transform_indices = @transform_5, window_bounds = array<i64: 128, 16>}]} {
    %c0 = arith.constant 0 : index
    %c0_0 = arith.constant 0 : index
    %0 = vector.load %arg2[%c0, %c0_0] : memref<1x16xf32, #tpu.memory_space<vmem>>, vector<1x16xf32>
    %cst = arith.constant 7.812500e-03 : f32
    %1 = vector.broadcast %cst : f32 to vector<1x16xf32>
    %2 = arith.mulf %0, %1 : vector<1x16xf32>
    %c0_1 = arith.constant 0 : index
    %c0_2 = arith.constant 0 : index
    %3 = vector.load %arg3[%c0_1, %c0_2] : memref<1x16xf32, #tpu.memory_space<vmem>>, vector<1x16xf32>
    %cst_3 = arith.constant 7.812500e-03 : f32
    %4 = vector.broadcast %cst_3 : f32 to vector<1x16xf32>
    %5 = arith.mulf %3, %4 : vector<1x16xf32>
    %6 = arith.mulf %2, %2 : vector<1x16xf32>
    %7 = arith.subf %5, %6 : vector<1x16xf32>
    %cst_4 = arith.constant 0.000000e+00 : f32
    %8 = vector.broadcast %cst_4 : f32 to vector<1x16xf32>
    %9 = arith.maximumf %7, %8 : vector<1x16xf32>
    %c0_5 = arith.constant 0 : index
    %c0_6 = arith.constant 0 : index
    %10 = vector.load %arg1[%c0_5, %c0_6] : memref<128x16xf32, #tpu.memory_space<vmem>>, vector<128x16xf32>
    %11 = vector.broadcast %2 : vector<1x16xf32> to vector<128x16xf32>
    %12 = arith.subf %10, %11 : vector<128x16xf32>
    %cst_7 = arith.constant 9.99999974E-6 : f32
    %13 = vector.broadcast %cst_7 : f32 to vector<1x16xf32>
    %14 = arith.addf %9, %13 : vector<1x16xf32>
    %15 = math.rsqrt %14 : vector<1x16xf32>
    %16 = vector.broadcast %15 : vector<1x16xf32> to vector<128x16xf32>
    %17 = arith.mulf %12, %16 : vector<128x16xf32>
    %c0_8 = arith.constant 0 : index
    %c0_9 = arith.constant 0 : index
    %18 = vector.load %arg4[%c0_8, %c0_9] : memref<1x16xf32, #tpu.memory_space<vmem>>, vector<1x16xf32>
    %19 = vector.broadcast %18 : vector<1x16xf32> to vector<128x16xf32>
    %20 = arith.mulf %17, %19 : vector<128x16xf32>
    %c0_10 = arith.constant 0 : index
    %c0_11 = arith.constant 0 : index
    %21 = vector.load %arg5[%c0_10, %c0_11] : memref<1x16xf32, #tpu.memory_space<vmem>>, vector<1x16xf32>
    %22 = vector.broadcast %21 : vector<1x16xf32> to vector<128x16xf32>
    %23 = arith.addf %20, %22 : vector<128x16xf32>
    %cst_12 = arith.constant 0.000000e+00 : f32
    %24 = vector.broadcast %cst_12 : f32 to vector<128x16xf32>
    %25 = arith.cmpf oge, %23, %24 : vector<128x16xf32>
    %cst_13 = arith.constant 2.000000e-01 : f32
    %26 = vector.broadcast %cst_13 : f32 to vector<128x16xf32>
    %27 = arith.mulf %26, %23 : vector<128x16xf32>
    %28 = arith.select %25, %23, %27 : vector<128x16xi1>, vector<128x16xf32>
    %c0_14 = arith.constant 0 : index
    %c0_15 = arith.constant 0 : index
    %29 = vector.load %arg6[%c0_14, %c0_15] : memref<128x16xf32, #tpu.memory_space<vmem>>, vector<128x16xf32>
    tpu.vector_store %arg6[%c0_14, %c0_15], %28 {strides = array<i32>} : memref<128x16xf32, #tpu.memory_space<vmem>>, vector<128x16xf32>,
    return
  }
  func.func @transform_0(%arg0: i32) -> (i32, i32) {
    %c0_i32 = arith.constant 0 : i32
    %c0_i32_0 = arith.constant 0 : i32
    return %arg0, %c0_i32 : i32, i32
  }
  func.func @transform_1(%arg0: i32) -> (i32, i32) {
    %c0_i32 = arith.constant 0 : i32
    %c0_i32_0 = arith.constant 0 : i32
    %c0_i32_1 = arith.constant 0 : i32
    return %c0_i32, %c0_i32_0 : i32, i32
  }
  func.func @transform_2(%arg0: i32) -> (i32, i32) {
    %c0_i32 = arith.constant 0 : i32
    %c0_i32_0 = arith.constant 0 : i32
    %c0_i32_1 = arith.constant 0 : i32
    return %c0_i32, %c0_i32_0 : i32, i32
  }
  func.func @transform_3(%arg0: i32) -> (i32, i32) {
    %c0_i32 = arith.constant 0 : i32
    %c0_i32_0 = arith.constant 0 : i32
    %c0_i32_1 = arith.constant 0 : i32
    return %c0_i32, %c0_i32_0 : i32, i32
  }
  func.func @transform_4(%arg0: i32) -> (i32, i32) {
    %c0_i32 = arith.constant 0 : i32
    %c0_i32_0 = arith.constant 0 : i32
    %c0_i32_1 = arith.constant 0 : i32
    return %c0_i32, %c0_i32_0 : i32, i32
  }
  func.func @transform_5(%arg0: i32) -> (i32, i32) {
    %c0_i32 = arith.constant 0 : i32
    %c0_i32_0 = arith.constant 0 : i32
    return %arg0, %c0_i32 : i32, i32
  }
}

module attributes {stable_mosaic.version = 11 : i64} {
  func.func @_bn_lrelu_kernel(%arg0: i32, %arg1: memref<32x32xf32, #tpu.memory_space<vmem>>, %arg2: memref<1x32xf32, #tpu.memory_space<vmem>>, %arg3: memref<1x32xf32, #tpu.memory_space<vmem>>, %arg4: memref<1x32xf32, #tpu.memory_space<vmem>>, %arg5: memref<1x32xf32, #tpu.memory_space<vmem>>, %arg6: memref<32x32xf32, #tpu.memory_space<vmem>>) attributes {dimension_semantics = [#tpu.dimension_semantics<parallel>], iteration_bounds = array<i64: 1>, scalar_prefetch = 0 : i64, scratch_operands = 0 : i64, tpu.core_type = #tpu.core_type<tc>, window_params = [{transform_indices = @transform_0, window_bounds = array<i64: 32, 32>}, {pipeline_mode = #tpu.pipeline_mode<synchronous>, transform_indices = @transform_1, window_bounds = array<i64: 1, 32>}, {pipeline_mode = #tpu.pipeline_mode<synchronous>, transform_indices = @transform_2, window_bounds = array<i64: 1, 32>}, {pipeline_mode = #tpu.pipeline_mode<synchronous>, transform_indices = @transform_3, window_bounds = array<i64: 1, 32>}, {pipeline_mode = #tpu.pipeline_mode<synchronous>, transform_indices = @transform_4, window_bounds = array<i64: 1, 32>}, {transform_indices = @transform_5, window_bounds = array<i64: 32, 32>}]} {
    %c0 = arith.constant 0 : index
    %c0_0 = arith.constant 0 : index
    %0 = vector.load %arg2[%c0, %c0_0] : memref<1x32xf32, #tpu.memory_space<vmem>>, vector<1x32xf32>
    %cst = arith.constant 3.125000e-02 : f32
    %1 = vector.broadcast %cst : f32 to vector<1x32xf32>
    %2 = arith.mulf %0, %1 : vector<1x32xf32>
    %c0_1 = arith.constant 0 : index
    %c0_2 = arith.constant 0 : index
    %3 = vector.load %arg3[%c0_1, %c0_2] : memref<1x32xf32, #tpu.memory_space<vmem>>, vector<1x32xf32>
    %cst_3 = arith.constant 3.125000e-02 : f32
    %4 = vector.broadcast %cst_3 : f32 to vector<1x32xf32>
    %5 = arith.mulf %3, %4 : vector<1x32xf32>
    %6 = arith.mulf %2, %2 : vector<1x32xf32>
    %7 = arith.subf %5, %6 : vector<1x32xf32>
    %cst_4 = arith.constant 0.000000e+00 : f32
    %8 = vector.broadcast %cst_4 : f32 to vector<1x32xf32>
    %9 = arith.maximumf %7, %8 : vector<1x32xf32>
    %c0_5 = arith.constant 0 : index
    %c0_6 = arith.constant 0 : index
    %10 = vector.load %arg1[%c0_5, %c0_6] : memref<32x32xf32, #tpu.memory_space<vmem>>, vector<32x32xf32>
    %11 = vector.broadcast %2 : vector<1x32xf32> to vector<32x32xf32>
    %12 = arith.subf %10, %11 : vector<32x32xf32>
    %cst_7 = arith.constant 9.99999974E-6 : f32
    %13 = vector.broadcast %cst_7 : f32 to vector<1x32xf32>
    %14 = arith.addf %9, %13 : vector<1x32xf32>
    %15 = math.rsqrt %14 : vector<1x32xf32>
    %16 = vector.broadcast %15 : vector<1x32xf32> to vector<32x32xf32>
    %17 = arith.mulf %12, %16 : vector<32x32xf32>
    %c0_8 = arith.constant 0 : index
    %c0_9 = arith.constant 0 : index
    %18 = vector.load %arg4[%c0_8, %c0_9] : memref<1x32xf32, #tpu.memory_space<vmem>>, vector<1x32xf32>
    %19 = vector.broadcast %18 : vector<1x32xf32> to vector<32x32xf32>
    %20 = arith.mulf %17, %19 : vector<32x32xf32>
    %c0_10 = arith.constant 0 : index
    %c0_11 = arith.constant 0 : index
    %21 = vector.load %arg5[%c0_10, %c0_11] : memref<1x32xf32, #tpu.memory_space<vmem>>, vector<1x32xf32>
    %22 = vector.broadcast %21 : vector<1x32xf32> to vector<32x32xf32>
    %23 = arith.addf %20, %22 : vector<32x32xf32>
    %cst_12 = arith.constant 0.000000e+00 : f32
    %24 = vector.broadcast %cst_12 : f32 to vector<32x32xf32>
    %25 = arith.cmpf oge, %23, %24 : vector<32x32xf32>
    %cst_13 = arith.constant 2.000000e-01 : f32
    %26 = vector.broadcast %cst_13 : f32 to vector<32x32xf32>
    %27 = arith.mulf %26, %23 : vector<32x32xf32>
    %28 = arith.select %25, %23, %27 : vector<32x32xi1>, vector<32x32xf32>
    %c0_14 = arith.constant 0 : index
    %c0_15 = arith.constant 0 : index
    %29 = vector.load %arg6[%c0_14, %c0_15] : memref<32x32xf32, #tpu.memory_space<vmem>>, vector<32x32xf32>
    tpu.vector_store %arg6[%c0_14, %c0_15], %28 {strides = array<i32>} : memref<32x32xf32, #tpu.memory_space<vmem>>, vector<32x32xf32>,
    return
  }
  func.func @transform_0(%arg0: i32) -> (i32, i32) {
    %c0_i32 = arith.constant 0 : i32
    %c0_i32_0 = arith.constant 0 : i32
    return %arg0, %c0_i32 : i32, i32
  }
  func.func @transform_1(%arg0: i32) -> (i32, i32) {
    %c0_i32 = arith.constant 0 : i32
    %c0_i32_0 = arith.constant 0 : i32
    %c0_i32_1 = arith.constant 0 : i32
    return %c0_i32, %c0_i32_0 : i32, i32
  }
  func.func @transform_2(%arg0: i32) -> (i32, i32) {
    %c0_i32 = arith.constant 0 : i32
    %c0_i32_0 = arith.constant 0 : i32
    %c0_i32_1 = arith.constant 0 : i32
    return %c0_i32, %c0_i32_0 : i32, i32
  }
  func.func @transform_3(%arg0: i32) -> (i32, i32) {
    %c0_i32 = arith.constant 0 : i32
    %c0_i32_0 = arith.constant 0 : i32
    %c0_i32_1 = arith.constant 0 : i32
    return %c0_i32, %c0_i32_0 : i32, i32
  }
  func.func @transform_4(%arg0: i32) -> (i32, i32) {
    %c0_i32 = arith.constant 0 : i32
    %c0_i32_0 = arith.constant 0 : i32
    %c0_i32_1 = arith.constant 0 : i32
    return %c0_i32, %c0_i32_0 : i32, i32
  }
  func.func @transform_5(%arg0: i32) -> (i32, i32) {
    %c0_i32 = arith.constant 0 : i32
    %c0_i32_0 = arith.constant 0 : i32
    return %arg0, %c0_i32 : i32, i32
  }
}

module attributes {stable_mosaic.version = 11 : i64} {
  func.func @_conv_rows_stats_kernel(%arg0: i32, %arg1: memref<32x256xf32, #tpu.memory_space<vmem>>, %arg2: memref<256x32xf32, #tpu.memory_space<vmem>>, %arg3: memref<1x32xf32, #tpu.memory_space<vmem>>, %arg4: memref<32x32xf32, #tpu.memory_space<vmem>>, %arg5: memref<8x32xf32, #tpu.memory_space<vmem>>, %arg6: memref<8x32xf32, #tpu.memory_space<vmem>>) attributes {dimension_semantics = [#tpu.dimension_semantics<parallel>], iteration_bounds = array<i64: 1>, scalar_prefetch = 0 : i64, scratch_operands = 0 : i64, tpu.core_type = #tpu.core_type<tc>, window_params = [{transform_indices = @transform_0, window_bounds = array<i64: 32, 256>}, {pipeline_mode = #tpu.pipeline_mode<synchronous>, transform_indices = @transform_1, window_bounds = array<i64: 256, 32>}, {pipeline_mode = #tpu.pipeline_mode<synchronous>, transform_indices = @transform_2, window_bounds = array<i64: 1, 32>}, {transform_indices = @transform_3, window_bounds = array<i64: 32, 32>}, {transform_indices = @transform_4, window_bounds = array<i64: 8, 32>}, {transform_indices = @transform_5, window_bounds = array<i64: 8, 32>}]} {
    %c0 = arith.constant 0 : index
    %c0_0 = arith.constant 0 : index
    %0 = vector.load %arg1[%c0, %c0_0] : memref<32x256xf32, #tpu.memory_space<vmem>>, vector<32x256xf32>
    %c0_1 = arith.constant 0 : index
    %c0_2 = arith.constant 0 : index
    %1 = vector.load %arg2[%c0_1, %c0_2] : memref<256x32xf32, #tpu.memory_space<vmem>>, vector<256x32xf32>
    %cst = arith.constant dense<0.000000e+00> : vector<32x32xf32>
    %2 = tpu.matmul %0, %1, %cst {dimension_numbers = #tpu.dot_dimension_numbers<[1], [0], [0], [1], [0, 0, 1, 1], [], []>} : vector<32x256xf32>, vector<256x32xf32>, vector<32x32xf32> -> vector<32x32xf32>
    %c0_3 = arith.constant 0 : index
    %c0_4 = arith.constant 0 : index
    %3 = vector.load %arg3[%c0_3, %c0_4] : memref<1x32xf32, #tpu.memory_space<vmem>>, vector<1x32xf32>
    %4 = vector.broadcast %3 : vector<1x32xf32> to vector<32x32xf32>
    %5 = arith.addf %2, %4 : vector<32x32xf32>
    %c0_5 = arith.constant 0 : index
    %c0_6 = arith.constant 0 : index
    %6 = vector.load %arg4[%c0_5, %c0_6] : memref<32x32xf32, #tpu.memory_space<vmem>>, vector<32x32xf32>
    tpu.vector_store %arg4[%c0_5, %c0_6], %5 {strides = array<i32>} : memref<32x32xf32, #tpu.memory_space<vmem>>, vector<32x32xf32>,
    %c0_i32 = arith.constant 0 : i32
    %7 = arith.cmpi slt, %arg0, %c0_i32 : i32
    %8 = arith.extui %7 : i1 to i32
    %c0_i32_7 = arith.constant 0 : i32
    %9 = arith.cmpi ne, %8, %c0_i32_7 : i32
    scf.if %9 {
      %13 = vector.shape_cast %5 : vector<32x32xf32> to vector<4x8x32xf32>
      %cst_10 = arith.constant dense<0.000000e+00> : vector<8x32xf32>
      %14 = vector.multi_reduction <add>, %13, %cst_10 [0] : vector<4x8x32xf32> to vector<8x32xf32>
      %c0_11 = arith.constant 0 : index
      %c0_12 = arith.constant 0 : index
      %15 = vector.load %arg5[%c0_11, %c0_12] : memref<8x32xf32, #tpu.memory_space<vmem>>, vector<8x32xf32>
      tpu.vector_store %arg5[%c0_11, %c0_12], %14 {strides = array<i32>} : memref<8x32xf32, #tpu.memory_space<vmem>>, vector<8x32xf32>,
      %16 = arith.mulf %13, %13 : vector<4x8x32xf32>
      %cst_13 = arith.constant dense<0.000000e+00> : vector<8x32xf32>
      %17 = vector.multi_reduction <add>, %16, %cst_13 [0] : vector<4x8x32xf32> to vector<8x32xf32>
      %c0_14 = arith.constant 0 : index
      %c0_15 = arith.constant 0 : index
      %18 = vector.load %arg6[%c0_14, %c0_15] : memref<8x32xf32, #tpu.memory_space<vmem>>, vector<8x32xf32>
      tpu.vector_store %arg6[%c0_14, %c0_15], %17 {strides = array<i32>} : memref<8x32xf32, #tpu.memory_space<vmem>>, vector<8x32xf32>,
    } else {
    }
    %c0_i32_8 = arith.constant 0 : i32
    %10 = arith.cmpi eq, %arg0, %c0_i32_8 : i32
    %11 = arith.extui %10 : i1 to i32
    %c0_i32_9 = arith.constant 0 : i32
    %12 = arith.cmpi ne, %11, %c0_i32_9 : i32
    scf.if %12 {
      %c32_i32 = arith.constant 32 : i32
      %13 = arith.muli %arg0, %c32_i32 : i32
      %14 = tpu.iota {dimensions = array<i32: 0>} : vector<32x1xi32>
      %15 = vector.broadcast %13 : i32 to vector<32x1xi32>
      %16 = arith.addi %15, %14 : vector<32x1xi32>
      %c32_i32_10 = arith.constant 32 : i32
      %17 = vector.broadcast %c32_i32_10 : i32 to vector<32x1xi32>
      %18 = arith.cmpi slt, %16, %17 : vector<32x1xi32>
      %cst_11 = arith.constant 0.000000e+00 : f32
      %19 = vector.shape_cast %18 : vector<32x1xi1> to vector<32x1xi1>
      %20 = vector.broadcast %19 : vector<32x1xi1> to vector<32x32xi1>
      %21 = vector.broadcast %cst_11 : f32 to vector<32x32xf32>
      %22 = arith.select %20, %5, %21 : vector<32x32xi1>, vector<32x32xf32>
      %23 = vector.shape_cast %22 : vector<32x32xf32> to vector<4x8x32xf32>
      %cst_12 = arith.constant dense<0.000000e+00> : vector<8x32xf32>
      %24 = vector.multi_reduction <add>, %23, %cst_12 [0] : vector<4x8x32xf32> to vector<8x32xf32>
      %c0_13 = arith.constant 0 : index
      %c0_14 = arith.constant 0 : index
      %25 = vector.load %arg5[%c0_13, %c0_14] : memref<8x32xf32, #tpu.memory_space<vmem>>, vector<8x32xf32>
      tpu.vector_store %arg5[%c0_13, %c0_14], %24 {strides = array<i32>} : memref<8x32xf32, #tpu.memory_space<vmem>>, vector<8x32xf32>,
      %26 = arith.mulf %23, %23 : vector<4x8x32xf32>
      %cst_15 = arith.constant dense<0.000000e+00> : vector<8x32xf32>
      %27 = vector.multi_reduction <add>, %26, %cst_15 [0] : vector<4x8x32xf32> to vector<8x32xf32>
      %c0_16 = arith.constant 0 : index
      %c0_17 = arith.constant 0 : index
      %28 = vector.load %arg6[%c0_16, %c0_17] : memref<8x32xf32, #tpu.memory_space<vmem>>, vector<8x32xf32>
      tpu.vector_store %arg6[%c0_16, %c0_17], %27 {strides = array<i32>} : memref<8x32xf32, #tpu.memory_space<vmem>>, vector<8x32xf32>,
    } else {
    }
    return
  }
  func.func @transform_0(%arg0: i32) -> (i32, i32) {
    %c0_i32 = arith.constant 0 : i32
    %c0_i32_0 = arith.constant 0 : i32
    return %arg0, %c0_i32 : i32, i32
  }
  func.func @transform_1(%arg0: i32) -> (i32, i32) {
    %c0_i32 = arith.constant 0 : i32
    %c0_i32_0 = arith.constant 0 : i32
    %c0_i32_1 = arith.constant 0 : i32
    return %c0_i32, %c0_i32_0 : i32, i32
  }
  func.func @transform_2(%arg0: i32) -> (i32, i32) {
    %c0_i32 = arith.constant 0 : i32
    %c0_i32_0 = arith.constant 0 : i32
    %c0_i32_1 = arith.constant 0 : i32
    return %c0_i32, %c0_i32_0 : i32, i32
  }
  func.func @transform_3(%arg0: i32) -> (i32, i32) {
    %c0_i32 = arith.constant 0 : i32
    %c0_i32_0 = arith.constant 0 : i32
    return %arg0, %c0_i32 : i32, i32
  }
  func.func @transform_4(%arg0: i32) -> (i32, i32) {
    %c0_i32 = arith.constant 0 : i32
    %c0_i32_0 = arith.constant 0 : i32
    return %arg0, %c0_i32 : i32, i32
  }
  func.func @transform_5(%arg0: i32) -> (i32, i32) {
    %c0_i32 = arith.constant 0 : i32
    %c0_i32_0 = arith.constant 0 : i32
    return %arg0, %c0_i32 : i32, i32
  }
}

module attributes {stable_mosaic.version = 11 : i64} {
  func.func @_head_reparam_kernel(%arg0: memref<2x512xf32, #tpu.memory_space<vmem>>, %arg1: memref<2x16xf32, #tpu.memory_space<vmem>>, %arg2: memref<512x32xf32, #tpu.memory_space<vmem>>, %arg3: memref<1x32xf32, #tpu.memory_space<vmem>>, %arg4: memref<2x16xf32, #tpu.memory_space<vmem>>, %arg5: memref<2x16xf32, #tpu.memory_space<vmem>>, %arg6: memref<2x16xf32, #tpu.memory_space<vmem>>) attributes {dimension_semantics = [], scalar_prefetch = 0 : i64, scratch_operands = 0 : i64, tpu.core_type = #tpu.core_type<tc>} {
    %c0 = arith.constant 0 : index
    %c0_0 = arith.constant 0 : index
    %0 = vector.load %arg0[%c0, %c0_0] : memref<2x512xf32, #tpu.memory_space<vmem>>, vector<2x512xf32>
    %c0_1 = arith.constant 0 : index
    %c0_2 = arith.constant 0 : index
    %1 = vector.load %arg2[%c0_1, %c0_2] : memref<512x32xf32, #tpu.memory_space<vmem>>, vector<512x32xf32>
    %cst = arith.constant dense<0.000000e+00> : vector<2x32xf32>
    %2 = tpu.matmul %0, %1, %cst {dimension_numbers = #tpu.dot_dimension_numbers<[1], [0], [0], [1], [0, 0, 1, 1], [], []>} : vector<2x512xf32>, vector<512x32xf32>, vector<2x32xf32> -> vector<2x32xf32>
    %c0_3 = arith.constant 0 : index
    %c0_4 = arith.constant 0 : index
    %3 = vector.load %arg3[%c0_3, %c0_4] : memref<1x32xf32, #tpu.memory_space<vmem>>, vector<1x32xf32>
    %4 = vector.broadcast %3 : vector<1x32xf32> to vector<2x32xf32>
    %5 = arith.addf %2, %4 : vector<2x32xf32>
    %6 = vector.extract_strided_slice %5 {offsets = [0, 0], sizes = [2, 16], strides = [1, 1]} : vector<2x32xf32> to vector<2x16xf32>
    %7 = vector.extract_strided_slice %5 {offsets = [0, 16], sizes = [2, 16], strides = [1, 1]} : vector<2x32xf32> to vector<2x16xf32>
    %c0_5 = arith.constant 0 : index
    %c0_6 = arith.constant 0 : index
    %8 = vector.load %arg4[%c0_5, %c0_6] : memref<2x16xf32, #tpu.memory_space<vmem>>, vector<2x16xf32>
    tpu.vector_store %arg4[%c0_5, %c0_6], %6 {strides = array<i32>} : memref<2x16xf32, #tpu.memory_space<vmem>>, vector<2x16xf32>,
    %c0_7 = arith.constant 0 : index
    %c0_8 = arith.constant 0 : index
    %9 = vector.load %arg5[%c0_7, %c0_8] : memref<2x16xf32, #tpu.memory_space<vmem>>, vector<2x16xf32>
    tpu.vector_store %arg5[%c0_7, %c0_8], %7 {strides = array<i32>} : memref<2x16xf32, #tpu.memory_space<vmem>>, vector<2x16xf32>,
    %c0_9 = arith.constant 0 : index
    %c0_10 = arith.constant 0 : index
    %10 = vector.load %arg1[%c0_9, %c0_10] : memref<2x16xf32, #tpu.memory_space<vmem>>, vector<2x16xf32>
    %cst_11 = arith.constant 5.000000e-01 : f32
    %11 = vector.broadcast %cst_11 : f32 to vector<2x16xf32>
    %12 = arith.mulf %11, %7 : vector<2x16xf32>
    %13 = math.exp %12 : vector<2x16xf32>
    %14 = arith.mulf %10, %13 : vector<2x16xf32>
    %15 = arith.addf %6, %14 : vector<2x16xf32>
    %c0_12 = arith.constant 0 : index
    %c0_13 = arith.constant 0 : index
    %16 = vector.load %arg6[%c0_12, %c0_13] : memref<2x16xf32, #tpu.memory_space<vmem>>, vector<2x16xf32>
    tpu.vector_store %arg6[%c0_12, %c0_13], %15 {strides = array<i32>} : memref<2x16xf32, #tpu.memory_space<vmem>>, vector<2x16xf32>,
    return
  }
}

module attributes {stable_mosaic.version = 11 : i64} {
  func.func @_matmul_bias_act_kernel(%arg0: i32, %arg1: memref<8x16xf32, #tpu.memory_space<vmem>>, %arg2: memref<16x512xf32, #tpu.memory_space<vmem>>, %arg3: memref<1x512xf32, #tpu.memory_space<vmem>>, %arg4: memref<8x512xf32, #tpu.memory_space<vmem>>) attributes {dimension_semantics = [#tpu.dimension_semantics<parallel>], iteration_bounds = array<i64: 1>, scalar_prefetch = 0 : i64, scratch_operands = 0 : i64, tpu.core_type = #tpu.core_type<tc>, window_params = [{transform_indices = @transform_0, window_bounds = array<i64: 8, 16>}, {pipeline_mode = #tpu.pipeline_mode<synchronous>, transform_indices = @transform_1, window_bounds = array<i64: 16, 512>}, {pipeline_mode = #tpu.pipeline_mode<synchronous>, transform_indices = @transform_2, window_bounds = array<i64: 1, 512>}, {transform_indices = @transform_3, window_bounds = array<i64: 8, 512>}]} {
    %c0 = arith.constant 0 : index
    %c0_0 = arith.constant 0 : index
    %0 = vector.load %arg1[%c0, %c0_0] : memref<8x16xf32, #tpu.memory_space<vmem>>, vector<8x16xf32>
    %c0_1 = arith.constant 0 : index
    %c0_2 = arith.constant 0 : index
    %1 = vector.load %arg2[%c0_1, %c0_2] : memref<16x512xf32, #tpu.memory_space<vmem>>, vector<16x512xf32>
    %cst = arith.constant dense<0.000000e+00> : vector<8x512xf32>
    %2 = tpu.matmul %0, %1, %cst {dimension_numbers = #tpu.dot_dimension_numbers<[1], [0], [0], [1], [0, 0, 1, 1], [], []>} : vector<8x16xf32>, vector<16x512xf32>, vector<8x512xf32> -> vector<8x512xf32>
    %c0_3 = arith.constant 0 : index
    %c0_4 = arith.constant 0 : index
    %3 = vector.load %arg3[%c0_3, %c0_4] : memref<1x512xf32, #tpu.memory_space<vmem>>, vector<1x512xf32>
    %4 = vector.broadcast %3 : vector<1x512xf32> to vector<8x512xf32>
    %5 = arith.addf %2, %4 : vector<8x512xf32>
    %c0_5 = arith.constant 0 : index
    %c0_6 = arith.constant 0 : index
    %6 = vector.load %arg4[%c0_5, %c0_6] : memref<8x512xf32, #tpu.memory_space<vmem>>, vector<8x512xf32>
    tpu.vector_store %arg4[%c0_5, %c0_6], %5 {strides = array<i32>} : memref<8x512xf32, #tpu.memory_space<vmem>>, vector<8x512xf32>,
    return
  }
  func.func @transform_0(%arg0: i32) -> (i32, i32) {
    %c0_i32 = arith.constant 0 : i32
    %c0_i32_0 = arith.constant 0 : i32
    return %arg0, %c0_i32 : i32, i32
  }
  func.func @transform_1(%arg0: i32) -> (i32, i32) {
    %c0_i32 = arith.constant 0 : i32
    %c0_i32_0 = arith.constant 0 : i32
    %c0_i32_1 = arith.constant 0 : i32
    return %c0_i32, %c0_i32_0 : i32, i32
  }
  func.func @transform_2(%arg0: i32) -> (i32, i32) {
    %c0_i32 = arith.constant 0 : i32
    %c0_i32_0 = arith.constant 0 : i32
    %c0_i32_1 = arith.constant 0 : i32
    return %c0_i32, %c0_i32_0 : i32, i32
  }
  func.func @transform_3(%arg0: i32) -> (i32, i32) {
    %c0_i32 = arith.constant 0 : i32
    %c0_i32_0 = arith.constant 0 : i32
    return %arg0, %c0_i32 : i32, i32
  }
}

module attributes {stable_mosaic.version = 11 : i64} {
  func.func @_matmul_bias_act_kernel(%arg0: i32, %arg1: memref<128x216xf32, #tpu.memory_space<vmem>>, %arg2: memref<216x32xf32, #tpu.memory_space<vmem>>, %arg3: memref<1x32xf32, #tpu.memory_space<vmem>>, %arg4: memref<128x32xf32, #tpu.memory_space<vmem>>) attributes {dimension_semantics = [#tpu.dimension_semantics<parallel>], iteration_bounds = array<i64: 1>, scalar_prefetch = 0 : i64, scratch_operands = 0 : i64, tpu.core_type = #tpu.core_type<tc>, window_params = [{transform_indices = @transform_0, window_bounds = array<i64: 128, 216>}, {pipeline_mode = #tpu.pipeline_mode<synchronous>, transform_indices = @transform_1, window_bounds = array<i64: 216, 32>}, {pipeline_mode = #tpu.pipeline_mode<synchronous>, transform_indices = @transform_2, window_bounds = array<i64: 1, 32>}, {transform_indices = @transform_3, window_bounds = array<i64: 128, 32>}]} {
    %c0 = arith.constant 0 : index
    %c0_0 = arith.constant 0 : index
    %0 = vector.load %arg1[%c0, %c0_0] : memref<128x216xf32, #tpu.memory_space<vmem>>, vector<128x216xf32>
    %c0_1 = arith.constant 0 : index
    %c0_2 = arith.constant 0 : index
    %1 = vector.load %arg2[%c0_1, %c0_2] : memref<216x32xf32, #tpu.memory_space<vmem>>, vector<216x32xf32>
    %cst = arith.constant dense<0.000000e+00> : vector<128x32xf32>
    %2 = tpu.matmul %0, %1, %cst {dimension_numbers = #tpu.dot_dimension_numbers<[1], [0], [0], [1], [0, 0, 1, 1], [], []>} : vector<128x216xf32>, vector<216x32xf32>, vector<128x32xf32> -> vector<128x32xf32>
    %c0_3 = arith.constant 0 : index
    %c0_4 = arith.constant 0 : index
    %3 = vector.load %arg3[%c0_3, %c0_4] : memref<1x32xf32, #tpu.memory_space<vmem>>, vector<1x32xf32>
    %4 = vector.broadcast %3 : vector<1x32xf32> to vector<128x32xf32>
    %5 = arith.addf %2, %4 : vector<128x32xf32>
    %cst_5 = arith.constant 0.000000e+00 : f32
    %6 = vector.broadcast %cst_5 : f32 to vector<128x32xf32>
    %7 = arith.maximumf %5, %6 : vector<128x32xf32>
    %c0_6 = arith.constant 0 : index
    %c0_7 = arith.constant 0 : index
    %8 = vector.load %arg4[%c0_6, %c0_7] : memref<128x32xf32, #tpu.memory_space<vmem>>, vector<128x32xf32>
    tpu.vector_store %arg4[%c0_6, %c0_7], %7 {strides = array<i32>} : memref<128x32xf32, #tpu.memory_space<vmem>>, vector<128x32xf32>,
    return
  }
  func.func @transform_0(%arg0: i32) -> (i32, i32) {
    %c0_i32 = arith.constant 0 : i32
    %c0_i32_0 = arith.constant 0 : i32
    return %arg0, %c0_i32 : i32, i32
  }
  func.func @transform_1(%arg0: i32) -> (i32, i32) {
    %c0_i32 = arith.constant 0 : i32
    %c0_i32_0 = arith.constant 0 : i32
    %c0_i32_1 = arith.constant 0 : i32
    return %c0_i32, %c0_i32_0 : i32, i32
  }
  func.func @transform_2(%arg0: i32) -> (i32, i32) {
    %c0_i32 = arith.constant 0 : i32
    %c0_i32_0 = arith.constant 0 : i32
    %c0_i32_1 = arith.constant 0 : i32
    return %c0_i32, %c0_i32_0 : i32, i32
  }
  func.func @transform_3(%arg0: i32) -> (i32, i32) {
    %c0_i32 = arith.constant 0 : i32
    %c0_i32_0 = arith.constant 0 : i32
    return %arg0, %c0_i32 : i32, i32
  }
}

module attributes {stable_mosaic.version = 11 : i64} {
  func.func @_matmul_bias_act_kernel(%arg0: i32, %arg1: memref<1024x108xf32, #tpu.memory_space<vmem>>, %arg2: memref<108x16xf32, #tpu.memory_space<vmem>>, %arg3: memref<1x16xf32, #tpu.memory_space<vmem>>, %arg4: memref<1024x16xf32, #tpu.memory_space<vmem>>) attributes {dimension_semantics = [#tpu.dimension_semantics<parallel>], iteration_bounds = array<i64: 1>, scalar_prefetch = 0 : i64, scratch_operands = 0 : i64, tpu.core_type = #tpu.core_type<tc>, window_params = [{transform_indices = @transform_0, window_bounds = array<i64: 1024, 108>}, {pipeline_mode = #tpu.pipeline_mode<synchronous>, transform_indices = @transform_1, window_bounds = array<i64: 108, 16>}, {pipeline_mode = #tpu.pipeline_mode<synchronous>, transform_indices = @transform_2, window_bounds = array<i64: 1, 16>}, {transform_indices = @transform_3, window_bounds = array<i64: 1024, 16>}]} {
    %c0 = arith.constant 0 : index
    %c0_0 = arith.constant 0 : index
    %0 = vector.load %arg1[%c0, %c0_0] : memref<1024x108xf32, #tpu.memory_space<vmem>>, vector<1024x108xf32>
    %c0_1 = arith.constant 0 : index
    %c0_2 = arith.constant 0 : index
    %1 = vector.load %arg2[%c0_1, %c0_2] : memref<108x16xf32, #tpu.memory_space<vmem>>, vector<108x16xf32>
    %cst = arith.constant dense<0.000000e+00> : vector<1024x16xf32>
    %2 = tpu.matmul %0, %1, %cst {dimension_numbers = #tpu.dot_dimension_numbers<[1], [0], [0], [1], [0, 0, 1, 1], [], []>} : vector<1024x108xf32>, vector<108x16xf32>, vector<1024x16xf32> -> vector<1024x16xf32>
    %c0_3 = arith.constant 0 : index
    %c0_4 = arith.constant 0 : index
    %3 = vector.load %arg3[%c0_3, %c0_4] : memref<1x16xf32, #tpu.memory_space<vmem>>, vector<1x16xf32>
    %4 = vector.broadcast %3 : vector<1x16xf32> to vector<1024x16xf32>
    %5 = arith.addf %2, %4 : vector<1024x16xf32>
    %cst_5 = arith.constant 0.000000e+00 : f32
    %6 = vector.broadcast %cst_5 : f32 to vector<1024x16xf32>
    %7 = arith.maximumf %5, %6 : vector<1024x16xf32>
    %c0_6 = arith.constant 0 : index
    %c0_7 = arith.constant 0 : index
    %8 = vector.load %arg4[%c0_6, %c0_7] : memref<1024x16xf32, #tpu.memory_space<vmem>>, vector<1024x16xf32>
    tpu.vector_store %arg4[%c0_6, %c0_7], %7 {strides = array<i32>} : memref<1024x16xf32, #tpu.memory_space<vmem>>, vector<1024x16xf32>,
    return
  }
  func.func @transform_0(%arg0: i32) -> (i32, i32) {
    %c0_i32 = arith.constant 0 : i32
    %c0_i32_0 = arith.constant 0 : i32
    return %arg0, %c0_i32 : i32, i32
  }
  func.func @transform_1(%arg0: i32) -> (i32, i32) {
    %c0_i32 = arith.constant 0 : i32
    %c0_i32_0 = arith.constant 0 : i32
    %c0_i32_1 = arith.constant 0 : i32
    return %c0_i32, %c0_i32_0 : i32, i32
  }
  func.func @transform_2(%arg0: i32) -> (i32, i32) {
    %c0_i32 = arith.constant 0 : i32
    %c0_i32_0 = arith.constant 0 : i32
    %c0_i32_1 = arith.constant 0 : i32
    return %c0_i32, %c0_i32_0 : i32, i32
  }
  func.func @transform_3(%arg0: i32) -> (i32, i32) {
    %c0_i32 = arith.constant 0 : i32
    %c0_i32_0 = arith.constant 0 : i32
    return %arg0, %c0_i32 : i32, i32
  }
}

module attributes {stable_mosaic.version = 11 : i64} {
  func.func @_matmul_bias_act_kernel(%arg0: i32, %arg1: memref<2048x54xf32, #tpu.memory_space<vmem>>, %arg2: memref<54x8xf32, #tpu.memory_space<vmem>>, %arg3: memref<1x8xf32, #tpu.memory_space<vmem>>, %arg4: memref<8x2048xf32, #tpu.memory_space<vmem>>) attributes {dimension_semantics = [#tpu.dimension_semantics<parallel>], iteration_bounds = array<i64: 4>, scalar_prefetch = 0 : i64, scratch_operands = 0 : i64, tpu.core_type = #tpu.core_type<tc>, window_params = [{transform_indices = @transform_0, window_bounds = array<i64: 2048, 54>}, {pipeline_mode = #tpu.pipeline_mode<synchronous>, transform_indices = @transform_1, window_bounds = array<i64: 54, 8>}, {pipeline_mode = #tpu.pipeline_mode<synchronous>, transform_indices = @transform_2, window_bounds = array<i64: 1, 8>}, {transform_indices = @transform_3, window_bounds = array<i64: 8, 2048>}]} {
    %c0 = arith.constant 0 : index
    %c0_0 = arith.constant 0 : index
    %0 = vector.load %arg1[%c0, %c0_0] : memref<2048x54xf32, #tpu.memory_space<vmem>>, vector<2048x54xf32>
    %c0_1 = arith.constant 0 : index
    %c0_2 = arith.constant 0 : index
    %1 = vector.load %arg2[%c0_1, %c0_2] : memref<54x8xf32, #tpu.memory_space<vmem>>, vector<54x8xf32>
    %cst = arith.constant dense<0.000000e+00> : vector<2048x8xf32>
    %2 = tpu.matmul %0, %1, %cst {dimension_numbers = #tpu.dot_dimension_numbers<[1], [0], [0], [1], [0, 0, 1, 1], [], []>} : vector<2048x54xf32>, vector<54x8xf32>, vector<2048x8xf32> -> vector<2048x8xf32>
    %c0_3 = arith.constant 0 : index
    %c0_4 = arith.constant 0 : index
    %3 = vector.load %arg3[%c0_3, %c0_4] : memref<1x8xf32, #tpu.memory_space<vmem>>, vector<1x8xf32>
    %4 = vector.broadcast %3 : vector<1x8xf32> to vector<2048x8xf32>
    %5 = arith.addf %2, %4 : vector<2048x8xf32>
    %6 = arith.negf %5 : vector<2048x8xf32>
    %7 = math.exp %6 : vector<2048x8xf32>
    %cst_5 = arith.constant 1.000000e+00 : f32
    %8 = vector.broadcast %cst_5 : f32 to vector<2048x8xf32>
    %9 = arith.addf %8, %7 : vector<2048x8xf32>
    %10 = arith.divf %8, %9 : vector<2048x8xf32>
    %11 = tpu.transpose %10, [1, 0] : vector<2048x8xf32> -> vector<8x2048xf32>
    %c0_6 = arith.constant 0 : index
    %c0_7 = arith.constant 0 : index
    %12 = vector.load %arg4[%c0_6, %c0_7] : memref<8x2048xf32, #tpu.memory_space<vmem>>, vector<8x2048xf32>
    tpu.vector_store %arg4[%c0_6, %c0_7], %11 {strides = array<i32>} : memref<8x2048xf32, #tpu.memory_space<vmem>>, vector<8x2048xf32>,
    return
  }
  func.func @transform_0(%arg0: i32) -> (i32, i32) {
    %c0_i32 = arith.constant 0 : i32
    %c0_i32_0 = arith.constant 0 : i32
    return %arg0, %c0_i32 : i32, i32
  }
  func.func @transform_1(%arg0: i32) -> (i32, i32) {
    %c0_i32 = arith.constant 0 : i32
    %c0_i32_0 = arith.constant 0 : i32
    %c0_i32_1 = arith.constant 0 : i32
    return %c0_i32, %c0_i32_0 : i32, i32
  }
  func.func @transform_2(%arg0: i32) -> (i32, i32) {
    %c0_i32 = arith.constant 0 : i32
    %c0_i32_0 = arith.constant 0 : i32
    %c0_i32_1 = arith.constant 0 : i32
    return %c0_i32, %c0_i32_0 : i32, i32
  }
  func.func @transform_3(%arg0: i32) -> (i32, i32) {
    %c0_i32 = arith.constant 0 : i32
    %c0_i32_0 = arith.constant 0 : i32
    return %c0_i32, %arg0 : i32, i32
  }
}

</mosaic_0001>

<llo_original>
// kernel: vae_forward.12
$region0: #{vae_forward.12}
  #allocation0 [shape = 'u32[]', space=smem, size = 0x4, offset = 0x4, fixed_abs, tag = 'smem constant byte address 0x4 - core index']
  #allocation1 [shape = 'u32[144,128]{1,0:T(1,128)}', space=vmem, size = 0x12000, scoped, tag = 'internal scratch']
  %s0 = inlined_call_operand.vmem [shape: f32[512,8], index: 0, kind: input, shape index: {}, may-alias: {0,5}]
  %s1 = inlined_call_operand.vmem [shape: f32[1,8], index: 1, kind: input, shape index: {}]
  %s2 = inlined_call_operand.vmem [shape: f32[1,8], index: 2, kind: input, shape index: {}]
  %s3 = inlined_call_operand.vmem [shape: f32[1,8], index: 3, kind: input, shape index: {}]
  %s4 = inlined_call_operand.vmem [shape: f32[1,8], index: 4, kind: input, shape index: {}]
  %s5 = inlined_call_operand.vmem [shape: f32[512,8], index: 5, kind: output, shape index: {}, may-alias: {0,5}]
  %s6 = sld [smem:[#allocation0]]
  $region30: #{vae_forward.12} parent=0
    _
  %s8 = ssub.s32 1, %s6
  %s9 = scalar_select 0, %s8, %s6
  // Predicated region
  $region2: #{vae_forward.12} parent=0 // pred_check
    _
  $region3: #{vae_forward.12} parent=0 // pred_check_branch
    %11 = sbr.rel (0) target = $region5
  $region4: #{vae_forward.12} parent=0 // pred_region
    _
  $region5: #{vae_forward.12} parent=0 // pred_fallthru
    _
  // Predicated region
  $region6: #{vae_forward.12} parent=0 // pred_check
    _
  $region7: #{vae_forward.12} parent=0 // pred_check_branch
    %13 = sbr.rel (0) target = $region9
  $region8: #{vae_forward.12} parent=0 // pred_region
    _
  $region9: #{vae_forward.12} parent=0 // pred_fallthru
    _
  // Predicated region
  $region10: #{vae_forward.12} parent=0 // pred_check
    _
  $region11: #{vae_forward.12} parent=0 // pred_check_branch
    %15 = sbr.rel (0) target = $region13
  $region12: #{vae_forward.12} parent=0 // pred_region
    _
  $region13: #{vae_forward.12} parent=0 // pred_fallthru
    _
  // Predicated region
  $region14: #{vae_forward.12} parent=0 // pred_check
    _
  $region15: #{vae_forward.12} parent=0 // pred_check_branch
    %17 = sbr.rel (0) target = $region17
  $region16: #{vae_forward.12} parent=0 // pred_region
    _
  $region17: #{vae_forward.12} parent=0 // pred_fallthru
    _
  // Predicated region
  $region18: #{vae_forward.12} parent=0 // pred_check
    _
  $region19: #{vae_forward.12} parent=0 // pred_check_branch
    %19 = sbr.rel (0) target = $region21
  $region20: #{vae_forward.12} parent=0 // pred_region
    _
  $region21: #{vae_forward.12} parent=0 // pred_fallthru
    _
  %v20 = vld [vmem:[%s1] sm:$0x1]
  %v21 = vmul.f32 %v20, 0.001953125
  %v22 = vld [vmem:[%s2] sm:$0x1]
  %v23 = vmul.f32 %v22, 0.001953125
  %v24 = vmul.f32 %v21, %v21
  %v25 = vsub.f32 %v23, %v24
  %v26 = vmax.f32 %v25, 0.0
  %v27 = vld [vmem:[%s0] sm:$0xff]
  %v28 = vld [vmem:[%s0 + $0x8] sm:$0xff]
  %v29 = vld [vmem:[%s0 + $0x10] sm:$0xff]
  %v30 = vld [vmem:[%s0 + $0x18] sm:$0xff]
  %v31 = vld [vmem:[%s0 + $0x20] sm:$0xff]
  %v32 = vld [vmem:[%s0 + $0x28] sm:$0xff]
  %v33 = vld [vmem:[%s0 + $0x30] sm:$0xff]
  %v34 = vld [vmem:[%s0 + $0x38] sm:$0xff]
  %v35 = vld [vmem:[%s0 + $0x40] sm:$0xff]
  %v36 = vld [vmem:[%s0 + $0x48] sm:$0xff]
  %v37 = vld [vmem:[%s0 + $0x50] sm:$0xff]
  %v38 = vld [vmem:[%s0 + $0x58] sm:$0xff]
  %v39 = vld [vmem:[%s0 + $0x60] sm:$0xff]
  %v40 = vld [vmem:[%s0 + $0x68] sm:$0xff]
  %v41 = vld [vmem:[%s0 + $0x70] sm:$0xff]
  %v42 = vld [vmem:[%s0 + $0x78] sm:$0xff]
  %v43 = vld [vmem:[%s0 + $0x80] sm:$0xff]
  %v44 = vld [vmem:[%s0 + $0x88] sm:$0xff]
  %v45 = vld [vmem:[%s0 + $0x90] sm:$0xff]
  %v46 = vld [vmem:[%s0 + $0x98] sm:$0xff]
  %v47 = vld [vmem:[%s0 + $0xa0] sm:$0xff]
  %v48 = vld [vmem:[%s0 + $0xa8] sm:$0xff]
  %v49 = vld [vmem:[%s0 + $0xb0] sm:$0xff]
  %v50 = vld [vmem:[%s0 + $0xb8] sm:$0xff]
  %v51 = vld [vmem:[%s0 + $0xc0] sm:$0xff]
  %v52 = vld [vmem:[%s0 + $0xc8] sm:$0xff]
  %v53 = vld [vmem:[%s0 + $0xd0] sm:$0xff]
  %v54 = vld [vmem:[%s0 + $0xd8] sm:$0xff]
  %v55 = vld [vmem:[%s0 + $0xe0] sm:$0xff]
  %v56 = vld [vmem:[%s0 + $0xe8] sm:$0xff]
  %v57 = vld [vmem:[%s0 + $0xf0] sm:$0xff]
  %v58 = vld [vmem:[%s0 + $0xf8] sm:$0xff]
  %v59 = vld [vmem:[%s0 + $0x100] sm:$0xff]
  %v60 = vld [vmem:[%s0 + $0x108] sm:$0xff]
  %v61 = vld [vmem:[%s0 + $0x110] sm:$0xff]
  %v62 = vld [vmem:[%s0 + $0x118] sm:$0xff]
  %v63 = vld [vmem:[%s0 + $0x120] sm:$0xff]
  %v64 = vld [vmem:[%s0 + $0x128] sm:$0xff]
  %v65 = vld [vmem:[%s0 + $0x130] sm:$0xff]
  %v66 = vld [vmem:[%s0 + $0x138] sm:$0xff]
  %v67 = vld [vmem:[%s0 + $0x140] sm:$0xff]
  %v68 = vld [vmem:[%s0 + $0x148] sm:$0xff]
  %v69 = vld [vmem:[%s0 + $0x150] sm:$0xff]
  %v70 = vld [vmem:[%s0 + $0x158] sm:$0xff]
  %v71 = vld [vmem:[%s0 + $0x160] sm:$0xff]
  %v72 = vld [vmem:[%s0 + $0x168] sm:$0xff]
  %v73 = vld [vmem:[%s0 + $0x170] sm:$0xff]
  %v74 = vld [vmem:[%s0 + $0x178] sm:$0xff]
  %v75 = vld [vmem:[%s0 + $0x180] sm:$0xff]
  %v76 = vld [vmem:[%s0 + $0x188] sm:$0xff]
  %v77 = vld [vmem:[%s0 + $0x190] sm:$0xff]
  %v78 = vld [vmem:[%s0 + $0x198] sm:$0xff]
  %v79 = vld [vmem:[%s0 + $0x1a0] sm:$0xff]
  %v80 = vld [vmem:[%s0 + $0x1a8] sm:$0xff]
  %v81 = vld [vmem:[%s0 + $0x1b0] sm:$0xff]
  %v82 = vld [vmem:[%s0 + $0x1b8] sm:$0xff]
  %v83 = vld [vmem:[%s0 + $0x1c0] sm:$0xff]
  %v84 = vld [vmem:[%s0 + $0x1c8] sm:$0xff]
  %v85 = vld [vmem:[%s0 + $0x1d0] sm:$0xff]
  %v86 = vld [vmem:[%s0 + $0x1d8] sm:$0xff]
  %v87 = vld [vmem:[%s0 + $0x1e0] sm:$0xff]
  %v88 = vld [vmem:[%s0 + $0x1e8] sm:$0xff]
  %v89 = vld [vmem:[%s0 + $0x1f0] sm:$0xff]
  %v90 = vld [vmem:[%s0 + $0x1f8] sm:$0xff]
  %v92 = vlaneseq
  %v93 = vshrl.u32 %v92, 7
  %v94 = vsub.s32 0, %v93
  %v95 = vrot.slane %v21, %v94
  %v97 = vsub.f32 %v27, %v95
  %v98 = vsub.f32 %v28, %v95
  %v99 = vsub.f32 %v29, %v95
  %v100 = vsub.f32 %v30, %v95
  %v101 = vsub.f32 %v31, %v95
  %v102 = vsub.f32 %v32, %v95
  %v103 = vsub.f32 %v33, %v95
  %v104 = vsub.f32 %v34, %v95
  %v105 = vsub.f32 %v35, %v95
  %v106 = vsub.f32 %v36, %v95
  %v107 = vsub.f32 %v37, %v95
  %v108 = vsub.f32 %v38, %v95
  %v109 = vsub.f32 %v39, %v95
  %v110 = vsub.f32 %v40, %v95
  %v111 = vsub.f32 %v41, %v95
  %v112 = vsub.f32 %v42, %v95
  %v113 = vsub.f32 %v43, %v95
  %v114 = vsub.f32 %v44, %v95
  %v115 = vsub.f32 %v45, %v95
  %v116 = vsub.f32 %v46, %v95
  %v117 = vsub.f32 %v47, %v95
  %v118 = vsub.f32 %v48, %v95
  %v119 = vsub.f32 %v49, %v95
  %v120 = vsub.f32 %v50, %v95
  %v121 = vsub.f32 %v51, %v95
  %v122 = vsub.f32 %v52, %v95
  %v123 = vsub.f32 %v53, %v95
  %v124 = vsub.f32 %v54, %v95
  %v125 = vsub.f32 %v55, %v95
  %v126 = vsub.f32 %v56, %v95
  %v127 = vsub.f32 %v57, %v95
  %v128 = vsub.f32 %v58, %v95
  %v129 = vsub.f32 %v59, %v95
  %v130 = vsub.f32 %v60, %v95
  %v131 = vsub.f32 %v61, %v95
  %v132 = vsub.f32 %v62, %v95
  %v133 = vsub.f32 %v63, %v95
  %v134 = vsub.f32 %v64, %v95
  %v135 = vsub.f32 %v65, %v95
  %v136 = vsub.f32 %v66, %v95
  %v137 = vsub.f32 %v67, %v95
  %v138 = vsub.f32 %v68, %v95
  %v139 = vsub.f32 %v69, %v95
  %v140 = vsub.f32 %v70, %v95
  %v141 = vsub.f32 %v71, %v95
  %v142 = vsub.f32 %v72, %v95
  %v143 = vsub.f32 %v73, %v95
  %v144 = vsub.f32 %v74, %v95
  %v145 = vsub.f32 %v75, %v95
  %v146 = vsub.f32 %v76, %v95
  %v147 = vsub.f32 %v77, %v95
  %v148 = vsub.f32 %v78, %v95
  %v149 = vsub.f32 %v79, %v95
  %v150 = vsub.f32 %v80, %v95
  %v151 = vsub.f32 %v81, %v95
  %v152 = vsub.f32 %v82, %v95
  %v153 = vsub.f32 %v83, %v95
  %v154 = vsub.f32 %v84, %v95
  %v155 = vsub.f32 %v85, %v95
  %v156 = vsub.f32 %v86, %v95
  %v157 = vsub.f32 %v87, %v95
  %v158 = vsub.f32 %v88, %v95
  %v159 = vsub.f32 %v89, %v95
  %v160 = vsub.f32 %v90, %v95
  %v161 = vadd.f32 %v26, 1e-05
  %v162 = vrsqrt.pop %v161
  %v164 = vlaneseq
  %v165 = vshrl.u32 %v164, 7
  %v166 = vsub.s32 0, %v165
  %v167 = vrot.slane %v162, %v166
  %v169 = vmul.f32 %v97, %v167
  %v170 = vmul.f32 %v98, %v167
  %v171 = vmul.f32 %v99, %v167
  %v172 = vmul.f32 %v100, %v167
  %v173 = vmul.f32 %v101, %v167
  %v174 = vmul.f32 %v102, %v167
  %v175 = vmul.f32 %v103, %v167
  %v176 = vmul.f32 %v104, %v167
  %v177 = vmul.f32 %v105, %v167
  %v178 = vmul.f32 %v106, %v167
  %v179 = vmul.f32 %v107, %v167
  %v180 = vmul.f32 %v108, %v167
  %v181 = vmul.f32 %v109, %v167
  %v182 = vmul.f32 %v110, %v167
  %v183 = vmul.f32 %v111, %v167
  %v184 = vmul.f32 %v112, %v167
  %v185 = vmul.f32 %v113, %v167
  %v186 = vmul.f32 %v114, %v167
  %v187 = vmul.f32 %v115, %v167
  %v188 = vmul.f32 %v116, %v167
  %v189 = vmul.f32 %v117, %v167
  %v190 = vmul.f32 %v118, %v167
  %v191 = vmul.f32 %v119, %v167
  %v192 = vmul.f32 %v120, %v167
  %v193 = vmul.f32 %v121, %v167
  %v194 = vmul.f32 %v122, %v167
  %v195 = vmul.f32 %v123, %v167
  %v196 = vmul.f32 %v124, %v167
  %v197 = vmul.f32 %v125, %v167
  %v198 = vmul.f32 %v126, %v167
  %v199 = vmul.f32 %v127, %v167
  %v200 = vmul.f32 %v128, %v167
  %v201 = vmul.f32 %v129, %v167
  %v202 = vmul.f32 %v130, %v167
  %v203 = vmul.f32 %v131, %v167
  %v204 = vmul.f32 %v132, %v167
  %v205 = vmul.f32 %v133, %v167
  %v206 = vmul.f32 %v134, %v167
  %v207 = vmul.f32 %v135, %v167
  %v208 = vmul.f32 %v136, %v167
  %v209 = vmul.f32 %v137, %v167
  %v210 = vmul.f32 %v138, %v167
  %v211 = vmul.f32 %v139, %v167
  %v212 = vmul.f32 %v140, %v167
  %v213 = vmul.f32 %v141, %v167
  %v214 = vmul.f32 %v142, %v167
  %v215 = vmul.f32 %v143, %v167
  %v216 = vmul.f32 %v144, %v167
  %v217 = vmul.f32 %v145, %v167
  %v218 = vmul.f32 %v146, %v167
  %v219 = vmul.f32 %v147, %v167
  %v220 = vmul.f32 %v148, %v167
  %v221 = vmul.f32 %v149, %v167
  %v222 = vmul.f32 %v150, %v167
  %v223 = vmul.f32 %v151, %v167
  %v224 = vmul.f32 %v152, %v167
  %v225 = vmul.f32 %v153, %v167
  %v226 = vmul.f32 %v154, %v167
  %v227 = vmul.f32 %v155, %v167
  %v228 = vmul.f32 %v156, %v167
  %v229 = vmul.f32 %v157, %v167
  %v230 = vmul.f32 %v158, %v167
  %v231 = vmul.f32 %v159, %v167
  %v232 = vmul.f32 %v160, %v167
  %v233 = vld [vmem:[%s3] sm:$0x1]
  %v235 = vlaneseq
  %v236 = vshrl.u32 %v235, 7
  %v237 = vsub.s32 0, %v236
  %v238 = vrot.slane %v233, %v237
  %v240 = vmul.f32 %v169, %v238
  %v241 = vmul.f32 %v170, %v238
  %v242 = vmul.f32 %v171, %v238
  %v243 = vmul.f32 %v172, %v238
  %v244 = vmul.f32 %v173, %v238
  %v245 = vmul.f32 %v174, %v238
  %v246 = vmul.f32 %v175, %v238
  %v247 = vmul.f32 %v176, %v238
  %v248 = vmul.f32 %v177, %v238
  %v249 = vmul.f32 %v178, %v238
  %v250 = vmul.f32 %v179, %v238
  %v251 = vmul.f32 %v180, %v238
  %v252 = vmul.f32 %v181, %v238
  %v253 = vmul.f32 %v182, %v238
  %v254 = vmul.f32 %v183, %v238
  %v255 = vmul.f32 %v184, %v238
  %v256 = vmul.f32 %v185, %v238
  %v257 = vmul.f32 %v186, %v238
  %v258 = vmul.f32 %v187, %v238
  %v259 = vmul.f32 %v188, %v238
  %v260 = vmul.f32 %v189, %v238
  %v261 = vmul.f32 %v190, %v238
  %v262 = vmul.f32 %v191, %v238
  %v263 = vmul.f32 %v192, %v238
  %v264 = vmul.f32 %v193, %v238
  %v265 = vmul.f32 %v194, %v238
  %v266 = vmul.f32 %v195, %v238
  %v267 = vmul.f32 %v196, %v238
  %v268 = vmul.f32 %v197, %v238
  %v269 = vmul.f32 %v198, %v238
  %v270 = vmul.f32 %v199, %v238
  %v271 = vmul.f32 %v200, %v238
  %v272 = vmul.f32 %v201, %v238
  %v273 = vmul.f32 %v202, %v238
  %v274 = vmul.f32 %v203, %v238
  %v275 = vmul.f32 %v204, %v238
  %v276 = vmul.f32 %v205, %v238
  %v277 = vmul.f32 %v206, %v238
  %v278 = vmul.f32 %v207, %v238
  %v279 = vmul.f32 %v208, %v238
  %v280 = vmul.f32 %v209, %v238
  %v281 = vmul.f32 %v210, %v238
  %v282 = vmul.f32 %v211, %v238
  %v283 = vmul.f32 %v212, %v238
  %v284 = vmul.f32 %v213, %v238
  %v285 = vmul.f32 %v214, %v238
  %v286 = vmul.f32 %v215, %v238
  %v287 = vmul.f32 %v216, %v238
  %v288 = vmul.f32 %v217, %v238
  %v289 = vmul.f32 %v218, %v238
  %v290 = vmul.f32 %v219, %v238
  %v291 = vmul.f32 %v220, %v238
  %v292 = vmul.f32 %v221, %v238
  %v293 = vmul.f32 %v222, %v238
  %v294 = vmul.f32 %v223, %v238
  %v295 = vmul.f32 %v224, %v238
  %v296 = vmul.f32 %v225, %v238
  %v297 = vmul.f32 %v226, %v238
  %v298 = vmul.f32 %v227, %v238
  %v299 = vmul.f32 %v228, %v238
  %v300 = vmul.f32 %v229, %v238
  %v301 = vmul.f32 %v230, %v238
  %v302 = vmul.f32 %v231, %v238
  %v303 = vmul.f32 %v232, %v238
  %v304 = vld [vmem:[%s4] sm:$0x1]
  %v306 = vlaneseq
  %v307 = vshrl.u32 %v306, 7
  %v308 = vsub.s32 0, %v307
  %v309 = vrot.slane %v304, %v308
  %v311 = vadd.f32 %v240, %v309
  %v312 = vadd.f32 %v241, %v309
  %v313 = vadd.f32 %v242, %v309
  %v314 = vadd.f32 %v243, %v309
  %v315 = vadd.f32 %v244, %v309
  %v316 = vadd.f32 %v245, %v309
  %v317 = vadd.f32 %v246, %v309
  %v318 = vadd.f32 %v247, %v309
  %v319 = vadd.f32 %v248, %v309
  %v320 = vadd.f32 %v249, %v309
  %v321 = vadd.f32 %v250, %v309
  %v322 = vadd.f32 %v251, %v309
  %v323 = vadd.f32 %v252, %v309
  %v324 = vadd.f32 %v253, %v309
  %v325 = vadd.f32 %v254, %v309
  %v326 = vadd.f32 %v255, %v309
  %v327 = vadd.f32 %v256, %v309
  %v328 = vadd.f32 %v257, %v309
  %v329 = vadd.f32 %v258, %v309
  %v330 = vadd.f32 %v259, %v309
  %v331 = vadd.f32 %v260, %v309
  %v332 = vadd.f32 %v261, %v309
  %v333 = vadd.f32 %v262, %v309
  %v334 = vadd.f32 %v263, %v309
  %v335 = vadd.f32 %v264, %v309
  %v336 = vadd.f32 %v265, %v309
  %v337 = vadd.f32 %v266, %v309
  %v338 = vadd.f32 %v267, %v309
  %v339 = vadd.f32 %v268, %v309
  %v340 = vadd.f32 %v269, %v309
  %v341 = vadd.f32 %v270, %v309
  %v342 = vadd.f32 %v271, %v309
  %v343 = vadd.f32 %v272, %v309
  %v344 = vadd.f32 %v273, %v309
  %v345 = vadd.f32 %v274, %v309
  %v346 = vadd.f32 %v275, %v309
  %v347 = vadd.f32 %v276, %v309
  %v348 = vadd.f32 %v277, %v309
  %v349 = vadd.f32 %v278, %v309
  %v350 = vadd.f32 %v279, %v309
  %v351 = vadd.f32 %v280, %v309
  %v352 = vadd.f32 %v281, %v309
  %v353 = vadd.f32 %v282, %v309
  %v354 = vadd.f32 %v283, %v309
  %v355 = vadd.f32 %v284, %v309
  %v356 = vadd.f32 %v285, %v309
  %v357 = vadd.f32 %v286, %v309
  %v358 = vadd.f32 %v287, %v309
  %v359 = vadd.f32 %v288, %v309
  %v360 = vadd.f32 %v289, %v309
  %v361 = vadd.f32 %v290, %v309
  %v362 = vadd.f32 %v291, %v309
  %v363 = vadd.f32 %v292, %v309
  %v364 = vadd.f32 %v293, %v309
  %v365 = vadd.f32 %v294, %v309
  %v366 = vadd.f32 %v295, %v309
  %v367 = vadd.f32 %v296, %v309
  %v368 = vadd.f32 %v297, %v309
  %v369 = vadd.f32 %v298, %v309
  %v370 = vadd.f32 %v299, %v309
  %v371 = vadd.f32 %v300, %v309
  %v372 = vadd.f32 %v301, %v309
  %v373 = vadd.f32 %v302, %v309
  %v374 = vadd.f32 %v303, %v309
  %vm375 = vcmp.ge.f32.partialorder %v311, 0.0
  %vm376 = vcmp.ge.f32.partialorder %v312, 0.0
  %vm377 = vcmp.ge.f32.partialorder %v313, 0.0
  %vm378 = vcmp.ge.f32.partialorder %v314, 0.0
  %vm379 = vcmp.ge.f32.partialorder %v315, 0.0
  %vm380 = vcmp.ge.f32.partialorder %v316, 0.0
  %vm381 = vcmp.ge.f32.partialorder %v317, 0.0
  %vm382 = vcmp.ge.f32.partialorder %v318, 0.0
  %vm383 = vcmp.ge.f32.partialorder %v319, 0.0
  %vm384 = vcmp.ge.f32.partialorder %v320, 0.0
  %vm385 = vcmp.ge.f32.partialorder %v321, 0.0
  %vm386 = vcmp.ge.f32.partialorder %v322, 0.0
  %vm387 = vcmp.ge.f32.partialorder %v323, 0.0
  %vm388 = vcmp.ge.f32.partialorder %v324, 0.0
  %vm389 = vcmp.ge.f32.partialorder %v325, 0.0
  %vm390 = vcmp.ge.f32.partialorder %v326, 0.0
  %vm391 = vcmp.ge.f32.partialorder %v327, 0.0
  %vm392 = vcmp.ge.f32.partialorder %v328, 0.0
  %vm393 = vcmp.ge.f32.partialorder %v329, 0.0
  %vm394 = vcmp.ge.f32.partialorder %v330, 0.0
  %vm395 = vcmp.ge.f32.partialorder %v331, 0.0
  %vm396 = vcmp.ge.f32.partialorder %v332, 0.0
  %vm397 = vcmp.ge.f32.partialorder %v333, 0.0
  %vm398 = vcmp.ge.f32.partialorder %v334, 0.0
  %vm399 = vcmp.ge.f32.partialorder %v335, 0.0
  %vm400 = vcmp.ge.f32.partialorder %v336, 0.0
  %vm401 = vcmp.ge.f32.partialorder %v337, 0.0
  %vm402 = vcmp.ge.f32.partialorder %v338, 0.0
  %vm403 = vcmp.ge.f32.partialorder %v339, 0.0
  %vm404 = vcmp.ge.f32.partialorder %v340, 0.0
  %vm405 = vcmp.ge.f32.partialorder %v341, 0.0
  %vm406 = vcmp.ge.f32.partialorder %v342, 0.0
  %vm407 = vcmp.ge.f32.partialorder %v343, 0.0
  %vm408 = vcmp.ge.f32.partialorder %v344, 0.0
  %vm409 = vcmp.ge.f32.partialorder %v345, 0.0
  %vm410 = vcmp.ge.f32.partialorder %v346, 0.0
  %vm411 = vcmp.ge.f32.partialorder %v347, 0.0
  %vm412 = vcmp.ge.f32.partialorder %v348, 0.0
  %vm413 = vcmp.ge.f32.partialorder %v349, 0.0
  %vm414 = vcmp.ge.f32.partialorder %v350, 0.0
  %vm415 = vcmp.ge.f32.partialorder %v351, 0.0
  %vm416 = vcmp.ge.f32.partialorder %v352, 0.0
  %vm417 = vcmp.ge.f32.partialorder %v353, 0.0
  %vm418 = vcmp.ge.f32.partialorder %v354, 0.0
  %vm419 = vcmp.ge.f32.partialorder %v355, 0.0
  %vm420 = vcmp.ge.f32.partialorder %v356, 0.0
  %vm421 = vcmp.ge.f32.partialorder %v357, 0.0
  %vm422 = vcmp.ge.f32.partialorder %v358, 0.0
  %vm423 = vcmp.ge.f32.partialorder %v359, 0.0
  %vm424 = vcmp.ge.f32.partialorder %v360, 0.0
  %vm425 = vcmp.ge.f32.partialorder %v361, 0.0
  %vm426 = vcmp.ge.f32.partialorder %v362, 0.0
  %vm427 = vcmp.ge.f32.partialorder %v363, 0.0
  %vm428 = vcmp.ge.f32.partialorder %v364, 0.0
  %vm429 = vcmp.ge.f32.partialorder %v365, 0.0
  %vm430 = vcmp.ge.f32.partialorder %v366, 0.0
  %vm431 = vcmp.ge.f32.partialorder %v367, 0.0
  %vm432 = vcmp.ge.f32.partialorder %v368, 0.0
  %vm433 = vcmp.ge.f32.partialorder %v369, 0.0
  %vm434 = vcmp.ge.f32.partialorder %v370, 0.0
  %vm435 = vcmp.ge.f32.partialorder %v371, 0.0
  %vm436 = vcmp.ge.f32.partialorder %v372, 0.0
  %vm437 = vcmp.ge.f32.partialorder %v373, 0.0
  %vm438 = vcmp.ge.f32.partialorder %v374, 0.0
  %v439 = vmul.f32 %v311, 0.2
  %v440 = vmul.f32 %v312, 0.2
  %v441 = vmul.f32 %v313, 0.2
  %v442 = vmul.f32 %v314, 0.2
  %v443 = vmul.f32 %v315, 0.2
  %v444 = vmul.f32 %v316, 0.2
  %v445 = vmul.f32 %v317, 0.2
  %v446 = vmul.f32 %v318, 0.2
  %v447 = vmul.f32 %v319, 0.2
  %v448 = vmul.f32 %v320, 0.2
  %v449 = vmul.f32 %v321, 0.2
  %v450 = vmul.f32 %v322, 0.2
  %v451 = vmul.f32 %v323, 0.2
  %v452 = vmul.f32 %v324, 0.2
  %v453 = vmul.f32 %v325, 0.2
  %v454 = vmul.f32 %v326, 0.2
  %v455 = vmul.f32 %v327, 0.2
  %v456 = vmul.f32 %v328, 0.2
  %v457 = vmul.f32 %v329, 0.2
  %v458 = vmul.f32 %v330, 0.2
  %v459 = vmul.f32 %v331, 0.2
  %v460 = vmul.f32 %v332, 0.2
  %v461 = vmul.f32 %v333, 0.2
  %v462 = vmul.f32 %v334, 0.2
  %v463 = vmul.f32 %v335, 0.2
  %v464 = vmul.f32 %v336, 0.2
  %v465 = vmul.f32 %v337, 0.2
  %v466 = vmul.f32 %v338, 0.2
  %v467 = vmul.f32 %v339, 0.2
  %v468 = vmul.f32 %v340, 0.2
  %v469 = vmul.f32 %v341, 0.2
  %v470 = vmul.f32 %v342, 0.2
  %v471 = vmul.f32 %v343, 0.2
  %v472 = vmul.f32 %v344, 0.2
  %v473 = vmul.f32 %v345, 0.2
  %v474 = vmul.f32 %v346, 0.2
  %v475 = vmul.f32 %v347, 0.2
  %v476 = vmul.f32 %v348, 0.2
  %v477 = vmul.f32 %v349, 0.2
  %v478 = vmul.f32 %v350, 0.2
  %v479 = vmul.f32 %v351, 0.2
  %v480 = vmul.f32 %v352, 0.2
  %v481 = vmul.f32 %v353, 0.2
  %v482 = vmul.f32 %v354, 0.2
  %v483 = vmul.f32 %v355, 0.2
  %v484 = vmul.f32 %v356, 0.2
  %v485 = vmul.f32 %v357, 0.2
  %v486 = vmul.f32 %v358, 0.2
  %v487 = vmul.f32 %v359, 0.2
  %v488 = vmul.f32 %v360, 0.2
  %v489 = vmul.f32 %v361, 0.2
  %v490 = vmul.f32 %v362, 0.2
  %v491 = vmul.f32 %v363, 0.2
  %v492 = vmul.f32 %v364, 0.2
  %v493 = vmul.f32 %v365, 0.2
  %v494 = vmul.f32 %v366, 0.2
  %v495 = vmul.f32 %v367, 0.2
  %v496 = vmul.f32 %v368, 0.2
  %v497 = vmul.f32 %v369, 0.2
  %v498 = vmul.f32 %v370, 0.2
  %v499 = vmul.f32 %v371, 0.2
  %v500 = vmul.f32 %v372, 0.2
  %v501 = vmul.f32 %v373, 0.2
  %v502 = vmul.f32 %v374, 0.2
  %v503 = vsel %vm375, %v311, %v439
  %v504 = vsel %vm376, %v312, %v440
  %v505 = vsel %vm377, %v313, %v441
  %v506 = vsel %vm378, %v314, %v442
  %v507 = vsel %vm379, %v315, %v443
  %v508 = vsel %vm380, %v316, %v444
  %v509 = vsel %vm381, %v317, %v445
  %v510 = vsel %vm382, %v318, %v446
  %v511 = vsel %vm383, %v319, %v447
  %v512 = vsel %vm384, %v320, %v448
  %v513 = vsel %vm385, %v321, %v449
  %v514 = vsel %vm386, %v322, %v450
  %v515 = vsel %vm387, %v323, %v451
  %v516 = vsel %vm388, %v324, %v452
  %v517 = vsel %vm389, %v325, %v453
  %v518 = vsel %vm390, %v326, %v454
  %v519 = vsel %vm391, %v327, %v455
  %v520 = vsel %vm392, %v328, %v456
  %v521 = vsel %vm393, %v329, %v457
  %v522 = vsel %vm394, %v330, %v458
  %v523 = vsel %vm395, %v331, %v459
  %v524 = vsel %vm396, %v332, %v460
  %v525 = vsel %vm397, %v333, %v461
  %v526 = vsel %vm398, %v334, %v462
  %v527 = vsel %vm399, %v335, %v463
  %v528 = vsel %vm400, %v336, %v464
  %v529 = vsel %vm401, %v337, %v465
  %v530 = vsel %vm402, %v338, %v466
  %v531 = vsel %vm403, %v339, %v467
  %v532 = vsel %vm404, %v340, %v468
  %v533 = vsel %vm405, %v341, %v469
  %v534 = vsel %vm406, %v342, %v470
  %v535 = vsel %vm407, %v343, %v471
  %v536 = vsel %vm408, %v344, %v472
  %v537 = vsel %vm409, %v345, %v473
  %v538 = vsel %vm410, %v346, %v474
  %v539 = vsel %vm411, %v347, %v475
  %v540 = vsel %vm412, %v348, %v476
  %v541 = vsel %vm413, %v349, %v477
  %v542 = vsel %vm414, %v350, %v478
  %v543 = vsel %vm415, %v351, %v479
  %v544 = vsel %vm416, %v352, %v480
  %v545 = vsel %vm417, %v353, %v481
  %v546 = vsel %vm418, %v354, %v482
  %v547 = vsel %vm419, %v355, %v483
  %v548 = vsel %vm420, %v356, %v484
  %v549 = vsel %vm421, %v357, %v485
  %v550 = vsel %vm422, %v358, %v486
  %v551 = vsel %vm423, %v359, %v487
  %v552 = vsel %vm424, %v360, %v488
  %v553 = vsel %vm425, %v361, %v489
  %v554 = vsel %vm426, %v362, %v490
  %v555 = vsel %vm427, %v363, %v491
  %v556 = vsel %vm428, %v364, %v492
  %v557 = vsel %vm429, %v365, %v493
  %v558 = vsel %vm430, %v366, %v494
  %v559 = vsel %vm431, %v367, %v495
  %v560 = vsel %vm432, %v368, %v496
  %v561 = vsel %vm433, %v369, %v497
  %v562 = vsel %vm434, %v370, %v498
  %v563 = vsel %vm435, %v371, %v499
  %v564 = vsel %vm436, %v372, %v500
  %v565 = vsel %vm437, %v373, %v501
  %v566 = vsel %vm438, %v374, %v502
  %vm567 = vcmask 64512
  %568 = vst.msk [vmem:[%s5] sm:$0xff] %vm567, %v503
  %569 = vst.msk [vmem:[%s5 + $0x8] sm:$0xff] %vm567, %v504
  %570 = vst.msk [vmem:[%s5 + $0x10] sm:$0xff] %vm567, %v505
  %571 = vst.msk [vmem:[%s5 + $0x18] sm:$0xff] %vm567, %v506
  %572 = vst.msk [vmem:[%s5 + $0x20] sm:$0xff] %vm567, %v507
  %573 = vst.msk [vmem:[%s5 + $0x28] sm:$0xff] %vm567, %v508
  %574 = vst.msk [vmem:[%s5 + $0x30] sm:$0xff] %vm567, %v509
  %575 = vst.msk [vmem:[%s5 + $0x38] sm:$0xff] %vm567, %v510
  %576 = vst.msk [vmem:[%s5 + $0x40] sm:$0xff] %vm567, %v511
  %577 = vst.msk [vmem:[%s5 + $0x48] sm:$0xff] %vm567, %v512
  %578 = vst.msk [vmem:[%s5 + $0x50] sm:$0xff] %vm567, %v513
  %579 = vst.msk [vmem:[%s5 + $0x58] sm:$0xff] %vm567, %v514
  %580 = vst.msk [vmem:[%s5 + $0x60] sm:$0xff] %vm567, %v515
  %581 = vst.msk [vmem:[%s5 + $0x68] sm:$0xff] %vm567, %v516
  %582 = vst.msk [vmem:[%s5 + $0x70] sm:$0xff] %vm567, %v517
  %583 = vst.msk [vmem:[%s5 + $0x78] sm:$0xff] %vm567, %v518
  %584 = vst.msk [vmem:[%s5 + $0x80] sm:$0xff] %vm567, %v519
  %585 = vst.msk [vmem:[%s5 + $0x88] sm:$0xff] %vm567, %v520
  %586 = vst.msk [vmem:[%s5 + $0x90] sm:$0xff] %vm567, %v521
  %587 = vst.msk [vmem:[%s5 + $0x98] sm:$0xff] %vm567, %v522
  %588 = vst.msk [vmem:[%s5 + $0xa0] sm:$0xff] %vm567, %v523
  %589 = vst.msk [vmem:[%s5 + $0xa8] sm:$0xff] %vm567, %v524
  %590 = vst.msk [vmem:[%s5 + $0xb0] sm:$0xff] %vm567, %v525
  %591 = vst.msk [vmem:[%s5 + $0xb8] sm:$0xff] %vm567, %v526
  %592 = vst.msk [vmem:[%s5 + $0xc0] sm:$0xff] %vm567, %v527
  %593 = vst.msk [vmem:[%s5 + $0xc8] sm:$0xff] %vm567, %v528
  %594 = vst.msk [vmem:[%s5 + $0xd0] sm:$0xff] %vm567, %v529
  %595 = vst.msk [vmem:[%s5 + $0xd8] sm:$0xff] %vm567, %v530
  %596 = vst.msk [vmem:[%s5 + $0xe0] sm:$0xff] %vm567, %v531
  %597 = vst.msk [vmem:[%s5 + $0xe8] sm:$0xff] %vm567, %v532
  %598 = vst.msk [vmem:[%s5 + $0xf0] sm:$0xff] %vm567, %v533
  %599 = vst.msk [vmem:[%s5 + $0xf8] sm:$0xff] %vm567, %v534
  %600 = vst.msk [vmem:[%s5 + $0x100] sm:$0xff] %vm567, %v535
  %601 = vst.msk [vmem:[%s5 + $0x108] sm:$0xff] %vm567, %v536
  %602 = vst.msk [vmem:[%s5 + $0x110] sm:$0xff] %vm567, %v537
  %603 = vst.msk [vmem:[%s5 + $0x118] sm:$0xff] %vm567, %v538
  %604 = vst.msk [vmem:[%s5 + $0x120] sm:$0xff] %vm567, %v539
  %605 = vst.msk [vmem:[%s5 + $0x128] sm:$0xff] %vm567, %v540
  %606 = vst.msk [vmem:[%s5 + $0x130] sm:$0xff] %vm567, %v541
  %607 = vst.msk [vmem:[%s5 + $0x138] sm:$0xff] %vm567, %v542
  %608 = vst.msk [vmem:[%s5 + $0x140] sm:$0xff] %vm567, %v543
  %609 = vst.msk [vmem:[%s5 + $0x148] sm:$0xff] %vm567, %v544
  %610 = vst.msk [vmem:[%s5 + $0x150] sm:$0xff] %vm567, %v545
  %611 = vst.msk [vmem:[%s5 + $0x158] sm:$0xff] %vm567, %v546
  %612 = vst.msk [vmem:[%s5 + $0x160] sm:$0xff] %vm567, %v547
  %613 = vst.msk [vmem:[%s5 + $0x168] sm:$0xff] %vm567, %v548
  %614 = vst.msk [vmem:[%s5 + $0x170] sm:$0xff] %vm567, %v549
  %615 = vst.msk [vmem:[%s5 + $0x178] sm:$0xff] %vm567, %v550
  %616 = vst.msk [vmem:[%s5 + $0x180] sm:$0xff] %vm567, %v551
  %617 = vst.msk [vmem:[%s5 + $0x188] sm:$0xff] %vm567, %v552
  %618 = vst.msk [vmem:[%s5 + $0x190] sm:$0xff] %vm567, %v553
  %619 = vst.msk [vmem:[%s5 + $0x198] sm:$0xff] %vm567, %v554
  %620 = vst.msk [vmem:[%s5 + $0x1a0] sm:$0xff] %vm567, %v555
  %621 = vst.msk [vmem:[%s5 + $0x1a8] sm:$0xff] %vm567, %v556
  %622 = vst.msk [vmem:[%s5 + $0x1b0] sm:$0xff] %vm567, %v557
  %623 = vst.msk [vmem:[%s5 + $0x1b8] sm:$0xff] %vm567, %v558
  %624 = vst.msk [vmem:[%s5 + $0x1c0] sm:$0xff] %vm567, %v559
  %625 = vst.msk [vmem:[%s5 + $0x1c8] sm:$0xff] %vm567, %v560
  %626 = vst.msk [vmem:[%s5 + $0x1d0] sm:$0xff] %vm567, %v561
  %627 = vst.msk [vmem:[%s5 + $0x1d8] sm:$0xff] %vm567, %v562
  %628 = vst.msk [vmem:[%s5 + $0x1e0] sm:$0xff] %vm567, %v563
  %629 = vst.msk [vmem:[%s5 + $0x1e8] sm:$0xff] %vm567, %v564
  %630 = vst.msk [vmem:[%s5 + $0x1f0] sm:$0xff] %vm567, %v565
  %631 = vst.msk [vmem:[%s5 + $0x1f8] sm:$0xff] %vm567, %v566
  // Predicated region
  $region22: #{vae_forward.12} parent=0 // pred_check
    _
  $region23: #{vae_forward.12} parent=0 // pred_check_branch
    %633 = sbr.rel (0) target = $region25
  $region24: #{vae_forward.12} parent=0 // pred_region
    _
  $region25: #{vae_forward.12} parent=0 // pred_fallthru
    _
  // Predicated region
  $region26: #{vae_forward.12} parent=0 // pred_check
    _
  $region27: #{vae_forward.12} parent=0 // pred_check_branch
    %635 = sbr.rel (0) target = $region29
  $region28: #{vae_forward.12} parent=0 // pred_region
    _
  $region29: #{vae_forward.12} parent=0 // pred_fallthru
    _

// kernel: vae_forward.11
$region0: #{vae_forward.11}
  #allocation0 [shape = 'u32[]', space=smem, size = 0x4, offset = 0x4, fixed_abs, tag = 'smem constant byte address 0x4 - core index']
  #allocation1 [shape = 'u32[144,128]{1,0:T(1,128)}', space=vmem, size = 0x12000, scoped, tag = 'internal scratch']
  %s0 = inlined_call_operand.vmem [shape: f32[512,16], index: 0, kind: input, shape index: {}]
  %s1 = inlined_call_operand.vmem [shape: f32[16,8], index: 1, kind: input, shape index: {}]
  %s2 = inlined_call_operand.vmem [shape: f32[1,8], index: 2, kind: input, shape index: {}]
  %s3 = inlined_call_operand.vmem [shape: f32[512,8], index: 3, kind: output, shape index: {0}]
  %s4 = inlined_call_operand.vmem [shape: f32[8,8], index: 4, kind: output, shape index: {1}]
  %s5 = inlined_call_operand.vmem [shape: f32[8,8], index: 5, kind: output, shape index: {2}]
  %6 = xla_tuple %s3, %s4, %s5
  %s7 = sld [smem:[#allocation0]]
  $region46: #{vae_forward.11} parent=0
    _
  %s9 = ssub.s32 1, %s7
  %s10 = scalar_select 0, %s9, %s7
  // Predicated region
  $region2: #{vae_forward.11} parent=0 // pred_check
    _
  $region3: #{vae_forward.11} parent=0 // pred_check_branch
    %12 = sbr.rel (0) target = $region5
  $region4: #{vae_forward.11} parent=0 // pred_region
    _
  $region5: #{vae_forward.11} parent=0 // pred_fallthru
    _
  // Predicated region
  $region6: #{vae_forward.11} parent=0 // pred_check
    _
  $region7: #{vae_forward.11} parent=0 // pred_check_branch
    %14 = sbr.rel (0) target = $region9
  $region8: #{vae_forward.11} parent=0 // pred_region
    _
  $region9: #{vae_forward.11} parent=0 // pred_fallthru
    _
  // Predicated region
  $region10: #{vae_forward.11} parent=0 // pred_check
    _
  $region11: #{vae_forward.11} parent=0 // pred_check_branch
    %16 = sbr.rel (0) target = $region13
  $region12: #{vae_forward.11} parent=0 // pred_region
    _
  $region13: #{vae_forward.11} parent=0 // pred_fallthru
    _
  %v17 = vld [vmem:[%s0] sm:$0xff]
  %v18 = vld [vmem:[%s0 + $0x8] sm:$0xff]
  %v19 = vld [vmem:[%s0 + $0x10] sm:$0xff]
  %v20 = vld [vmem:[%s0 + $0x18] sm:$0xff]
  %v21 = vld [vmem:[%s0 + $0x20] sm:$0xff]
  %v22 = vld [vmem:[%s0 + $0x28] sm:$0xff]
  %v23 = vld [vmem:[%s0 + $0x30] sm:$0xff]
  %v24 = vld [vmem:[%s0 + $0x38] sm:$0xff]
  %v25 = vld [vmem:[%s0 + $0x40] sm:$0xff]
  %v26 = vld [vmem:[%s0 + $0x48] sm:$0xff]
  %v27 = vld [vmem:[%s0 + $0x50] sm:$0xff]
  %v28 = vld [vmem:[%s0 + $0x58] sm:$0xff]
  %v29 = vld [vmem:[%s0 + $0x60] sm:$0xff]
  %v30 = vld [vmem:[%s0 + $0x68] sm:$0xff]
  %v31 = vld [vmem:[%s0 + $0x70] sm:$0xff]
  %v32 = vld [vmem:[%s0 + $0x78] sm:$0xff]
  %v33 = vld [vmem:[%s0 + $0x80] sm:$0xff]
  %v34 = vld [vmem:[%s0 + $0x88] sm:$0xff]
  %v35 = vld [vmem:[%s0 + $0x90] sm:$0xff]
  %v36 = vld [vmem:[%s0 + $0x98] sm:$0xff]
  %v37 = vld [vmem:[%s0 + $0xa0] sm:$0xff]
  %v38 = vld [vmem:[%s0 + $0xa8] sm:$0xff]
  %v39 = vld [vmem:[%s0 + $0xb0] sm:$0xff]
  %v40 = vld [vmem:[%s0 + $0xb8] sm:$0xff]
  %v41 = vld [vmem:[%s0 + $0xc0] sm:$0xff]
  %v42 = vld [vmem:[%s0 + $0xc8] sm:$0xff]
  %v43 = vld [vmem:[%s0 + $0xd0] sm:$0xff]
  %v44 = vld [vmem:[%s0 + $0xd8] sm:$0xff]
  %v45 = vld [vmem:[%s0 + $0xe0] sm:$0xff]
  %v46 = vld [vmem:[%s0 + $0xe8] sm:$0xff]
  %v47 = vld [vmem:[%s0 + $0xf0] sm:$0xff]
  %v48 = vld [vmem:[%s0 + $0xf8] sm:$0xff]
  %v49 = vld [vmem:[%s0 + $0x100] sm:$0xff]
  %v50 = vld [vmem:[%s0 + $0x108] sm:$0xff]
  %v51 = vld [vmem:[%s0 + $0x110] sm:$0xff]
  %v52 = vld [vmem:[%s0 + $0x118] sm:$0xff]
  %v53 = vld [vmem:[%s0 + $0x120] sm:$0xff]
  %v54 = vld [vmem:[%s0 + $0x128] sm:$0xff]
  %v55 = vld [vmem:[%s0 + $0x130] sm:$0xff]
  %v56 = vld [vmem:[%s0 + $0x138] sm:$0xff]
  %v57 = vld [vmem:[%s0 + $0x140] sm:$0xff]
  %v58 = vld [vmem:[%s0 + $0x148] sm:$0xff]
  %v59 = vld [vmem:[%s0 + $0x150] sm:$0xff]
  %v60 = vld [vmem:[%s0 + $0x158] sm:$0xff]
  %v61 = vld [vmem:[%s0 + $0x160] sm:$0xff]
  %v62 = vld [vmem:[%s0 + $0x168] sm:$0xff]
  %v63 = vld [vmem:[%s0 + $0x170] sm:$0xff]
  %v64 = vld [vmem:[%s0 + $0x178] sm:$0xff]
  %v65 = vld [vmem:[%s0 + $0x180] sm:$0xff]
  %v66 = vld [vmem:[%s0 + $0x188] sm:$0xff]
  %v67 = vld [vmem:[%s0 + $0x190] sm:$0xff]
  %v68 = vld [vmem:[%s0 + $0x198] sm:$0xff]
  %v69 = vld [vmem:[%s0 + $0x1a0] sm:$0xff]
  %v70 = vld [vmem:[%s0 + $0x1a8] sm:$0xff]
  %v71 = vld [vmem:[%s0 + $0x1b0] sm:$0xff]
  %v72 = vld [vmem:[%s0 + $0x1b8] sm:$0xff]
  %v73 = vld [vmem:[%s0 + $0x1c0] sm:$0xff]
  %v74 = vld [vmem:[%s0 + $0x1c8] sm:$0xff]
  %v75 = vld [vmem:[%s0 + $0x1d0] sm:$0xff]
  %v76 = vld [vmem:[%s0 + $0x1d8] sm:$0xff]
  %v77 = vld [vmem:[%s0 + $0x1e0] sm:$0xff]
  %v78 = vld [vmem:[%s0 + $0x1e8] sm:$0xff]
  %v79 = vld [vmem:[%s0 + $0x1f0] sm:$0xff]
  %v80 = vld [vmem:[%s0 + $0x1f8] sm:$0xff]
  %v81 = vld [vmem:[%s1] sm:$0xff]
  %v82 = vld [vmem:[%s1 + $0x8] sm:$0xff]
  %v83 = vld [vmem:[%s2] sm:$0x1]
  %v85 = vlaneseq
  %v86 = vshrl.u32 %v85, 7
  %v87 = vsub.s32 0, %v86
  %v88 = vrot.slane %v83, %v87
  %vm90 = vcmask 130048
  %v92 = vsel %vm90, %v17, 0
  %v95 = vsel %vm90, %v18, 0
  %v98 = vsel %vm90, %v19, 0
  %v101 = vsel %vm90, %v20, 0
  %v104 = vsel %vm90, %v21, 0
  %v107 = vsel %vm90, %v22, 0
  %v110 = vsel %vm90, %v23, 0
  %v113 = vsel %vm90, %v24, 0
  %v116 = vsel %vm90, %v25, 0
  %v119 = vsel %vm90, %v26, 0
  %v122 = vsel %vm90, %v27, 0
  %v125 = vsel %vm90, %v28, 0
  %v128 = vsel %vm90, %v29, 0
  %v131 = vsel %vm90, %v30, 0
  %v134 = vsel %vm90, %v31, 0
  %v137 = vsel %vm90, %v32, 0
  %v140 = vsel %vm90, %v33, 0
  %v143 = vsel %vm90, %v34, 0
  %v146 = vsel %vm90, %v35, 0
  %v149 = vsel %vm90, %v36, 0
  %v152 = vsel %vm90, %v37, 0
  %v155 = vsel %vm90, %v38, 0
  %v158 = vsel %vm90, %v39, 0
  %v161 = vsel %vm90, %v40, 0
  %v164 = vsel %vm90, %v41, 0
  %v167 = vsel %vm90, %v42, 0
  %v170 = vsel %vm90, %v43, 0
  %v173 = vsel %vm90, %v44, 0
  %v176 = vsel %vm90, %v45, 0
  %v179 = vsel %vm90, %v46, 0
  %v182 = vsel %vm90, %v47, 0
  %v185 = vsel %vm90, %v48, 0
  %v188 = vsel %vm90, %v49, 0
  %v191 = vsel %vm90, %v50, 0
  %v194 = vsel %vm90, %v51, 0
  %v197 = vsel %vm90, %v52, 0
  %v200 = vsel %vm90, %v53, 0
  %v203 = vsel %vm90, %v54, 0
  %v206 = vsel %vm90, %v55, 0
  %v209 = vsel %vm90, %v56, 0
  %v212 = vsel %vm90, %v57, 0
  %v215 = vsel %vm90, %v58, 0
  %v218 = vsel %vm90, %v59, 0
  %v221 = vsel %vm90, %v60, 0
  %v224 = vsel %vm90, %v61, 0
  %v227 = vsel %vm90, %v62, 0
  %v230 = vsel %vm90, %v63, 0
  %v233 = vsel %vm90, %v64, 0
  %v236 = vsel %vm90, %v65, 0
  %v239 = vsel %vm90, %v66, 0
  %v242 = vsel %vm90, %v67, 0
  %v245 = vsel %vm90, %v68, 0
  %v248 = vsel %vm90, %v69, 0
  %v251 = vsel %vm90, %v70, 0
  %v254 = vsel %vm90, %v71, 0
  %v257 = vsel %vm90, %v72, 0
  %v260 = vsel %vm90, %v73, 0
  %v263 = vsel %vm90, %v74, 0
  %v266 = vsel %vm90, %v75, 0
  %v269 = vsel %vm90, %v76, 0
  %v272 = vsel %vm90, %v77, 0
  %v275 = vsel %vm90, %v78, 0
  %v278 = vsel %vm90, %v79, 0
  %v281 = vsel %vm90, %v80, 0
  %283 = vmatprep.subr.mxu0 0.0
  %284 = vmatpush1.msra.mxu0 %v81
  %285 = vmatprep.subr.mxu0 0.0
  %286 = vmatpush1.msra.mxu0 %v82
  %287 = vmatprep.subr.mxu0 0.0
  %288 = vmatpush1.msra.mxu0 0.0
  %289 = vmatprep.subr.mxu0 0.0
  %290 = vmatpush1.msra.mxu0 0.0
  %291 = vmatprep.subr.mxu0 0.0
  %292 = vmatpush1.msra.mxu0 0.0
  %293 = vmatprep.subr.mxu0 0.0
  %294 = vmatpush1.msra.mxu0 0.0
  %295 = vmatprep.subr.mxu0 0.0
  %296 = vmatpush1.msra.mxu0 0.0
  %297 = vmatprep.subr.mxu0 0.0
  %298 = vmatpush1.msra.mxu0 0.0
  %299 = vmatprep.subr.mxu0 0.0
  %300 = vmatpush1.msra.mxu0 0.0
  %301 = vmatprep.subr.mxu0 0.0
  %302 = vmatpush1.msra.mxu0 0.0
  %303 = vmatprep.subr.mxu0 0.0
  %304 = vmatpush1.msra.mxu0 0.0
  %305 = vmatprep.subr.mxu0 0.0
  %306 = vmatpush1.msra.mxu0 0.0
  %307 = vmatprep.subr.mxu0 0.0
  %308 = vmatpush1.msra.mxu0 0.0
  %309 = vmatprep.subr.mxu0 0.0
  %310 = vmatpush1.msra.mxu0 0.0
  %311 = vmatprep.subr.mxu0 0.0
  %312 = vmatpush1.msra.mxu0 0.0
  %313 = vmatprep.subr.mxu0 0.0
  %314 = vmatpush1.msra.mxu0 0.0
  %315 = vmatprep.subr.mxu0 0.0
  %316 = vmatpush1.msra.mxu0 0.0
  %317 = vmatprep.subr.mxu0 0.0
  %318 = vmatpush1.msra.mxu0 0.0
  %319 = vmatprep.subr.mxu0 0.0
  %320 = vmatpush1.msra.mxu0 0.0
  %321 = vmatprep.subr.mxu0 0.0
  %322 = vmatpush1.msra.mxu0 0.0
  %323 = vmatprep.subr.mxu0 0.0
  %324 = vmatpush1.msra.mxu0 0.0
  %325 = vmatprep.subr.mxu0 0.0
  %326 = vmatpush1.msra.mxu0 0.0
  %327 = vmatprep.subr.mxu0 0.0
  %328 = vmatpush1.msra.mxu0 0.0
  %329 = vmatprep.subr.mxu0 0.0
  %330 = vmatpush1.msra.mxu0 0.0
  %331 = vmatprep.subr.mxu0 0.0
  %332 = vmatpush1.msra.mxu0 0.0
  %333 = vmatprep.subr.mxu0 0.0
  %334 = vmatpush1.msra.mxu0 0.0
  %335 = vmatprep.subr.mxu0 0.0
  %336 = vmatpush1.msra.mxu0 0.0
  %337 = vmatprep.subr.mxu0 0.0
  %338 = vmatpush1.msra.mxu0 0.0
  %339 = vmatprep.subr.mxu0 0.0
  %340 = vmatpush1.msra.mxu0 0.0
  %341 = vmatprep.subr.mxu0 0.0
  %342 = vmatpush1.msra.mxu0 0.0
  %343 = vmatprep.subr.mxu0 0.0
  %344 = vmatpush1.msra.mxu0 0.0
  %345 = vmatprep.subr.mxu0 0.0
  %346 = vmatpush1.msra.mxu0 0.0
  %347 = vmatprep.mubr.f32.mxu0 0.0
  %348 = vmatmul.mubr.f32.gmra.mrb[0].mxu0 %v92
  %v349 = vpop.f32.mrb[0].mxu0
  %v350 = vadd.f32 %v88, %v349
  %v351 = vpop.f32.mrb[0].mxu0
  %352 = vmatprep.mubr.f32.mxu0 0.0
  %353 = vmatmul.mubr.f32.gmra.mrb[0].mxu0 %v95
  %v354 = vpop.f32.mrb[0].mxu0
  %v355 = vadd.f32 %v88, %v354
  %v356 = vpop.f32.mrb[0].mxu0
  %357 = vmatprep.mubr.f32.mxu0 0.0
  %358 = vmatmul.mubr.f32.gmra.mrb[0].mxu0 %v98
  %v359 = vpop.f32.mrb[0].mxu0
  %v360 = vadd.f32 %v88, %v359
  %v361 = vpop.f32.mrb[0].mxu0
  %362 = vmatprep.mubr.f32.mxu0 0.0
  %363 = vmatmul.mubr.f32.gmra.mrb[0].mxu0 %v101
  %v364 = vpop.f32.mrb[0].mxu0
  %v365 = vadd.f32 %v88, %v364
  %v366 = vpop.f32.mrb[0].mxu0
  %367 = vmatprep.mubr.f32.mxu0 0.0
  %368 = vmatmul.mubr.f32.gmra.mrb[0].mxu0 %v104
  %v369 = vpop.f32.mrb[0].mxu0
  %v370 = vadd.f32 %v88, %v369
  %v371 = vpop.f32.mrb[0].mxu0
  %372 = vmatprep.mubr.f32.mxu0 0.0
  %373 = vmatmul.mubr.f32.gmra.mrb[0].mxu0 %v107
  %v374 = vpop.f32.mrb[0].mxu0
  %v375 = vadd.f32 %v88, %v374
  %v376 = vpop.f32.mrb[0].mxu0
  %377 = vmatprep.mubr.f32.mxu0 0.0
  %378 = vmatmul.mubr.f32.gmra.mrb[0].mxu0 %v110
  %v379 = vpop.f32.mrb[0].mxu0
  %v380 = vadd.f32 %v88, %v379
  %v381 = vpop.f32.mrb[0].mxu0
  %382 = vmatprep.mubr.f32.mxu0 0.0
  %383 = vmatmul.mubr.f32.gmra.mrb[0].mxu0 %v113
  %v384 = vpop.f32.mrb[0].mxu0
  %v385 = vadd.f32 %v88, %v384
  %v386 = vpop.f32.mrb[0].mxu0
  %387 = vmatprep.mubr.f32.mxu0 0.0
  %388 = vmatmul.mubr.f32.gmra.mrb[0].mxu0 %v116
  %v389 = vpop.f32.mrb[0].mxu0
  %v390 = vadd.f32 %v88, %v389
  %v391 = vpop.f32.mrb[0].mxu0
  %392 = vmatprep.mubr.f32.mxu0 0.0
  %393 = vmatmul.mubr.f32.gmra.mrb[0].mxu0 %v119
  %v394 = vpop.f32.mrb[0].mxu0
  %v395 = vadd.f32 %v88, %v394
  %v396 = vpop.f32.mrb[0].mxu0
  %397 = vmatprep.mubr.f32.mxu0 0.0
  %398 = vmatmul.mubr.f32.gmra.mrb[0].mxu0 %v122
  %v399 = vpop.f32.mrb[0].mxu0
  %v400 = vadd.f32 %v88, %v399
  %v401 = vpop.f32.mrb[0].mxu0
  %402 = vmatprep.mubr.f32.mxu0 0.0
  %403 = vmatmul.mubr.f32.gmra.mrb[0].mxu0 %v125
  %v404 = vpop.f32.mrb[0].mxu0
  %v405 = vadd.f32 %v88, %v404
  %v406 = vpop.f32.mrb[0].mxu0
  %407 = vmatprep.mubr.f32.mxu0 0.0
  %408 = vmatmul.mubr.f32.gmra.mrb[0].mxu0 %v128
  %v409 = vpop.f32.mrb[0].mxu0
  %v410 = vadd.f32 %v88, %v409
  %v411 = vpop.f32.mrb[0].mxu0
  %412 = vmatprep.mubr.f32.mxu0 0.0
  %413 = vmatmul.mubr.f32.gmra.mrb[0].mxu0 %v131
  %v414 = vpop.f32.mrb[0].mxu0
  %v415 = vadd.f32 %v88, %v414
  %v416 = vpop.f32.mrb[0].mxu0
  %417 = vmatprep.mubr.f32.mxu0 0.0
  %418 = vmatmul.mubr.f32.gmra.mrb[0].mxu0 %v134
  %v419 = vpop.f32.mrb[0].mxu0
  %v420 = vadd.f32 %v88, %v419
  %v421 = vpop.f32.mrb[0].mxu0
  %422 = vmatprep.mubr.f32.mxu0 0.0
  %423 = vmatmul.mubr.f32.gmra.mrb[0].mxu0 %v137
  %v424 = vpop.f32.mrb[0].mxu0
  %v425 = vadd.f32 %v88, %v424
  %v426 = vpop.f32.mrb[0].mxu0
  %427 = vmatprep.mubr.f32.mxu0 0.0
  %428 = vmatmul.mubr.f32.gmra.mrb[0].mxu0 %v140
  %v429 = vpop.f32.mrb[0].mxu0
  %v430 = vadd.f32 %v88, %v429
  %v431 = vpop.f32.mrb[0].mxu0
  %432 = vmatprep.mubr.f32.mxu0 0.0
  %433 = vmatmul.mubr.f32.gmra.mrb[0].mxu0 %v143
  %v434 = vpop.f32.mrb[0].mxu0
  %v435 = vadd.f32 %v88, %v434
  %v436 = vpop.f32.mrb[0].mxu0
  %437 = vmatprep.mubr.f32.mxu0 0.0
  %438 = vmatmul.mubr.f32.gmra.mrb[0].mxu0 %v146
  %v439 = vpop.f32.mrb[0].mxu0
  %v440 = vadd.f32 %v88, %v439
  %v441 = vpop.f32.mrb[0].mxu0
  %442 = vmatprep.mubr.f32.mxu0 0.0
  %443 = vmatmul.mubr.f32.gmra.mrb[0].mxu0 %v149
  %v444 = vpop.f32.mrb[0].mxu0
  %v445 = vadd.f32 %v88, %v444
  %v446 = vpop.f32.mrb[0].mxu0
  %447 = vmatprep.mubr.f32.mxu0 0.0
  %448 = vmatmul.mubr.f32.gmra.mrb[0].mxu0 %v152
  %v449 = vpop.f32.mrb[0].mxu0
  %v450 = vadd.f32 %v88, %v449
  %v451 = vpop.f32.mrb[0].mxu0
  %452 = vmatprep.mubr.f32.mxu0 0.0
  %453 = vmatmul.mubr.f32.gmra.mrb[0].mxu0 %v155
  %v454 = vpop.f32.mrb[0].mxu0
  %v455 = vadd.f32 %v88, %v454
  %v456 = vpop.f32.mrb[0].mxu0
  %457 = vmatprep.mubr.f32.mxu0 0.0
  %458 = vmatmul.mubr.f32.gmra.mrb[0].mxu0 %v158
  %v459 = vpop.f32.mrb[0].mxu0
  %v460 = vadd.f32 %v88, %v459
  %v461 = vpop.f32.mrb[0].mxu0
  %462 = vmatprep.mubr.f32.mxu0 0.0
  %463 = vmatmul.mubr.f32.gmra.mrb[0].mxu0 %v161
  %v464 = vpop.f32.mrb[0].mxu0
  %v465 = vadd.f32 %v88, %v464
  %v466 = vpop.f32.mrb[0].mxu0
  %467 = vmatprep.mubr.f32.mxu0 0.0
  %468 = vmatmul.mubr.f32.gmra.mrb[0].mxu0 %v164
  %v469 = vpop.f32.mrb[0].mxu0
  %v470 = vadd.f32 %v88, %v469
  %v471 = vpop.f32.mrb[0].mxu0
  %472 = vmatprep.mubr.f32.mxu0 0.0
  %473 = vmatmul.mubr.f32.gmra.mrb[0].mxu0 %v167
  %v474 = vpop.f32.mrb[0].mxu0
  %v475 = vadd.f32 %v88, %v474
  %v476 = vpop.f32.mrb[0].mxu0
  %477 = vmatprep.mubr.f32.mxu0 0.0
  %478 = vmatmul.mubr.f32.gmra.mrb[0].mxu0 %v170
  %v479 = vpop.f32.mrb[0].mxu0
  %v480 = vadd.f32 %v88, %v479
  %v481 = vpop.f32.mrb[0].mxu0
  %482 = vmatprep.mubr.f32.mxu0 0.0
  %483 = vmatmul.mubr.f32.gmra.mrb[0].mxu0 %v173
  %v484 = vpop.f32.mrb[0].mxu0
  %v485 = vadd.f32 %v88, %v484
  %v486 = vpop.f32.mrb[0].mxu0
  %487 = vmatprep.mubr.f32.mxu0 0.0
  %488 = vmatmul.mubr.f32.gmra.mrb[0].mxu0 %v176
  %v489 = vpop.f32.mrb[0].mxu0
  %v490 = vadd.f32 %v88, %v489
  %v491 = vpop.f32.mrb[0].mxu0
  %492 = vmatprep.mubr.f32.mxu0 0.0
  %493 = vmatmul.mubr.f32.gmra.mrb[0].mxu0 %v179
  %v494 = vpop.f32.mrb[0].mxu0
  %v495 = vadd.f32 %v88, %v494
  %v496 = vpop.f32.mrb[0].mxu0
  %497 = vmatprep.mubr.f32.mxu0 0.0
  %498 = vmatmul.mubr.f32.gmra.mrb[0].mxu0 %v182
  %v499 = vpop.f32.mrb[0].mxu0
  %v500 = vadd.f32 %v88, %v499
  %v501 = vpop.f32.mrb[0].mxu0
  %502 = vmatprep.mubr.f32.mxu0 0.0
  %503 = vmatmul.mubr.f32.gmra.mrb[0].mxu0 %v185
  %v504 = vpop.f32.mrb[0].mxu0
  %v505 = vadd.f32 %v88, %v504
  %v506 = vpop.f32.mrb[0].mxu0
  %507 = vmatprep.mubr.f32.mxu0 0.0
  %508 = vmatmul.mubr.f32.gmra.mrb[0].mxu0 %v188
  %v509 = vpop.f32.mrb[0].mxu0
  %v510 = vadd.f32 %v88, %v509
  %v511 = vpop.f32.mrb[0].mxu0
  %512 = vmatprep.mubr.f32.mxu0 0.0
  %513 = vmatmul.mubr.f32.gmra.mrb[0].mxu0 %v191
  %v514 = vpop.f32.mrb[0].mxu0
  %v515 = vadd.f32 %v88, %v514
  %v516 = vpop.f32.mrb[0].mxu0
  %517 = vmatprep.mubr.f32.mxu0 0.0
  %518 = vmatmul.mubr.f32.gmra.mrb[0].mxu0 %v194
  %v519 = vpop.f32.mrb[0].mxu0
  %v520 = vadd.f32 %v88, %v519
  %v521 = vpop.f32.mrb[0].mxu0
  %522 = vmatprep.mubr.f32.mxu0 0.0
  %523 = vmatmul.mubr.f32.gmra.mrb[0].mxu0 %v197
  %v524 = vpop.f32.mrb[0].mxu0
  %v525 = vadd.f32 %v88, %v524
  %v526 = vpop.f32.mrb[0].mxu0
  %527 = vmatprep.mubr.f32.mxu0 0.0
  %528 = vmatmul.mubr.f32.gmra.mrb[0].mxu0 %v200
  %v529 = vpop.f32.mrb[0].mxu0
  %v530 = vadd.f32 %v88, %v529
  %v531 = vpop.f32.mrb[0].mxu0
  %532 = vmatprep.mubr.f32.mxu0 0.0
  %533 = vmatmul.mubr.f32.gmra.mrb[0].mxu0 %v203
  %v534 = vpop.f32.mrb[0].mxu0
  %v535 = vadd.f32 %v88, %v534
  %v536 = vpop.f32.mrb[0].mxu0
  %537 = vmatprep.mubr.f32.mxu0 0.0
  %538 = vmatmul.mubr.f32.gmra.mrb[0].mxu0 %v206
  %v539 = vpop.f32.mrb[0].mxu0
  %v540 = vadd.f32 %v88, %v539
  %v541 = vpop.f32.mrb[0].mxu0
  %542 = vmatprep.mubr.f32.mxu0 0.0
  %543 = vmatmul.mubr.f32.gmra.mrb[0].mxu0 %v209
  %v544 = vpop.f32.mrb[0].mxu0
  %v545 = vadd.f32 %v88, %v544
  %v546 = vpop.f32.mrb[0].mxu0
  %547 = vmatprep.mubr.f32.mxu0 0.0
  %548 = vmatmul.mubr.f32.gmra.mrb[0].mxu0 %v212
  %v549 = vpop.f32.mrb[0].mxu0
  %v550 = vadd.f32 %v88, %v549
  %v551 = vpop.f32.mrb[0].mxu0
  %552 = vmatprep.mubr.f32.mxu0 0.0
  %553 = vmatmul.mubr.f32.gmra.mrb[0].mxu0 %v215
  %v554 = vpop.f32.mrb[0].mxu0
  %v555 = vadd.f32 %v88, %v554
  %v556 = vpop.f32.mrb[0].mxu0
  %557 = vmatprep.mubr.f32.mxu0 0.0
  %558 = vmatmul.mubr.f32.gmra.mrb[0].mxu0 %v218
  %v559 = vpop.f32.mrb[0].mxu0
  %v560 = vadd.f32 %v88, %v559
  %v561 = vpop.f32.mrb[0].mxu0
  %562 = vmatprep.mubr.f32.mxu0 0.0
  %563 = vmatmul.mubr.f32.gmra.mrb[0].mxu0 %v221
  %v564 = vpop.f32.mrb[0].mxu0
  %v565 = vadd.f32 %v88, %v564
  %v566 = vpop.f32.mrb[0].mxu0
  %567 = vmatprep.mubr.f32.mxu0 0.0
  %568 = vmatmul.mubr.f32.gmra.mrb[0].mxu0 %v224
  %v569 = vpop.f32.mrb[0].mxu0
  %v570 = vadd.f32 %v88, %v569
  %v571 = vpop.f32.mrb[0].mxu0
  %572 = vmatprep.mubr.f32.mxu0 0.0
  %573 = vmatmul.mubr.f32.gmra.mrb[0].mxu0 %v227
  %v574 = vpop.f32.mrb[0].mxu0
  %v575 = vadd.f32 %v88, %v574
  %v576 = vpop.f32.mrb[0].mxu0
  %577 = vmatprep.mubr.f32.mxu0 0.0
  %578 = vmatmul.mubr.f32.gmra.mrb[0].mxu0 %v230
  %v579 = vpop.f32.mrb[0].mxu0
  %v580 = vadd.f32 %v88, %v579
  %v581 = vpop.f32.mrb[0].mxu0
  %582 = vmatprep.mubr.f32.mxu0 0.0
  %583 = vmatmul.mubr.f32.gmra.mrb[0].mxu0 %v233
  %v584 = vpop.f32.mrb[0].mxu0
  %v585 = vadd.f32 %v88, %v584
  %v586 = vpop.f32.mrb[0].mxu0
  %587 = vmatprep.mubr.f32.mxu0 0.0
  %588 = vmatmul.mubr.f32.gmra.mrb[0].mxu0 %v236
  %v589 = vpop.f32.mrb[0].mxu0
  %v590 = vadd.f32 %v88, %v589
  %v591 = vpop.f32.mrb[0].mxu0
  %592 = vmatprep.mubr.f32.mxu0 0.0
  %593 = vmatmul.mubr.f32.gmra.mrb[0].mxu0 %v239
  %v594 = vpop.f32.mrb[0].mxu0
  %v595 = vadd.f32 %v88, %v594
  %v596 = vpop.f32.mrb[0].mxu0
  %597 = vmatprep.mubr.f32.mxu0 0.0
  %598 = vmatmul.mubr.f32.gmra.mrb[0].mxu0 %v242
  %v599 = vpop.f32.mrb[0].mxu0
  %v600 = vadd.f32 %v88, %v599
  %v601 = vpop.f32.mrb[0].mxu0
  %602 = vmatprep.mubr.f32.mxu0 0.0
  %603 = vmatmul.mubr.f32.gmra.mrb[0].mxu0 %v245
  %v604 = vpop.f32.mrb[0].mxu0
  %v605 = vadd.f32 %v88, %v604
  %v606 = vpop.f32.mrb[0].mxu0
  %607 = vmatprep.mubr.f32.mxu0 0.0
  %608 = vmatmul.mubr.f32.gmra.mrb[0].mxu0 %v248
  %v609 = vpop.f32.mrb[0].mxu0
  %v610 = vadd.f32 %v88, %v609
  %v611 = vpop.f32.mrb[0].mxu0
  %612 = vmatprep.mubr.f32.mxu0 0.0
  %613 = vmatmul.mubr.f32.gmra.mrb[0].mxu0 %v251
  %v614 = vpop.f32.mrb[0].mxu0
  %v615 = vadd.f32 %v88, %v614
  %v616 = vpop.f32.mrb[0].mxu0
  %617 = vmatprep.mubr.f32.mxu0 0.0
  %618 = vmatmul.mubr.f32.gmra.mrb[0].mxu0 %v254
  %v619 = vpop.f32.mrb[0].mxu0
  %v620 = vadd.f32 %v88, %v619
  %v621 = vpop.f32.mrb[0].mxu0
  %622 = vmatprep.mubr.f32.mxu0 0.0
  %623 = vmatmul.mubr.f32.gmra.mrb[0].mxu0 %v257
  %v624 = vpop.f32.mrb[0].mxu0
  %v625 = vadd.f32 %v88, %v624
  %v626 = vpop.f32.mrb[0].mxu0
  %627 = vmatprep.mubr.f32.mxu0 0.0
  %628 = vmatmul.mubr.f32.gmra.mrb[0].mxu0 %v260
  %v629 = vpop.f32.mrb[0].mxu0
  %v630 = vadd.f32 %v88, %v629
  %v631 = vpop.f32.mrb[0].mxu0
  %632 = vmatprep.mubr.f32.mxu0 0.0
  %633 = vmatmul.mubr.f32.gmra.mrb[0].mxu0 %v263
  %v634 = vpop.f32.mrb[0].mxu0
  %v635 = vadd.f32 %v88, %v634
  %v636 = vpop.f32.mrb[0].mxu0
  %637 = vmatprep.mubr.f32.mxu0 0.0
  %638 = vmatmul.mubr.f32.gmra.mrb[0].mxu0 %v266
  %v639 = vpop.f32.mrb[0].mxu0
  %v640 = vadd.f32 %v88, %v639
  %v641 = vpop.f32.mrb[0].mxu0
  %642 = vmatprep.mubr.f32.mxu0 0.0
  %643 = vmatmul.mubr.f32.gmra.mrb[0].mxu0 %v269
  %v644 = vpop.f32.mrb[0].mxu0
  %v645 = vadd.f32 %v88, %v644
  %v646 = vpop.f32.mrb[0].mxu0
  %647 = vmatprep.mubr.f32.mxu0 0.0
  %648 = vmatmul.mubr.f32.gmra.mrb[0].mxu0 %v272
  %v649 = vpop.f32.mrb[0].mxu0
  %v650 = vadd.f32 %v88, %v649
  %v651 = vpop.f32.mrb[0].mxu0
  %652 = vmatprep.mubr.f32.mxu0 0.0
  %653 = vmatmul.mubr.f32.gmra.mrb[0].mxu0 %v275
  %v654 = vpop.f32.mrb[0].mxu0
  %v655 = vadd.f32 %v88, %v654
  %v656 = vpop.f32.mrb[0].mxu0
  %657 = vmatprep.mubr.f32.mxu0 0.0
  %658 = vmatmul.mubr.f32.gmra.mrb[0].mxu0 %v278
  %v659 = vpop.f32.mrb[0].mxu0
  %v660 = vadd.f32 %v88, %v659
  %v661 = vpop.f32.mrb[0].mxu0
  %662 = vmatprep.mubr.f32.mxu0 0.0
  %663 = vmatmul.mubr.f32.gmra.mrb[0].mxu0 %v281
  %v664 = vpop.f32.mrb[0].mxu0
  %v665 = vadd.f32 %v88, %v664
  %v666 = vpop.f32.mrb[0].mxu0
  %667 = vdwg.mxu0
  %vm668 = vcmask 64512
  %669 = vst.msk [vmem:[%s3] sm:$0xff] %vm668, %v350
  %670 = vst.msk [vmem:[%s3 + $0x8] sm:$0xff] %vm668, %v355
  %671 = vst.msk [vmem:[%s3 + $0x10] sm:$0xff] %vm668, %v360
  %672 = vst.msk [vmem:[%s3 + $0x18] sm:$0xff] %vm668, %v365
  %673 = vst.msk [vmem:[%s3 + $0x20] sm:$0xff] %vm668, %v370
  %674 = vst.msk [vmem:[%s3 + $0x28] sm:$0xff] %vm668, %v375
  %675 = vst.msk [vmem:[%s3 + $0x30] sm:$0xff] %vm668, %v380
  %676 = vst.msk [vmem:[%s3 + $0x38] sm:$0xff] %vm668, %v385
  %677 = vst.msk [vmem:[%s3 + $0x40] sm:$0xff] %vm668, %v390
  %678 = vst.msk [vmem:[%s3 + $0x48] sm:$0xff] %vm668, %v395
  %679 = vst.msk [vmem:[%s3 + $0x50] sm:$0xff] %vm668, %v400
  %680 = vst.msk [vmem:[%s3 + $0x58] sm:$0xff] %vm668, %v405
  %681 = vst.msk [vmem:[%s3 + $0x60] sm:$0xff] %vm668, %v410
  %682 = vst.msk [vmem:[%s3 + $0x68] sm:$0xff] %vm668, %v415
  %683 = vst.msk [vmem:[%s3 + $0x70] sm:$0xff] %vm668, %v420
  %684 = vst.msk [vmem:[%s3 + $0x78] sm:$0xff] %vm668, %v425
  %685 = vst.msk [vmem:[%s3 + $0x80] sm:$0xff] %vm668, %v430
  %686 = vst.msk [vmem:[%s3 + $0x88] sm:$0xff] %vm668, %v435
  %687 = vst.msk [vmem:[%s3 + $0x90] sm:$0xff] %vm668, %v440
  %688 = vst.msk [vmem:[%s3 + $0x98] sm:$0xff] %vm668, %v445
  %689 = vst.msk [vmem:[%s3 + $0xa0] sm:$0xff] %vm668, %v450
  %690 = vst.msk [vmem:[%s3 + $0xa8] sm:$0xff] %vm668, %v455
  %691 = vst.msk [vmem:[%s3 + $0xb0] sm:$0xff] %vm668, %v460
  %692 = vst.msk [vmem:[%s3 + $0xb8] sm:$0xff] %vm668, %v465
  %693 = vst.msk [vmem:[%s3 + $0xc0] sm:$0xff] %vm668, %v470
  %694 = vst.msk [vmem:[%s3 + $0xc8] sm:$0xff] %vm668, %v475
  %695 = vst.msk [vmem:[%s3 + $0xd0] sm:$0xff] %vm668, %v480
  %696 = vst.msk [vmem:[%s3 + $0xd8] sm:$0xff] %vm668, %v485
  %697 = vst.msk [vmem:[%s3 + $0xe0] sm:$0xff] %vm668, %v490
  %698 = vst.msk [vmem:[%s3 + $0xe8] sm:$0xff] %vm668, %v495
  %699 = vst.msk [vmem:[%s3 + $0xf0] sm:$0xff] %vm668, %v500
  %700 = vst.msk [vmem:[%s3 + $0xf8] sm:$0xff] %vm668, %v505
  %701 = vst.msk [vmem:[%s3 + $0x100] sm:$0xff] %vm668, %v510
  %702 = vst.msk [vmem:[%s3 + $0x108] sm:$0xff] %vm668, %v515
  %703 = vst.msk [vmem:[%s3 + $0x110] sm:$0xff] %vm668, %v520
  %704 = vst.msk [vmem:[%s3 + $0x118] sm:$0xff] %vm668, %v525
  %705 = vst.msk [vmem:[%s3 + $0x120] sm:$0xff] %vm668, %v530
  %706 = vst.msk [vmem:[%s3 + $0x128] sm:$0xff] %vm668, %v535
  %707 = vst.msk [vmem:[%s3 + $0x130] sm:$0xff] %vm668, %v540
  %708 = vst.msk [vmem:[%s3 + $0x138] sm:$0xff] %vm668, %v545
  %709 = vst.msk [vmem:[%s3 + $0x140] sm:$0xff] %vm668, %v550
  %710 = vst.msk [vmem:[%s3 + $0x148] sm:$0xff] %vm668, %v555
  %711 = vst.msk [vmem:[%s3 + $0x150] sm:$0xff] %vm668, %v560
  %712 = vst.msk [vmem:[%s3 + $0x158] sm:$0xff] %vm668, %v565
  %713 = vst.msk [vmem:[%s3 + $0x160] sm:$0xff] %vm668, %v570
  %714 = vst.msk [vmem:[%s3 + $0x168] sm:$0xff] %vm668, %v575
  %715 = vst.msk [vmem:[%s3 + $0x170] sm:$0xff] %vm668, %v580
  %716 = vst.msk [vmem:[%s3 + $0x178] sm:$0xff] %vm668, %v585
  %717 = vst.msk [vmem:[%s3 + $0x180] sm:$0xff] %vm668, %v590
  %718 = vst.msk [vmem:[%s3 + $0x188] sm:$0xff] %vm668, %v595
  %719 = vst.msk [vmem:[%s3 + $0x190] sm:$0xff] %vm668, %v600
  %720 = vst.msk [vmem:[%s3 + $0x198] sm:$0xff] %vm668, %v605
  %721 = vst.msk [vmem:[%s3 + $0x1a0] sm:$0xff] %vm668, %v610
  %722 = vst.msk [vmem:[%s3 + $0x1a8] sm:$0xff] %vm668, %v615
  %723 = vst.msk [vmem:[%s3 + $0x1b0] sm:$0xff] %vm668, %v620
  %724 = vst.msk [vmem:[%s3 + $0x1b8] sm:$0xff] %vm668, %v625
  %725 = vst.msk [vmem:[%s3 + $0x1c0] sm:$0xff] %vm668, %v630
  %726 = vst.msk [vmem:[%s3 + $0x1c8] sm:$0xff] %vm668, %v635
  %727 = vst.msk [vmem:[%s3 + $0x1d0] sm:$0xff] %vm668, %v640
  %728 = vst.msk [vmem:[%s3 + $0x1d8] sm:$0xff] %vm668, %v645
  %729 = vst.msk [vmem:[%s3 + $0x1e0] sm:$0xff] %vm668, %v650
  %730 = vst.msk [vmem:[%s3 + $0x1e8] sm:$0xff] %vm668, %v655
  %731 = vst.msk [vmem:[%s3 + $0x1f0] sm:$0xff] %vm668, %v660
  %732 = vst.msk [vmem:[%s3 + $0x1f8] sm:$0xff] %vm668, %v665
  %p733 = scmp.lt.s32.totalorder 0, 0
  // Predicated region
  $region14: #{vae_forward.11} parent=0 // pred_check
    %p734 = pneg %p733
  $region15: #{vae_forward.11} parent=0 // pred_check_branch
    %736 = sbr.rel (%p734) target = $region17
  $region16: #{vae_forward.11} parent=0 // pred_region
    %v737 = vsel %vm668, %v350, 0.0
    %v738 = vsel %vm668, %v355, 0.0
    %v739 = vadd.f32 %v737, %v738
    %v740 = vsel %vm668, %v360, 0.0
    %v741 = vadd.f32 %v739, %v740
    %v742 = vsel %vm668, %v365, 0.0
    %v743 = vadd.f32 %v741, %v742
    %v744 = vsel %vm668, %v370, 0.0
    %v745 = vadd.f32 %v743, %v744
    %v746 = vsel %vm668, %v375, 0.0
    %v747 = vadd.f32 %v745, %v746
    %v748 = vsel %vm668, %v380, 0.0
    %v749 = vadd.f32 %v747, %v748
    %v750 = vsel %vm668, %v385, 0.0
    %v751 = vadd.f32 %v749, %v750
    %v752 = vsel %vm668, %v390, 0.0
    %v753 = vadd.f32 %v751, %v752
    %v754 = vsel %vm668, %v395, 0.0
    %v755 = vadd.f32 %v753, %v754
    %v756 = vsel %vm668, %v400, 0.0
    %v757 = vadd.f32 %v755, %v756
    %v758 = vsel %vm668, %v405, 0.0
    %v759 = vadd.f32 %v757, %v758
    %v760 = vsel %vm668, %v410, 0.0
    %v761 = vadd.f32 %v759, %v760
    %v762 = vsel %vm668, %v415, 0.0
    %v763 = vadd.f32 %v761, %v762
    %v764 = vsel %vm668, %v420, 0.0
    %v765 = vadd.f32 %v763, %v764
    %v766 = vsel %vm668, %v425, 0.0
    %v767 = vadd.f32 %v765, %v766
    %v768 = vsel %vm668, %v430, 0.0
    %v769 = vadd.f32 %v767, %v768
    %v770 = vsel %vm668, %v435, 0.0
    %v771 = vadd.f32 %v769, %v770
    %v772 = vsel %vm668, %v440, 0.0
    %v773 = vadd.f32 %v771, %v772
    %v774 = vsel %vm668, %v445, 0.0
    %v775 = vadd.f32 %v773, %v774
    %v776 = vsel %vm668, %v450, 0.0
    %v777 = vadd.f32 %v775, %v776
    %v778 = vsel %vm668, %v455, 0.0
    %v779 = vadd.f32 %v777, %v778
    %v780 = vsel %vm668, %v460, 0.0
    %v781 = vadd.f32 %v779, %v780
    %v782 = vsel %vm668, %v465, 0.0
    %v783 = vadd.f32 %v781, %v782
    %v784 = vsel %vm668, %v470, 0.0
    %v785 = vadd.f32 %v783, %v784
    %v786 = vsel %vm668, %v475, 0.0
    %v787 = vadd.f32 %v785, %v786
    %v788 = vsel %vm668, %v480, 0.0
    %v789 = vadd.f32 %v787, %v788
    %v790 = vsel %vm668, %v485, 0.0
    %v791 = vadd.f32 %v789, %v790
    %v792 = vsel %vm668, %v490, 0.0
    %v793 = vadd.f32 %v791, %v792
    %v794 = vsel %vm668, %v495, 0.0
    %v795 = vadd.f32 %v793, %v794
    %v796 = vsel %vm668, %v500, 0.0
    %v797 = vadd.f32 %v795, %v796
    %v798 = vsel %vm668, %v505, 0.0
    %v799 = vadd.f32 %v797, %v798
    %v800 = vsel %vm668, %v510, 0.0
    %v801 = vadd.f32 %v799, %v800
    %v802 = vsel %vm668, %v515, 0.0
    %v803 = vadd.f32 %v801, %v802
    %v804 = vsel %vm668, %v520, 0.0
    %v805 = vadd.f32 %v803, %v804
    %v806 = vsel %vm668, %v525, 0.0
    %v807 = vadd.f32 %v805, %v806
    %v808 = vsel %vm668, %v530, 0.0
    %v809 = vadd.f32 %v807, %v808
    %v810 = vsel %vm668, %v535, 0.0
    %v811 = vadd.f32 %v809, %v810
    %v812 = vsel %vm668, %v540, 0.0
    %v813 = vadd.f32 %v811, %v812
    %v814 = vsel %vm668, %v545, 0.0
    %v815 = vadd.f32 %v813, %v814
    %v816 = vsel %vm668, %v550, 0.0
    %v817 = vadd.f32 %v815, %v816
    %v818 = vsel %vm668, %v555, 0.0
    %v819 = vadd.f32 %v817, %v818
    %v820 = vsel %vm668, %v560, 0.0
    %v821 = vadd.f32 %v819, %v820
    %v822 = vsel %vm668, %v565, 0.0
    %v823 = vadd.f32 %v821, %v822
    %v824 = vsel %vm668, %v570, 0.0
    %v825 = vadd.f32 %v823, %v824
    %v826 = vsel %vm668, %v575, 0.0
    %v827 = vadd.f32 %v825, %v826
    %v828 = vsel %vm668, %v580, 0.0
    %v829 = vadd.f32 %v827, %v828
    %v830 = vsel %vm668, %v585, 0.0
    %v831 = vadd.f32 %v829, %v830
    %v832 = vsel %vm668, %v590, 0.0
    %v833 = vadd.f32 %v831, %v832
    %v834 = vsel %vm668, %v595, 0.0
    %v835 = vadd.f32 %v833, %v834
    %v836 = vsel %vm668, %v600, 0.0
    %v837 = vadd.f32 %v835, %v836
    %v838 = vsel %vm668, %v605, 0.0
    %v839 = vadd.f32 %v837, %v838
    %v840 = vsel %vm668, %v610, 0.0
    %v841 = vadd.f32 %v839, %v840
    %v842 = vsel %vm668, %v615, 0.0
    %v843 = vadd.f32 %v841, %v842
    %v844 = vsel %vm668, %v620, 0.0
    %v845 = vadd.f32 %v843, %v844
    %v846 = vsel %vm668, %v625, 0.0
    %v847 = vadd.f32 %v845, %v846
    %v848 = vsel %vm668, %v630, 0.0
    %v849 = vadd.f32 %v847, %v848
    %v850 = vsel %vm668, %v635, 0.0
    %v851 = vadd.f32 %v849, %v850
    %v852 = vsel %vm668, %v640, 0.0
    %v853 = vadd.f32 %v851, %v852
    %v854 = vsel %vm668, %v645, 0.0
    %v855 = vadd.f32 %v853, %v854
    %v856 = vsel %vm668, %v650, 0.0
    %v857 = vadd.f32 %v855, %v856
    %v858 = vsel %vm668, %v655, 0.0
    %v859 = vadd.f32 %v857, %v858
    %v860 = vsel %vm668, %v660, 0.0
    %v861 = vadd.f32 %v859, %v860
    %v862 = vsel %vm668, %v665, 0.0
    %v863 = vadd.f32 %v861, %v862
    %864 = vst.msk [vmem:[%s4] sm:$0xff] %vm668, %v863
    %v865 = vmul.f32 %v350, %v350
    %v866 = vmul.f32 %v355, %v355
    %v867 = vmul.f32 %v360, %v360
    %v868 = vmul.f32 %v365, %v365
    %v869 = vmul.f32 %v370, %v370
    %v870 = vmul.f32 %v375, %v375
    %v871 = vmul.f32 %v380, %v380
    %v872 = vmul.f32 %v385, %v385
    %v873 = vmul.f32 %v390, %v390
    %v874 = vmul.f32 %v395, %v395
    %v875 = vmul.f32 %v400, %v400
    %v876 = vmul.f32 %v405, %v405
    %v877 = vmul.f32 %v410, %v410
    %v878 = vmul.f32 %v415, %v415
    %v879 = vmul.f32 %v420, %v420
    %v880 = vmul.f32 %v425, %v425
    %v881 = vmul.f32 %v430, %v430
    %v882 = vmul.f32 %v435, %v435
    %v883 = vmul.f32 %v440, %v440
    %v884 = vmul.f32 %v445, %v445
    %v885 = vmul.f32 %v450, %v450
    %v886 = vmul.f32 %v455, %v455
    %v887 = vmul.f32 %v460, %v460
    %v888 = vmul.f32 %v465, %v465
    %v889 = vmul.f32 %v470, %v470
    %v890 = vmul.f32 %v475, %v475
    %v891 = vmul.f32 %v480, %v480
    %v892 = vmul.f32 %v485, %v485
    %v893 = vmul.f32 %v490, %v490
    %v894 = vmul.f32 %v495, %v495
    %v895 = vmul.f32 %v500, %v500
    %v896 = vmul.f32 %v505, %v505
    %v897 = vmul.f32 %v510, %v510
    %v898 = vmul.f32 %v515, %v515
    %v899 = vmul.f32 %v520, %v520
    %v900 = vmul.f32 %v525, %v525
    %v901 = vmul.f32 %v530, %v530
    %v902 = vmul.f32 %v535, %v535
    %v903 = vmul.f32 %v540, %v540
    %v904 = vmul.f32 %v545, %v545
    %v905 = vmul.f32 %v550, %v550
    %v906 = vmul.f32 %v555, %v555
    %v907 = vmul.f32 %v560, %v560
    %v908 = vmul.f32 %v565, %v565
    %v909 = vmul.f32 %v570, %v570
    %v910 = vmul.f32 %v575, %v575
    %v911 = vmul.f32 %v580, %v580
    %v912 = vmul.f32 %v585, %v585
    %v913 = vmul.f32 %v590, %v590
    %v914 = vmul.f32 %v595, %v595
    %v915 = vmul.f32 %v600, %v600
    %v916 = vmul.f32 %v605, %v605
    %v917 = vmul.f32 %v610, %v610
    %v918 = vmul.f32 %v615, %v615
    %v919 = vmul.f32 %v620, %v620
    %v920 = vmul.f32 %v625, %v625
    %v921 = vmul.f32 %v630, %v630
    %v922 = vmul.f32 %v635, %v635
    %v923 = vmul.f32 %v640, %v640
    %v924 = vmul.f32 %v645, %v645
    %v925 = vmul.f32 %v650, %v650
    %v926 = vmul.f32 %v655, %v655
    %v927 = vmul.f32 %v660, %v660
    %v928 = vmul.f32 %v665, %v665
    %v929 = vsel %vm668, %v865, 0.0
    %v930 = vsel %vm668, %v866, 0.0
    %v931 = vadd.f32 %v929, %v930
    %v932 = vsel %vm668, %v867, 0.0
    %v933 = vadd.f32 %v931, %v932
    %v934 = vsel %vm668, %v868, 0.0
    %v935 = vadd.f32 %v933, %v934
    %v936 = vsel %vm668, %v869, 0.0
    %v937 = vadd.f32 %v935, %v936
    %v938 = vsel %vm668, %v870, 0.0
    %v939 = vadd.f32 %v937, %v938
    %v940 = vsel %vm668, %v871, 0.0
    %v941 = vadd.f32 %v939, %v940
    %v942 = vsel %vm668, %v872, 0.0
    %v943 = vadd.f32 %v941, %v942
    %v944 = vsel %vm668, %v873, 0.0
    %v945 = vadd.f32 %v943, %v944
    %v946 = vsel %vm668, %v874, 0.0
    %v947 = vadd.f32 %v945, %v946
    %v948 = vsel %vm668, %v875, 0.0
    %v949 = vadd.f32 %v947, %v948
    %v950 = vsel %vm668, %v876, 0.0
    %v951 = vadd.f32 %v949, %v950
    %v952 = vsel %vm668, %v877, 0.0
    %v953 = vadd.f32 %v951, %v952
    %v954 = vsel %vm668, %v878, 0.0
    %v955 = vadd.f32 %v953, %v954
    %v956 = vsel %vm668, %v879, 0.0
    %v957 = vadd.f32 %v955, %v956
    %v958 = vsel %vm668, %v880, 0.0
    %v959 = vadd.f32 %v957, %v958
    %v960 = vsel %vm668, %v881, 0.0
    %v961 = vadd.f32 %v959, %v960
    %v962 = vsel %vm668, %v882, 0.0
    %v963 = vadd.f32 %v961, %v962
    %v964 = vsel %vm668, %v883, 0.0
    %v965 = vadd.f32 %v963, %v964
    %v966 = vsel %vm668, %v884, 0.0
    %v967 = vadd.f32 %v965, %v966
    %v968 = vsel %vm668, %v885, 0.0
    %v969 = vadd.f32 %v967, %v968
    %v970 = vsel %vm668, %v886, 0.0
    %v971 = vadd.f32 %v969, %v970
    %v972 = vsel %vm668, %v887, 0.0
    %v973 = vadd.f32 %v971, %v972
    %v974 = vsel %vm668, %v888, 0.0
    %v975 = vadd.f32 %v973, %v974
    %v976 = vsel %vm668, %v889, 0.0
    %v977 = vadd.f32 %v975, %v976
    %v978 = vsel %vm668, %v890, 0.0
    %v979 = vadd.f32 %v977, %v978
    %v980 = vsel %vm668, %v891, 0.0
    %v981 = vadd.f32 %v979, %v980
    %v982 = vsel %vm668, %v892, 0.0
    %v983 = vadd.f32 %v981, %v982
    %v984 = vsel %vm668, %v893, 0.0
    %v985 = vadd.f32 %v983, %v984
    %v986 = vsel %vm668, %v894, 0.0
    %v987 = vadd.f32 %v985, %v986
    %v988 = vsel %vm668, %v895, 0.0
    %v989 = vadd.f32 %v987, %v988
    %v990 = vsel %vm668, %v896, 0.0
    %v991 = vadd.f32 %v989, %v990
    %v992 = vsel %vm668, %v897, 0.0
    %v993 = vadd.f32 %v991, %v992
    %v994 = vsel %vm668, %v898, 0.0
    %v995 = vadd.f32 %v993, %v994
    %v996 = vsel %vm668, %v899, 0.0
    %v997 = vadd.f32 %v995, %v996
    %v998 = vsel %vm668, %v900, 0.0
    %v999 = vadd.f32 %v997, %v998
    %v1000 = vsel %vm668, %v901, 0.0
    %v1001 = vadd.f32 %v999, %v1000
    %v1002 = vsel %vm668, %v902, 0.0
    %v1003 = vadd.f32 %v1001, %v1002
    %v1004 = vsel %vm668, %v903, 0.0
    %v1005 = vadd.f32 %v1003, %v1004
    %v1006 = vsel %vm668, %v904, 0.0
    %v1007 = vadd.f32 %v1005, %v1006
    %v1008 = vsel %vm668, %v905, 0.0
    %v1009 = vadd.f32 %v1007, %v1008
    %v1010 = vsel %vm668, %v906, 0.0
    %v1011 = vadd.f32 %v1009, %v1010
    %v1012 = vsel %vm668, %v907, 0.0
    %v1013 = vadd.f32 %v1011, %v1012
    %v1014 = vsel %vm668, %v908, 0.0
    %v1015 = vadd.f32 %v1013, %v1014
    %v1016 = vsel %vm668, %v909, 0.0
    %v1017 = vadd.f32 %v1015, %v1016
    %v1018 = vsel %vm668, %v910, 0.0
    %v1019 = vadd.f32 %v1017, %v1018
    %v1020 = vsel %vm668, %v911, 0.0
    %v1021 = vadd.f32 %v1019, %v1020
    %v1022 = vsel %vm668, %v912, 0.0
    %v1023 = vadd.f32 %v1021, %v1022
    %v1024 = vsel %vm668, %v913, 0.0
    %v1025 = vadd.f32 %v1023, %v1024
    %v1026 = vsel %vm668, %v914, 0.0
    %v1027 = vadd.f32 %v1025, %v1026
    %v1028 = vsel %vm668, %v915, 0.0
    %v1029 = vadd.f32 %v1027, %v1028
    %v1030 = vsel %vm668, %v916, 0.0
    %v1031 = vadd.f32 %v1029, %v1030
    %v1032 = vsel %vm668, %v917, 0.0
    %v1033 = vadd.f32 %v1031, %v1032
    %v1034 = vsel %vm668, %v918, 0.0
    %v1035 = vadd.f32 %v1033, %v1034
    %v1036 = vsel %vm668, %v919, 0.0
    %v1037 = vadd.f32 %v1035, %v1036
    %v1038 = vsel %vm668, %v920, 0.0
    %v1039 = vadd.f32 %v1037, %v1038
    %v1040 = vsel %vm668, %v921, 0.0
    %v1041 = vadd.f32 %v1039, %v1040
    %v1042 = vsel %vm668, %v922, 0.0
    %v1043 = vadd.f32 %v1041, %v1042
    %v1044 = vsel %vm668, %v923, 0.0
    %v1045 = vadd.f32 %v1043, %v1044
    %v1046 = vsel %vm668, %v924, 0.0
    %v1047 = vadd.f32 %v1045, %v1046
    %v1048 = vsel %vm668, %v925, 0.0
    %v1049 = vadd.f32 %v1047, %v1048
    %v1050 = vsel %vm668, %v926, 0.0
    %v1051 = vadd.f32 %v1049, %v1050
    %v1052 = vsel %vm668, %v927, 0.0
    %v1053 = vadd.f32 %v1051, %v1052
    %v1054 = vsel %vm668, %v928, 0.0
    %v1055 = vadd.f32 %v1053, %v1054
    %1056 = vst.msk [vmem:[%s5] sm:$0xff] %vm668, %v1055
  $region17: #{vae_forward.11} parent=0 // pred_fallthru
    _
  %p1057 = scmp.eq.s32.totalorder 0, 0
  // Predicated region
  $region18: #{vae_forward.11} parent=0 // pred_check
    %p1058 = pneg %p1057
  $region19: #{vae_forward.11} parent=0 // pred_check_branch
    %1060 = sbr.rel (%p1058) target = $region21
  $region20: #{vae_forward.11} parent=0 // pred_region
    %s1061 = smul.u32 0, 512
    %v1062 = vlaneseq
    %v1063 = vshrl.u32 %v1062, 7
    %v1064 = vadd.s32 %v1063, 8
    %v1065 = vadd.s32 %v1063, 16
    %v1066 = vadd.s32 %v1063, 24
    %v1067 = vadd.s32 %v1063, 32
    %v1068 = vadd.s32 %v1063, 40
    %v1069 = vadd.s32 %v1063, 48
    %v1070 = vadd.s32 %v1063, 56
    %v1071 = vadd.s32 %v1063, 64
    %v1072 = vadd.s32 %v1063, 72
    %v1073 = vadd.s32 %v1063, 80
    %v1074 = vadd.s32 %v1063, 88
    %v1075 = vadd.s32 %v1063, 96
    %v1076 = vadd.s32 %v1063, 104
    %v1077 = vadd.s32 %v1063, 112
    %v1078 = vadd.s32 %v1063, 120
    %v1079 = vadd.s32 %v1063, 128
    %v1080 = vadd.s32 %v1063, 136
    %v1081 = vadd.s32 %v1063, 144
    %v1082 = vadd.s32 %v1063, 152
    %v1083 = vadd.s32 %v1063, 160
    %v1084 = vadd.s32 %v1063, 168
    %v1085 = vadd.s32 %v1063, 176
    %v1086 = vadd.s32 %v1063, 184
    %v1087 = vadd.s32 %v1063, 192
    %v1088 = vadd.s32 %v1063, 200
    %v1089 = vadd.s32 %v1063, 208
    %v1090 = vadd.s32 %v1063, 216
    %v1091 = vadd.s32 %v1063, 224
    %v1092 = vadd.s32 %v1063, 232
    %v1093 = vadd.s32 %v1063, 240
    %v1094 = vadd.s32 %v1063, 248
    %v1095 = vadd.s32 %v1063, 256
    %v1096 = vadd.s32 %v1063, 264
    %v1097 = vadd.s32 %v1063, 272
    %v1098 = vadd.s32 %v1063, 280
    %v1099 = vadd.s32 %v1063, 288
    %v1100 = vadd.s32 %v1063, 296
    %v1101 = vadd.s32 %v1063, 304
    %v1102 = vadd.s32 %v1063, 312
    %v1103 = vadd.s32 %v1063, 320
    %v1104 = vadd.s32 %v1063, 328
    %v1105 = vadd.s32 %v1063, 336
    %v1106 = vadd.s32 %v1063, 344
    %v1107 = vadd.s32 %v1063, 352
    %v1108 = vadd.s32 %v1063, 360
    %v1109 = vadd.s32 %v1063, 368
    %v1110 = vadd.s32 %v1063, 376
    %v1111 = vadd.s32 %v1063, 384
    %v1112 = vadd.s32 %v1063, 392
    %v1113 = vadd.s32 %v1063, 400
    %v1114 = vadd.s32 %v1063, 408
    %v1115 = vadd.s32 %v1063, 416
    %v1116 = vadd.s32 %v1063, 424
    %v1117 = vadd.s32 %v1063, 432
    %v1118 = vadd.s32 %v1063, 440
    %v1119 = vadd.s32 %v1063, 448
    %v1120 = vadd.s32 %v1063, 456
    %v1121 = vadd.s32 %v1063, 464
    %v1122 = vadd.s32 %v1063, 472
    %v1123 = vadd.s32 %v1063, 480
    %v1124 = vadd.s32 %v1063, 488
    %v1125 = vadd.s32 %v1063, 496
    %v1126 = vadd.s32 %v1063, 504
    %v1127 = vstv %s1061
    %v1128 = vadd.s32 %v1127, %v1063
    %v1129 = vadd.s32 %v1127, %v1064
    %v1130 = vadd.s32 %v1127, %v1065
    %v1131 = vadd.s32 %v1127, %v1066
    %v1132 = vadd.s32 %v1127, %v1067
    %v1133 = vadd.s32 %v1127, %v1068
    %v1134 = vadd.s32 %v1127, %v1069
    %v1135 = vadd.s32 %v1127, %v1070
    %v1136 = vadd.s32 %v1127, %v1071
    %v1137 = vadd.s32 %v1127, %v1072
    %v1138 = vadd.s32 %v1127, %v1073
    %v1139 = vadd.s32 %v1127, %v1074
    %v1140 = vadd.s32 %v1127, %v1075
    %v1141 = vadd.s32 %v1127, %v1076
    %v1142 = vadd.s32 %v1127, %v1077
    %v1143 = vadd.s32 %v1127, %v1078
    %v1144 = vadd.s32 %v1127, %v1079
    %v1145 = vadd.s32 %v1127, %v1080
    %v1146 = vadd.s32 %v1127, %v1081
    %v1147 = vadd.s32 %v1127, %v1082
    %v1148 = vadd.s32 %v1127, %v1083
    %v1149 = vadd.s32 %v1127, %v1084
    %v1150 = vadd.s32 %v1127, %v1085
    %v1151 = vadd.s32 %v1127, %v1086
    %v1152 = vadd.s32 %v1127, %v1087
    %v1153 = vadd.s32 %v1127, %v1088
    %v1154 = vadd.s32 %v1127, %v1089
    %v1155 = vadd.s32 %v1127, %v1090
    %v1156 = vadd.s32 %v1127, %v1091
    %v1157 = vadd.s32 %v1127, %v1092
    %v1158 = vadd.s32 %v1127, %v1093
    %v1159 = vadd.s32 %v1127, %v1094
    %v1160 = vadd.s32 %v1127, %v1095
    %v1161 = vadd.s32 %v1127, %v1096
    %v1162 = vadd.s32 %v1127, %v1097
    %v1163 = vadd.s32 %v1127, %v1098
    %v1164 = vadd.s32 %v1127, %v1099
    %v1165 = vadd.s32 %v1127, %v1100
    %v1166 = vadd.s32 %v1127, %v1101
    %v1167 = vadd.s32 %v1127, %v1102
    %v1168 = vadd.s32 %v1127, %v1103
    %v1169 = vadd.s32 %v1127, %v1104
    %v1170 = vadd.s32 %v1127, %v1105
    %v1171 = vadd.s32 %v1127, %v1106
    %v1172 = vadd.s32 %v1127, %v1107
    %v1173 = vadd.s32 %v1127, %v1108
    %v1174 = vadd.s32 %v1127, %v1109
    %v1175 = vadd.s32 %v1127, %v1110
    %v1176 = vadd.s32 %v1127, %v1111
    %v1177 = vadd.s32 %v1127, %v1112
    %v1178 = vadd.s32 %v1127, %v1113
    %v1179 = vadd.s32 %v1127, %v1114
    %v1180 = vadd.s32 %v1127, %v1115
    %v1181 = vadd.s32 %v1127, %v1116
    %v1182 = vadd.s32 %v1127, %v1117
    %v1183 = vadd.s32 %v1127, %v1118
    %v1184 = vadd.s32 %v1127, %v1119
    %v1185 = vadd.s32 %v1127, %v1120
    %v1186 = vadd.s32 %v1127, %v1121
    %v1187 = vadd.s32 %v1127, %v1122
    %v1188 = vadd.s32 %v1127, %v1123
    %v1189 = vadd.s32 %v1127, %v1124
    %v1190 = vadd.s32 %v1127, %v1125
    %v1191 = vadd.s32 %v1127, %v1126
    %vm1192 = vcmp.lt.s32.totalorder %v1128, 512
    %vm1193 = vcmp.lt.s32.totalorder %v1129, 512
    %vm1194 = vcmp.lt.s32.totalorder %v1130, 512
    %vm1195 = vcmp.lt.s32.totalorder %v1131, 512
    %vm1196 = vcmp.lt.s32.totalorder %v1132, 512
    %vm1197 = vcmp.lt.s32.totalorder %v1133, 512
    %vm1198 = vcmp.lt.s32.totalorder %v1134, 512
    %vm1199 = vcmp.lt.s32.totalorder %v1135, 512
    %vm1200 = vcmp.lt.s32.totalorder %v1136, 512
    %vm1201 = vcmp.lt.s32.totalorder %v1137, 512
    %vm1202 = vcmp.lt.s32.totalorder %v1138, 512
    %vm1203 = vcmp.lt.s32.totalorder %v1139, 512
    %vm1204 = vcmp.lt.s32.totalorder %v1140, 512
    %vm1205 = vcmp.lt.s32.totalorder %v1141, 512
    %vm1206 = vcmp.lt.s32.totalorder %v1142, 512
    %vm1207 = vcmp.lt.s32.totalorder %v1143, 512
    %vm1208 = vcmp.lt.s32.totalorder %v1144, 512
    %vm1209 = vcmp.lt.s32.totalorder %v1145, 512
    %vm1210 = vcmp.lt.s32.totalorder %v1146, 512
    %vm1211 = vcmp.lt.s32.totalorder %v1147, 512
    %vm1212 = vcmp.lt.s32.totalorder %v1148, 512
    %vm1213 = vcmp.lt.s32.totalorder %v1149, 512
    %vm1214 = vcmp.lt.s32.totalorder %v1150, 512
    %vm1215 = vcmp.lt.s32.totalorder %v1151, 512
    %vm1216 = vcmp.lt.s32.totalorder %v1152, 512
    %vm1217 = vcmp.lt.s32.totalorder %v1153, 512
    %vm1218 = vcmp.lt.s32.totalorder %v1154, 512
    %vm1219 = vcmp.lt.s32.totalorder %v1155, 512
    %vm1220 = vcmp.lt.s32.totalorder %v1156, 512
    %vm1221 = vcmp.lt.s32.totalorder %v1157, 512
    %vm1222 = vcmp.lt.s32.totalorder %v1158, 512
    %vm1223 = vcmp.lt.s32.totalorder %v1159, 512
    %vm1224 = vcmp.lt.s32.totalorder %v1160, 512
    %vm1225 = vcmp.lt.s32.totalorder %v1161, 512
    %vm1226 = vcmp.lt.s32.totalorder %v1162, 512
    %vm1227 = vcmp.lt.s32.totalorder %v1163, 512
    %vm1228 = vcmp.lt.s32.totalorder %v1164, 512
    %vm1229 = vcmp.lt.s32.totalorder %v1165, 512
    %vm1230 = vcmp.lt.s32.totalorder %v1166, 512
    %vm1231 = vcmp.lt.s32.totalorder %v1167, 512
    %vm1232 = vcmp.lt.s32.totalorder %v1168, 512
    %vm1233 = vcmp.lt.s32.totalorder %v1169, 512
    %vm1234 = vcmp.lt.s32.totalorder %v1170, 512
    %vm1235 = vcmp.lt.s32.totalorder %v1171, 512
    %vm1236 = vcmp.lt.s32.totalorder %v1172, 512
    %vm1237 = vcmp.lt.s32.totalorder %v1173, 512
    %vm1238 = vcmp.lt.s32.totalorder %v1174, 512
    %vm1239 = vcmp.lt.s32.totalorder %v1175, 512
    %vm1240 = vcmp.lt.s32.totalorder %v1176, 512
    %vm1241 = vcmp.lt.s32.totalorder %v1177, 512
    %vm1242 = vcmp.lt.s32.totalorder %v1178, 512
    %vm1243 = vcmp.lt.s32.totalorder %v1179, 512
    %vm1244 = vcmp.lt.s32.totalorder %v1180, 512
    %vm1245 = vcmp.lt.s32.totalorder %v1181, 512
    %vm1246 = vcmp.lt.s32.totalorder %v1182, 512
    %vm1247 = vcmp.lt.s32.totalorder %v1183, 512
    %vm1248 = vcmp.lt.s32.totalorder %v1184, 512
    %vm1249 = vcmp.lt.s32.totalorder %v1185, 512
    %vm1250 = vcmp.lt.s32.totalorder %v1186, 512
    %vm1251 = vcmp.lt.s32.totalorder %v1187, 512
    %vm1252 = vcmp.lt.s32.totalorder %v1188, 512
    %vm1253 = vcmp.lt.s32.totalorder %v1189, 512
    %vm1254 = vcmp.lt.s32.totalorder %v1190, 512
    %vm1255 = vcmp.lt.s32.totalorder %v1191, 512
    %v1256 = vsel %vm1192, 1, 0
    %v1257 = vsel %vm1193, 1, 0
    %v1258 = vsel %vm1194, 1, 0
    %v1259 = vsel %vm1195, 1, 0
    %v1260 = vsel %vm1196, 1, 0
    %v1261 = vsel %vm1197, 1, 0
    %v1262 = vsel %vm1198, 1, 0
    %v1263 = vsel %vm1199, 1, 0
    %v1264 = vsel %vm1200, 1, 0
    %v1265 = vsel %vm1201, 1, 0
    %v1266 = vsel %vm1202, 1, 0
    %v1267 = vsel %vm1203, 1, 0
    %v1268 = vsel %vm1204, 1, 0
    %v1269 = vsel %vm1205, 1, 0
    %v1270 = vsel %vm1206, 1, 0
    %v1271 = vsel %vm1207, 1, 0
    %v1272 = vsel %vm1208, 1, 0
    %v1273 = vsel %vm1209, 1, 0
    %v1274 = vsel %vm1210, 1, 0
    %v1275 = vsel %vm1211, 1, 0
    %v1276 = vsel %vm1212, 1, 0
    %v1277 = vsel %vm1213, 1, 0
    %v1278 = vsel %vm1214, 1, 0
    %v1279 = vsel %vm1215, 1, 0
    %v1280 = vsel %vm1216, 1, 0
    %v1281 = vsel %vm1217, 1, 0
    %v1282 = vsel %vm1218, 1, 0
    %v1283 = vsel %vm1219, 1, 0
    %v1284 = vsel %vm1220, 1, 0
    %v1285 = vsel %vm1221, 1, 0
    %v1286 = vsel %vm1222, 1, 0
    %v1287 = vsel %vm1223, 1, 0
    %v1288 = vsel %vm1224, 1, 0
    %v1289 = vsel %vm1225, 1, 0
    %v1290 = vsel %vm1226, 1, 0
    %v1291 = vsel %vm1227, 1, 0
    %v1292 = vsel %vm1228, 1, 0
    %v1293 = vsel %vm1229, 1, 0
    %v1294 = vsel %vm1230, 1, 0
    %v1295 = vsel %vm1231, 1, 0
    %v1296 = vsel %vm1232, 1, 0
    %v1297 = vsel %vm1233, 1, 0
    %v1298 = vsel %vm1234, 1, 0
    %v1299 = vsel %vm1235, 1, 0
    %v1300 = vsel %vm1236, 1, 0
    %v1301 = vsel %vm1237, 1, 0
    %v1302 = vsel %vm1238, 1, 0
    %v1303 = vsel %vm1239, 1, 0
    %v1304 = vsel %vm1240, 1, 0
    %v1305 = vsel %vm1241, 1, 0
    %v1306 = vsel %vm1242, 1, 0
    %v1307 = vsel %vm1243, 1, 0
    %v1308 = vsel %vm1244, 1, 0
    %v1309 = vsel %vm1245, 1, 0
    %v1310 = vsel %vm1246, 1, 0
    %v1311 = vsel %vm1247, 1, 0
    %v1312 = vsel %vm1248, 1, 0
    %v1313 = vsel %vm1249, 1, 0
    %v1314 = vsel %vm1250, 1, 0
    %v1315 = vsel %vm1251, 1, 0
    %v1316 = vsel %vm1252, 1, 0
    %v1317 = vsel %vm1253, 1, 0
    %v1318 = vsel %vm1254, 1, 0
    %v1319 = vsel %vm1255, 1, 0
    %vm1320 = vcmp.eq.s32.totalorder %v1256, 1
    %vm1321 = vcmp.eq.s32.totalorder %v1257, 1
    %vm1322 = vcmp.eq.s32.totalorder %v1258, 1
    %vm1323 = vcmp.eq.s32.totalorder %v1259, 1
    %vm1324 = vcmp.eq.s32.totalorder %v1260, 1
    %vm1325 = vcmp.eq.s32.totalorder %v1261, 1
    %vm1326 = vcmp.eq.s32.totalorder %v1262, 1
    %vm1327 = vcmp.eq.s32.totalorder %v1263, 1
    %vm1328 = vcmp.eq.s32.totalorder %v1264, 1
    %vm1329 = vcmp.eq.s32.totalorder %v1265, 1
    %vm1330 = vcmp.eq.s32.totalorder %v1266, 1
    %vm1331 = vcmp.eq.s32.totalorder %v1267, 1
    %vm1332 = vcmp.eq.s32.totalorder %v1268, 1
    %vm1333 = vcmp.eq.s32.totalorder %v1269, 1
    %vm1334 = vcmp.eq.s32.totalorder %v1270, 1
    %vm1335 = vcmp.eq.s32.totalorder %v1271, 1
    %vm1336 = vcmp.eq.s32.totalorder %v1272, 1
    %vm1337 = vcmp.eq.s32.totalorder %v1273, 1
    %vm1338 = vcmp.eq.s32.totalorder %v1274, 1
    %vm1339 = vcmp.eq.s32.totalorder %v1275, 1
    %vm1340 = vcmp.eq.s32.totalorder %v1276, 1
    %vm1341 = vcmp.eq.s32.totalorder %v1277, 1
    %vm1342 = vcmp.eq.s32.totalorder %v1278, 1
    %vm1343 = vcmp.eq.s32.totalorder %v1279, 1
    %vm1344 = vcmp.eq.s32.totalorder %v1280, 1
    %vm1345 = vcmp.eq.s32.totalorder %v1281, 1
    %vm1346 = vcmp.eq.s32.totalorder %v1282, 1
    %vm1347 = vcmp.eq.s32.totalorder %v1283, 1
    %vm1348 = vcmp.eq.s32.totalorder %v1284, 1
    %vm1349 = vcmp.eq.s32.totalorder %v1285, 1
    %vm1350 = vcmp.eq.s32.totalorder %v1286, 1
    %vm1351 = vcmp.eq.s32.totalorder %v1287, 1
    %vm1352 = vcmp.eq.s32.totalorder %v1288, 1
    %vm1353 = vcmp.eq.s32.totalorder %v1289, 1
    %vm1354 = vcmp.eq.s32.totalorder %v1290, 1
    %vm1355 = vcmp.eq.s32.totalorder %v1291, 1
    %vm1356 = vcmp.eq.s32.totalorder %v1292, 1
    %vm1357 = vcmp.eq.s32.totalorder %v1293, 1
    %vm1358 = vcmp.eq.s32.totalorder %v1294, 1
    %vm1359 = vcmp.eq.s32.totalorder %v1295, 1
    %vm1360 = vcmp.eq.s32.totalorder %v1296, 1
    %vm1361 = vcmp.eq.s32.totalorder %v1297, 1
    %vm1362 = vcmp.eq.s32.totalorder %v1298, 1
    %vm1363 = vcmp.eq.s32.totalorder %v1299, 1
    %vm1364 = vcmp.eq.s32.totalorder %v1300, 1
    %vm1365 = vcmp.eq.s32.totalorder %v1301, 1
    %vm1366 = vcmp.eq.s32.totalorder %v1302, 1
    %vm1367 = vcmp.eq.s32.totalorder %v1303, 1
    %vm1368 = vcmp.eq.s32.totalorder %v1304, 1
    %vm1369 = vcmp.eq.s32.totalorder %v1305, 1
    %vm1370 = vcmp.eq.s32.totalorder %v1306, 1
    %vm1371 = vcmp.eq.s32.totalorder %v1307, 1
    %vm1372 = vcmp.eq.s32.totalorder %v1308, 1
    %vm1373 = vcmp.eq.s32.totalorder %v1309, 1
    %vm1374 = vcmp.eq.s32.totalorder %v1310, 1
    %vm1375 = vcmp.eq.s32.totalorder %v1311, 1
    %vm1376 = vcmp.eq.s32.totalorder %v1312, 1
    %vm1377 = vcmp.eq.s32.totalorder %v1313, 1
    %vm1378 = vcmp.eq.s32.totalorder %v1314, 1
    %vm1379 = vcmp.eq.s32.totalorder %v1315, 1
    %vm1380 = vcmp.eq.s32.totalorder %v1316, 1
    %vm1381 = vcmp.eq.s32.totalorder %v1317, 1
    %vm1382 = vcmp.eq.s32.totalorder %v1318, 1
    %vm1383 = vcmp.eq.s32.totalorder %v1319, 1
    %v1384 = vsel %vm1320, %v350, 0.0
    %v1385 = vsel %vm1321, %v355, 0.0
    %v1386 = vsel %vm1322, %v360, 0.0
    %v1387 = vsel %vm1323, %v365, 0.0
    %v1388 = vsel %vm1324, %v370, 0.0
    %v1389 = vsel %vm1325, %v375, 0.0
    %v1390 = vsel %vm1326, %v380, 0.0
    %v1391 = vsel %vm1327, %v385, 0.0
    %v1392 = vsel %vm1328, %v390, 0.0
    %v1393 = vsel %vm1329, %v395, 0.0
    %v1394 = vsel %vm1330, %v400, 0.0
    %v1395 = vsel %vm1331, %v405, 0.0
    %v1396 = vsel %vm1332, %v410, 0.0
    %v1397 = vsel %vm1333, %v415, 0.0
    %v1398 = vsel %vm1334, %v420, 0.0
    %v1399 = vsel %vm1335, %v425, 0.0
    %v1400 = vsel %vm1336, %v430, 0.0
    %v1401 = vsel %vm1337, %v435, 0.0
    %v1402 = vsel %vm1338, %v440, 0.0
    %v1403 = vsel %vm1339, %v445, 0.0
    %v1404 = vsel %vm1340, %v450, 0.0
    %v1405 = vsel %vm1341, %v455, 0.0
    %v1406 = vsel %vm1342, %v460, 0.0
    %v1407 = vsel %vm1343, %v465, 0.0
    %v1408 = vsel %vm1344, %v470, 0.0
    %v1409 = vsel %vm1345, %v475, 0.0
    %v1410 = vsel %vm1346, %v480, 0.0
    %v1411 = vsel %vm1347, %v485, 0.0
    %v1412 = vsel %vm1348, %v490, 0.0
    %v1413 = vsel %vm1349, %v495, 0.0
    %v1414 = vsel %vm1350, %v500, 0.0
    %v1415 = vsel %vm1351, %v505, 0.0
    %v1416 = vsel %vm1352, %v510, 0.0
    %v1417 = vsel %vm1353, %v515, 0.0
    %v1418 = vsel %vm1354, %v520, 0.0
    %v1419 = vsel %vm1355, %v525, 0.0
    %v1420 = vsel %vm1356, %v530, 0.0
    %v1421 = vsel %vm1357, %v535, 0.0
    %v1422 = vsel %vm1358, %v540, 0.0
    %v1423 = vsel %vm1359, %v545, 0.0
    %v1424 = vsel %vm1360, %v550, 0.0
    %v1425 = vsel %vm1361, %v555, 0.0
    %v1426 = vsel %vm1362, %v560, 0.0
    %v1427 = vsel %vm1363, %v565, 0.0
    %v1428 = vsel %vm1364, %v570, 0.0
    %v1429 = vsel %vm1365, %v575, 0.0
    %v1430 = vsel %vm1366, %v580, 0.0
    %v1431 = vsel %vm1367, %v585, 0.0
    %v1432 = vsel %vm1368, %v590, 0.0
    %v1433 = vsel %vm1369, %v595, 0.0
    %v1434 = vsel %vm1370, %v600, 0.0
    %v1435 = vsel %vm1371, %v605, 0.0
    %v1436 = vsel %vm1372, %v610, 0.0
    %v1437 = vsel %vm1373, %v615, 0.0
    %v1438 = vsel %vm1374, %v620, 0.0
    %v1439 = vsel %vm1375, %v625, 0.0
    %v1440 = vsel %vm1376, %v630, 0.0
    %v1441 = vsel %vm1377, %v635, 0.0
    %v1442 = vsel %vm1378, %v640, 0.0
    %v1443 = vsel %vm1379, %v645, 0.0
    %v1444 = vsel %vm1380, %v650, 0.0
    %v1445 = vsel %vm1381, %v655, 0.0
    %v1446 = vsel %vm1382, %v660, 0.0
    %v1447 = vsel %vm1383, %v665, 0.0
    %v1448 = vsel %vm668, %v1384, 0.0
    %v1449 = vsel %vm668, %v1385, 0.0
    %v1450 = vadd.f32 %v1448, %v1449
    %v1451 = vsel %vm668, %v1386, 0.0
    %v1452 = vadd.f32 %v1450, %v1451
    %v1453 = vsel %vm668, %v1387, 0.0
    %v1454 = vadd.f32 %v1452, %v1453
    %v1455 = vsel %vm668, %v1388, 0.0
    %v1456 = vadd.f32 %v1454, %v1455
    %v1457 = vsel %vm668, %v1389, 0.0
    %v1458 = vadd.f32 %v1456, %v1457
    %v1459 = vsel %vm668, %v1390, 0.0
    %v1460 = vadd.f32 %v1458, %v1459
    %v1461 = vsel %vm668, %v1391, 0.0
    %v1462 = vadd.f32 %v1460, %v1461
    %v1463 = vsel %vm668, %v1392, 0.0
    %v1464 = vadd.f32 %v1462, %v1463
    %v1465 = vsel %vm668, %v1393, 0.0
    %v1466 = vadd.f32 %v1464, %v1465
    %v1467 = vsel %vm668, %v1394, 0.0
    %v1468 = vadd.f32 %v1466, %v1467
    %v1469 = vsel %vm668, %v1395, 0.0
    %v1470 = vadd.f32 %v1468, %v1469
    %v1471 = vsel %vm668, %v1396, 0.0
    %v1472 = vadd.f32 %v1470, %v1471
    %v1473 = vsel %vm668, %v1397, 0.0
    %v1474 = vadd.f32 %v1472, %v1473
    %v1475 = vsel %vm668, %v1398, 0.0
    %v1476 = vadd.f32 %v1474, %v1475
    %v1477 = vsel %vm668, %v1399, 0.0
    %v1478 = vadd.f32 %v1476, %v1477
    %v1479 = vsel %vm668, %v1400, 0.0
    %v1480 = vadd.f32 %v1478, %v1479
    %v1481 = vsel %vm668, %v1401, 0.0
    %v1482 = vadd.f32 %v1480, %v1481
    %v1483 = vsel %vm668, %v1402, 0.0
    %v1484 = vadd.f32 %v1482, %v1483
    %v1485 = vsel %vm668, %v1403, 0.0
    %v1486 = vadd.f32 %v1484, %v1485
    %v1487 = vsel %vm668, %v1404, 0.0
    %v1488 = vadd.f32 %v1486, %v1487
    %v1489 = vsel %vm668, %v1405, 0.0
    %v1490 = vadd.f32 %v1488, %v1489
    %v1491 = vsel %vm668, %v1406, 0.0
    %v1492 = vadd.f32 %v1490, %v1491
    %v1493 = vsel %vm668, %v1407, 0.0
    %v1494 = vadd.f32 %v1492, %v1493
    %v1495 = vsel %vm668, %v1408, 0.0
    %v1496 = vadd.f32 %v1494, %v1495
    %v1497 = vsel %vm668, %v1409, 0.0
    %v1498 = vadd.f32 %v1496, %v1497
    %v1499 = vsel %vm668, %v1410, 0.0
    %v1500 = vadd.f32 %v1498, %v1499
    %v1501 = vsel %vm668, %v1411, 0.0
    %v1502 = vadd.f32 %v1500, %v1501
    %v1503 = vsel %vm668, %v1412, 0.0
    %v1504 = vadd.f32 %v1502, %v1503
    %v1505 = vsel %vm668, %v1413, 0.0
    %v1506 = vadd.f32 %v1504, %v1505
    %v1507 = vsel %vm668, %v1414, 0.0
    %v1508 = vadd.f32 %v1506, %v1507
    %v1509 = vsel %vm668, %v1415, 0.0
    %v1510 = vadd.f32 %v1508, %v1509
    %v1511 = vsel %vm668, %v1416, 0.0
    %v1512 = vadd.f32 %v1510, %v1511
    %v1513 = vsel %vm668, %v1417, 0.0
    %v1514 = vadd.f32 %v1512, %v1513
    %v1515 = vsel %vm668, %v1418, 0.0
    %v1516 = vadd.f32 %v1514, %v1515
    %v1517 = vsel %vm668, %v1419, 0.0
    %v1518 = vadd.f32 %v1516, %v1517
    %v1519 = vsel %vm668, %v1420, 0.0
    %v1520 = vadd.f32 %v1518, %v1519
    %v1521 = vsel %vm668, %v1421, 0.0
    %v1522 = vadd.f32 %v1520, %v1521
    %v1523 = vsel %vm668, %v1422, 0.0
    %v1524 = vadd.f32 %v1522, %v1523
    %v1525 = vsel %vm668, %v1423, 0.0
    %v1526 = vadd.f32 %v1524, %v1525
    %v1527 = vsel %vm668, %v1424, 0.0
    %v1528 = vadd.f32 %v1526, %v1527
    %v1529 = vsel %vm668, %v1425, 0.0
    %v1530 = vadd.f32 %v1528, %v1529
    %v1531 = vsel %vm668, %v1426, 0.0
    %v1532 = vadd.f32 %v1530, %v1531
    %v1533 = vsel %vm668, %v1427, 0.0
    %v1534 = vadd.f32 %v1532, %v1533
    %v1535 = vsel %vm668, %v1428, 0.0
    %v1536 = vadd.f32 %v1534, %v1535
    %v1537 = vsel %vm668, %v1429, 0.0
    %v1538 = vadd.f32 %v1536, %v1537
    %v1539 = vsel %vm668, %v1430, 0.0
    %v1540 = vadd.f32 %v1538, %v1539
    %v1541 = vsel %vm668, %v1431, 0.0
    %v1542 = vadd.f32 %v1540, %v1541
    %v1543 = vsel %vm668, %v1432, 0.0
    %v1544 = vadd.f32 %v1542, %v1543
    %v1545 = vsel %vm668, %v1433, 0.0
    %v1546 = vadd.f32 %v1544, %v1545
    %v1547 = vsel %vm668, %v1434, 0.0
    %v1548 = vadd.f32 %v1546, %v1547
    %v1549 = vsel %vm668, %v1435, 0.0
    %v1550 = vadd.f32 %v1548, %v1549
    %v1551 = vsel %vm668, %v1436, 0.0
    %v1552 = vadd.f32 %v1550, %v1551
    %v1553 = vsel %vm668, %v1437, 0.0
    %v1554 = vadd.f32 %v1552, %v1553
    %v1555 = vsel %vm668, %v1438, 0.0
    %v1556 = vadd.f32 %v1554, %v1555
    %v1557 = vsel %vm668, %v1439, 0.0
    %v1558 = vadd.f32 %v1556, %v1557
    %v1559 = vsel %vm668, %v1440, 0.0
    %v1560 = vadd.f32 %v1558, %v1559
    %v1561 = vsel %vm668, %v1441, 0.0
    %v1562 = vadd.f32 %v1560, %v1561
    %v1563 = vsel %vm668, %v1442, 0.0
    %v1564 = vadd.f32 %v1562, %v1563
    %v1565 = vsel %vm668, %v1443, 0.0
    %v1566 = vadd.f32 %v1564, %v1565
    %v1567 = vsel %vm668, %v1444, 0.0
    %v1568 = vadd.f32 %v1566, %v1567
    %v1569 = vsel %vm668, %v1445, 0.0
    %v1570 = vadd.f32 %v1568, %v1569
    %v1571 = vsel %vm668, %v1446, 0.0
    %v1572 = vadd.f32 %v1570, %v1571
    %v1573 = vsel %vm668, %v1447, 0.0
    %v1574 = vadd.f32 %v1572, %v1573
    %1575 = vst.msk [vmem:[%s4] sm:$0xff] %vm668, %v1574
    %v1576 = vmul.f32 %v1384, %v1384
    %v1577 = vmul.f32 %v1385, %v1385
    %v1578 = vmul.f32 %v1386, %v1386
    %v1579 = vmul.f32 %v1387, %v1387
    %v1580 = vmul.f32 %v1388, %v1388
    %v1581 = vmul.f32 %v1389, %v1389
    %v1582 = vmul.f32 %v1390, %v1390
    %v1583 = vmul.f32 %v1391, %v1391
    %v1584 = vmul.f32 %v1392, %v1392
    %v1585 = vmul.f32 %v1393, %v1393
    %v1586 = vmul.f32 %v1394, %v1394
    %v1587 = vmul.f32 %v1395, %v1395
    %v1588 = vmul.f32 %v1396, %v1396
    %v1589 = vmul.f32 %v1397, %v1397
    %v1590 = vmul.f32 %v1398, %v1398
    %v1591 = vmul.f32 %v1399, %v1399
    %v1592 = vmul.f32 %v1400, %v1400
    %v1593 = vmul.f32 %v1401, %v1401
    %v1594 = vmul.f32 %v1402, %v1402
    %v1595 = vmul.f32 %v1403, %v1403
    %v1596 = vmul.f32 %v1404, %v1404
    %v1597 = vmul.f32 %v1405, %v1405
    %v1598 = vmul.f32 %v1406, %v1406
    %v1599 = vmul.f32 %v1407, %v1407
    %v1600 = vmul.f32 %v1408, %v1408
    %v1601 = vmul.f32 %v1409, %v1409
    %v1602 = vmul.f32 %v1410, %v1410
    %v1603 = vmul.f32 %v1411, %v1411
    %v1604 = vmul.f32 %v1412, %v1412
    %v1605 = vmul.f32 %v1413, %v1413
    %v1606 = vmul.f32 %v1414, %v1414
    %v1607 = vmul.f32 %v1415, %v1415
    %v1608 = vmul.f32 %v1416, %v1416
    %v1609 = vmul.f32 %v1417, %v1417
    %v1610 = vmul.f32 %v1418, %v1418
    %v1611 = vmul.f32 %v1419, %v1419
    %v1612 = vmul.f32 %v1420, %v1420
    %v1613 = vmul.f32 %v1421, %v1421
    %v1614 = vmul.f32 %v1422, %v1422
    %v1615 = vmul.f32 %v1423, %v1423
    %v1616 = vmul.f32 %v1424, %v1424
    %v1617 = vmul.f32 %v1425, %v1425
    %v1618 = vmul.f32 %v1426, %v1426
    %v1619 = vmul.f32 %v1427, %v1427
    %v1620 = vmul.f32 %v1428, %v1428
    %v1621 = vmul.f32 %v1429, %v1429
    %v1622 = vmul.f32 %v1430, %v1430
    %v1623 = vmul.f32 %v1431, %v1431
    %v1624 = vmul.f32 %v1432, %v1432
    %v1625 = vmul.f32 %v1433, %v1433
    %v1626 = vmul.f32 %v1434, %v1434
    %v1627 = vmul.f32 %v1435, %v1435
    %v1628 = vmul.f32 %v1436, %v1436
    %v1629 = vmul.f32 %v1437, %v1437
    %v1630 = vmul.f32 %v1438, %v1438
    %v1631 = vmul.f32 %v1439, %v1439
    %v1632 = vmul.f32 %v1440, %v1440
    %v1633 = vmul.f32 %v1441, %v1441
    %v1634 = vmul.f32 %v1442, %v1442
    %v1635 = vmul.f32 %v1443, %v1443
    %v1636 = vmul.f32 %v1444, %v1444
    %v1637 = vmul.f32 %v1445, %v1445
    %v1638 = vmul.f32 %v1446, %v1446
    %v1639 = vmul.f32 %v1447, %v1447
    %v1640 = vsel %vm668, %v1576, 0.0
    %v1641 = vsel %vm668, %v1577, 0.0
    %v1642 = vadd.f32 %v1640, %v1641
    %v1643 = vsel %vm668, %v1578, 0.0
    %v1644 = vadd.f32 %v1642, %v1643
    %v1645 = vsel %vm668, %v1579, 0.0
    %v1646 = vadd.f32 %v1644, %v1645
    %v1647 = vsel %vm668, %v1580, 0.0
    %v1648 = vadd.f32 %v1646, %v1647
    %v1649 = vsel %vm668, %v1581, 0.0
    %v1650 = vadd.f32 %v1648, %v1649
    %v1651 = vsel %vm668, %v1582, 0.0
    %v1652 = vadd.f32 %v1650, %v1651
    %v1653 = vsel %vm668, %v1583, 0.0
    %v1654 = vadd.f32 %v1652, %v1653
    %v1655 = vsel %vm668, %v1584, 0.0
    %v1656 = vadd.f32 %v1654, %v1655
    %v1657 = vsel %vm668, %v1585, 0.0
    %v1658 = vadd.f32 %v1656, %v1657
    %v1659 = vsel %vm668, %v1586, 0.0
    %v1660 = vadd.f32 %v1658, %v1659
    %v1661 = vsel %vm668, %v1587, 0.0
    %v1662 = vadd.f32 %v1660, %v1661
    %v1663 = vsel %vm668, %v1588, 0.0
    %v1664 = vadd.f32 %v1662, %v1663
    %v1665 = vsel %vm668, %v1589, 0.0
    %v1666 = vadd.f32 %v1664, %v1665
    %v1667 = vsel %vm668, %v1590, 0.0
    %v1668 = vadd.f32 %v1666, %v1667
    %v1669 = vsel %vm668, %v1591, 0.0
    %v1670 = vadd.f32 %v1668, %v1669
    %v1671 = vsel %vm668, %v1592, 0.0
    %v1672 = vadd.f32 %v1670, %v1671
    %v1673 = vsel %vm668, %v1593, 0.0
    %v1674 = vadd.f32 %v1672, %v1673
    %v1675 = vsel %vm668, %v1594, 0.0
    %v1676 = vadd.f32 %v1674, %v1675
    %v1677 = vsel %vm668, %v1595, 0.0
    %v1678 = vadd.f32 %v1676, %v1677
    %v1679 = vsel %vm668, %v1596, 0.0
    %v1680 = vadd.f32 %v1678, %v1679
    %v1681 = vsel %vm668, %v1597, 0.0
    %v1682 = vadd.f32 %v1680, %v1681
    %v1683 = vsel %vm668, %v1598, 0.0
    %v1684 = vadd.f32 %v1682, %v1683
    %v1685 = vsel %vm668, %v1599, 0.0
    %v1686 = vadd.f32 %v1684, %v1685
    %v1687 = vsel %vm668, %v1600, 0.0
    %v1688 = vadd.f32 %v1686, %v1687
    %v1689 = vsel %vm668, %v1601, 0.0
    %v1690 = vadd.f32 %v1688, %v1689
    %v1691 = vsel %vm668, %v1602, 0.0
    %v1692 = vadd.f32 %v1690, %v1691
    %v1693 = vsel %vm668, %v1603, 0.0
    %v1694 = vadd.f32 %v1692, %v1693
    %v1695 = vsel %vm668, %v1604, 0.0
    %v1696 = vadd.f32 %v1694, %v1695
    %v1697 = vsel %vm668, %v1605, 0.0
    %v1698 = vadd.f32 %v1696, %v1697
    %v1699 = vsel %vm668, %v1606, 0.0
    %v1700 = vadd.f32 %v1698, %v1699
    %v1701 = vsel %vm668, %v1607, 0.0
    %v1702 = vadd.f32 %v1700, %v1701
    %v1703 = vsel %vm668, %v1608, 0.0
    %v1704 = vadd.f32 %v1702, %v1703
    %v1705 = vsel %vm668, %v1609, 0.0
    %v1706 = vadd.f32 %v1704, %v1705
    %v1707 = vsel %vm668, %v1610, 0.0
    %v1708 = vadd.f32 %v1706, %v1707
    %v1709 = vsel %vm668, %v1611, 0.0
    %v1710 = vadd.f32 %v1708, %v1709
    %v1711 = vsel %vm668, %v1612, 0.0
    %v1712 = vadd.f32 %v1710, %v1711
    %v1713 = vsel %vm668, %v1613, 0.0
    %v1714 = vadd.f32 %v1712, %v1713
    %v1715 = vsel %vm668, %v1614, 0.0
    %v1716 = vadd.f32 %v1714, %v1715
    %v1717 = vsel %vm668, %v1615, 0.0
    %v1718 = vadd.f32 %v1716, %v1717
    %v1719 = vsel %vm668, %v1616, 0.0
    %v1720 = vadd.f32 %v1718, %v1719
    %v1721 = vsel %vm668, %v1617, 0.0
    %v1722 = vadd.f32 %v1720, %v1721
    %v1723 = vsel %vm668, %v1618, 0.0
    %v1724 = vadd.f32 %v1722, %v1723
    %v1725 = vsel %vm668, %v1619, 0.0
    %v1726 = vadd.f32 %v1724, %v1725
    %v1727 = vsel %vm668, %v1620, 0.0
    %v1728 = vadd.f32 %v1726, %v1727
    %v1729 = vsel %vm668, %v1621, 0.0
    %v1730 = vadd.f32 %v1728, %v1729
    %v1731 = vsel %vm668, %v1622, 0.0
    %v1732 = vadd.f32 %v1730, %v1731
    %v1733 = vsel %vm668, %v1623, 0.0
    %v1734 = vadd.f32 %v1732, %v1733
    %v1735 = vsel %vm668, %v1624, 0.0
    %v1736 = vadd.f32 %v1734, %v1735
    %v1737 = vsel %vm668, %v1625, 0.0
    %v1738 = vadd.f32 %v1736, %v1737
    %v1739 = vsel %vm668, %v1626, 0.0
    %v1740 = vadd.f32 %v1738, %v1739
    %v1741 = vsel %vm668, %v1627, 0.0
    %v1742 = vadd.f32 %v1740, %v1741
    %v1743 = vsel %vm668, %v1628, 0.0
    %v1744 = vadd.f32 %v1742, %v1743
    %v1745 = vsel %vm668, %v1629, 0.0
    %v1746 = vadd.f32 %v1744, %v1745
    %v1747 = vsel %vm668, %v1630, 0.0
    %v1748 = vadd.f32 %v1746, %v1747
    %v1749 = vsel %vm668, %v1631, 0.0
    %v1750 = vadd.f32 %v1748, %v1749
    %v1751 = vsel %vm668, %v1632, 0.0
    %v1752 = vadd.f32 %v1750, %v1751
    %v1753 = vsel %vm668, %v1633, 0.0
    %v1754 = vadd.f32 %v1752, %v1753
    %v1755 = vsel %vm668, %v1634, 0.0
    %v1756 = vadd.f32 %v1754, %v1755
    %v1757 = vsel %vm668, %v1635, 0.0
    %v1758 = vadd.f32 %v1756, %v1757
    %v1759 = vsel %vm668, %v1636, 0.0
    %v1760 = vadd.f32 %v1758, %v1759
    %v1761 = vsel %vm668, %v1637, 0.0
    %v1762 = vadd.f32 %v1760, %v1761
    %v1763 = vsel %vm668, %v1638, 0.0
    %v1764 = vadd.f32 %v1762, %v1763
    %v1765 = vsel %vm668, %v1639, 0.0
    %v1766 = vadd.f32 %v1764, %v1765
    %1767 = vst.msk [vmem:[%s5] sm:$0xff] %vm668, %v1766
  $region21: #{vae_forward.11} parent=0 // pred_fallthru
    _
  // Predicated region
  $region22: #{vae_forward.11} parent=0 // pred_check
    _
  $region23: #{vae_forward.11} parent=0 // pred_check_branch
    %1769 = sbr.rel (0) target = $region25
  $region24: #{vae_forward.11} parent=0 // pred_region
    _
  $region25: #{vae_forward.11} parent=0 // pred_fallthru
    _
  // Predicated region
  $region26: #{vae_forward.11} parent=0 // pred_check
    _
  $region27: #{vae_forward.11} parent=0 // pred_check_branch
    %1771 = sbr.rel (0) target = $region29
  $region28: #{vae_forward.11} parent=0 // pred_region
    _
  $region29: #{vae_forward.11} parent=0 // pred_fallthru
    _
  // Predicated region
  $region30: #{vae_forward.11} parent=0 // pred_check
    _
  $region31: #{vae_forward.11} parent=0 // pred_check_branch
    %1773 = sbr.rel (0) target = $region33
  $region32: #{vae_forward.11} parent=0 // pred_region
    _
  $region33: #{vae_forward.11} parent=0 // pred_fallthru
    _
  // Predicated region
  $region34: #{vae_forward.11} parent=0 // pred_check
    _
  $region35: #{vae_forward.11} parent=0 // pred_check_branch
    %1775 = sbr.rel (0) target = $region37
  $region36: #{vae_forward.11} parent=0 // pred_region
    _
  $region37: #{vae_forward.11} parent=0 // pred_fallthru
    _
  // Predicated region
  $region38: #{vae_forward.11} parent=0 // pred_check
    _
  $region39: #{vae_forward.11} parent=0 // pred_check_branch
    %1777 = sbr.rel (0) target = $region41
  $region40: #{vae_forward.11} parent=0 // pred_region
    _
  $region41: #{vae_forward.11} parent=0 // pred_fallthru
    _
  // Predicated region
  $region42: #{vae_forward.11} parent=0 // pred_check
    _
  $region43: #{vae_forward.11} parent=0 // pred_check_branch
    %1779 = sbr.rel (0) target = $region45
  $region44: #{vae_forward.11} parent=0 // pred_region
    _
  $region45: #{vae_forward.11} parent=0 // pred_fallthru
    _

// kernel: vae_forward.14
$region0: #{vae_forward.14}
  #allocation0 [shape = 'u32[]', space=smem, size = 0x4, offset = 0x4, fixed_abs, tag = 'smem constant byte address 0x4 - core index']
  #allocation1 [shape = 'u32[144,128]{1,0:T(1,128)}', space=vmem, size = 0x12000, scoped, tag = 'internal scratch']
  %s0 = inlined_call_operand.vmem [shape: f32[128,16], index: 0, kind: input, shape index: {}, may-alias: {0,5}]
  %s1 = inlined_call_operand.vmem [shape: f32[1,16], index: 1, kind: input, shape index: {}]
  %s2 = inlined_call_operand.vmem [shape: f32[1,16], index: 2, kind: input, shape index: {}]
  %s3 = inlined_call_operand.vmem [shape: f32[1,16], index: 3, kind: input, shape index: {}]
  %s4 = inlined_call_operand.vmem [shape: f32[1,16], index: 4, kind: input, shape index: {}]
  %s5 = inlined_call_operand.vmem [shape: f32[128,16], index: 5, kind: output, shape index: {}, may-alias: {0,5}]
  %s6 = sld [smem:[#allocation0]]
  $region30: #{vae_forward.14} parent=0
    _
  %s8 = ssub.s32 1, %s6
  %s9 = scalar_select 0, %s8, %s6
  // Predicated region
  $region2: #{vae_forward.14} parent=0 // pred_check
    _
  $region3: #{vae_forward.14} parent=0 // pred_check_branch
    %11 = sbr.rel (0) target = $region5
  $region4: #{vae_forward.14} parent=0 // pred_region
    _
  $region5: #{vae_forward.14} parent=0 // pred_fallthru
    _
  // Predicated region
  $region6: #{vae_forward.14} parent=0 // pred_check
    _
  $region7: #{vae_forward.14} parent=0 // pred_check_branch
    %13 = sbr.rel (0) target = $region9
  $region8: #{vae_forward.14} parent=0 // pred_region
    _
  $region9: #{vae_forward.14} parent=0 // pred_fallthru
    _
  // Predicated region
  $region10: #{vae_forward.14} parent=0 // pred_check
    _
  $region11: #{vae_forward.14} parent=0 // pred_check_branch
    %15 = sbr.rel (0) target = $region13
  $region12: #{vae_forward.14} parent=0 // pred_region
    _
  $region13: #{vae_forward.14} parent=0 // pred_fallthru
    _
  // Predicated region
  $region14: #{vae_forward.14} parent=0 // pred_check
    _
  $region15: #{vae_forward.14} parent=0 // pred_check_branch
    %17 = sbr.rel (0) target = $region17
  $region16: #{vae_forward.14} parent=0 // pred_region
    _
  $region17: #{vae_forward.14} parent=0 // pred_fallthru
    _
  // Predicated region
  $region18: #{vae_forward.14} parent=0 // pred_check
    _
  $region19: #{vae_forward.14} parent=0 // pred_check_branch
    %19 = sbr.rel (0) target = $region21
  $region20: #{vae_forward.14} parent=0 // pred_region
    _
  $region21: #{vae_forward.14} parent=0 // pred_fallthru
    _
  %v20 = vld [vmem:[%s1] sm:$0x1]
  %v21 = vmul.f32 %v20, 0.0078125
  %v22 = vld [vmem:[%s2] sm:$0x1]
  %v23 = vmul.f32 %v22, 0.0078125
  %v24 = vmul.f32 %v21, %v21
  %v25 = vsub.f32 %v23, %v24
  %v26 = vmax.f32 %v25, 0.0
  %v27 = vld [vmem:[%s0] sm:$0xff]
  %v28 = vld [vmem:[%s0 + $0x8] sm:$0xff]
  %v29 = vld [vmem:[%s0 + $0x10] sm:$0xff]
  %v30 = vld [vmem:[%s0 + $0x18] sm:$0xff]
  %v31 = vld [vmem:[%s0 + $0x20] sm:$0xff]
  %v32 = vld [vmem:[%s0 + $0x28] sm:$0xff]
  %v33 = vld [vmem:[%s0 + $0x30] sm:$0xff]
  %v34 = vld [vmem:[%s0 + $0x38] sm:$0xff]
  %v35 = vld [vmem:[%s0 + $0x40] sm:$0xff]
  %v36 = vld [vmem:[%s0 + $0x48] sm:$0xff]
  %v37 = vld [vmem:[%s0 + $0x50] sm:$0xff]
  %v38 = vld [vmem:[%s0 + $0x58] sm:$0xff]
  %v39 = vld [vmem:[%s0 + $0x60] sm:$0xff]
  %v40 = vld [vmem:[%s0 + $0x68] sm:$0xff]
  %v41 = vld [vmem:[%s0 + $0x70] sm:$0xff]
  %v42 = vld [vmem:[%s0 + $0x78] sm:$0xff]
  %v44 = vlaneseq
  %v45 = vshrl.u32 %v44, 7
  %v46 = vsub.s32 0, %v45
  %v47 = vrot.slane %v21, %v46
  %v49 = vsub.f32 %v27, %v47
  %v50 = vsub.f32 %v28, %v47
  %v51 = vsub.f32 %v29, %v47
  %v52 = vsub.f32 %v30, %v47
  %v53 = vsub.f32 %v31, %v47
  %v54 = vsub.f32 %v32, %v47
  %v55 = vsub.f32 %v33, %v47
  %v56 = vsub.f32 %v34, %v47
  %v57 = vsub.f32 %v35, %v47
  %v58 = vsub.f32 %v36, %v47
  %v59 = vsub.f32 %v37, %v47
  %v60 = vsub.f32 %v38, %v47
  %v61 = vsub.f32 %v39, %v47
  %v62 = vsub.f32 %v40, %v47
  %v63 = vsub.f32 %v41, %v47
  %v64 = vsub.f32 %v42, %v47
  %v65 = vadd.f32 %v26, 1e-05
  %v66 = vrsqrt.pop %v65
  %v68 = vlaneseq
  %v69 = vshrl.u32 %v68, 7
  %v70 = vsub.s32 0, %v69
  %v71 = vrot.slane %v66, %v70
  %v73 = vmul.f32 %v49, %v71
  %v74 = vmul.f32 %v50, %v71
  %v75 = vmul.f32 %v51, %v71
  %v76 = vmul.f32 %v52, %v71
  %v77 = vmul.f32 %v53, %v71
  %v78 = vmul.f32 %v54, %v71
  %v79 = vmul.f32 %v55, %v71
  %v80 = vmul.f32 %v56, %v71
  %v81 = vmul.f32 %v57, %v71
  %v82 = vmul.f32 %v58, %v71
  %v83 = vmul.f32 %v59, %v71
  %v84 = vmul.f32 %v60, %v71
  %v85 = vmul.f32 %v61, %v71
  %v86 = vmul.f32 %v62, %v71
  %v87 = vmul.f32 %v63, %v71
  %v88 = vmul.f32 %v64, %v71
  %v89 = vld [vmem:[%s3] sm:$0x1]
  %v91 = vlaneseq
  %v92 = vshrl.u32 %v91, 7
  %v93 = vsub.s32 0, %v92
  %v94 = vrot.slane %v89, %v93
  %v96 = vmul.f32 %v73, %v94
  %v97 = vmul.f32 %v74, %v94
  %v98 = vmul.f32 %v75, %v94
  %v99 = vmul.f32 %v76, %v94
  %v100 = vmul.f32 %v77, %v94
  %v101 = vmul.f32 %v78, %v94
  %v102 = vmul.f32 %v79, %v94
  %v103 = vmul.f32 %v80, %v94
  %v104 = vmul.f32 %v81, %v94
  %v105 = vmul.f32 %v82, %v94
  %v106 = vmul.f32 %v83, %v94
  %v107 = vmul.f32 %v84, %v94
  %v108 = vmul.f32 %v85, %v94
  %v109 = vmul.f32 %v86, %v94
  %v110 = vmul.f32 %v87, %v94
  %v111 = vmul.f32 %v88, %v94
  %v112 = vld [vmem:[%s4] sm:$0x1]
  %v114 = vlaneseq
  %v115 = vshrl.u32 %v114, 7
  %v116 = vsub.s32 0, %v115
  %v117 = vrot.slane %v112, %v116
  %v119 = vadd.f32 %v96, %v117
  %v120 = vadd.f32 %v97, %v117
  %v121 = vadd.f32 %v98, %v117
  %v122 = vadd.f32 %v99, %v117
  %v123 = vadd.f32 %v100, %v117
  %v124 = vadd.f32 %v101, %v117
  %v125 = vadd.f32 %v102, %v117
  %v126 = vadd.f32 %v103, %v117
  %v127 = vadd.f32 %v104, %v117
  %v128 = vadd.f32 %v105, %v117
  %v129 = vadd.f32 %v106, %v117
  %v130 = vadd.f32 %v107, %v117
  %v131 = vadd.f32 %v108, %v117
  %v132 = vadd.f32 %v109, %v117
  %v133 = vadd.f32 %v110, %v117
  %v134 = vadd.f32 %v111, %v117
  %vm135 = vcmp.ge.f32.partialorder %v119, 0.0
  %vm136 = vcmp.ge.f32.partialorder %v120, 0.0
  %vm137 = vcmp.ge.f32.partialorder %v121, 0.0
  %vm138 = vcmp.ge.f32.partialorder %v122, 0.0
  %vm139 = vcmp.ge.f32.partialorder %v123, 0.0
  %vm140 = vcmp.ge.f32.partialorder %v124, 0.0
  %vm141 = vcmp.ge.f32.partialorder %v125, 0.0
  %vm142 = vcmp.ge.f32.partialorder %v126, 0.0
  %vm143 = vcmp.ge.f32.partialorder %v127, 0.0
  %vm144 = vcmp.ge.f32.partialorder %v128, 0.0
  %vm145 = vcmp.ge.f32.partialorder %v129, 0.0
  %vm146 = vcmp.ge.f32.partialorder %v130, 0.0
  %vm147 = vcmp.ge.f32.partialorder %v131, 0.0
  %vm148 = vcmp.ge.f32.partialorder %v132, 0.0
  %vm149 = vcmp.ge.f32.partialorder %v133, 0.0
  %vm150 = vcmp.ge.f32.partialorder %v134, 0.0
  %v151 = vmul.f32 %v119, 0.2
  %v152 = vmul.f32 %v120, 0.2
  %v153 = vmul.f32 %v121, 0.2
  %v154 = vmul.f32 %v122, 0.2
  %v155 = vmul.f32 %v123, 0.2
  %v156 = vmul.f32 %v124, 0.2
  %v157 = vmul.f32 %v125, 0.2
  %v158 = vmul.f32 %v126, 0.2
  %v159 = vmul.f32 %v127, 0.2
  %v160 = vmul.f32 %v128, 0.2
  %v161 = vmul.f32 %v129, 0.2
  %v162 = vmul.f32 %v130, 0.2
  %v163 = vmul.f32 %v131, 0.2
  %v164 = vmul.f32 %v132, 0.2
  %v165 = vmul.f32 %v133, 0.2
  %v166 = vmul.f32 %v134, 0.2
  %v167 = vsel %vm135, %v119, %v151
  %v168 = vsel %vm136, %v120, %v152
  %v169 = vsel %vm137, %v121, %v153
  %v170 = vsel %vm138, %v122, %v154
  %v171 = vsel %vm139, %v123, %v155
  %v172 = vsel %vm140, %v124, %v156
  %v173 = vsel %vm141, %v125, %v157
  %v174 = vsel %vm142, %v126, %v158
  %v175 = vsel %vm143, %v127, %v159
  %v176 = vsel %vm144, %v128, %v160
  %v177 = vsel %vm145, %v129, %v161
  %v178 = vsel %vm146, %v130, %v162
  %v179 = vsel %vm147, %v131, %v163
  %v180 = vsel %vm148, %v132, %v164
  %v181 = vsel %vm149, %v133, %v165
  %v182 = vsel %vm150, %v134, %v166
  %vm183 = vcmask 130048
  %184 = vst.msk [vmem:[%s5] sm:$0xff] %vm183, %v167
  %185 = vst.msk [vmem:[%s5 + $0x8] sm:$0xff] %vm183, %v168
  %186 = vst.msk [vmem:[%s5 + $0x10] sm:$0xff] %vm183, %v169
  %187 = vst.msk [vmem:[%s5 + $0x18] sm:$0xff] %vm183, %v170
  %188 = vst.msk [vmem:[%s5 + $0x20] sm:$0xff] %vm183, %v171
  %189 = vst.msk [vmem:[%s5 + $0x28] sm:$0xff] %vm183, %v172
  %190 = vst.msk [vmem:[%s5 + $0x30] sm:$0xff] %vm183, %v173
  %191 = vst.msk [vmem:[%s5 + $0x38] sm:$0xff] %vm183, %v174
  %192 = vst.msk [vmem:[%s5 + $0x40] sm:$0xff] %vm183, %v175
  %193 = vst.msk [vmem:[%s5 + $0x48] sm:$0xff] %vm183, %v176
  %194 = vst.msk [vmem:[%s5 + $0x50] sm:$0xff] %vm183, %v177
  %195 = vst.msk [vmem:[%s5 + $0x58] sm:$0xff] %vm183, %v178
  %196 = vst.msk [vmem:[%s5 + $0x60] sm:$0xff] %vm183, %v179
  %197 = vst.msk [vmem:[%s5 + $0x68] sm:$0xff] %vm183, %v180
  %198 = vst.msk [vmem:[%s5 + $0x70] sm:$0xff] %vm183, %v181
  %199 = vst.msk [vmem:[%s5 + $0x78] sm:$0xff] %vm183, %v182
  // Predicated region
  $region22: #{vae_forward.14} parent=0 // pred_check
    _
  $region23: #{vae_forward.14} parent=0 // pred_check_branch
    %201 = sbr.rel (0) target = $region25
  $region24: #{vae_forward.14} parent=0 // pred_region
    _
  $region25: #{vae_forward.14} parent=0 // pred_fallthru
    _
  // Predicated region
  $region26: #{vae_forward.14} parent=0 // pred_check
    _
  $region27: #{vae_forward.14} parent=0 // pred_check_branch
    %203 = sbr.rel (0) target = $region29
  $region28: #{vae_forward.14} parent=0 // pred_region
    _
  $region29: #{vae_forward.14} parent=0 // pred_fallthru
    _

// kernel: vae_forward.13
$region0: #{vae_forward.13}
  #allocation0 [shape = 'u32[]', space=smem, size = 0x4, offset = 0x4, fixed_abs, tag = 'smem constant byte address 0x4 - core index']
  #allocation1 [shape = 'u32[144,128]{1,0:T(1,128)}', space=vmem, size = 0x12000, scoped, tag = 'internal scratch']
  %s0 = inlined_call_operand.vmem [shape: f32[128,128], index: 0, kind: input, shape index: {}]
  %s1 = inlined_call_operand.vmem [shape: f32[128,16], index: 1, kind: input, shape index: {}]
  %s2 = inlined_call_operand.vmem [shape: f32[1,16], index: 2, kind: input, shape index: {}]
  %s3 = inlined_call_operand.vmem [shape: f32[128,16], index: 3, kind: output, shape index: {0}]
  %s4 = inlined_call_operand.vmem [shape: f32[8,16], index: 4, kind: output, shape index: {1}]
  %s5 = inlined_call_operand.vmem [shape: f32[8,16], index: 5, kind: output, shape index: {2}]
  %6 = xla_tuple %s3, %s4, %s5
  %s7 = sld [smem:[#allocation0]]
  $region46: #{vae_forward.13} parent=0
    _
  %s9 = ssub.s32 1, %s7
  %s10 = scalar_select 0, %s9, %s7
  // Predicated region
  $region2: #{vae_forward.13} parent=0 // pred_check
    _
  $region3: #{vae_forward.13} parent=0 // pred_check_branch
    %12 = sbr.rel (0) target = $region5
  $region4: #{vae_forward.13} parent=0 // pred_region
    _
  $region5: #{vae_forward.13} parent=0 // pred_fallthru
    _
  // Predicated region
  $region6: #{vae_forward.13} parent=0 // pred_check
    _
  $region7: #{vae_forward.13} parent=0 // pred_check_branch
    %14 = sbr.rel (0) target = $region9
  $region8: #{vae_forward.13} parent=0 // pred_region
    _
  $region9: #{vae_forward.13} parent=0 // pred_fallthru
    _
  // Predicated region
  $region10: #{vae_forward.13} parent=0 // pred_check
    _
  $region11: #{vae_forward.13} parent=0 // pred_check_branch
    %16 = sbr.rel (0) target = $region13
  $region12: #{vae_forward.13} parent=0 // pred_region
    _
  $region13: #{vae_forward.13} parent=0 // pred_fallthru
    _
  %v17 = vld [vmem:[%s0] sm:$0xff]
  %v18 = vld [vmem:[%s0 + $0x8] sm:$0xff]
  %v19 = vld [vmem:[%s0 + $0x10] sm:$0xff]
  %v20 = vld [vmem:[%s0 + $0x18] sm:$0xff]
  %v21 = vld [vmem:[%s0 + $0x20] sm:$0xff]
  %v22 = vld [vmem:[%s0 + $0x28] sm:$0xff]
  %v23 = vld [vmem:[%s0 + $0x30] sm:$0xff]
  %v24 = vld [vmem:[%s0 + $0x38] sm:$0xff]
  %v25 = vld [vmem:[%s0 + $0x40] sm:$0xff]
  %v26 = vld [vmem:[%s0 + $0x48] sm:$0xff]
  %v27 = vld [vmem:[%s0 + $0x50] sm:$0xff]
  %v28 = vld [vmem:[%s0 + $0x58] sm:$0xff]
  %v29 = vld [vmem:[%s0 + $0x60] sm:$0xff]
  %v30 = vld [vmem:[%s0 + $0x68] sm:$0xff]
  %v31 = vld [vmem:[%s0 + $0x70] sm:$0xff]
  %v32 = vld [vmem:[%s0 + $0x78] sm:$0xff]
  %v33 = vld [vmem:[%s1] sm:$0xff]
  %v34 = vld [vmem:[%s1 + $0x8] sm:$0xff]
  %v35 = vld [vmem:[%s1 + $0x10] sm:$0xff]
  %v36 = vld [vmem:[%s1 + $0x18] sm:$0xff]
  %v37 = vld [vmem:[%s1 + $0x20] sm:$0xff]
  %v38 = vld [vmem:[%s1 + $0x28] sm:$0xff]
  %v39 = vld [vmem:[%s1 + $0x30] sm:$0xff]
  %v40 = vld [vmem:[%s1 + $0x38] sm:$0xff]
  %v41 = vld [vmem:[%s1 + $0x40] sm:$0xff]
  %v42 = vld [vmem:[%s1 + $0x48] sm:$0xff]
  %v43 = vld [vmem:[%s1 + $0x50] sm:$0xff]
  %v44 = vld [vmem:[%s1 + $0x58] sm:$0xff]
  %v45 = vld [vmem:[%s1 + $0x60] sm:$0xff]
  %v46 = vld [vmem:[%s1 + $0x68] sm:$0xff]
  %v47 = vld [vmem:[%s1 + $0x70] sm:$0xff]
  %v48 = vld [vmem:[%s1 + $0x78] sm:$0xff]
  %v49 = vld [vmem:[%s2] sm:$0x1]
  %v51 = vlaneseq
  %v52 = vshrl.u32 %v51, 7
  %v53 = vsub.s32 0, %v52
  %v54 = vrot.slane %v49, %v53
  %56 = vmatprep.subr.mxu0 0.0
  %57 = vmatpush1.msra.mxu0 %v33
  %58 = vmatprep.subr.mxu0 0.0
  %59 = vmatpush1.msra.mxu0 %v34
  %60 = vmatprep.subr.mxu0 0.0
  %61 = vmatpush1.msra.mxu0 %v35
  %62 = vmatprep.subr.mxu0 0.0
  %63 = vmatpush1.msra.mxu0 %v36
  %64 = vmatprep.subr.mxu0 0.0
  %65 = vmatpush1.msra.mxu0 %v37
  %66 = vmatprep.subr.mxu0 0.0
  %67 = vmatpush1.msra.mxu0 %v38
  %68 = vmatprep.subr.mxu0 0.0
  %69 = vmatpush1.msra.mxu0 %v39
  %70 = vmatprep.subr.mxu0 0.0
  %71 = vmatpush1.msra.mxu0 %v40
  %72 = vmatprep.subr.mxu0 0.0
  %73 = vmatpush1.msra.mxu0 %v41
  %74 = vmatprep.subr.mxu0 0.0
  %75 = vmatpush1.msra.mxu0 %v42
  %76 = vmatprep.subr.mxu0 0.0
  %77 = vmatpush1.msra.mxu0 %v43
  %78 = vmatprep.subr.mxu0 0.0
  %79 = vmatpush1.msra.mxu0 %v44
  %80 = vmatprep.subr.mxu0 0.0
  %81 = vmatpush1.msra.mxu0 %v45
  %82 = vmatprep.subr.mxu0 0.0
  %83 = vmatpush1.msra.mxu0 %v46
  %84 = vmatprep.subr.mxu0 0.0
  %85 = vmatpush1.msra.mxu0 %v47
  %86 = vmatprep.subr.mxu0 0.0
  %87 = vmatpush1.msra.mxu0 %v48
  %88 = vmatprep.subr.mxu0 0.0
  %89 = vmatpush1.msra.mxu0 0.0
  %90 = vmatprep.subr.mxu0 0.0
  %91 = vmatpush1.msra.mxu0 0.0
  %92 = vmatprep.subr.mxu0 0.0
  %93 = vmatpush1.msra.mxu0 0.0
  %94 = vmatprep.subr.mxu0 0.0
  %95 = vmatpush1.msra.mxu0 0.0
  %96 = vmatprep.subr.mxu0 0.0
  %97 = vmatpush1.msra.mxu0 0.0
  %98 = vmatprep.subr.mxu0 0.0
  %99 = vmatpush1.msra.mxu0 0.0
  %100 = vmatprep.subr.mxu0 0.0
  %101 = vmatpush1.msra.mxu0 0.0
  %102 = vmatprep.subr.mxu0 0.0
  %103 = vmatpush1.msra.mxu0 0.0
  %104 = vmatprep.subr.mxu0 0.0
  %105 = vmatpush1.msra.mxu0 0.0
  %106 = vmatprep.subr.mxu0 0.0
  %107 = vmatpush1.msra.mxu0 0.0
  %108 = vmatprep.subr.mxu0 0.0
  %109 = vmatpush1.msra.mxu0 0.0
  %110 = vmatprep.subr.mxu0 0.0
  %111 = vmatpush1.msra.mxu0 0.0
  %112 = vmatprep.subr.mxu0 0.0
  %113 = vmatpush1.msra.mxu0 0.0
  %114 = vmatprep.subr.mxu0 0.0
  %115 = vmatpush1.msra.mxu0 0.0
  %116 = vmatprep.subr.mxu0 0.0
  %117 = vmatpush1.msra.mxu0 0.0
  %118 = vmatprep.subr.mxu0 0.0
  %119 = vmatpush1.msra.mxu0 0.0
  %120 = vmatprep.mubr.f32.mxu0 0.0
  %121 = vmatmul.mubr.f32.gmra.mrb[0].mxu0 %v17
  %v122 = vpop.f32.mrb[0].mxu0
  %v123 = vadd.f32 %v54, %v122
  %v124 = vpop.f32.mrb[0].mxu0
  %125 = vmatprep.mubr.f32.mxu0 0.0
  %126 = vmatmul.mubr.f32.gmra.mrb[0].mxu0 %v18
  %v127 = vpop.f32.mrb[0].mxu0
  %v128 = vadd.f32 %v54, %v127
  %v129 = vpop.f32.mrb[0].mxu0
  %130 = vmatprep.mubr.f32.mxu0 0.0
  %131 = vmatmul.mubr.f32.gmra.mrb[0].mxu0 %v19
  %v132 = vpop.f32.mrb[0].mxu0
  %v133 = vadd.f32 %v54, %v132
  %v134 = vpop.f32.mrb[0].mxu0
  %135 = vmatprep.mubr.f32.mxu0 0.0
  %136 = vmatmul.mubr.f32.gmra.mrb[0].mxu0 %v20
  %v137 = vpop.f32.mrb[0].mxu0
  %v138 = vadd.f32 %v54, %v137
  %v139 = vpop.f32.mrb[0].mxu0
  %140 = vmatprep.mubr.f32.mxu0 0.0
  %141 = vmatmul.mubr.f32.gmra.mrb[0].mxu0 %v21
  %v142 = vpop.f32.mrb[0].mxu0
  %v143 = vadd.f32 %v54, %v142
  %v144 = vpop.f32.mrb[0].mxu0
  %145 = vmatprep.mubr.f32.mxu0 0.0
  %146 = vmatmul.mubr.f32.gmra.mrb[0].mxu0 %v22
  %v147 = vpop.f32.mrb[0].mxu0
  %v148 = vadd.f32 %v54, %v147
  %v149 = vpop.f32.mrb[0].mxu0
  %150 = vmatprep.mubr.f32.mxu0 0.0
  %151 = vmatmul.mubr.f32.gmra.mrb[0].mxu0 %v23
  %v152 = vpop.f32.mrb[0].mxu0
  %v153 = vadd.f32 %v54, %v152
  %v154 = vpop.f32.mrb[0].mxu0
  %155 = vmatprep.mubr.f32.mxu0 0.0
  %156 = vmatmul.mubr.f32.gmra.mrb[0].mxu0 %v24
  %v157 = vpop.f32.mrb[0].mxu0
  %v158 = vadd.f32 %v54, %v157
  %v159 = vpop.f32.mrb[0].mxu0
  %160 = vmatprep.mubr.f32.mxu0 0.0
  %161 = vmatmul.mubr.f32.gmra.mrb[0].mxu0 %v25
  %v162 = vpop.f32.mrb[0].mxu0
  %v163 = vadd.f32 %v54, %v162
  %v164 = vpop.f32.mrb[0].mxu0
  %165 = vmatprep.mubr.f32.mxu0 0.0
  %166 = vmatmul.mubr.f32.gmra.mrb[0].mxu0 %v26
  %v167 = vpop.f32.mrb[0].mxu0
  %v168 = vadd.f32 %v54, %v167
  %v169 = vpop.f32.mrb[0].mxu0
  %170 = vmatprep.mubr.f32.mxu0 0.0
  %171 = vmatmul.mubr.f32.gmra.mrb[0].mxu0 %v27
  %v172 = vpop.f32.mrb[0].mxu0
  %v173 = vadd.f32 %v54, %v172
  %v174 = vpop.f32.mrb[0].mxu0
  %175 = vmatprep.mubr.f32.mxu0 0.0
  %176 = vmatmul.mubr.f32.gmra.mrb[0].mxu0 %v28
  %v177 = vpop.f32.mrb[0].mxu0
  %v178 = vadd.f32 %v54, %v177
  %v179 = vpop.f32.mrb[0].mxu0
  %180 = vmatprep.mubr.f32.mxu0 0.0
  %181 = vmatmul.mubr.f32.gmra.mrb[0].mxu0 %v29
  %v182 = vpop.f32.mrb[0].mxu0
  %v183 = vadd.f32 %v54, %v182
  %v184 = vpop.f32.mrb[0].mxu0
  %185 = vmatprep.mubr.f32.mxu0 0.0
  %186 = vmatmul.mubr.f32.gmra.mrb[0].mxu0 %v30
  %v187 = vpop.f32.mrb[0].mxu0
  %v188 = vadd.f32 %v54, %v187
  %v189 = vpop.f32.mrb[0].mxu0
  %190 = vmatprep.mubr.f32.mxu0 0.0
  %191 = vmatmul.mubr.f32.gmra.mrb[0].mxu0 %v31
  %v192 = vpop.f32.mrb[0].mxu0
  %v193 = vadd.f32 %v54, %v192
  %v194 = vpop.f32.mrb[0].mxu0
  %195 = vmatprep.mubr.f32.mxu0 0.0
  %196 = vmatmul.mubr.f32.gmra.mrb[0].mxu0 %v32
  %v197 = vpop.f32.mrb[0].mxu0
  %v198 = vadd.f32 %v54, %v197
  %v199 = vpop.f32.mrb[0].mxu0
  %200 = vdwg.mxu0
  %vm201 = vcmask 130048
  %202 = vst.msk [vmem:[%s3] sm:$0xff] %vm201, %v123
  %203 = vst.msk [vmem:[%s3 + $0x8] sm:$0xff] %vm201, %v128
  %204 = vst.msk [vmem:[%s3 + $0x10] sm:$0xff] %vm201, %v133
  %205 = vst.msk [vmem:[%s3 + $0x18] sm:$0xff] %vm201, %v138
  %206 = vst.msk [vmem:[%s3 + $0x20] sm:$0xff] %vm201, %v143
  %207 = vst.msk [vmem:[%s3 + $0x28] sm:$0xff] %vm201, %v148
  %208 = vst.msk [vmem:[%s3 + $0x30] sm:$0xff] %vm201, %v153
  %209 = vst.msk [vmem:[%s3 + $0x38] sm:$0xff] %vm201, %v158
  %210 = vst.msk [vmem:[%s3 + $0x40] sm:$0xff] %vm201, %v163
  %211 = vst.msk [vmem:[%s3 + $0x48] sm:$0xff] %vm201, %v168
  %212 = vst.msk [vmem:[%s3 + $0x50] sm:$0xff] %vm201, %v173
  %213 = vst.msk [vmem:[%s3 + $0x58] sm:$0xff] %vm201, %v178
  %214 = vst.msk [vmem:[%s3 + $0x60] sm:$0xff] %vm201, %v183
  %215 = vst.msk [vmem:[%s3 + $0x68] sm:$0xff] %vm201, %v188
  %216 = vst.msk [vmem:[%s3 + $0x70] sm:$0xff] %vm201, %v193
  %217 = vst.msk [vmem:[%s3 + $0x78] sm:$0xff] %vm201, %v198
  %p218 = scmp.lt.s32.totalorder 0, 0
  // Predicated region
  $region14: #{vae_forward.13} parent=0 // pred_check
    %p219 = pneg %p218
  $region15: #{vae_forward.13} parent=0 // pred_check_branch
    %221 = sbr.rel (%p219) target = $region17
  $region16: #{vae_forward.13} parent=0 // pred_region
    %v222 = vsel %vm201, %v123, 0.0
    %v223 = vsel %vm201, %v128, 0.0
    %v224 = vadd.f32 %v222, %v223
    %v225 = vsel %vm201, %v133, 0.0
    %v226 = vadd.f32 %v224, %v225
    %v227 = vsel %vm201, %v138, 0.0
    %v228 = vadd.f32 %v226, %v227
    %v229 = vsel %vm201, %v143, 0.0
    %v230 = vadd.f32 %v228, %v229
    %v231 = vsel %vm201, %v148, 0.0
    %v232 = vadd.f32 %v230, %v231
    %v233 = vsel %vm201, %v153, 0.0
    %v234 = vadd.f32 %v232, %v233
    %v235 = vsel %vm201, %v158, 0.0
    %v236 = vadd.f32 %v234, %v235
    %v237 = vsel %vm201, %v163, 0.0
    %v238 = vadd.f32 %v236, %v237
    %v239 = vsel %vm201, %v168, 0.0
    %v240 = vadd.f32 %v238, %v239
    %v241 = vsel %vm201, %v173, 0.0
    %v242 = vadd.f32 %v240, %v241
    %v243 = vsel %vm201, %v178, 0.0
    %v244 = vadd.f32 %v242, %v243
    %v245 = vsel %vm201, %v183, 0.0
    %v246 = vadd.f32 %v244, %v245
    %v247 = vsel %vm201, %v188, 0.0
    %v248 = vadd.f32 %v246, %v247
    %v249 = vsel %vm201, %v193, 0.0
    %v250 = vadd.f32 %v248, %v249
    %v251 = vsel %vm201, %v198, 0.0
    %v252 = vadd.f32 %v250, %v251
    %253 = vst.msk [vmem:[%s4] sm:$0xff] %vm201, %v252
    %v254 = vmul.f32 %v123, %v123
    %v255 = vmul.f32 %v128, %v128
    %v256 = vmul.f32 %v133, %v133
    %v257 = vmul.f32 %v138, %v138
    %v258 = vmul.f32 %v143, %v143
    %v259 = vmul.f32 %v148, %v148
    %v260 = vmul.f32 %v153, %v153
    %v261 = vmul.f32 %v158, %v158
    %v262 = vmul.f32 %v163, %v163
    %v263 = vmul.f32 %v168, %v168
    %v264 = vmul.f32 %v173, %v173
    %v265 = vmul.f32 %v178, %v178
    %v266 = vmul.f32 %v183, %v183
    %v267 = vmul.f32 %v188, %v188
    %v268 = vmul.f32 %v193, %v193
    %v269 = vmul.f32 %v198, %v198
    %v270 = vsel %vm201, %v254, 0.0
    %v271 = vsel %vm201, %v255, 0.0
    %v272 = vadd.f32 %v270, %v271
    %v273 = vsel %vm201, %v256, 0.0
    %v274 = vadd.f32 %v272, %v273
    %v275 = vsel %vm201, %v257, 0.0
    %v276 = vadd.f32 %v274, %v275
    %v277 = vsel %vm201, %v258, 0.0
    %v278 = vadd.f32 %v276, %v277
    %v279 = vsel %vm201, %v259, 0.0
    %v280 = vadd.f32 %v278, %v279
    %v281 = vsel %vm201, %v260, 0.0
    %v282 = vadd.f32 %v280, %v281
    %v283 = vsel %vm201, %v261, 0.0
    %v284 = vadd.f32 %v282, %v283
    %v285 = vsel %vm201, %v262, 0.0
    %v286 = vadd.f32 %v284, %v285
    %v287 = vsel %vm201, %v263, 0.0
    %v288 = vadd.f32 %v286, %v287
    %v289 = vsel %vm201, %v264, 0.0
    %v290 = vadd.f32 %v288, %v289
    %v291 = vsel %vm201, %v265, 0.0
    %v292 = vadd.f32 %v290, %v291
    %v293 = vsel %vm201, %v266, 0.0
    %v294 = vadd.f32 %v292, %v293
    %v295 = vsel %vm201, %v267, 0.0
    %v296 = vadd.f32 %v294, %v295
    %v297 = vsel %vm201, %v268, 0.0
    %v298 = vadd.f32 %v296, %v297
    %v299 = vsel %vm201, %v269, 0.0
    %v300 = vadd.f32 %v298, %v299
    %301 = vst.msk [vmem:[%s5] sm:$0xff] %vm201, %v300
  $region17: #{vae_forward.13} parent=0 // pred_fallthru
    _
  %p302 = scmp.eq.s32.totalorder 0, 0
  // Predicated region
  $region18: #{vae_forward.13} parent=0 // pred_check
    %p303 = pneg %p302
  $region19: #{vae_forward.13} parent=0 // pred_check_branch
    %305 = sbr.rel (%p303) target = $region21
  $region20: #{vae_forward.13} parent=0 // pred_region
    %s306 = smul.u32 0, 128
    %v307 = vlaneseq
    %v308 = vshrl.u32 %v307, 7
    %v309 = vadd.s32 %v308, 8
    %v310 = vadd.s32 %v308, 16
    %v311 = vadd.s32 %v308, 24
    %v312 = vadd.s32 %v308, 32
    %v313 = vadd.s32 %v308, 40
    %v314 = vadd.s32 %v308, 48
    %v315 = vadd.s32 %v308, 56
    %v316 = vadd.s32 %v308, 64
    %v317 = vadd.s32 %v308, 72
    %v318 = vadd.s32 %v308, 80
    %v319 = vadd.s32 %v308, 88
    %v320 = vadd.s32 %v308, 96
    %v321 = vadd.s32 %v308, 104
    %v322 = vadd.s32 %v308, 112
    %v323 = vadd.s32 %v308, 120
    %v324 = vstv %s306
    %v325 = vadd.s32 %v324, %v308
    %v326 = vadd.s32 %v324, %v309
    %v327 = vadd.s32 %v324, %v310
    %v328 = vadd.s32 %v324, %v311
    %v329 = vadd.s32 %v324, %v312
    %v330 = vadd.s32 %v324, %v313
    %v331 = vadd.s32 %v324, %v314
    %v332 = vadd.s32 %v324, %v315
    %v333 = vadd.s32 %v324, %v316
    %v334 = vadd.s32 %v324, %v317
    %v335 = vadd.s32 %v324, %v318
    %v336 = vadd.s32 %v324, %v319
    %v337 = vadd.s32 %v324, %v320
    %v338 = vadd.s32 %v324, %v321
    %v339 = vadd.s32 %v324, %v322
    %v340 = vadd.s32 %v324, %v323
    %vm341 = vcmp.lt.s32.totalorder %v325, 128
    %vm342 = vcmp.lt.s32.totalorder %v326, 128
    %vm343 = vcmp.lt.s32.totalorder %v327, 128
    %vm344 = vcmp.lt.s32.totalorder %v328, 128
    %vm345 = vcmp.lt.s32.totalorder %v329, 128
    %vm346 = vcmp.lt.s32.totalorder %v330, 128
    %vm347 = vcmp.lt.s32.totalorder %v331, 128
    %vm348 = vcmp.lt.s32.totalorder %v332, 128
    %vm349 = vcmp.lt.s32.totalorder %v333, 128
    %vm350 = vcmp.lt.s32.totalorder %v334, 128
    %vm351 = vcmp.lt.s32.totalorder %v335, 128
    %vm352 = vcmp.lt.s32.totalorder %v336, 128
    %vm353 = vcmp.lt.s32.totalorder %v337, 128
    %vm354 = vcmp.lt.s32.totalorder %v338, 128
    %vm355 = vcmp.lt.s32.totalorder %v339, 128
    %vm356 = vcmp.lt.s32.totalorder %v340, 128
    %v357 = vsel %vm341, 1, 0
    %v358 = vsel %vm342, 1, 0
    %v359 = vsel %vm343, 1, 0
    %v360 = vsel %vm344, 1, 0
    %v361 = vsel %vm345, 1, 0
    %v362 = vsel %vm346, 1, 0
    %v363 = vsel %vm347, 1, 0
    %v364 = vsel %vm348, 1, 0
    %v365 = vsel %vm349, 1, 0
    %v366 = vsel %vm350, 1, 0
    %v367 = vsel %vm351, 1, 0
    %v368 = vsel %vm352, 1, 0
    %v369 = vsel %vm353, 1, 0
    %v370 = vsel %vm354, 1, 0
    %v371 = vsel %vm355, 1, 0
    %v372 = vsel %vm356, 1, 0
    %vm373 = vcmp.eq.s32.totalorder %v357, 1
    %vm374 = vcmp.eq.s32.totalorder %v358, 1
    %vm375 = vcmp.eq.s32.totalorder %v359, 1
    %vm376 = vcmp.eq.s32.totalorder %v360, 1
    %vm377 = vcmp.eq.s32.totalorder %v361, 1
    %vm378 = vcmp.eq.s32.totalorder %v362, 1
    %vm379 = vcmp.eq.s32.totalorder %v363, 1
    %vm380 = vcmp.eq.s32.totalorder %v364, 1
    %vm381 = vcmp.eq.s32.totalorder %v365, 1
    %vm382 = vcmp.eq.s32.totalorder %v366, 1
    %vm383 = vcmp.eq.s32.totalorder %v367, 1
    %vm384 = vcmp.eq.s32.totalorder %v368, 1
    %vm385 = vcmp.eq.s32.totalorder %v369, 1
    %vm386 = vcmp.eq.s32.totalorder %v370, 1
    %vm387 = vcmp.eq.s32.totalorder %v371, 1
    %vm388 = vcmp.eq.s32.totalorder %v372, 1
    %v389 = vsel %vm373, %v123, 0.0
    %v390 = vsel %vm374, %v128, 0.0
    %v391 = vsel %vm375, %v133, 0.0
    %v392 = vsel %vm376, %v138, 0.0
    %v393 = vsel %vm377, %v143, 0.0
    %v394 = vsel %vm378, %v148, 0.0
    %v395 = vsel %vm379, %v153, 0.0
    %v396 = vsel %vm380, %v158, 0.0
    %v397 = vsel %vm381, %v163, 0.0
    %v398 = vsel %vm382, %v168, 0.0
    %v399 = vsel %vm383, %v173, 0.0
    %v400 = vsel %vm384, %v178, 0.0
    %v401 = vsel %vm385, %v183, 0.0
    %v402 = vsel %vm386, %v188, 0.0
    %v403 = vsel %vm387, %v193, 0.0
    %v404 = vsel %vm388, %v198, 0.0
    %v405 = vsel %vm201, %v389, 0.0
    %v406 = vsel %vm201, %v390, 0.0
    %v407 = vadd.f32 %v405, %v406
    %v408 = vsel %vm201, %v391, 0.0
    %v409 = vadd.f32 %v407, %v408
    %v410 = vsel %vm201, %v392, 0.0
    %v411 = vadd.f32 %v409, %v410
    %v412 = vsel %vm201, %v393, 0.0
    %v413 = vadd.f32 %v411, %v412
    %v414 = vsel %vm201, %v394, 0.0
    %v415 = vadd.f32 %v413, %v414
    %v416 = vsel %vm201, %v395, 0.0
    %v417 = vadd.f32 %v415, %v416
    %v418 = vsel %vm201, %v396, 0.0
    %v419 = vadd.f32 %v417, %v418
    %v420 = vsel %vm201, %v397, 0.0
    %v421 = vadd.f32 %v419, %v420
    %v422 = vsel %vm201, %v398, 0.0
    %v423 = vadd.f32 %v421, %v422
    %v424 = vsel %vm201, %v399, 0.0
    %v425 = vadd.f32 %v423, %v424
    %v426 = vsel %vm201, %v400, 0.0
    %v427 = vadd.f32 %v425, %v426
    %v428 = vsel %vm201, %v401, 0.0
    %v429 = vadd.f32 %v427, %v428
    %v430 = vsel %vm201, %v402, 0.0
    %v431 = vadd.f32 %v429, %v430
    %v432 = vsel %vm201, %v403, 0.0
    %v433 = vadd.f32 %v431, %v432
    %v434 = vsel %vm201, %v404, 0.0
    %v435 = vadd.f32 %v433, %v434
    %436 = vst.msk [vmem:[%s4] sm:$0xff] %vm201, %v435
    %v437 = vmul.f32 %v389, %v389
    %v438 = vmul.f32 %v390, %v390
    %v439 = vmul.f32 %v391, %v391
    %v440 = vmul.f32 %v392, %v392
    %v441 = vmul.f32 %v393, %v393
    %v442 = vmul.f32 %v394, %v394
    %v443 = vmul.f32 %v395, %v395
    %v444 = vmul.f32 %v396, %v396
    %v445 = vmul.f32 %v397, %v397
    %v446 = vmul.f32 %v398, %v398
    %v447 = vmul.f32 %v399, %v399
    %v448 = vmul.f32 %v400, %v400
    %v449 = vmul.f32 %v401, %v401
    %v450 = vmul.f32 %v402, %v402
    %v451 = vmul.f32 %v403, %v403
    %v452 = vmul.f32 %v404, %v404
    %v453 = vsel %vm201, %v437, 0.0
    %v454 = vsel %vm201, %v438, 0.0
    %v455 = vadd.f32 %v453, %v454
    %v456 = vsel %vm201, %v439, 0.0
    %v457 = vadd.f32 %v455, %v456
    %v458 = vsel %vm201, %v440, 0.0
    %v459 = vadd.f32 %v457, %v458
    %v460 = vsel %vm201, %v441, 0.0
    %v461 = vadd.f32 %v459, %v460
    %v462 = vsel %vm201, %v442, 0.0
    %v463 = vadd.f32 %v461, %v462
    %v464 = vsel %vm201, %v443, 0.0
    %v465 = vadd.f32 %v463, %v464
    %v466 = vsel %vm201, %v444, 0.0
    %v467 = vadd.f32 %v465, %v466
    %v468 = vsel %vm201, %v445, 0.0
    %v469 = vadd.f32 %v467, %v468
    %v470 = vsel %vm201, %v446, 0.0
    %v471 = vadd.f32 %v469, %v470
    %v472 = vsel %vm201, %v447, 0.0
    %v473 = vadd.f32 %v471, %v472
    %v474 = vsel %vm201, %v448, 0.0
    %v475 = vadd.f32 %v473, %v474
    %v476 = vsel %vm201, %v449, 0.0
    %v477 = vadd.f32 %v475, %v476
    %v478 = vsel %vm201, %v450, 0.0
    %v479 = vadd.f32 %v477, %v478
    %v480 = vsel %vm201, %v451, 0.0
    %v481 = vadd.f32 %v479, %v480
    %v482 = vsel %vm201, %v452, 0.0
    %v483 = vadd.f32 %v481, %v482
    %484 = vst.msk [vmem:[%s5] sm:$0xff] %vm201, %v483
  $region21: #{vae_forward.13} parent=0 // pred_fallthru
    _
  // Predicated region
  $region22: #{vae_forward.13} parent=0 // pred_check
    _
  $region23: #{vae_forward.13} parent=0 // pred_check_branch
    %486 = sbr.rel (0) target = $region25
  $region24: #{vae_forward.13} parent=0 // pred_region
    _
  $region25: #{vae_forward.13} parent=0 // pred_fallthru
    _
  // Predicated region
  $region26: #{vae_forward.13} parent=0 // pred_check
    _
  $region27: #{vae_forward.13} parent=0 // pred_check_branch
    %488 = sbr.rel (0) target = $region29
  $region28: #{vae_forward.13} parent=0 // pred_region
    _
  $region29: #{vae_forward.13} parent=0 // pred_fallthru
    _
  // Predicated region
  $region30: #{vae_forward.13} parent=0 // pred_check
    _
  $region31: #{vae_forward.13} parent=0 // pred_check_branch
    %490 = sbr.rel (0) target = $region33
  $region32: #{vae_forward.13} parent=0 // pred_region
    _
  $region33: #{vae_forward.13} parent=0 // pred_fallthru
    _
  // Predicated region
  $region34: #{vae_forward.13} parent=0 // pred_check
    _
  $region35: #{vae_forward.13} parent=0 // pred_check_branch
    %492 = sbr.rel (0) target = $region37
  $region36: #{vae_forward.13} parent=0 // pred_region
    _
  $region37: #{vae_forward.13} parent=0 // pred_fallthru
    _
  // Predicated region
  $region38: #{vae_forward.13} parent=0 // pred_check
    _
  $region39: #{vae_forward.13} parent=0 // pred_check_branch
    %494 = sbr.rel (0) target = $region41
  $region40: #{vae_forward.13} parent=0 // pred_region
    _
  $region41: #{vae_forward.13} parent=0 // pred_fallthru
    _
  // Predicated region
  $region42: #{vae_forward.13} parent=0 // pred_check
    _
  $region43: #{vae_forward.13} parent=0 // pred_check_branch
    %496 = sbr.rel (0) target = $region45
  $region44: #{vae_forward.13} parent=0 // pred_region
    _
  $region45: #{vae_forward.13} parent=0 // pred_fallthru
    _

// kernel: vae_forward.16
$region0: #{vae_forward.16}
  #allocation0 [shape = 'u32[]', space=smem, size = 0x4, offset = 0x4, fixed_abs, tag = 'smem constant byte address 0x4 - core index']
  #allocation1 [shape = 'u32[144,128]{1,0:T(1,128)}', space=vmem, size = 0x12000, scoped, tag = 'internal scratch']
  %s0 = inlined_call_operand.vmem [shape: f32[32,32], index: 0, kind: input, shape index: {}, may-alias: {0,5}]
  %s1 = inlined_call_operand.vmem [shape: f32[1,32], index: 1, kind: input, shape index: {}]
  %s2 = inlined_call_operand.vmem [shape: f32[1,32], index: 2, kind: input, shape index: {}]
  %s3 = inlined_call_operand.vmem [shape: f32[1,32], index: 3, kind: input, shape index: {}]
  %s4 = inlined_call_operand.vmem [shape: f32[1,32], index: 4, kind: input, shape index: {}]
  %s5 = inlined_call_operand.vmem [shape: f32[32,32], index: 5, kind: output, shape index: {}, may-alias: {0,5}]
  %s6 = sld [smem:[#allocation0]]
  $region30: #{vae_forward.16} parent=0
    _
  %s8 = ssub.s32 1, %s6
  %s9 = scalar_select 0, %s8, %s6
  // Predicated region
  $region2: #{vae_forward.16} parent=0 // pred_check
    _
  $region3: #{vae_forward.16} parent=0 // pred_check_branch
    %11 = sbr.rel (0) target = $region5
  $region4: #{vae_forward.16} parent=0 // pred_region
    _
  $region5: #{vae_forward.16} parent=0 // pred_fallthru
    _
  // Predicated region
  $region6: #{vae_forward.16} parent=0 // pred_check
    _
  $region7: #{vae_forward.16} parent=0 // pred_check_branch
    %13 = sbr.rel (0) target = $region9
  $region8: #{vae_forward.16} parent=0 // pred_region
    _
  $region9: #{vae_forward.16} parent=0 // pred_fallthru
    _
  // Predicated region
  $region10: #{vae_forward.16} parent=0 // pred_check
    _
  $region11: #{vae_forward.16} parent=0 // pred_check_branch
    %15 = sbr.rel (0) target = $region13
  $region12: #{vae_forward.16} parent=0 // pred_region
    _
  $region13: #{vae_forward.16} parent=0 // pred_fallthru
    _
  // Predicated region
  $region14: #{vae_forward.16} parent=0 // pred_check
    _
  $region15: #{vae_forward.16} parent=0 // pred_check_branch
    %17 = sbr.rel (0) target = $region17
  $region16: #{vae_forward.16} parent=0 // pred_region
    _
  $region17: #{vae_forward.16} parent=0 // pred_fallthru
    _
  // Predicated region
  $region18: #{vae_forward.16} parent=0 // pred_check
    _
  $region19: #{vae_forward.16} parent=0 // pred_check_branch
    %19 = sbr.rel (0) target = $region21
  $region20: #{vae_forward.16} parent=0 // pred_region
    _
  $region21: #{vae_forward.16} parent=0 // pred_fallthru
    _
  %v20 = vld [vmem:[%s1] sm:$0x1]
  %v21 = vmul.f32 %v20, 0.03125
  %v22 = vld [vmem:[%s2] sm:$0x1]
  %v23 = vmul.f32 %v22, 0.03125
  %v24 = vmul.f32 %v21, %v21
  %v25 = vsub.f32 %v23, %v24
  %v26 = vmax.f32 %v25, 0.0
  %v27 = vld [vmem:[%s0] sm:$0xff]
  %v28 = vld [vmem:[%s0 + $0x8] sm:$0xff]
  %v29 = vld [vmem:[%s0 + $0x10] sm:$0xff]
  %v30 = vld [vmem:[%s0 + $0x18] sm:$0xff]
  %v32 = vlaneseq
  %v33 = vshrl.u32 %v32, 7
  %v34 = vsub.s32 0, %v33
  %v35 = vrot.slane %v21, %v34
  %v37 = vsub.f32 %v27, %v35
  %v38 = vsub.f32 %v28, %v35
  %v39 = vsub.f32 %v29, %v35
  %v40 = vsub.f32 %v30, %v35
  %v41 = vadd.f32 %v26, 1e-05
  %v42 = vrsqrt.pop %v41
  %v44 = vlaneseq
  %v45 = vshrl.u32 %v44, 7
  %v46 = vsub.s32 0, %v45
  %v47 = vrot.slane %v42, %v46
  %v49 = vmul.f32 %v37, %v47
  %v50 = vmul.f32 %v38, %v47
  %v51 = vmul.f32 %v39, %v47
  %v52 = vmul.f32 %v40, %v47
  %v53 = vld [vmem:[%s3] sm:$0x1]
  %v55 = vlaneseq
  %v56 = vshrl.u32 %v55, 7
  %v57 = vsub.s32 0, %v56
  %v58 = vrot.slane %v53, %v57
  %v60 = vmul.f32 %v49, %v58
  %v61 = vmul.f32 %v50, %v58
  %v62 = vmul.f32 %v51, %v58
  %v63 = vmul.f32 %v52, %v58
  %v64 = vld [vmem:[%s4] sm:$0x1]
  %v66 = vlaneseq
  %v67 = vshrl.u32 %v66, 7
  %v68 = vsub.s32 0, %v67
  %v69 = vrot.slane %v64, %v68
  %v71 = vadd.f32 %v60, %v69
  %v72 = vadd.f32 %v61, %v69
  %v73 = vadd.f32 %v62, %v69
  %v74 = vadd.f32 %v63, %v69
  %vm75 = vcmp.ge.f32.partialorder %v71, 0.0
  %vm76 = vcmp.ge.f32.partialorder %v72, 0.0
  %vm77 = vcmp.ge.f32.partialorder %v73, 0.0
  %vm78 = vcmp.ge.f32.partialorder %v74, 0.0
  %v79 = vmul.f32 %v71, 0.2
  %v80 = vmul.f32 %v72, 0.2
  %v81 = vmul.f32 %v73, 0.2
  %v82 = vmul.f32 %v74, 0.2
  %v83 = vsel %vm75, %v71, %v79
  %v84 = vsel %vm76, %v72, %v80
  %v85 = vsel %vm77, %v73, %v81
  %v86 = vsel %vm78, %v74, %v82
  %vm87 = vcmask 261120
  %88 = vst.msk [vmem:[%s5] sm:$0xff] %vm87, %v83
  %89 = vst.msk [vmem:[%s5 + $0x8] sm:$0xff] %vm87, %v84
  %90 = vst.msk [vmem:[%s5 + $0x10] sm:$0xff] %vm87, %v85
  %91 = vst.msk [vmem:[%s5 + $0x18] sm:$0xff] %vm87, %v86
  // Predicated region
  $region22: #{vae_forward.16} parent=0 // pred_check
    _
  $region23: #{vae_forward.16} parent=0 // pred_check_branch
    %93 = sbr.rel (0) target = $region25
  $region24: #{vae_forward.16} parent=0 // pred_region
    _
  $region25: #{vae_forward.16} parent=0 // pred_fallthru
    _
  // Predicated region
  $region26: #{vae_forward.16} parent=0 // pred_check
    _
  $region27: #{vae_forward.16} parent=0 // pred_check_branch
    %95 = sbr.rel (0) target = $region29
  $region28: #{vae_forward.16} parent=0 // pred_region
    _
  $region29: #{vae_forward.16} parent=0 // pred_fallthru
    _

// kernel: vae_forward.15
$region0: #{vae_forward.15}
  #allocation0 [shape = 'u32[]', space=smem, size = 0x4, offset = 0x4, fixed_abs, tag = 'smem constant byte address 0x4 - core index']
  #allocation1 [shape = 'u32[144,128]{1,0:T(1,128)}', space=vmem, size = 0x12000, scoped, tag = 'internal scratch']
  %s0 = inlined_call_operand.vmem [shape: f32[32,256], index: 0, kind: input, shape index: {}]
  %s1 = inlined_call_operand.vmem [shape: f32[256,32], index: 1, kind: input, shape index: {}]
  %s2 = inlined_call_operand.vmem [shape: f32[1,32], index: 2, kind: input, shape index: {}]
  %s3 = inlined_call_operand.vmem [shape: f32[32,32], index: 3, kind: output, shape index: {0}]
  %s4 = inlined_call_operand.vmem [shape: f32[8,32], index: 4, kind: output, shape index: {1}]
  %s5 = inlined_call_operand.vmem [shape: f32[8,32], index: 5, kind: output, shape index: {2}]
  %6 = xla_tuple %s3, %s4, %s5
  %s7 = sld [smem:[#allocation0]]
  $region46: #{vae_forward.15} parent=0
    _
  %s9 = ssub.s32 1, %s7
  %s10 = scalar_select 0, %s9, %s7
  // Predicated region
  $region2: #{vae_forward.15} parent=0 // pred_check
    _
  $region3: #{vae_forward.15} parent=0 // pred_check_branch
    %12 = sbr.rel (0) target = $region5
  $region4: #{vae_forward.15} parent=0 // pred_region
    _
  $region5: #{vae_forward.15} parent=0 // pred_fallthru
    _
  // Predicated region
  $region6: #{vae_forward.15} parent=0 // pred_check
    _
  $region7: #{vae_forward.15} parent=0 // pred_check_branch
    %14 = sbr.rel (0) target = $region9
  $region8: #{vae_forward.15} parent=0 // pred_region
    _
  $region9: #{vae_forward.15} parent=0 // pred_fallthru
    _
  // Predicated region
  $region10: #{vae_forward.15} parent=0 // pred_check
    _
  $region11: #{vae_forward.15} parent=0 // pred_check_branch
    %16 = sbr.rel (0) target = $region13
  $region12: #{vae_forward.15} parent=0 // pred_region
    _
  $region13: #{vae_forward.15} parent=0 // pred_fallthru
    _
  %v17 = vld [vmem:[%s0] sm:$0xff]
  %v18 = vld [vmem:[%s0 + $0x8] sm:$0xff]
  %v19 = vld [vmem:[%s0 + $0x10] sm:$0xff]
  %v20 = vld [vmem:[%s0 + $0x18] sm:$0xff]
  %v21 = vld [vmem:[%s0 + $0x20] sm:$0xff]
  %v22 = vld [vmem:[%s0 + $0x28] sm:$0xff]
  %v23 = vld [vmem:[%s0 + $0x30] sm:$0xff]
  %v24 = vld [vmem:[%s0 + $0x38] sm:$0xff]
  %v25 = vld [vmem:[%s1] sm:$0xff]
  %v26 = vld [vmem:[%s1 + $0x8] sm:$0xff]
  %v27 = vld [vmem:[%s1 + $0x10] sm:$0xff]
  %v28 = vld [vmem:[%s1 + $0x18] sm:$0xff]
  %v29 = vld [vmem:[%s1 + $0x20] sm:$0xff]
  %v30 = vld [vmem:[%s1 + $0x28] sm:$0xff]
  %v31 = vld [vmem:[%s1 + $0x30] sm:$0xff]
  %v32 = vld [vmem:[%s1 + $0x38] sm:$0xff]
  %v33 = vld [vmem:[%s1 + $0x40] sm:$0xff]
  %v34 = vld [vmem:[%s1 + $0x48] sm:$0xff]
  %v35 = vld [vmem:[%s1 + $0x50] sm:$0xff]
  %v36 = vld [vmem:[%s1 + $0x58] sm:$0xff]
  %v37 = vld [vmem:[%s1 + $0x60] sm:$0xff]
  %v38 = vld [vmem:[%s1 + $0x68] sm:$0xff]
  %v39 = vld [vmem:[%s1 + $0x70] sm:$0xff]
  %v40 = vld [vmem:[%s1 + $0x78] sm:$0xff]
  %v41 = vld [vmem:[%s1 + $0x80] sm:$0xff]
  %v42 = vld [vmem:[%s1 + $0x88] sm:$0xff]
  %v43 = vld [vmem:[%s1 + $0x90] sm:$0xff]
  %v44 = vld [vmem:[%s1 + $0x98] sm:$0xff]
  %v45 = vld [vmem:[%s1 + $0xa0] sm:$0xff]
  %v46 = vld [vmem:[%s1 + $0xa8] sm:$0xff]
  %v47 = vld [vmem:[%s1 + $0xb0] sm:$0xff]
  %v48 = vld [vmem:[%s1 + $0xb8] sm:$0xff]
  %v49 = vld [vmem:[%s1 + $0xc0] sm:$0xff]
  %v50 = vld [vmem:[%s1 + $0xc8] sm:$0xff]
  %v51 = vld [vmem:[%s1 + $0xd0] sm:$0xff]
  %v52 = vld [vmem:[%s1 + $0xd8] sm:$0xff]
  %v53 = vld [vmem:[%s1 + $0xe0] sm:$0xff]
  %v54 = vld [vmem:[%s1 + $0xe8] sm:$0xff]
  %v55 = vld [vmem:[%s1 + $0xf0] sm:$0xff]
  %v56 = vld [vmem:[%s1 + $0xf8] sm:$0xff]
  %v57 = vld [vmem:[%s2] sm:$0x1]
  %v59 = vlaneseq
  %v60 = vshrl.u32 %v59, 7
  %v61 = vsub.s32 0, %v60
  %v62 = vrot.slane %v57, %v61
  %64 = vmatprep.subr.mxu0 0.0
  %65 = vmatpush1.msra.mxu0 %v25
  %66 = vmatprep.subr.mxu0 0.0
  %67 = vmatpush1.msra.mxu0 %v26
  %68 = vmatprep.subr.mxu0 0.0
  %69 = vmatpush1.msra.mxu0 %v27
  %70 = vmatprep.subr.mxu0 0.0
  %71 = vmatpush1.msra.mxu0 %v28
  %72 = vmatprep.subr.mxu0 0.0
  %73 = vmatpush1.msra.mxu0 %v29
  %74 = vmatprep.subr.mxu0 0.0
  %75 = vmatpush1.msra.mxu0 %v30
  %76 = vmatprep.subr.mxu0 0.0
  %77 = vmatpush1.msra.mxu0 %v31
  %78 = vmatprep.subr.mxu0 0.0
  %79 = vmatpush1.msra.mxu0 %v32
  %80 = vmatprep.subr.mxu0 0.0
  %81 = vmatpush1.msra.mxu0 %v33
  %82 = vmatprep.subr.mxu0 0.0
  %83 = vmatpush1.msra.mxu0 %v34
  %84 = vmatprep.subr.mxu0 0.0
  %85 = vmatpush1.msra.mxu0 %v35
  %86 = vmatprep.subr.mxu0 0.0
  %87 = vmatpush1.msra.mxu0 %v36
  %88 = vmatprep.subr.mxu0 0.0
  %89 = vmatpush1.msra.mxu0 %v37
  %90 = vmatprep.subr.mxu0 0.0
  %91 = vmatpush1.msra.mxu0 %v38
  %92 = vmatprep.subr.mxu0 0.0
  %93 = vmatpush1.msra.mxu0 %v39
  %94 = vmatprep.subr.mxu0 0.0
  %95 = vmatpush1.msra.mxu0 %v40
  %96 = vmatprep.subr.mxu0 0.0
  %97 = vmatpush1.msra.mxu0 %v41
  %98 = vmatprep.subr.mxu0 0.0
  %99 = vmatpush1.msra.mxu0 %v42
  %100 = vmatprep.subr.mxu0 0.0
  %101 = vmatpush1.msra.mxu0 %v43
  %102 = vmatprep.subr.mxu0 0.0
  %103 = vmatpush1.msra.mxu0 %v44
  %104 = vmatprep.subr.mxu0 0.0
  %105 = vmatpush1.msra.mxu0 %v45
  %106 = vmatprep.subr.mxu0 0.0
  %107 = vmatpush1.msra.mxu0 %v46
  %108 = vmatprep.subr.mxu0 0.0
  %109 = vmatpush1.msra.mxu0 %v47
  %110 = vmatprep.subr.mxu0 0.0
  %111 = vmatpush1.msra.mxu0 %v48
  %112 = vmatprep.subr.mxu0 0.0
  %113 = vmatpush1.msra.mxu0 %v49
  %114 = vmatprep.subr.mxu0 0.0
  %115 = vmatpush1.msra.mxu0 %v50
  %116 = vmatprep.subr.mxu0 0.0
  %117 = vmatpush1.msra.mxu0 %v51
  %118 = vmatprep.subr.mxu0 0.0
  %119 = vmatpush1.msra.mxu0 %v52
  %120 = vmatprep.subr.mxu0 0.0
  %121 = vmatpush1.msra.mxu0 %v53
  %122 = vmatprep.subr.mxu0 0.0
  %123 = vmatpush1.msra.mxu0 %v54
  %124 = vmatprep.subr.mxu0 0.0
  %125 = vmatpush1.msra.mxu0 %v55
  %126 = vmatprep.subr.mxu0 0.0
  %127 = vmatpush1.msra.mxu0 %v56
  %128 = vmatprep.mubr.f32.mxu0 %v18
  %129 = vmatmul.mubr.f32.gmra.mrb[0].mxu0 %v17
  %v130 = vpop.f32.mrb[0].mxu0
  %v131 = vadd.f32 %v62, %v130
  %v132 = vpop.f32.mrb[0].mxu0
  %133 = vmatprep.mubr.f32.mxu0 %v20
  %134 = vmatmul.mubr.f32.gmra.mrb[0].mxu0 %v19
  %v135 = vpop.f32.mrb[0].mxu0
  %v136 = vadd.f32 %v62, %v135
  %v137 = vpop.f32.mrb[0].mxu0
  %138 = vmatprep.mubr.f32.mxu0 %v22
  %139 = vmatmul.mubr.f32.gmra.mrb[0].mxu0 %v21
  %v140 = vpop.f32.mrb[0].mxu0
  %v141 = vadd.f32 %v62, %v140
  %v142 = vpop.f32.mrb[0].mxu0
  %143 = vmatprep.mubr.f32.mxu0 %v24
  %144 = vmatmul.mubr.f32.gmra.mrb[0].mxu0 %v23
  %v145 = vpop.f32.mrb[0].mxu0
  %v146 = vadd.f32 %v62, %v145
  %v147 = vpop.f32.mrb[0].mxu0
  %148 = vdwg.mxu0
  %vm149 = vcmask 261120
  %150 = vst.msk [vmem:[%s3] sm:$0xff] %vm149, %v131
  %151 = vst.msk [vmem:[%s3 + $0x8] sm:$0xff] %vm149, %v136
  %152 = vst.msk [vmem:[%s3 + $0x10] sm:$0xff] %vm149, %v141
  %153 = vst.msk [vmem:[%s3 + $0x18] sm:$0xff] %vm149, %v146
  %p154 = scmp.lt.s32.totalorder 0, 0
  // Predicated region
  $region14: #{vae_forward.15} parent=0 // pred_check
    %p155 = pneg %p154
  $region15: #{vae_forward.15} parent=0 // pred_check_branch
    %157 = sbr.rel (%p155) target = $region17
  $region16: #{vae_forward.15} parent=0 // pred_region
    %v158 = vsel %vm149, %v131, 0.0
    %v159 = vsel %vm149, %v136, 0.0
    %v160 = vadd.f32 %v158, %v159
    %v161 = vsel %vm149, %v141, 0.0
    %v162 = vadd.f32 %v160, %v161
    %v163 = vsel %vm149, %v146, 0.0
    %v164 = vadd.f32 %v162, %v163
    %165 = vst.msk [vmem:[%s4] sm:$0xff] %vm149, %v164
    %v166 = vmul.f32 %v131, %v131
    %v167 = vmul.f32 %v136, %v136
    %v168 = vmul.f32 %v141, %v141
    %v169 = vmul.f32 %v146, %v146
    %v170 = vsel %vm149, %v166, 0.0
    %v171 = vsel %vm149, %v167, 0.0
    %v172 = vadd.f32 %v170, %v171
    %v173 = vsel %vm149, %v168, 0.0
    %v174 = vadd.f32 %v172, %v173
    %v175 = vsel %vm149, %v169, 0.0
    %v176 = vadd.f32 %v174, %v175
    %177 = vst.msk [vmem:[%s5] sm:$0xff] %vm149, %v176
  $region17: #{vae_forward.15} parent=0 // pred_fallthru
    _
  %p178 = scmp.eq.s32.totalorder 0, 0
  // Predicated region
  $region18: #{vae_forward.15} parent=0 // pred_check
    %p179 = pneg %p178
  $region19: #{vae_forward.15} parent=0 // pred_check_branch
    %181 = sbr.rel (%p179) target = $region21
  $region20: #{vae_forward.15} parent=0 // pred_region
    %s182 = smul.u32 0, 32
    %v183 = vlaneseq
    %v184 = vshrl.u32 %v183, 7
    %v185 = vadd.s32 %v184, 8
    %v186 = vadd.s32 %v184, 16
    %v187 = vadd.s32 %v184, 24
    %v188 = vstv %s182
    %v189 = vadd.s32 %v188, %v184
    %v190 = vadd.s32 %v188, %v185
    %v191 = vadd.s32 %v188, %v186
    %v192 = vadd.s32 %v188, %v187
    %vm193 = vcmp.lt.s32.totalorder %v189, 32
    %vm194 = vcmp.lt.s32.totalorder %v190, 32
    %vm195 = vcmp.lt.s32.totalorder %v191, 32
    %vm196 = vcmp.lt.s32.totalorder %v192, 32
    %v197 = vsel %vm193, 1, 0
    %v198 = vsel %vm194, 1, 0
    %v199 = vsel %vm195, 1, 0
    %v200 = vsel %vm196, 1, 0
    %vm201 = vcmp.eq.s32.totalorder %v197, 1
    %vm202 = vcmp.eq.s32.totalorder %v198, 1
    %vm203 = vcmp.eq.s32.totalorder %v199, 1
    %vm204 = vcmp.eq.s32.totalorder %v200, 1
    %v205 = vsel %vm201, %v131, 0.0
    %v206 = vsel %vm202, %v136, 0.0
    %v207 = vsel %vm203, %v141, 0.0
    %v208 = vsel %vm204, %v146, 0.0
    %v209 = vsel %vm149, %v205, 0.0
    %v210 = vsel %vm149, %v206, 0.0
    %v211 = vadd.f32 %v209, %v210
    %v212 = vsel %vm149, %v207, 0.0
    %v213 = vadd.f32 %v211, %v212
    %v214 = vsel %vm149, %v208, 0.0
    %v215 = vadd.f32 %v213, %v214
    %216 = vst.msk [vmem:[%s4] sm:$0xff] %vm149, %v215
    %v217 = vmul.f32 %v205, %v205
    %v218 = vmul.f32 %v206, %v206
    %v219 = vmul.f32 %v207, %v207
    %v220 = vmul.f32 %v208, %v208
    %v221 = vsel %vm149, %v217, 0.0
    %v222 = vsel %vm149, %v218, 0.0
    %v223 = vadd.f32 %v221, %v222
    %v224 = vsel %vm149, %v219, 0.0
    %v225 = vadd.f32 %v223, %v224
    %v226 = vsel %vm149, %v220, 0.0
    %v227 = vadd.f32 %v225, %v226
    %228 = vst.msk [vmem:[%s5] sm:$0xff] %vm149, %v227
  $region21: #{vae_forward.15} parent=0 // pred_fallthru
    _
  // Predicated region
  $region22: #{vae_forward.15} parent=0 // pred_check
    _
  $region23: #{vae_forward.15} parent=0 // pred_check_branch
    %230 = sbr.rel (0) target = $region25
  $region24: #{vae_forward.15} parent=0 // pred_region
    _
  $region25: #{vae_forward.15} parent=0 // pred_fallthru
    _
  // Predicated region
  $region26: #{vae_forward.15} parent=0 // pred_check
    _
  $region27: #{vae_forward.15} parent=0 // pred_check_branch
    %232 = sbr.rel (0) target = $region29
  $region28: #{vae_forward.15} parent=0 // pred_region
    _
  $region29: #{vae_forward.15} parent=0 // pred_fallthru
    _
  // Predicated region
  $region30: #{vae_forward.15} parent=0 // pred_check
    _
  $region31: #{vae_forward.15} parent=0 // pred_check_branch
    %234 = sbr.rel (0) target = $region33
  $region32: #{vae_forward.15} parent=0 // pred_region
    _
  $region33: #{vae_forward.15} parent=0 // pred_fallthru
    _
  // Predicated region
  $region34: #{vae_forward.15} parent=0 // pred_check
    _
  $region35: #{vae_forward.15} parent=0 // pred_check_branch
    %236 = sbr.rel (0) target = $region37
  $region36: #{vae_forward.15} parent=0 // pred_region
    _
  $region37: #{vae_forward.15} parent=0 // pred_fallthru
    _
  // Predicated region
  $region38: #{vae_forward.15} parent=0 // pred_check
    _
  $region39: #{vae_forward.15} parent=0 // pred_check_branch
    %238 = sbr.rel (0) target = $region41
  $region40: #{vae_forward.15} parent=0 // pred_region
    _
  $region41: #{vae_forward.15} parent=0 // pred_fallthru
    _
  // Predicated region
  $region42: #{vae_forward.15} parent=0 // pred_check
    _
  $region43: #{vae_forward.15} parent=0 // pred_check_branch
    %240 = sbr.rel (0) target = $region45
  $region44: #{vae_forward.15} parent=0 // pred_region
    _
  $region45: #{vae_forward.15} parent=0 // pred_fallthru
    _

// kernel: vae_forward.17
$region0: #{vae_forward.17}
  #allocation0 [shape = 'u32[]', space=smem, size = 0x4, offset = 0x4, fixed_abs, tag = 'smem constant byte address 0x4 - core index']
  #allocation1 [shape = 'u32[144,128]{1,0:T(1,128)}', space=vmem, size = 0x12000, scoped, tag = 'internal scratch']
  %s0 = inlined_call_operand.vmem [shape: f32[2,512], index: 0, kind: input, shape index: {}]
  %s1 = inlined_call_operand.vmem [shape: f32[2,16], index: 1, kind: input, shape index: {}]
  %s2 = inlined_call_operand.vmem [shape: f32[512,32], index: 2, kind: input, shape index: {}]
  %s3 = inlined_call_operand.vmem [shape: f32[1,32], index: 3, kind: input, shape index: {}]
  %s4 = inlined_call_operand.hbm [shape: f32[2,16], index: 4, kind: output, shape index: {0}]
  %s5 = inlined_call_operand.hbm [shape: f32[2,16], index: 5, kind: output, shape index: {1}]
  %s6 = inlined_call_operand.vmem [shape: f32[2,16], index: 6, kind: output, shape index: {2}]
  %7 = xla_tuple %s4, %s5, %s6
  %s8 = sld [smem:[#allocation0]]
  $region42: #{vae_forward.17} parent=0
    _
  %s10 = ssub.s32 1, %s8
  %s11 = scalar_select 0, %s10, %s8
  $region1: #{vae_forward.17} parent=0
    #allocation2 [shape = 'u8[1024]{0}', space=vmem, size = 0x400, scoped, tag = 'output window, operand 0, single buffered']
    #allocation3 [shape = 's32[1]{0}', space=sflag, size = 0x4, scoped, tag = 'scoped memory for vae_forward.17']
    #allocation4 [shape = 'u8[1024]{0}', space=vmem, size = 0x400, scoped, tag = 'output window, operand 1, single buffered']
    #allocation5 [shape = 's32[1]{0}', space=sflag, size = 0x4, scoped, tag = 'scoped memory for vae_forward.17']
    %12 = vsyncpa [#allocation3], 0
    %13 = vsyncpa [#allocation5], 0
    // Predicated region
    $region2: #{vae_forward.17} parent=1 // pred_check
      _
    $region3: #{vae_forward.17} parent=1 // pred_check_branch
      %15 = sbr.rel (0) target = $region5
    $region4: #{vae_forward.17} parent=1 // pred_region
      _
    $region5: #{vae_forward.17} parent=1 // pred_fallthru
      _
    // Predicated region
    $region6: #{vae_forward.17} parent=1 // pred_check
      _
    $region7: #{vae_forward.17} parent=1 // pred_check_branch
      %17 = sbr.rel (0) target = $region9
    $region8: #{vae_forward.17} parent=1 // pred_region
      _
    $region9: #{vae_forward.17} parent=1 // pred_fallthru
      _
    // Predicated region
    $region10: #{vae_forward.17} parent=1 // pred_check
      _
    $region11: #{vae_forward.17} parent=1 // pred_check_branch
      %19 = sbr.rel (0) target = $region13
    $region12: #{vae_forward.17} parent=1 // pred_region
      _
    $region13: #{vae_forward.17} parent=1 // pred_fallthru
      _
    // Predicated region
    $region14: #{vae_forward.17} parent=1 // pred_check
      _
    $region15: #{vae_forward.17} parent=1 // pred_check_branch
      %21 = sbr.rel (0) target = $region17
    $region16: #{vae_forward.17} parent=1 // pred_region
      _
    $region17: #{vae_forward.17} parent=1 // pred_fallthru
      _
    %v22 = vld [vmem:[%s0] sm:$0xff]
    %v23 = vld [vmem:[%s2] sm:$0xff]
    %v24 = vld [vmem:[%s2 + $0x8] sm:$0xff]
    %v25 = vld [vmem:[%s2 + $0x10] sm:$0xff]
    %v26 = vld [vmem:[%s2 + $0x18] sm:$0xff]
    %v27 = vld [vmem:[%s2 + $0x20] sm:$0xff]
    %v28 = vld [vmem:[%s2 + $0x28] sm:$0xff]
    %v29 = vld [vmem:[%s2 + $0x30] sm:$0xff]
    %v30 = vld [vmem:[%s2 + $0x38] sm:$0xff]
    %v31 = vld [vmem:[%s2 + $0x40] sm:$0xff]
    %v32 = vld [vmem:[%s2 + $0x48] sm:$0xff]
    %v33 = vld [vmem:[%s2 + $0x50] sm:$0xff]
    %v34 = vld [vmem:[%s2 + $0x58] sm:$0xff]
    %v35 = vld [vmem:[%s2 + $0x60] sm:$0xff]
    %v36 = vld [vmem:[%s2 + $0x68] sm:$0xff]
    %v37 = vld [vmem:[%s2 + $0x70] sm:$0xff]
    %v38 = vld [vmem:[%s2 + $0x78] sm:$0xff]
    %v39 = vld [vmem:[%s2 + $0x80] sm:$0xff]
    %v40 = vld [vmem:[%s2 + $0x88] sm:$0xff]
    %v41 = vld [vmem:[%s2 + $0x90] sm:$0xff]
    %v42 = vld [vmem:[%s2 + $0x98] sm:$0xff]
    %v43 = vld [vmem:[%s2 + $0xa0] sm:$0xff]
    %v44 = vld [vmem:[%s2 + $0xa8] sm:$0xff]
    %v45 = vld [vmem:[%s2 + $0xb0] sm:$0xff]
    %v46 = vld [vmem:[%s2 + $0xb8] sm:$0xff]
    %v47 = vld [vmem:[%s2 + $0xc0] sm:$0xff]
    %v48 = vld [vmem:[%s2 + $0xc8] sm:$0xff]
    %v49 = vld [vmem:[%s2 + $0xd0] sm:$0xff]
    %v50 = vld [vmem:[%s2 + $0xd8] sm:$0xff]
    %v51 = vld [vmem:[%s2 + $0xe0] sm:$0xff]
    %v52 = vld [vmem:[%s2 + $0xe8] sm:$0xff]
    %v53 = vld [vmem:[%s2 + $0xf0] sm:$0xff]
    %v54 = vld [vmem:[%s2 + $0xf8] sm:$0xff]
    %v55 = vld [vmem:[%s2 + $0x100] sm:$0xff]
    %v56 = vld [vmem:[%s2 + $0x108] sm:$0xff]
    %v57 = vld [vmem:[%s2 + $0x110] sm:$0xff]
    %v58 = vld [vmem:[%s2 + $0x118] sm:$0xff]
    %v59 = vld [vmem:[%s2 + $0x120] sm:$0xff]
    %v60 = vld [vmem:[%s2 + $0x128] sm:$0xff]
    %v61 = vld [vmem:[%s2 + $0x130] sm:$0xff]
    %v62 = vld [vmem:[%s2 + $0x138] sm:$0xff]
    %v63 = vld [vmem:[%s2 + $0x140] sm:$0xff]
    %v64 = vld [vmem:[%s2 + $0x148] sm:$0xff]
    %v65 = vld [vmem:[%s2 + $0x150] sm:$0xff]
    %v66 = vld [vmem:[%s2 + $0x158] sm:$0xff]
    %v67 = vld [vmem:[%s2 + $0x160] sm:$0xff]
    %v68 = vld [vmem:[%s2 + $0x168] sm:$0xff]
    %v69 = vld [vmem:[%s2 + $0x170] sm:$0xff]
    %v70 = vld [vmem:[%s2 + $0x178] sm:$0xff]
    %v71 = vld [vmem:[%s2 + $0x180] sm:$0xff]
    %v72 = vld [vmem:[%s2 + $0x188] sm:$0xff]
    %v73 = vld [vmem:[%s2 + $0x190] sm:$0xff]
    %v74 = vld [vmem:[%s2 + $0x198] sm:$0xff]
    %v75 = vld [vmem:[%s2 + $0x1a0] sm:$0xff]
    %v76 = vld [vmem:[%s2 + $0x1a8] sm:$0xff]
    %v77 = vld [vmem:[%s2 + $0x1b0] sm:$0xff]
    %v78 = vld [vmem:[%s2 + $0x1b8] sm:$0xff]
    %v79 = vld [vmem:[%s2 + $0x1c0] sm:$0xff]
    %v80 = vld [vmem:[%s2 + $0x1c8] sm:$0xff]
    %v81 = vld [vmem:[%s2 + $0x1d0] sm:$0xff]
    %v82 = vld [vmem:[%s2 + $0x1d8] sm:$0xff]
    %v83 = vld [vmem:[%s2 + $0x1e0] sm:$0xff]
    %v84 = vld [vmem:[%s2 + $0x1e8] sm:$0xff]
    %v85 = vld [vmem:[%s2 + $0x1f0] sm:$0xff]
    %v86 = vld [vmem:[%s2 + $0x1f8] sm:$0xff]
    %v87 = vld [vmem:[%s3] sm:$0x1]
    %v89 = vlaneseq
    %v90 = vshrl.u32 %v89, 7
    %v91 = vsub.s32 0, %v90
    %v92 = vrot.slane %v87, %v91
    %v95 = vcombine.high %v22, %v22
    %v97 = vunpack.c.l.s4 1983009808
    %v98 = vunpack.c.0.s8 %v97
    %v99 = vlaneseq
    %v100 = vshrl.u32 %v99, 7
    %v101 = vsub.s32 %v98, %v100
    %v102 = vrot.slane %v22, %v101
    %v104 = vunpack.c.l.s4 1983009808
    %v105 = vunpack.c.0.s8 %v104
    %v106 = vlaneseq
    %v107 = vshrl.u32 %v106, 7
    %v108 = vsub.s32 %v105, %v107
    %v109 = vrot.slane %v95, %v108
    %v110 = vcombine.high %v102, %v102
    %v111 = vcombine.high %v109, %v109
    %116 = vmatprep.subr.mxu0 0.0
    %117 = vmatpush1.msra.mxu0 %v23
    %118 = vmatprep.subr.mxu0 0.0
    %119 = vmatpush1.msra.mxu0 %v24
    %120 = vmatprep.subr.mxu0 0.0
    %121 = vmatpush1.msra.mxu0 %v25
    %122 = vmatprep.subr.mxu0 0.0
    %123 = vmatpush1.msra.mxu0 %v26
    %124 = vmatprep.subr.mxu0 0.0
    %125 = vmatpush1.msra.mxu0 %v27
    %126 = vmatprep.subr.mxu0 0.0
    %127 = vmatpush1.msra.mxu0 %v28
    %128 = vmatprep.subr.mxu0 0.0
    %129 = vmatpush1.msra.mxu0 %v29
    %130 = vmatprep.subr.mxu0 0.0
    %131 = vmatpush1.msra.mxu0 %v30
    %132 = vmatprep.subr.mxu0 0.0
    %133 = vmatpush1.msra.mxu0 %v31
    %134 = vmatprep.subr.mxu0 0.0
    %135 = vmatpush1.msra.mxu0 %v32
    %136 = vmatprep.subr.mxu0 0.0
    %137 = vmatpush1.msra.mxu0 %v33
    %138 = vmatprep.subr.mxu0 0.0
    %139 = vmatpush1.msra.mxu0 %v34
    %140 = vmatprep.subr.mxu0 0.0
    %141 = vmatpush1.msra.mxu0 %v35
    %142 = vmatprep.subr.mxu0 0.0
    %143 = vmatpush1.msra.mxu0 %v36
    %144 = vmatprep.subr.mxu0 0.0
    %145 = vmatpush1.msra.mxu0 %v37
    %146 = vmatprep.subr.mxu0 0.0
    %147 = vmatpush1.msra.mxu0 %v38
    %148 = vmatprep.subr.mxu0 0.0
    %149 = vmatpush1.msra.mxu0 %v39
    %150 = vmatprep.subr.mxu0 0.0
    %151 = vmatpush1.msra.mxu0 %v40
    %152 = vmatprep.subr.mxu0 0.0
    %153 = vmatpush1.msra.mxu0 %v41
    %154 = vmatprep.subr.mxu0 0.0
    %155 = vmatpush1.msra.mxu0 %v42
    %156 = vmatprep.subr.mxu0 0.0
    %157 = vmatpush1.msra.mxu0 %v43
    %158 = vmatprep.subr.mxu0 0.0
    %159 = vmatpush1.msra.mxu0 %v44
    %160 = vmatprep.subr.mxu0 0.0
    %161 = vmatpush1.msra.mxu0 %v45
    %162 = vmatprep.subr.mxu0 0.0
    %163 = vmatpush1.msra.mxu0 %v46
    %164 = vmatprep.subr.mxu0 0.0
    %165 = vmatpush1.msra.mxu0 %v47
    %166 = vmatprep.subr.mxu0 0.0
    %167 = vmatpush1.msra.mxu0 %v48
    %168 = vmatprep.subr.mxu0 0.0
    %169 = vmatpush1.msra.mxu0 %v49
    %170 = vmatprep.subr.mxu0 0.0
    %171 = vmatpush1.msra.mxu0 %v50
    %172 = vmatprep.subr.mxu0 0.0
    %173 = vmatpush1.msra.mxu0 %v51
    %174 = vmatprep.subr.mxu0 0.0
    %175 = vmatpush1.msra.mxu0 %v52
    %176 = vmatprep.subr.mxu0 0.0
    %177 = vmatpush1.msra.mxu0 %v53
    %178 = vmatprep.subr.mxu0 0.0
    %179 = vmatpush1.msra.mxu0 %v54
    %180 = vmatprep.mubr.f32.mxu0 %v110
    %181 = vmatmul.mubr.f32.gmra.mrb[0].mxu0 %v102
    %v182 = vpop.f32.mrb[0].mxu0
    %v183 = vadd.f32 %v92, %v182
    %v184 = vpop.f32.mrb[0].mxu0
    %185 = vdwg.mxu0
    %186 = vmatprep.subr.mxu0 0.0
    %187 = vmatpush1.msra.mxu0 %v55
    %188 = vmatprep.subr.mxu0 0.0
    %189 = vmatpush1.msra.mxu0 %v56
    %190 = vmatprep.subr.mxu0 0.0
    %191 = vmatpush1.msra.mxu0 %v57
    %192 = vmatprep.subr.mxu0 0.0
    %193 = vmatpush1.msra.mxu0 %v58
    %194 = vmatprep.subr.mxu0 0.0
    %195 = vmatpush1.msra.mxu0 %v59
    %196 = vmatprep.subr.mxu0 0.0
    %197 = vmatpush1.msra.mxu0 %v60
    %198 = vmatprep.subr.mxu0 0.0
    %199 = vmatpush1.msra.mxu0 %v61
    %200 = vmatprep.subr.mxu0 0.0
    %201 = vmatpush1.msra.mxu0 %v62
    %202 = vmatprep.subr.mxu0 0.0
    %203 = vmatpush1.msra.mxu0 %v63
    %204 = vmatprep.subr.mxu0 0.0
    %205 = vmatpush1.msra.mxu0 %v64
    %206 = vmatprep.subr.mxu0 0.0
    %207 = vmatpush1.msra.mxu0 %v65
    %208 = vmatprep.subr.mxu0 0.0
    %209 = vmatpush1.msra.mxu0 %v66
    %210 = vmatprep.subr.mxu0 0.0
    %211 = vmatpush1.msra.mxu0 %v67
    %212 = vmatprep.subr.mxu0 0.0
    %213 = vmatpush1.msra.mxu0 %v68
    %214 = vmatprep.subr.mxu0 0.0
    %215 = vmatpush1.msra.mxu0 %v69
    %216 = vmatprep.subr.mxu0 0.0
    %217 = vmatpush1.msra.mxu0 %v70
    %218 = vmatprep.subr.mxu0 0.0
    %219 = vmatpush1.msra.mxu0 %v71
    %220 = vmatprep.subr.mxu0 0.0
    %221 = vmatpush1.msra.mxu0 %v72
    %222 = vmatprep.subr.mxu0 0.0
    %223 = vmatpush1.msra.mxu0 %v73
    %224 = vmatprep.subr.mxu0 0.0
    %225 = vmatpush1.msra.mxu0 %v74
    %226 = vmatprep.subr.mxu0 0.0
    %227 = vmatpush1.msra.mxu0 %v75
    %228 = vmatprep.subr.mxu0 0.0
    %229 = vmatpush1.msra.mxu0 %v76
    %230 = vmatprep.subr.mxu0 0.0
    %231 = vmatpush1.msra.mxu0 %v77
    %232 = vmatprep.subr.mxu0 0.0
    %233 = vmatpush1.msra.mxu0 %v78
    %234 = vmatprep.subr.mxu0 0.0
    %235 = vmatpush1.msra.mxu0 %v79
    %236 = vmatprep.subr.mxu0 0.0
    %237 = vmatpush1.msra.mxu0 %v80
    %238 = vmatprep.subr.mxu0 0.0
    %239 = vmatpush1.msra.mxu0 %v81
    %240 = vmatprep.subr.mxu0 0.0
    %241 = vmatpush1.msra.mxu0 %v82
    %242 = vmatprep.subr.mxu0 0.0
    %243 = vmatpush1.msra.mxu0 %v83
    %244 = vmatprep.subr.mxu0 0.0
    %245 = vmatpush1.msra.mxu0 %v84
    %246 = vmatprep.subr.mxu0 0.0
    %247 = vmatpush1.msra.mxu0 %v85
    %248 = vmatprep.subr.mxu0 0.0
    %249 = vmatpush1.msra.mxu0 %v86
    %250 = vmatprep.mubr.f32.mxu0 %v111
    %251 = vmatmul.mubr.f32.gmra.mrb[0].mxu0 %v109
    %v252 = vpop.f32.mrb[0].mxu0
    %v253 = vadd.f32 %v183, %v252
    %v254 = vpop.f32.mrb[0].mxu0
    %255 = vdwg.mxu0
    %vm256 = vcmask 123904
    %257 = vst.msk [vmem:[#allocation2] sm:$0x3] %vm256, %v253
    %259 = vrot.lane.b32.xlu0 %v253, 112
    %v260 = vpop.permute.xlu0 %259
    %262 = vst.msk [vmem:[#allocation4] sm:$0x3] %vm256, %v260
    %v263 = vld [vmem:[%s1] sm:$0x3]
    %v264 = vmul.f32 %v253, 0.5
    %v265 = vmul.f32 %v264, 1.442695
    %v266 = vpow.pop %v265
    %268 = vrot.lane.b32.xlu0 %v266, 112
    %v269 = vpop.permute.xlu0 %268
    %v271 = vmul.f32 %v263, %v269
    %v272 = vadd.f32 %v253, %v271
    %273 = vst.msk [vmem:[%s6] sm:$0x3] %vm256, %v272
    // Predicated region
    $region18: #{vae_forward.17} parent=1 // pred_check
      _
    $region19: #{vae_forward.17} parent=1 // pred_check_branch
      %275 = sbr.rel (0) target = $region21
    $region20: #{vae_forward.17} parent=1 // pred_region
      %s277 = ssub.s32 32, 32
      %278 = vsyncadd [#allocation3], %s277
      %s280 = sshll.u32 [#allocation2], 4
      %s281 = int_to_ptr.vmem [resolvable:$true] %s280
      %283 = dma.vmem_to_hbm [thread:$0]  %s281, 32, %s4, [#allocation3]
    $region21: #{vae_forward.17} parent=1 // pred_fallthru
      _
    // Predicated region
    $region22: #{vae_forward.17} parent=1 // pred_check
      _
    $region23: #{vae_forward.17} parent=1 // pred_check_branch
      %285 = sbr.rel (0) target = $region25
    $region24: #{vae_forward.17} parent=1 // pred_region
      %s287 = ssub.s32 32, 32
      %288 = vsyncadd [#allocation5], %s287
      %s290 = sshll.u32 [#allocation4], 4
      %s291 = int_to_ptr.vmem [resolvable:$true] %s290
      %293 = dma.vmem_to_hbm [thread:$0]  %s291, 32, %s5, [#allocation5]
    $region25: #{vae_forward.17} parent=1 // pred_fallthru
      _
    // Predicated region
    $region26: #{vae_forward.17} parent=1 // pred_check
      _
    $region27: #{vae_forward.17} parent=1 // pred_check_branch
      %295 = sbr.rel (0) target = $region29
    $region28: #{vae_forward.17} parent=1 // pred_region
      _
    $region29: #{vae_forward.17} parent=1 // pred_fallthru
      _
    // Predicated region
    $region30: #{vae_forward.17} parent=1 // pred_check
      _
    $region31: #{vae_forward.17} parent=1 // pred_check_branch
      %297 = sbr.rel (0) target = $region33
    $region32: #{vae_forward.17} parent=1 // pred_region
      %298 = dma.done [#allocation3], 32
    $region33: #{vae_forward.17} parent=1 // pred_fallthru
      _
    // Predicated region
    $region34: #{vae_forward.17} parent=1 // pred_check
      _
    $region35: #{vae_forward.17} parent=1 // pred_check_branch
      %300 = sbr.rel (0) target = $region37
    $region36: #{vae_forward.17} parent=1 // pred_region
      %301 = dma.done [#allocation5], 32
    $region37: #{vae_forward.17} parent=1 // pred_fallthru
      _
    // Predicated region
    $region38: #{vae_forward.17} parent=1 // pred_check
      _
    $region39: #{vae_forward.17} parent=1 // pred_check_branch
      %303 = sbr.rel (0) target = $region41
    $region40: #{vae_forward.17} parent=1 // pred_region
      _
    $region41: #{vae_forward.17} parent=1 // pred_fallthru
      _
    %304 = vsyncpa [#allocation3], 1
    %305 = vsyncpa [#allocation5], 1

// kernel: vae_forward.18
$region0: #{vae_forward.18}
  #allocation0 [shape = 'u32[]', space=smem, size = 0x4, offset = 0x4, fixed_abs, tag = 'smem constant byte address 0x4 - core index']
  #allocation1 [shape = 'u32[144,128]{1,0:T(1,128)}', space=vmem, size = 0x12000, scoped, tag = 'internal scratch']
  %s0 = inlined_call_operand.vmem [shape: f32[8,16], index: 0, kind: input, shape index: {}]
  %s1 = inlined_call_operand.vmem [shape: f32[16,512], index: 1, kind: input, shape index: {}]
  %s2 = inlined_call_operand.vmem [shape: f32[1,512], index: 2, kind: input, shape index: {}]
  %s3 = inlined_call_operand.vmem [shape: f32[8,512], index: 3, kind: output, shape index: {}]
  %s4 = sld [smem:[#allocation0]]
  $region22: #{vae_forward.18} parent=0
    _
  %s6 = ssub.s32 1, %s4
  %s7 = scalar_select 0, %s6, %s4
  // Predicated region
  $region2: #{vae_forward.18} parent=0 // pred_check
    _
  $region3: #{vae_forward.18} parent=0 // pred_check_branch
    %9 = sbr.rel (0) target = $region5
  $region4: #{vae_forward.18} parent=0 // pred_region
    _
  $region5: #{vae_forward.18} parent=0 // pred_fallthru
    _
  // Predicated region
  $region6: #{vae_forward.18} parent=0 // pred_check
    _
  $region7: #{vae_forward.18} parent=0 // pred_check_branch
    %11 = sbr.rel (0) target = $region9
  $region8: #{vae_forward.18} parent=0 // pred_region
    _
  $region9: #{vae_forward.18} parent=0 // pred_fallthru
    _
  // Predicated region
  $region10: #{vae_forward.18} parent=0 // pred_check
    _
  $region11: #{vae_forward.18} parent=0 // pred_check_branch
    %13 = sbr.rel (0) target = $region13
  $region12: #{vae_forward.18} parent=0 // pred_region
    _
  $region13: #{vae_forward.18} parent=0 // pred_fallthru
    _
  %v14 = vld [vmem:[%s0] sm:$0xff]
  %v15 = vld [vmem:[%s1] sm:$0xff]
  %v16 = vld [vmem:[%s1 + $0x8] sm:$0xff]
  %v17 = vld [vmem:[%s1 + $0x10] sm:$0xff]
  %v18 = vld [vmem:[%s1 + $0x18] sm:$0xff]
  %v19 = vld [vmem:[%s1 + $0x20] sm:$0xff]
  %v20 = vld [vmem:[%s1 + $0x28] sm:$0xff]
  %v21 = vld [vmem:[%s1 + $0x30] sm:$0xff]
  %v22 = vld [vmem:[%s1 + $0x38] sm:$0xff]
  %v23 = vld [vmem:[%s2] sm:$0xf]
  %v25 = vlaneseq
  %v26 = vshrl.u32 %v25, 7
  %v27 = vsub.s32 0, %v26
  %v28 = vrot.slane %v23, %v27
  %v29 = vlaneseq
  %v30 = vshrl.u32 %v29, 7
  %v31 = vsub.s32 1, %v30
  %v32 = vrot.slane %v23, %v31
  %v33 = vlaneseq
  %v34 = vshrl.u32 %v33, 7
  %v35 = vsub.s32 2, %v34
  %v36 = vrot.slane %v23, %v35
  %v37 = vlaneseq
  %v38 = vshrl.u32 %v37, 7
  %v39 = vsub.s32 3, %v38
  %v40 = vrot.slane %v23, %v39
  %vm45 = vcmask 130048
  %v47 = vsel %vm45, %v14, 0
  %49 = vmatprep.subr.mxu0 %v16
  %50 = vmatpush1.msra.mxu0 %v15
  %51 = vmatprep.subr.mxu0 %v20
  %52 = vmatpush1.msra.mxu0 %v19
  %53 = vmatprep.subr.mxu0 0.0
  %54 = vmatpush1.msra.mxu0 0.0
  %55 = vmatprep.subr.mxu0 0.0
  %56 = vmatpush1.msra.mxu0 0.0
  %57 = vmatprep.subr.mxu0 0.0
  %58 = vmatpush1.msra.mxu0 0.0
  %59 = vmatprep.subr.mxu0 0.0
  %60 = vmatpush1.msra.mxu0 0.0
  %61 = vmatprep.subr.mxu0 0.0
  %62 = vmatpush1.msra.mxu0 0.0
  %63 = vmatprep.subr.mxu0 0.0
  %64 = vmatpush1.msra.mxu0 0.0
  %65 = vmatprep.subr.mxu0 0.0
  %66 = vmatpush1.msra.mxu0 0.0
  %67 = vmatprep.subr.mxu0 0.0
  %68 = vmatpush1.msra.mxu0 0.0
  %69 = vmatprep.subr.mxu0 0.0
  %70 = vmatpush1.msra.mxu0 0.0
  %71 = vmatprep.subr.mxu0 0.0
  %72 = vmatpush1.msra.mxu0 0.0
  %73 = vmatprep.subr.mxu0 0.0
  %74 = vmatpush1.msra.mxu0 0.0
  %75 = vmatprep.subr.mxu0 0.0
  %76 = vmatpush1.msra.mxu0 0.0
  %77 = vmatprep.subr.mxu0 0.0
  %78 = vmatpush1.msra.mxu0 0.0
  %79 = vmatprep.subr.mxu0 0.0
  %80 = vmatpush1.msra.mxu0 0.0
  %81 = vmatprep.subr.mxu0 0.0
  %82 = vmatpush1.msra.mxu0 0.0
  %83 = vmatprep.subr.mxu0 0.0
  %84 = vmatpush1.msra.mxu0 0.0
  %85 = vmatprep.subr.mxu0 0.0
  %86 = vmatpush1.msra.mxu0 0.0
  %87 = vmatprep.subr.mxu0 0.0
  %88 = vmatpush1.msra.mxu0 0.0
  %89 = vmatprep.subr.mxu0 0.0
  %90 = vmatpush1.msra.mxu0 0.0
  %91 = vmatprep.subr.mxu0 0.0
  %92 = vmatpush1.msra.mxu0 0.0
  %93 = vmatprep.subr.mxu0 0.0
  %94 = vmatpush1.msra.mxu0 0.0
  %95 = vmatprep.subr.mxu0 0.0
  %96 = vmatpush1.msra.mxu0 0.0
  %97 = vmatprep.subr.mxu0 0.0
  %98 = vmatpush1.msra.mxu0 0.0
  %99 = vmatprep.subr.mxu0 0.0
  %100 = vmatpush1.msra.mxu0 0.0
  %101 = vmatprep.subr.mxu0 0.0
  %102 = vmatpush1.msra.mxu0 0.0
  %103 = vmatprep.subr.mxu0 0.0
  %104 = vmatpush1.msra.mxu0 0.0
  %105 = vmatprep.subr.mxu0 0.0
  %106 = vmatpush1.msra.mxu0 0.0
  %107 = vmatprep.subr.mxu0 0.0
  %108 = vmatpush1.msra.mxu0 0.0
  %109 = vmatprep.subr.mxu0 0.0
  %110 = vmatpush1.msra.mxu0 0.0
  %111 = vmatprep.subr.mxu0 0.0
  %112 = vmatpush1.msra.mxu0 0.0
  %113 = vmatprep.mubr.f32.mxu0 0.0
  %114 = vmatmul.mubr.f32.gmra.mrb[0].mxu0 %v47
  %v115 = vpop.f32.mrb[0].mxu0
  %v116 = vadd.f32 %v28, %v115
  %v117 = vpop.f32.mrb[0].mxu0
  %v118 = vadd.f32 %v32, %v117
  %119 = vdwg.mxu0
  %120 = vmatprep.subr.mxu0 %v18
  %121 = vmatpush1.msra.mxu0 %v17
  %122 = vmatprep.subr.mxu0 %v22
  %123 = vmatpush1.msra.mxu0 %v21
  %124 = vmatprep.subr.mxu0 0.0
  %125 = vmatpush1.msra.mxu0 0.0
  %126 = vmatprep.subr.mxu0 0.0
  %127 = vmatpush1.msra.mxu0 0.0
  %128 = vmatprep.subr.mxu0 0.0
  %129 = vmatpush1.msra.mxu0 0.0
  %130 = vmatprep.subr.mxu0 0.0
  %131 = vmatpush1.msra.mxu0 0.0
  %132 = vmatprep.subr.mxu0 0.0
  %133 = vmatpush1.msra.mxu0 0.0
  %134 = vmatprep.subr.mxu0 0.0
  %135 = vmatpush1.msra.mxu0 0.0
  %136 = vmatprep.subr.mxu0 0.0
  %137 = vmatpush1.msra.mxu0 0.0
  %138 = vmatprep.subr.mxu0 0.0
  %139 = vmatpush1.msra.mxu0 0.0
  %140 = vmatprep.subr.mxu0 0.0
  %141 = vmatpush1.msra.mxu0 0.0
  %142 = vmatprep.subr.mxu0 0.0
  %143 = vmatpush1.msra.mxu0 0.0
  %144 = vmatprep.subr.mxu0 0.0
  %145 = vmatpush1.msra.mxu0 0.0
  %146 = vmatprep.subr.mxu0 0.0
  %147 = vmatpush1.msra.mxu0 0.0
  %148 = vmatprep.subr.mxu0 0.0
  %149 = vmatpush1.msra.mxu0 0.0
  %150 = vmatprep.subr.mxu0 0.0
  %151 = vmatpush1.msra.mxu0 0.0
  %152 = vmatprep.subr.mxu0 0.0
  %153 = vmatpush1.msra.mxu0 0.0
  %154 = vmatprep.subr.mxu0 0.0
  %155 = vmatpush1.msra.mxu0 0.0
  %156 = vmatprep.subr.mxu0 0.0
  %157 = vmatpush1.msra.mxu0 0.0
  %158 = vmatprep.subr.mxu0 0.0
  %159 = vmatpush1.msra.mxu0 0.0
  %160 = vmatprep.subr.mxu0 0.0
  %161 = vmatpush1.msra.mxu0 0.0
  %162 = vmatprep.subr.mxu0 0.0
  %163 = vmatpush1.msra.mxu0 0.0
  %164 = vmatprep.subr.mxu0 0.0
  %165 = vmatpush1.msra.mxu0 0.0
  %166 = vmatprep.subr.mxu0 0.0
  %167 = vmatpush1.msra.mxu0 0.0
  %168 = vmatprep.subr.mxu0 0.0
  %169 = vmatpush1.msra.mxu0 0.0
  %170 = vmatprep.subr.mxu0 0.0
  %171 = vmatpush1.msra.mxu0 0.0
  %172 = vmatprep.subr.mxu0 0.0
  %173 = vmatpush1.msra.mxu0 0.0
  %174 = vmatprep.subr.mxu0 0.0
  %175 = vmatpush1.msra.mxu0 0.0
  %176 = vmatprep.subr.mxu0 0.0
  %177 = vmatpush1.msra.mxu0 0.0
  %178 = vmatprep.subr.mxu0 0.0
  %179 = vmatpush1.msra.mxu0 0.0
  %180 = vmatprep.subr.mxu0 0.0
  %181 = vmatpush1.msra.mxu0 0.0
  %182 = vmatprep.subr.mxu0 0.0
  %183 = vmatpush1.msra.mxu0 0.0
  %184 = vmatprep.mubr.f32.mxu0 0.0
  %185 = vmatmul.mubr.f32.gmra.mrb[0].mxu0 %v47
  %v186 = vpop.f32.mrb[0].mxu0
  %v187 = vadd.f32 %v36, %v186
  %v188 = vpop.f32.mrb[0].mxu0
  %v189 = vadd.f32 %v40, %v188
  %190 = vdwg.mxu0
  %191 = vst [vmem:[%s3] sm:$0xff] %v116
  %192 = vst [vmem:[%s3 + $0x8] sm:$0xff] %v118
  %193 = vst [vmem:[%s3 + $0x10] sm:$0xff] %v187
  %194 = vst [vmem:[%s3 + $0x18] sm:$0xff] %v189
  // Predicated region
  $region14: #{vae_forward.18} parent=0 // pred_check
    _
  $region15: #{vae_forward.18} parent=0 // pred_check_branch
    %196 = sbr.rel (0) target = $region17
  $region16: #{vae_forward.18} parent=0 // pred_region
    _
  $region17: #{vae_forward.18} parent=0 // pred_fallthru
    _
  // Predicated region
  $region18: #{vae_forward.18} parent=0 // pred_check
    _
  $region19: #{vae_forward.18} parent=0 // pred_check_branch
    %198 = sbr.rel (0) target = $region21
  $region20: #{vae_forward.18} parent=0 // pred_region
    _
  $region21: #{vae_forward.18} parent=0 // pred_fallthru
    _

// kernel: vae_forward.19
$region0: #{vae_forward.19}
  #allocation0 [shape = 'u32[]', space=smem, size = 0x4, offset = 0x4, fixed_abs, tag = 'smem constant byte address 0x4 - core index']
  #allocation1 [shape = 'u32[144,128]{1,0:T(1,128)}', space=vmem, size = 0x12000, scoped, tag = 'internal scratch']
  %s0 = inlined_call_operand.vmem [shape: f32[128,216], index: 0, kind: input, shape index: {}]
  %s1 = inlined_call_operand.vmem [shape: f32[216,32], index: 1, kind: input, shape index: {}]
  %s2 = inlined_call_operand.vmem [shape: f32[1,32], index: 2, kind: input, shape index: {}]
  %s3 = inlined_call_operand.vmem [shape: f32[128,32], index: 3, kind: output, shape index: {}]
  %s4 = sld [smem:[#allocation0]]
  $region22: #{vae_forward.19} parent=0
    _
  %s6 = ssub.s32 1, %s4
  %s7 = scalar_select 0, %s6, %s4
  // Predicated region
  $region2: #{vae_forward.19} parent=0 // pred_check
    _
  $region3: #{vae_forward.19} parent=0 // pred_check_branch
    %9 = sbr.rel (0) target = $region5
  $region4: #{vae_forward.19} parent=0 // pred_region
    _
  $region5: #{vae_forward.19} parent=0 // pred_fallthru
    _
  // Predicated region
  $region6: #{vae_forward.19} parent=0 // pred_check
    _
  $region7: #{vae_forward.19} parent=0 // pred_check_branch
    %11 = sbr.rel (0) target = $region9
  $region8: #{vae_forward.19} parent=0 // pred_region
    _
  $region9: #{vae_forward.19} parent=0 // pred_fallthru
    _
  // Predicated region
  $region10: #{vae_forward.19} parent=0 // pred_check
    _
  $region11: #{vae_forward.19} parent=0 // pred_check_branch
    %13 = sbr.rel (0) target = $region13
  $region12: #{vae_forward.19} parent=0 // pred_region
    _
  $region13: #{vae_forward.19} parent=0 // pred_fallthru
    _
  %v14 = vld [vmem:[%s0] sm:$0xff]
  %v15 = vld [vmem:[%s0 + $0x8] sm:$0xff]
  %v16 = vld [vmem:[%s0 + $0x10] sm:$0xff]
  %v17 = vld [vmem:[%s0 + $0x18] sm:$0xff]
  %v18 = vld [vmem:[%s0 + $0x20] sm:$0xff]
  %v19 = vld [vmem:[%s0 + $0x28] sm:$0xff]
  %v20 = vld [vmem:[%s0 + $0x30] sm:$0xff]
  %v21 = vld [vmem:[%s0 + $0x38] sm:$0xff]
  %v22 = vld [vmem:[%s0 + $0x40] sm:$0xff]
  %v23 = vld [vmem:[%s0 + $0x48] sm:$0xff]
  %v24 = vld [vmem:[%s0 + $0x50] sm:$0xff]
  %v25 = vld [vmem:[%s0 + $0x58] sm:$0xff]
  %v26 = vld [vmem:[%s0 + $0x60] sm:$0xff]
  %v27 = vld [vmem:[%s0 + $0x68] sm:$0xff]
  %v28 = vld [vmem:[%s0 + $0x70] sm:$0xff]
  %v29 = vld [vmem:[%s0 + $0x78] sm:$0xff]
  %v30 = vld [vmem:[%s0 + $0x80] sm:$0xff]
  %v31 = vld [vmem:[%s0 + $0x88] sm:$0xff]
  %v32 = vld [vmem:[%s0 + $0x90] sm:$0xff]
  %v33 = vld [vmem:[%s0 + $0x98] sm:$0xff]
  %v34 = vld [vmem:[%s0 + $0xa0] sm:$0xff]
  %v35 = vld [vmem:[%s0 + $0xa8] sm:$0xff]
  %v36 = vld [vmem:[%s0 + $0xb0] sm:$0xff]
  %v37 = vld [vmem:[%s0 + $0xb8] sm:$0xff]
  %v38 = vld [vmem:[%s0 + $0xc0] sm:$0xff]
  %v39 = vld [vmem:[%s0 + $0xc8] sm:$0xff]
  %v40 = vld [vmem:[%s0 + $0xd0] sm:$0xff]
  %v41 = vld [vmem:[%s0 + $0xd8] sm:$0xff]
  %v42 = vld [vmem:[%s0 + $0xe0] sm:$0xff]
  %v43 = vld [vmem:[%s0 + $0xe8] sm:$0xff]
  %v44 = vld [vmem:[%s0 + $0xf0] sm:$0xff]
  %v45 = vld [vmem:[%s0 + $0xf8] sm:$0xff]
  %v46 = vld [vmem:[%s1] sm:$0xff]
  %v47 = vld [vmem:[%s1 + $0x8] sm:$0xff]
  %v48 = vld [vmem:[%s1 + $0x10] sm:$0xff]
  %v49 = vld [vmem:[%s1 + $0x18] sm:$0xff]
  %v50 = vld [vmem:[%s1 + $0x20] sm:$0xff]
  %v51 = vld [vmem:[%s1 + $0x28] sm:$0xff]
  %v52 = vld [vmem:[%s1 + $0x30] sm:$0xff]
  %v53 = vld [vmem:[%s1 + $0x38] sm:$0xff]
  %v54 = vld [vmem:[%s1 + $0x40] sm:$0xff]
  %v55 = vld [vmem:[%s1 + $0x48] sm:$0xff]
  %v56 = vld [vmem:[%s1 + $0x50] sm:$0xff]
  %v57 = vld [vmem:[%s1 + $0x58] sm:$0xff]
  %v58 = vld [vmem:[%s1 + $0x60] sm:$0xff]
  %v59 = vld [vmem:[%s1 + $0x68] sm:$0xff]
  %v60 = vld [vmem:[%s1 + $0x70] sm:$0xff]
  %v61 = vld [vmem:[%s1 + $0x78] sm:$0xff]
  %v62 = vld [vmem:[%s1 + $0x80] sm:$0xff]
  %v63 = vld [vmem:[%s1 + $0x88] sm:$0xff]
  %v64 = vld [vmem:[%s1 + $0x90] sm:$0xff]
  %v65 = vld [vmem:[%s1 + $0x98] sm:$0xff]
  %v66 = vld [vmem:[%s1 + $0xa0] sm:$0xff]
  %v67 = vld [vmem:[%s1 + $0xa8] sm:$0xff]
  %v68 = vld [vmem:[%s1 + $0xb0] sm:$0xff]
  %v69 = vld [vmem:[%s1 + $0xb8] sm:$0xff]
  %v70 = vld [vmem:[%s1 + $0xc0] sm:$0xff]
  %v71 = vld [vmem:[%s1 + $0xc8] sm:$0xff]
  %v72 = vld [vmem:[%s1 + $0xd0] sm:$0xff]
  %v73 = vld [vmem:[%s2] sm:$0x1]
  %v75 = vlaneseq
  %v76 = vshrl.u32 %v75, 7
  %v77 = vsub.s32 0, %v76
  %v78 = vrot.slane %v73, %v77
  %vm80 = vcmask 719872
  %v82 = vsel %vm80, %v15, 0
  %v85 = vsel %vm80, %v17, 0
  %v88 = vsel %vm80, %v19, 0
  %v91 = vsel %vm80, %v21, 0
  %v94 = vsel %vm80, %v23, 0
  %v97 = vsel %vm80, %v25, 0
  %v100 = vsel %vm80, %v27, 0
  %v103 = vsel %vm80, %v29, 0
  %v106 = vsel %vm80, %v31, 0
  %v109 = vsel %vm80, %v33, 0
  %v112 = vsel %vm80, %v35, 0
  %v115 = vsel %vm80, %v37, 0
  %v118 = vsel %vm80, %v39, 0
  %v121 = vsel %vm80, %v41, 0
  %v124 = vsel %vm80, %v43, 0
  %v127 = vsel %vm80, %v45, 0
  %129 = vmatprep.subr.mxu0 0.0
  %130 = vmatpush1.msra.mxu0 %v46
  %131 = vmatprep.subr.mxu0 0.0
  %132 = vmatpush1.msra.mxu0 %v47
  %133 = vmatprep.subr.mxu0 0.0
  %134 = vmatpush1.msra.mxu0 %v48
  %135 = vmatprep.subr.mxu0 0.0
  %136 = vmatpush1.msra.mxu0 %v49
  %137 = vmatprep.subr.mxu0 0.0
  %138 = vmatpush1.msra.mxu0 %v50
  %139 = vmatprep.subr.mxu0 0.0
  %140 = vmatpush1.msra.mxu0 %v51
  %141 = vmatprep.subr.mxu0 0.0
  %142 = vmatpush1.msra.mxu0 %v52
  %143 = vmatprep.subr.mxu0 0.0
  %144 = vmatpush1.msra.mxu0 %v53
  %145 = vmatprep.subr.mxu0 0.0
  %146 = vmatpush1.msra.mxu0 %v54
  %147 = vmatprep.subr.mxu0 0.0
  %148 = vmatpush1.msra.mxu0 %v55
  %149 = vmatprep.subr.mxu0 0.0
  %150 = vmatpush1.msra.mxu0 %v56
  %151 = vmatprep.subr.mxu0 0.0
  %152 = vmatpush1.msra.mxu0 %v57
  %153 = vmatprep.subr.mxu0 0.0
  %154 = vmatpush1.msra.mxu0 %v58
  %155 = vmatprep.subr.mxu0 0.0
  %156 = vmatpush1.msra.mxu0 %v59
  %157 = vmatprep.subr.mxu0 0.0
  %158 = vmatpush1.msra.mxu0 %v60
  %159 = vmatprep.subr.mxu0 0.0
  %160 = vmatpush1.msra.mxu0 %v61
  %161 = vmatprep.subr.mxu0 0.0
  %162 = vmatpush1.msra.mxu0 %v62
  %163 = vmatprep.subr.mxu0 0.0
  %164 = vmatpush1.msra.mxu0 %v63
  %165 = vmatprep.subr.mxu0 0.0
  %166 = vmatpush1.msra.mxu0 %v64
  %167 = vmatprep.subr.mxu0 0.0
  %168 = vmatpush1.msra.mxu0 %v65
  %169 = vmatprep.subr.mxu0 0.0
  %170 = vmatpush1.msra.mxu0 %v66
  %171 = vmatprep.subr.mxu0 0.0
  %172 = vmatpush1.msra.mxu0 %v67
  %173 = vmatprep.subr.mxu0 0.0
  %174 = vmatpush1.msra.mxu0 %v68
  %175 = vmatprep.subr.mxu0 0.0
  %176 = vmatpush1.msra.mxu0 %v69
  %177 = vmatprep.subr.mxu0 0.0
  %178 = vmatpush1.msra.mxu0 %v70
  %179 = vmatprep.subr.mxu0 0.0
  %180 = vmatpush1.msra.mxu0 %v71
  %181 = vmatprep.subr.mxu0 0.0
  %182 = vmatpush1.msra.mxu0 %v72
  %183 = vmatprep.subr.mxu0 0.0
  %184 = vmatpush1.msra.mxu0 0.0
  %185 = vmatprep.subr.mxu0 0.0
  %186 = vmatpush1.msra.mxu0 0.0
  %187 = vmatprep.subr.mxu0 0.0
  %188 = vmatpush1.msra.mxu0 0.0
  %189 = vmatprep.subr.mxu0 0.0
  %190 = vmatpush1.msra.mxu0 0.0
  %191 = vmatprep.subr.mxu0 0.0
  %192 = vmatpush1.msra.mxu0 0.0
  %193 = vmatprep.mubr.f32.mxu0 %v82
  %194 = vmatmul.mubr.f32.gmra.mrb[0].mxu0 %v14
  %v195 = vpop.f32.mrb[0].mxu0
  %v196 = vadd.f32 %v78, %v195
  %v197 = vpop.f32.mrb[0].mxu0
  %198 = vmatprep.mubr.f32.mxu0 %v85
  %199 = vmatmul.mubr.f32.gmra.mrb[0].mxu0 %v16
  %v200 = vpop.f32.mrb[0].mxu0
  %v201 = vadd.f32 %v78, %v200
  %v202 = vpop.f32.mrb[0].mxu0
  %203 = vmatprep.mubr.f32.mxu0 %v88
  %204 = vmatmul.mubr.f32.gmra.mrb[0].mxu0 %v18
  %v205 = vpop.f32.mrb[0].mxu0
  %v206 = vadd.f32 %v78, %v205
  %v207 = vpop.f32.mrb[0].mxu0
  %208 = vmatprep.mubr.f32.mxu0 %v91
  %209 = vmatmul.mubr.f32.gmra.mrb[0].mxu0 %v20
  %v210 = vpop.f32.mrb[0].mxu0
  %v211 = vadd.f32 %v78, %v210
  %v212 = vpop.f32.mrb[0].mxu0
  %213 = vmatprep.mubr.f32.mxu0 %v94
  %214 = vmatmul.mubr.f32.gmra.mrb[0].mxu0 %v22
  %v215 = vpop.f32.mrb[0].mxu0
  %v216 = vadd.f32 %v78, %v215
  %v217 = vpop.f32.mrb[0].mxu0
  %218 = vmatprep.mubr.f32.mxu0 %v97
  %219 = vmatmul.mubr.f32.gmra.mrb[0].mxu0 %v24
  %v220 = vpop.f32.mrb[0].mxu0
  %v221 = vadd.f32 %v78, %v220
  %v222 = vpop.f32.mrb[0].mxu0
  %223 = vmatprep.mubr.f32.mxu0 %v100
  %224 = vmatmul.mubr.f32.gmra.mrb[0].mxu0 %v26
  %v225 = vpop.f32.mrb[0].mxu0
  %v226 = vadd.f32 %v78, %v225
  %v227 = vpop.f32.mrb[0].mxu0
  %228 = vmatprep.mubr.f32.mxu0 %v103
  %229 = vmatmul.mubr.f32.gmra.mrb[0].mxu0 %v28
  %v230 = vpop.f32.mrb[0].mxu0
  %v231 = vadd.f32 %v78, %v230
  %v232 = vpop.f32.mrb[0].mxu0
  %233 = vmatprep.mubr.f32.mxu0 %v106
  %234 = vmatmul.mubr.f32.gmra.mrb[0].mxu0 %v30
  %v235 = vpop.f32.mrb[0].mxu0
  %v236 = vadd.f32 %v78, %v235
  %v237 = vpop.f32.mrb[0].mxu0
  %238 = vmatprep.mubr.f32.mxu0 %v109
  %239 = vmatmul.mubr.f32.gmra.mrb[0].mxu0 %v32
  %v240 = vpop.f32.mrb[0].mxu0
  %v241 = vadd.f32 %v78, %v240
  %v242 = vpop.f32.mrb[0].mxu0
  %243 = vmatprep.mubr.f32.mxu0 %v112
  %244 = vmatmul.mubr.f32.gmra.mrb[0].mxu0 %v34
  %v245 = vpop.f32.mrb[0].mxu0
  %v246 = vadd.f32 %v78, %v245
  %v247 = vpop.f32.mrb[0].mxu0
  %248 = vmatprep.mubr.f32.mxu0 %v115
  %249 = vmatmul.mubr.f32.gmra.mrb[0].mxu0 %v36
  %v250 = vpop.f32.mrb[0].mxu0
  %v251 = vadd.f32 %v78, %v250
  %v252 = vpop.f32.mrb[0].mxu0
  %253 = vmatprep.mubr.f32.mxu0 %v118
  %254 = vmatmul.mubr.f32.gmra.mrb[0].mxu0 %v38
  %v255 = vpop.f32.mrb[0].mxu0
  %v256 = vadd.f32 %v78, %v255
  %v257 = vpop.f32.mrb[0].mxu0
  %258 = vmatprep.mubr.f32.mxu0 %v121
  %259 = vmatmul.mubr.f32.gmra.mrb[0].mxu0 %v40
  %v260 = vpop.f32.mrb[0].mxu0
  %v261 = vadd.f32 %v78, %v260
  %v262 = vpop.f32.mrb[0].mxu0
  %263 = vmatprep.mubr.f32.mxu0 %v124
  %264 = vmatmul.mubr.f32.gmra.mrb[0].mxu0 %v42
  %v265 = vpop.f32.mrb[0].mxu0
  %v266 = vadd.f32 %v78, %v265
  %v267 = vpop.f32.mrb[0].mxu0
  %268 = vmatprep.mubr.f32.mxu0 %v127
  %269 = vmatmul.mubr.f32.gmra.mrb[0].mxu0 %v44
  %v270 = vpop.f32.mrb[0].mxu0
  %v271 = vadd.f32 %v78, %v270
  %v272 = vpop.f32.mrb[0].mxu0
  %273 = vdwg.mxu0
  %v274 = vmax.f32 %v196, 0.0
  %v275 = vmax.f32 %v201, 0.0
  %v276 = vmax.f32 %v206, 0.0
  %v277 = vmax.f32 %v211, 0.0
  %v278 = vmax.f32 %v216, 0.0
  %v279 = vmax.f32 %v221, 0.0
  %v280 = vmax.f32 %v226, 0.0
  %v281 = vmax.f32 %v231, 0.0
  %v282 = vmax.f32 %v236, 0.0
  %v283 = vmax.f32 %v241, 0.0
  %v284 = vmax.f32 %v246, 0.0
  %v285 = vmax.f32 %v251, 0.0
  %v286 = vmax.f32 %v256, 0.0
  %v287 = vmax.f32 %v261, 0.0
  %v288 = vmax.f32 %v266, 0.0
  %v289 = vmax.f32 %v271, 0.0
  %vm290 = vcmask 261120
  %291 = vst.msk [vmem:[%s3] sm:$0xff] %vm290, %v274
  %292 = vst.msk [vmem:[%s3 + $0x8] sm:$0xff] %vm290, %v275
  %293 = vst.msk [vmem:[%s3 + $0x10] sm:$0xff] %vm290, %v276
  %294 = vst.msk [vmem:[%s3 + $0x18] sm:$0xff] %vm290, %v277
  %295 = vst.msk [vmem:[%s3 + $0x20] sm:$0xff] %vm290, %v278
  %296 = vst.msk [vmem:[%s3 + $0x28] sm:$0xff] %vm290, %v279
  %297 = vst.msk [vmem:[%s3 + $0x30] sm:$0xff] %vm290, %v280
  %298 = vst.msk [vmem:[%s3 + $0x38] sm:$0xff] %vm290, %v281
  %299 = vst.msk [vmem:[%s3 + $0x40] sm:$0xff] %vm290, %v282
  %300 = vst.msk [vmem:[%s3 + $0x48] sm:$0xff] %vm290, %v283
  %301 = vst.msk [vmem:[%s3 + $0x50] sm:$0xff] %vm290, %v284
  %302 = vst.msk [vmem:[%s3 + $0x58] sm:$0xff] %vm290, %v285
  %303 = vst.msk [vmem:[%s3 + $0x60] sm:$0xff] %vm290, %v286
  %304 = vst.msk [vmem:[%s3 + $0x68] sm:$0xff] %vm290, %v287
  %305 = vst.msk [vmem:[%s3 + $0x70] sm:$0xff] %vm290, %v288
  %306 = vst.msk [vmem:[%s3 + $0x78] sm:$0xff] %vm290, %v289
  // Predicated region
  $region14: #{vae_forward.19} parent=0 // pred_check
    _
  $region15: #{vae_forward.19} parent=0 // pred_check_branch
    %308 = sbr.rel (0) target = $region17
  $region16: #{vae_forward.19} parent=0 // pred_region
    _
  $region17: #{vae_forward.19} parent=0 // pred_fallthru
    _
  // Predicated region
  $region18: #{vae_forward.19} parent=0 // pred_check
    _
  $region19: #{vae_forward.19} parent=0 // pred_check_branch
    %310 = sbr.rel (0) target = $region21
  $region20: #{vae_forward.19} parent=0 // pred_region
    _
  $region21: #{vae_forward.19} parent=0 // pred_fallthru
    _

// kernel: vae_forward.20
$region0: #{vae_forward.20}
  #allocation0 [shape = 'u32[]', space=smem, size = 0x4, offset = 0x4, fixed_abs, tag = 'smem constant byte address 0x4 - core index']
  #allocation1 [shape = 'u32[144,128]{1,0:T(1,128)}', space=vmem, size = 0x12000, scoped, tag = 'internal scratch']
  %s0 = inlined_call_operand.vmem [shape: f32[1024,108], index: 0, kind: input, shape index: {}]
  %s1 = inlined_call_operand.vmem [shape: f32[108,16], index: 1, kind: input, shape index: {}]
  %s2 = inlined_call_operand.vmem [shape: f32[1,16], index: 2, kind: input, shape index: {}]
  %s3 = inlined_call_operand.vmem [shape: f32[1024,16], index: 3, kind: output, shape index: {}]
  %s4 = sld [smem:[#allocation0]]
  $region22: #{vae_forward.20} parent=0
    _
  %s6 = ssub.s32 1, %s4
  %s7 = scalar_select 0, %s6, %s4
  // Predicated region
  $region2: #{vae_forward.20} parent=0 // pred_check
    _
  $region3: #{vae_forward.20} parent=0 // pred_check_branch
    %9 = sbr.rel (0) target = $region5
  $region4: #{vae_forward.20} parent=0 // pred_region
    _
  $region5: #{vae_forward.20} parent=0 // pred_fallthru
    _
  // Predicated region
  $region6: #{vae_forward.20} parent=0 // pred_check
    _
  $region7: #{vae_forward.20} parent=0 // pred_check_branch
    %11 = sbr.rel (0) target = $region9
  $region8: #{vae_forward.20} parent=0 // pred_region
    _
  $region9: #{vae_forward.20} parent=0 // pred_fallthru
    _
  // Predicated region
  $region10: #{vae_forward.20} parent=0 // pred_check
    _
  $region11: #{vae_forward.20} parent=0 // pred_check_branch
    %13 = sbr.rel (0) target = $region13
  $region12: #{vae_forward.20} parent=0 // pred_region
    _
  $region13: #{vae_forward.20} parent=0 // pred_fallthru
    _
  %v14 = vld [vmem:[%s0] sm:$0xff]
  %v15 = vld [vmem:[%s0 + $0x8] sm:$0xff]
  %v16 = vld [vmem:[%s0 + $0x10] sm:$0xff]
  %v17 = vld [vmem:[%s0 + $0x18] sm:$0xff]
  %v18 = vld [vmem:[%s0 + $0x20] sm:$0xff]
  %v19 = vld [vmem:[%s0 + $0x28] sm:$0xff]
  %v20 = vld [vmem:[%s0 + $0x30] sm:$0xff]
  %v21 = vld [vmem:[%s0 + $0x38] sm:$0xff]
  %v22 = vld [vmem:[%s0 + $0x40] sm:$0xff]
  %v23 = vld [vmem:[%s0 + $0x48] sm:$0xff]
  %v24 = vld [vmem:[%s0 + $0x50] sm:$0xff]
  %v25 = vld [vmem:[%s0 + $0x58] sm:$0xff]
  %v26 = vld [vmem:[%s0 + $0x60] sm:$0xff]
  %v27 = vld [vmem:[%s0 + $0x68] sm:$0xff]
  %v28 = vld [vmem:[%s0 + $0x70] sm:$0xff]
  %v29 = vld [vmem:[%s0 + $0x78] sm:$0xff]
  %v30 = vld [vmem:[%s0 + $0x80] sm:$0xff]
  %v31 = vld [vmem:[%s0 + $0x88] sm:$0xff]
  %v32 = vld [vmem:[%s0 + $0x90] sm:$0xff]
  %v33 = vld [vmem:[%s0 + $0x98] sm:$0xff]
  %v34 = vld [vmem:[%s0 + $0xa0] sm:$0xff]
  %v35 = vld [vmem:[%s0 + $0xa8] sm:$0xff]
  %v36 = vld [vmem:[%s0 + $0xb0] sm:$0xff]
  %v37 = vld [vmem:[%s0 + $0xb8] sm:$0xff]
  %v38 = vld [vmem:[%s0 + $0xc0] sm:$0xff]
  %v39 = vld [vmem:[%s0 + $0xc8] sm:$0xff]
  %v40 = vld [vmem:[%s0 + $0xd0] sm:$0xff]
  %v41 = vld [vmem:[%s0 + $0xd8] sm:$0xff]
  %v42 = vld [vmem:[%s0 + $0xe0] sm:$0xff]
  %v43 = vld [vmem:[%s0 + $0xe8] sm:$0xff]
  %v44 = vld [vmem:[%s0 + $0xf0] sm:$0xff]
  %v45 = vld [vmem:[%s0 + $0xf8] sm:$0xff]
  %v46 = vld [vmem:[%s0 + $0x100] sm:$0xff]
  %v47 = vld [vmem:[%s0 + $0x108] sm:$0xff]
  %v48 = vld [vmem:[%s0 + $0x110] sm:$0xff]
  %v49 = vld [vmem:[%s0 + $0x118] sm:$0xff]
  %v50 = vld [vmem:[%s0 + $0x120] sm:$0xff]
  %v51 = vld [vmem:[%s0 + $0x128] sm:$0xff]
  %v52 = vld [vmem:[%s0 + $0x130] sm:$0xff]
  %v53 = vld [vmem:[%s0 + $0x138] sm:$0xff]
  %v54 = vld [vmem:[%s0 + $0x140] sm:$0xff]
  %v55 = vld [vmem:[%s0 + $0x148] sm:$0xff]
  %v56 = vld [vmem:[%s0 + $0x150] sm:$0xff]
  %v57 = vld [vmem:[%s0 + $0x158] sm:$0xff]
  %v58 = vld [vmem:[%s0 + $0x160] sm:$0xff]
  %v59 = vld [vmem:[%s0 + $0x168] sm:$0xff]
  %v60 = vld [vmem:[%s0 + $0x170] sm:$0xff]
  %v61 = vld [vmem:[%s0 + $0x178] sm:$0xff]
  %v62 = vld [vmem:[%s0 + $0x180] sm:$0xff]
  %v63 = vld [vmem:[%s0 + $0x188] sm:$0xff]
  %v64 = vld [vmem:[%s0 + $0x190] sm:$0xff]
  %v65 = vld [vmem:[%s0 + $0x198] sm:$0xff]
  %v66 = vld [vmem:[%s0 + $0x1a0] sm:$0xff]
  %v67 = vld [vmem:[%s0 + $0x1a8] sm:$0xff]
  %v68 = vld [vmem:[%s0 + $0x1b0] sm:$0xff]
  %v69 = vld [vmem:[%s0 + $0x1b8] sm:$0xff]
  %v70 = vld [vmem:[%s0 + $0x1c0] sm:$0xff]
  %v71 = vld [vmem:[%s0 + $0x1c8] sm:$0xff]
  %v72 = vld [vmem:[%s0 + $0x1d0] sm:$0xff]
  %v73 = vld [vmem:[%s0 + $0x1d8] sm:$0xff]
  %v74 = vld [vmem:[%s0 + $0x1e0] sm:$0xff]
  %v75 = vld [vmem:[%s0 + $0x1e8] sm:$0xff]
  %v76 = vld [vmem:[%s0 + $0x1f0] sm:$0xff]
  %v77 = vld [vmem:[%s0 + $0x1f8] sm:$0xff]
  %v78 = vld [vmem:[%s0 + $0x200] sm:$0xff]
  %v79 = vld [vmem:[%s0 + $0x208] sm:$0xff]
  %v80 = vld [vmem:[%s0 + $0x210] sm:$0xff]
  %v81 = vld [vmem:[%s0 + $0x218] sm:$0xff]
  %v82 = vld [vmem:[%s0 + $0x220] sm:$0xff]
  %v83 = vld [vmem:[%s0 + $0x228] sm:$0xff]
  %v84 = vld [vmem:[%s0 + $0x230] sm:$0xff]
  %v85 = vld [vmem:[%s0 + $0x238] sm:$0xff]
  %v86 = vld [vmem:[%s0 + $0x240] sm:$0xff]
  %v87 = vld [vmem:[%s0 + $0x248] sm:$0xff]
  %v88 = vld [vmem:[%s0 + $0x250] sm:$0xff]
  %v89 = vld [vmem:[%s0 + $0x258] sm:$0xff]
  %v90 = vld [vmem:[%s0 + $0x260] sm:$0xff]
  %v91 = vld [vmem:[%s0 + $0x268] sm:$0xff]
  %v92 = vld [vmem:[%s0 + $0x270] sm:$0xff]
  %v93 = vld [vmem:[%s0 + $0x278] sm:$0xff]
  %v94 = vld [vmem:[%s0 + $0x280] sm:$0xff]
  %v95 = vld [vmem:[%s0 + $0x288] sm:$0xff]
  %v96 = vld [vmem:[%s0 + $0x290] sm:$0xff]
  %v97 = vld [vmem:[%s0 + $0x298] sm:$0xff]
  %v98 = vld [vmem:[%s0 + $0x2a0] sm:$0xff]
  %v99 = vld [vmem:[%s0 + $0x2a8] sm:$0xff]
  %v100 = vld [vmem:[%s0 + $0x2b0] sm:$0xff]
  %v101 = vld [vmem:[%s0 + $0x2b8] sm:$0xff]
  %v102 = vld [vmem:[%s0 + $0x2c0] sm:$0xff]
  %v103 = vld [vmem:[%s0 + $0x2c8] sm:$0xff]
  %v104 = vld [vmem:[%s0 + $0x2d0] sm:$0xff]
  %v105 = vld [vmem:[%s0 + $0x2d8] sm:$0xff]
  %v106 = vld [vmem:[%s0 + $0x2e0] sm:$0xff]
  %v107 = vld [vmem:[%s0 + $0x2e8] sm:$0xff]
  %v108 = vld [vmem:[%s0 + $0x2f0] sm:$0xff]
  %v109 = vld [vmem:[%s0 + $0x2f8] sm:$0xff]
  %v110 = vld [vmem:[%s0 + $0x300] sm:$0xff]
  %v111 = vld [vmem:[%s0 + $0x308] sm:$0xff]
  %v112 = vld [vmem:[%s0 + $0x310] sm:$0xff]
  %v113 = vld [vmem:[%s0 + $0x318] sm:$0xff]
  %v114 = vld [vmem:[%s0 + $0x320] sm:$0xff]
  %v115 = vld [vmem:[%s0 + $0x328] sm:$0xff]
  %v116 = vld [vmem:[%s0 + $0x330] sm:$0xff]
  %v117 = vld [vmem:[%s0 + $0x338] sm:$0xff]
  %v118 = vld [vmem:[%s0 + $0x340] sm:$0xff]
  %v119 = vld [vmem:[%s0 + $0x348] sm:$0xff]
  %v120 = vld [vmem:[%s0 + $0x350] sm:$0xff]
  %v121 = vld [vmem:[%s0 + $0x358] sm:$0xff]
  %v122 = vld [vmem:[%s0 + $0x360] sm:$0xff]
  %v123 = vld [vmem:[%s0 + $0x368] sm:$0xff]
  %v124 = vld [vmem:[%s0 + $0x370] sm:$0xff]
  %v125 = vld [vmem:[%s0 + $0x378] sm:$0xff]
  %v126 = vld [vmem:[%s0 + $0x380] sm:$0xff]
  %v127 = vld [vmem:[%s0 + $0x388] sm:$0xff]
  %v128 = vld [vmem:[%s0 + $0x390] sm:$0xff]
  %v129 = vld [vmem:[%s0 + $0x398] sm:$0xff]
  %v130 = vld [vmem:[%s0 + $0x3a0] sm:$0xff]
  %v131 = vld [vmem:[%s0 + $0x3a8] sm:$0xff]
  %v132 = vld [vmem:[%s0 + $0x3b0] sm:$0xff]
  %v133 = vld [vmem:[%s0 + $0x3b8] sm:$0xff]
  %v134 = vld [vmem:[%s0 + $0x3c0] sm:$0xff]
  %v135 = vld [vmem:[%s0 + $0x3c8] sm:$0xff]
  %v136 = vld [vmem:[%s0 + $0x3d0] sm:$0xff]
  %v137 = vld [vmem:[%s0 + $0x3d8] sm:$0xff]
  %v138 = vld [vmem:[%s0 + $0x3e0] sm:$0xff]
  %v139 = vld [vmem:[%s0 + $0x3e8] sm:$0xff]
  %v140 = vld [vmem:[%s0 + $0x3f0] sm:$0xff]
  %v141 = vld [vmem:[%s0 + $0x3f8] sm:$0xff]
  %v142 = vld [vmem:[%s1] sm:$0xff]
  %v143 = vld [vmem:[%s1 + $0x8] sm:$0xff]
  %v144 = vld [vmem:[%s1 + $0x10] sm:$0xff]
  %v145 = vld [vmem:[%s1 + $0x18] sm:$0xff]
  %v146 = vld [vmem:[%s1 + $0x20] sm:$0xff]
  %v147 = vld [vmem:[%s1 + $0x28] sm:$0xff]
  %v148 = vld [vmem:[%s1 + $0x30] sm:$0xff]
  %v149 = vld [vmem:[%s1 + $0x38] sm:$0xff]
  %v150 = vld [vmem:[%s1 + $0x40] sm:$0xff]
  %v151 = vld [vmem:[%s1 + $0x48] sm:$0xff]
  %v152 = vld [vmem:[%s1 + $0x50] sm:$0xff]
  %v153 = vld [vmem:[%s1 + $0x58] sm:$0xff]
  %v154 = vld [vmem:[%s1 + $0x60] sm:$0xff]
  %v155 = vld [vmem:[%s1 + $0x68] sm:$0xf]
  %v156 = vld [vmem:[%s2] sm:$0x1]
  %v158 = vlaneseq
  %v159 = vshrl.u32 %v158, 7
  %v160 = vsub.s32 0, %v159
  %v161 = vrot.slane %v156, %v160
  %vm163 = vcmask 883712
  %v165 = vsel %vm163, %v14, 0
  %v168 = vsel %vm163, %v15, 0
  %v171 = vsel %vm163, %v16, 0
  %v174 = vsel %vm163, %v17, 0
  %v177 = vsel %vm163, %v18, 0
  %v180 = vsel %vm163, %v19, 0
  %v183 = vsel %vm163, %v20, 0
  %v186 = vsel %vm163, %v21, 0
  %v189 = vsel %vm163, %v22, 0
  %v192 = vsel %vm163, %v23, 0
  %v195 = vsel %vm163, %v24, 0
  %v198 = vsel %vm163, %v25, 0
  %v201 = vsel %vm163, %v26, 0
  %v204 = vsel %vm163, %v27, 0
  %v207 = vsel %vm163, %v28, 0
  %v210 = vsel %vm163, %v29, 0
  %v213 = vsel %vm163, %v30, 0
  %v216 = vsel %vm163, %v31, 0
  %v219 = vsel %vm163, %v32, 0
  %v222 = vsel %vm163, %v33, 0
  %v225 = vsel %vm163, %v34, 0
  %v228 = vsel %vm163, %v35, 0
  %v231 = vsel %vm163, %v36, 0
  %v234 = vsel %vm163, %v37, 0
  %v237 = vsel %vm163, %v38, 0
  %v240 = vsel %vm163, %v39, 0
  %v243 = vsel %vm163, %v40, 0
  %v246 = vsel %vm163, %v41, 0
  %v249 = vsel %vm163, %v42, 0
  %v252 = vsel %vm163, %v43, 0
  %v255 = vsel %vm163, %v44, 0
  %v258 = vsel %vm163, %v45, 0
  %v261 = vsel %vm163, %v46, 0
  %v264 = vsel %vm163, %v47, 0
  %v267 = vsel %vm163, %v48, 0
  %v270 = vsel %vm163, %v49, 0
  %v273 = vsel %vm163, %v50, 0
  %v276 = vsel %vm163, %v51, 0
  %v279 = vsel %vm163, %v52, 0
  %v282 = vsel %vm163, %v53, 0
  %v285 = vsel %vm163, %v54, 0
  %v288 = vsel %vm163, %v55, 0
  %v291 = vsel %vm163, %v56, 0
  %v294 = vsel %vm163, %v57, 0
  %v297 = vsel %vm163, %v58, 0
  %v300 = vsel %vm163, %v59, 0
  %v303 = vsel %vm163, %v60, 0
  %v306 = vsel %vm163, %v61, 0
  %v309 = vsel %vm163, %v62, 0
  %v312 = vsel %vm163, %v63, 0
  %v315 = vsel %vm163, %v64, 0
  %v318 = vsel %vm163, %v65, 0
  %v321 = vsel %vm163, %v66, 0
  %v324 = vsel %vm163, %v67, 0
  %v327 = vsel %vm163, %v68, 0
  %v330 = vsel %vm163, %v69, 0
  %v333 = vsel %vm163, %v70, 0
  %v336 = vsel %vm163, %v71, 0
  %v339 = vsel %vm163, %v72, 0
  %v342 = vsel %vm163, %v73, 0
  %v345 = vsel %vm163, %v74, 0
  %v348 = vsel %vm163, %v75, 0
  %v351 = vsel %vm163, %v76, 0
  %v354 = vsel %vm163, %v77, 0
  %v357 = vsel %vm163, %v78, 0
  %v360 = vsel %vm163, %v79, 0
  %v363 = vsel %vm163, %v80, 0
  %v366 = vsel %vm163, %v81, 0
  %v369 = vsel %vm163, %v82, 0
  %v372 = vsel %vm163, %v83, 0
  %v375 = vsel %vm163, %v84, 0
  %v378 = vsel %vm163, %v85, 0
  %v381 = vsel %vm163, %v86, 0
  %v384 = vsel %vm163, %v87, 0
  %v387 = vsel %vm163, %v88, 0
  %v390 = vsel %vm163, %v89, 0
  %v393 = vsel %vm163, %v90, 0
  %v396 = vsel %vm163, %v91, 0
  %v399 = vsel %vm163, %v92, 0
  %v402 = vsel %vm163, %v93, 0
  %v405 = vsel %vm163, %v94, 0
  %v408 = vsel %vm163, %v95, 0
  %v411 = vsel %vm163, %v96, 0
  %v414 = vsel %vm163, %v97, 0
  %v417 = vsel %vm163, %v98, 0
  %v420 = vsel %vm163, %v99, 0
  %v423 = vsel %vm163, %v100, 0
  %v426 = vsel %vm163, %v101, 0
  %v429 = vsel %vm163, %v102, 0
  %v432 = vsel %vm163, %v103, 0
  %v435 = vsel %vm163, %v104, 0
  %v438 = vsel %vm163, %v105, 0
  %v441 = vsel %vm163, %v106, 0
  %v444 = vsel %vm163, %v107, 0
  %v447 = vsel %vm163, %v108, 0
  %v450 = vsel %vm163, %v109, 0
  %v453 = vsel %vm163, %v110, 0
  %v456 = vsel %vm163, %v111, 0
  %v459 = vsel %vm163, %v112, 0
  %v462 = vsel %vm163, %v113, 0
  %v465 = vsel %vm163, %v114, 0
  %v468 = vsel %vm163, %v115, 0
  %v471 = vsel %vm163, %v116, 0
  %v474 = vsel %vm163, %v117, 0
  %v477 = vsel %vm163, %v118, 0
  %v480 = vsel %vm163, %v119, 0
  %v483 = vsel %vm163, %v120, 0
  %v486 = vsel %vm163, %v121, 0
  %v489 = vsel %vm163, %v122, 0
  %v492 = vsel %vm163, %v123, 0
  %v495 = vsel %vm163, %v124, 0
  %v498 = vsel %vm163, %v125, 0
  %v501 = vsel %vm163, %v126, 0
  %v504 = vsel %vm163, %v127, 0
  %v507 = vsel %vm163, %v128, 0
  %v510 = vsel %vm163, %v129, 0
  %v513 = vsel %vm163, %v130, 0
  %v516 = vsel %vm163, %v131, 0
  %v519 = vsel %vm163, %v132, 0
  %v522 = vsel %vm163, %v133, 0
  %v525 = vsel %vm163, %v134, 0
  %v528 = vsel %vm163, %v135, 0
  %v531 = vsel %vm163, %v136, 0
  %v534 = vsel %vm163, %v137, 0
  %v537 = vsel %vm163, %v138, 0
  %v540 = vsel %vm163, %v139, 0
  %v543 = vsel %vm163, %v140, 0
  %v546 = vsel %vm163, %v141, 0
  %vm548 = vcmask 1043456
  %v550 = vsel %vm548, %v155, 0
  %552 = vmatprep.subr.mxu0 0.0
  %553 = vmatpush1.msra.mxu0 %v142
  %554 = vmatprep.subr.mxu0 0.0
  %555 = vmatpush1.msra.mxu0 %v143
  %556 = vmatprep.subr.mxu0 0.0
  %557 = vmatpush1.msra.mxu0 %v144
  %558 = vmatprep.subr.mxu0 0.0
  %559 = vmatpush1.msra.mxu0 %v145
  %560 = vmatprep.subr.mxu0 0.0
  %561 = vmatpush1.msra.mxu0 %v146
  %562 = vmatprep.subr.mxu0 0.0
  %563 = vmatpush1.msra.mxu0 %v147
  %564 = vmatprep.subr.mxu0 0.0
  %565 = vmatpush1.msra.mxu0 %v148
  %566 = vmatprep.subr.mxu0 0.0
  %567 = vmatpush1.msra.mxu0 %v149
  %568 = vmatprep.subr.mxu0 0.0
  %569 = vmatpush1.msra.mxu0 %v150
  %570 = vmatprep.subr.mxu0 0.0
  %571 = vmatpush1.msra.mxu0 %v151
  %572 = vmatprep.subr.mxu0 0.0
  %573 = vmatpush1.msra.mxu0 %v152
  %574 = vmatprep.subr.mxu0 0.0
  %575 = vmatpush1.msra.mxu0 %v153
  %576 = vmatprep.subr.mxu0 0.0
  %577 = vmatpush1.msra.mxu0 %v154
  %578 = vmatprep.subr.mxu0 0.0
  %579 = vmatpush1.msra.mxu0 %v550
  %580 = vmatprep.subr.mxu0 0.0
  %581 = vmatpush1.msra.mxu0 0.0
  %582 = vmatprep.subr.mxu0 0.0
  %583 = vmatpush1.msra.mxu0 0.0
  %584 = vmatprep.subr.mxu0 0.0
  %585 = vmatpush1.msra.mxu0 0.0
  %586 = vmatprep.subr.mxu0 0.0
  %587 = vmatpush1.msra.mxu0 0.0
  %588 = vmatprep.subr.mxu0 0.0
  %589 = vmatpush1.msra.mxu0 0.0
  %590 = vmatprep.subr.mxu0 0.0
  %591 = vmatpush1.msra.mxu0 0.0
  %592 = vmatprep.subr.mxu0 0.0
  %593 = vmatpush1.msra.mxu0 0.0
  %594 = vmatprep.subr.mxu0 0.0
  %595 = vmatpush1.msra.mxu0 0.0
  %596 = vmatprep.subr.mxu0 0.0
  %597 = vmatpush1.msra.mxu0 0.0
  %598 = vmatprep.subr.mxu0 0.0
  %599 = vmatpush1.msra.mxu0 0.0
  %600 = vmatprep.subr.mxu0 0.0
  %601 = vmatpush1.msra.mxu0 0.0
  %602 = vmatprep.subr.mxu0 0.0
  %603 = vmatpush1.msra.mxu0 0.0
  %604 = vmatprep.subr.mxu0 0.0
  %605 = vmatpush1.msra.mxu0 0.0
  %606 = vmatprep.subr.mxu0 0.0
  %607 = vmatpush1.msra.mxu0 0.0
  %608 = vmatprep.subr.mxu0 0.0
  %609 = vmatpush1.msra.mxu0 0.0
  %610 = vmatprep.subr.mxu0 0.0
  %611 = vmatpush1.msra.mxu0 0.0
  %612 = vmatprep.subr.mxu0 0.0
  %613 = vmatpush1.msra.mxu0 0.0
  %614 = vmatprep.subr.mxu0 0.0
  %615 = vmatpush1.msra.mxu0 0.0
  %616 = vmatprep.mubr.f32.mxu0 0.0
  %617 = vmatmul.mubr.f32.gmra.mrb[0].mxu0 %v165
  %v618 = vpop.f32.mrb[0].mxu0
  %v619 = vadd.f32 %v161, %v618
  %v620 = vpop.f32.mrb[0].mxu0
  %621 = vmatprep.mubr.f32.mxu0 0.0
  %622 = vmatmul.mubr.f32.gmra.mrb[0].mxu0 %v168
  %v623 = vpop.f32.mrb[0].mxu0
  %v624 = vadd.f32 %v161, %v623
  %v625 = vpop.f32.mrb[0].mxu0
  %626 = vmatprep.mubr.f32.mxu0 0.0
  %627 = vmatmul.mubr.f32.gmra.mrb[0].mxu0 %v171
  %v628 = vpop.f32.mrb[0].mxu0
  %v629 = vadd.f32 %v161, %v628
  %v630 = vpop.f32.mrb[0].mxu0
  %631 = vmatprep.mubr.f32.mxu0 0.0
  %632 = vmatmul.mubr.f32.gmra.mrb[0].mxu0 %v174
  %v633 = vpop.f32.mrb[0].mxu0
  %v634 = vadd.f32 %v161, %v633
  %v635 = vpop.f32.mrb[0].mxu0
  %636 = vmatprep.mubr.f32.mxu0 0.0
  %637 = vmatmul.mubr.f32.gmra.mrb[0].mxu0 %v177
  %v638 = vpop.f32.mrb[0].mxu0
  %v639 = vadd.f32 %v161, %v638
  %v640 = vpop.f32.mrb[0].mxu0
  %641 = vmatprep.mubr.f32.mxu0 0.0
  %642 = vmatmul.mubr.f32.gmra.mrb[0].mxu0 %v180
  %v643 = vpop.f32.mrb[0].mxu0
  %v644 = vadd.f32 %v161, %v643
  %v645 = vpop.f32.mrb[0].mxu0
  %646 = vmatprep.mubr.f32.mxu0 0.0
  %647 = vmatmul.mubr.f32.gmra.mrb[0].mxu0 %v183
  %v648 = vpop.f32.mrb[0].mxu0
  %v649 = vadd.f32 %v161, %v648
  %v650 = vpop.f32.mrb[0].mxu0
  %651 = vmatprep.mubr.f32.mxu0 0.0
  %652 = vmatmul.mubr.f32.gmra.mrb[0].mxu0 %v186
  %v653 = vpop.f32.mrb[0].mxu0
  %v654 = vadd.f32 %v161, %v653
  %v655 = vpop.f32.mrb[0].mxu0
  %656 = vmatprep.mubr.f32.mxu0 0.0
  %657 = vmatmul.mubr.f32.gmra.mrb[0].mxu0 %v189
  %v658 = vpop.f32.mrb[0].mxu0
  %v659 = vadd.f32 %v161, %v658
  %v660 = vpop.f32.mrb[0].mxu0
  %661 = vmatprep.mubr.f32.mxu0 0.0
  %662 = vmatmul.mubr.f32.gmra.mrb[0].mxu0 %v192
  %v663 = vpop.f32.mrb[0].mxu0
  %v664 = vadd.f32 %v161, %v663
  %v665 = vpop.f32.mrb[0].mxu0
  %666 = vmatprep.mubr.f32.mxu0 0.0
  %667 = vmatmul.mubr.f32.gmra.mrb[0].mxu0 %v195
  %v668 = vpop.f32.mrb[0].mxu0
  %v669 = vadd.f32 %v161, %v668
  %v670 = vpop.f32.mrb[0].mxu0
  %671 = vmatprep.mubr.f32.mxu0 0.0
  %672 = vmatmul.mubr.f32.gmra.mrb[0].mxu0 %v198
  %v673 = vpop.f32.mrb[0].mxu0
  %v674 = vadd.f32 %v161, %v673
  %v675 = vpop.f32.mrb[0].mxu0
  %676 = vmatprep.mubr.f32.mxu0 0.0
  %677 = vmatmul.mubr.f32.gmra.mrb[0].mxu0 %v201
  %v678 = vpop.f32.mrb[0].mxu0
  %v679 = vadd.f32 %v161, %v678
  %v680 = vpop.f32.mrb[0].mxu0
  %681 = vmatprep.mubr.f32.mxu0 0.0
  %682 = vmatmul.mubr.f32.gmra.mrb[0].mxu0 %v204
  %v683 = vpop.f32.mrb[0].mxu0
  %v684 = vadd.f32 %v161, %v683
  %v685 = vpop.f32.mrb[0].mxu0
  %686 = vmatprep.mubr.f32.mxu0 0.0
  %687 = vmatmul.mubr.f32.gmra.mrb[0].mxu0 %v207
  %v688 = vpop.f32.mrb[0].mxu0
  %v689 = vadd.f32 %v161, %v688
  %v690 = vpop.f32.mrb[0].mxu0
  %691 = vmatprep.mubr.f32.mxu0 0.0
  %692 = vmatmul.mubr.f32.gmra.mrb[0].mxu0 %v210
  %v693 = vpop.f32.mrb[0].mxu0
  %v694 = vadd.f32 %v161, %v693
  %v695 = vpop.f32.mrb[0].mxu0
  %696 = vmatprep.mubr.f32.mxu0 0.0
  %697 = vmatmul.mubr.f32.gmra.mrb[0].mxu0 %v213
  %v698 = vpop.f32.mrb[0].mxu0
  %v699 = vadd.f32 %v161, %v698
  %v700 = vpop.f32.mrb[0].mxu0
  %701 = vmatprep.mubr.f32.mxu0 0.0
  %702 = vmatmul.mubr.f32.gmra.mrb[0].mxu0 %v216
  %v703 = vpop.f32.mrb[0].mxu0
  %v704 = vadd.f32 %v161, %v703
  %v705 = vpop.f32.mrb[0].mxu0
  %706 = vmatprep.mubr.f32.mxu0 0.0
  %707 = vmatmul.mubr.f32.gmra.mrb[0].mxu0 %v219
  %v708 = vpop.f32.mrb[0].mxu0
  %v709 = vadd.f32 %v161, %v708
  %v710 = vpop.f32.mrb[0].mxu0
  %711 = vmatprep.mubr.f32.mxu0 0.0
  %712 = vmatmul.mubr.f32.gmra.mrb[0].mxu0 %v222
  %v713 = vpop.f32.mrb[0].mxu0
  %v714 = vadd.f32 %v161, %v713
  %v715 = vpop.f32.mrb[0].mxu0
  %716 = vmatprep.mubr.f32.mxu0 0.0
  %717 = vmatmul.mubr.f32.gmra.mrb[0].mxu0 %v225
  %v718 = vpop.f32.mrb[0].mxu0
  %v719 = vadd.f32 %v161, %v718
  %v720 = vpop.f32.mrb[0].mxu0
  %721 = vmatprep.mubr.f32.mxu0 0.0
  %722 = vmatmul.mubr.f32.gmra.mrb[0].mxu0 %v228
  %v723 = vpop.f32.mrb[0].mxu0
  %v724 = vadd.f32 %v161, %v723
  %v725 = vpop.f32.mrb[0].mxu0
  %726 = vmatprep.mubr.f32.mxu0 0.0
  %727 = vmatmul.mubr.f32.gmra.mrb[0].mxu0 %v231
  %v728 = vpop.f32.mrb[0].mxu0
  %v729 = vadd.f32 %v161, %v728
  %v730 = vpop.f32.mrb[0].mxu0
  %731 = vmatprep.mubr.f32.mxu0 0.0
  %732 = vmatmul.mubr.f32.gmra.mrb[0].mxu0 %v234
  %v733 = vpop.f32.mrb[0].mxu0
  %v734 = vadd.f32 %v161, %v733
  %v735 = vpop.f32.mrb[0].mxu0
  %736 = vmatprep.mubr.f32.mxu0 0.0
  %737 = vmatmul.mubr.f32.gmra.mrb[0].mxu0 %v237
  %v738 = vpop.f32.mrb[0].mxu0
  %v739 = vadd.f32 %v161, %v738
  %v740 = vpop.f32.mrb[0].mxu0
  %741 = vmatprep.mubr.f32.mxu0 0.0
  %742 = vmatmul.mubr.f32.gmra.mrb[0].mxu0 %v240
  %v743 = vpop.f32.mrb[0].mxu0
  %v744 = vadd.f32 %v161, %v743
  %v745 = vpop.f32.mrb[0].mxu0
  %746 = vmatprep.mubr.f32.mxu0 0.0
  %747 = vmatmul.mubr.f32.gmra.mrb[0].mxu0 %v243
  %v748 = vpop.f32.mrb[0].mxu0
  %v749 = vadd.f32 %v161, %v748
  %v750 = vpop.f32.mrb[0].mxu0
  %751 = vmatprep.mubr.f32.mxu0 0.0
  %752 = vmatmul.mubr.f32.gmra.mrb[0].mxu0 %v246
  %v753 = vpop.f32.mrb[0].mxu0
  %v754 = vadd.f32 %v161, %v753
  %v755 = vpop.f32.mrb[0].mxu0
  %756 = vmatprep.mubr.f32.mxu0 0.0
  %757 = vmatmul.mubr.f32.gmra.mrb[0].mxu0 %v249
  %v758 = vpop.f32.mrb[0].mxu0
  %v759 = vadd.f32 %v161, %v758
  %v760 = vpop.f32.mrb[0].mxu0
  %761 = vmatprep.mubr.f32.mxu0 0.0
  %762 = vmatmul.mubr.f32.gmra.mrb[0].mxu0 %v252
  %v763 = vpop.f32.mrb[0].mxu0
  %v764 = vadd.f32 %v161, %v763
  %v765 = vpop.f32.mrb[0].mxu0
  %766 = vmatprep.mubr.f32.mxu0 0.0
  %767 = vmatmul.mubr.f32.gmra.mrb[0].mxu0 %v255
  %v768 = vpop.f32.mrb[0].mxu0
  %v769 = vadd.f32 %v161, %v768
  %v770 = vpop.f32.mrb[0].mxu0
  %771 = vmatprep.mubr.f32.mxu0 0.0
  %772 = vmatmul.mubr.f32.gmra.mrb[0].mxu0 %v258
  %v773 = vpop.f32.mrb[0].mxu0
  %v774 = vadd.f32 %v161, %v773
  %v775 = vpop.f32.mrb[0].mxu0
  %776 = vmatprep.mubr.f32.mxu0 0.0
  %777 = vmatmul.mubr.f32.gmra.mrb[0].mxu0 %v261
  %v778 = vpop.f32.mrb[0].mxu0
  %v779 = vadd.f32 %v161, %v778
  %v780 = vpop.f32.mrb[0].mxu0
  %781 = vmatprep.mubr.f32.mxu0 0.0
  %782 = vmatmul.mubr.f32.gmra.mrb[0].mxu0 %v264
  %v783 = vpop.f32.mrb[0].mxu0
  %v784 = vadd.f32 %v161, %v783
  %v785 = vpop.f32.mrb[0].mxu0
  %786 = vmatprep.mubr.f32.mxu0 0.0
  %787 = vmatmul.mubr.f32.gmra.mrb[0].mxu0 %v267
  %v788 = vpop.f32.mrb[0].mxu0
  %v789 = vadd.f32 %v161, %v788
  %v790 = vpop.f32.mrb[0].mxu0
  %791 = vmatprep.mubr.f32.mxu0 0.0
  %792 = vmatmul.mubr.f32.gmra.mrb[0].mxu0 %v270
  %v793 = vpop.f32.mrb[0].mxu0
  %v794 = vadd.f32 %v161, %v793
  %v795 = vpop.f32.mrb[0].mxu0
  %796 = vmatprep.mubr.f32.mxu0 0.0
  %797 = vmatmul.mubr.f32.gmra.mrb[0].mxu0 %v273
  %v798 = vpop.f32.mrb[0].mxu0
  %v799 = vadd.f32 %v161, %v798
  %v800 = vpop.f32.mrb[0].mxu0
  %801 = vmatprep.mubr.f32.mxu0 0.0
  %802 = vmatmul.mubr.f32.gmra.mrb[0].mxu0 %v276
  %v803 = vpop.f32.mrb[0].mxu0
  %v804 = vadd.f32 %v161, %v803
  %v805 = vpop.f32.mrb[0].mxu0
  %806 = vmatprep.mubr.f32.mxu0 0.0
  %807 = vmatmul.mubr.f32.gmra.mrb[0].mxu0 %v279
  %v808 = vpop.f32.mrb[0].mxu0
  %v809 = vadd.f32 %v161, %v808
  %v810 = vpop.f32.mrb[0].mxu0
  %811 = vmatprep.mubr.f32.mxu0 0.0
  %812 = vmatmul.mubr.f32.gmra.mrb[0].mxu0 %v282
  %v813 = vpop.f32.mrb[0].mxu0
  %v814 = vadd.f32 %v161, %v813
  %v815 = vpop.f32.mrb[0].mxu0
  %816 = vmatprep.mubr.f32.mxu0 0.0
  %817 = vmatmul.mubr.f32.gmra.mrb[0].mxu0 %v285
  %v818 = vpop.f32.mrb[0].mxu0
  %v819 = vadd.f32 %v161, %v818
  %v820 = vpop.f32.mrb[0].mxu0
  %821 = vmatprep.mubr.f32.mxu0 0.0
  %822 = vmatmul.mubr.f32.gmra.mrb[0].mxu0 %v288
  %v823 = vpop.f32.mrb[0].mxu0
  %v824 = vadd.f32 %v161, %v823
  %v825 = vpop.f32.mrb[0].mxu0
  %826 = vmatprep.mubr.f32.mxu0 0.0
  %827 = vmatmul.mubr.f32.gmra.mrb[0].mxu0 %v291
  %v828 = vpop.f32.mrb[0].mxu0
  %v829 = vadd.f32 %v161, %v828
  %v830 = vpop.f32.mrb[0].mxu0
  %831 = vmatprep.mubr.f32.mxu0 0.0
  %832 = vmatmul.mubr.f32.gmra.mrb[0].mxu0 %v294
  %v833 = vpop.f32.mrb[0].mxu0
  %v834 = vadd.f32 %v161, %v833
  %v835 = vpop.f32.mrb[0].mxu0
  %836 = vmatprep.mubr.f32.mxu0 0.0
  %837 = vmatmul.mubr.f32.gmra.mrb[0].mxu0 %v297
  %v838 = vpop.f32.mrb[0].mxu0
  %v839 = vadd.f32 %v161, %v838
  %v840 = vpop.f32.mrb[0].mxu0
  %841 = vmatprep.mubr.f32.mxu0 0.0
  %842 = vmatmul.mubr.f32.gmra.mrb[0].mxu0 %v300
  %v843 = vpop.f32.mrb[0].mxu0
  %v844 = vadd.f32 %v161, %v843
  %v845 = vpop.f32.mrb[0].mxu0
  %846 = vmatprep.mubr.f32.mxu0 0.0
  %847 = vmatmul.mubr.f32.gmra.mrb[0].mxu0 %v303
  %v848 = vpop.f32.mrb[0].mxu0
  %v849 = vadd.f32 %v161, %v848
  %v850 = vpop.f32.mrb[0].mxu0
  %851 = vmatprep.mubr.f32.mxu0 0.0
  %852 = vmatmul.mubr.f32.gmra.mrb[0].mxu0 %v306
  %v853 = vpop.f32.mrb[0].mxu0
  %v854 = vadd.f32 %v161, %v853
  %v855 = vpop.f32.mrb[0].mxu0
  %856 = vmatprep.mubr.f32.mxu0 0.0
  %857 = vmatmul.mubr.f32.gmra.mrb[0].mxu0 %v309
  %v858 = vpop.f32.mrb[0].mxu0
  %v859 = vadd.f32 %v161, %v858
  %v860 = vpop.f32.mrb[0].mxu0
  %861 = vmatprep.mubr.f32.mxu0 0.0
  %862 = vmatmul.mubr.f32.gmra.mrb[0].mxu0 %v312
  %v863 = vpop.f32.mrb[0].mxu0
  %v864 = vadd.f32 %v161, %v863
  %v865 = vpop.f32.mrb[0].mxu0
  %866 = vmatprep.mubr.f32.mxu0 0.0
  %867 = vmatmul.mubr.f32.gmra.mrb[0].mxu0 %v315
  %v868 = vpop.f32.mrb[0].mxu0
  %v869 = vadd.f32 %v161, %v868
  %v870 = vpop.f32.mrb[0].mxu0
  %871 = vmatprep.mubr.f32.mxu0 0.0
  %872 = vmatmul.mubr.f32.gmra.mrb[0].mxu0 %v318
  %v873 = vpop.f32.mrb[0].mxu0
  %v874 = vadd.f32 %v161, %v873
  %v875 = vpop.f32.mrb[0].mxu0
  %876 = vmatprep.mubr.f32.mxu0 0.0
  %877 = vmatmul.mubr.f32.gmra.mrb[0].mxu0 %v321
  %v878 = vpop.f32.mrb[0].mxu0
  %v879 = vadd.f32 %v161, %v878
  %v880 = vpop.f32.mrb[0].mxu0
  %881 = vmatprep.mubr.f32.mxu0 0.0
  %882 = vmatmul.mubr.f32.gmra.mrb[0].mxu0 %v324
  %v883 = vpop.f32.mrb[0].mxu0
  %v884 = vadd.f32 %v161, %v883
  %v885 = vpop.f32.mrb[0].mxu0
  %886 = vmatprep.mubr.f32.mxu0 0.0
  %887 = vmatmul.mubr.f32.gmra.mrb[0].mxu0 %v327
  %v888 = vpop.f32.mrb[0].mxu0
  %v889 = vadd.f32 %v161, %v888
  %v890 = vpop.f32.mrb[0].mxu0
  %891 = vmatprep.mubr.f32.mxu0 0.0
  %892 = vmatmul.mubr.f32.gmra.mrb[0].mxu0 %v330
  %v893 = vpop.f32.mrb[0].mxu0
  %v894 = vadd.f32 %v161, %v893
  %v895 = vpop.f32.mrb[0].mxu0
  %896 = vmatprep.mubr.f32.mxu0 0.0
  %897 = vmatmul.mubr.f32.gmra.mrb[0].mxu0 %v333
  %v898 = vpop.f32.mrb[0].mxu0
  %v899 = vadd.f32 %v161, %v898
  %v900 = vpop.f32.mrb[0].mxu0
  %901 = vmatprep.mubr.f32.mxu0 0.0
  %902 = vmatmul.mubr.f32.gmra.mrb[0].mxu0 %v336
  %v903 = vpop.f32.mrb[0].mxu0
  %v904 = vadd.f32 %v161, %v903
  %v905 = vpop.f32.mrb[0].mxu0
  %906 = vmatprep.mubr.f32.mxu0 0.0
  %907 = vmatmul.mubr.f32.gmra.mrb[0].mxu0 %v339
  %v908 = vpop.f32.mrb[0].mxu0
  %v909 = vadd.f32 %v161, %v908
  %v910 = vpop.f32.mrb[0].mxu0
  %911 = vmatprep.mubr.f32.mxu0 0.0
  %912 = vmatmul.mubr.f32.gmra.mrb[0].mxu0 %v342
  %v913 = vpop.f32.mrb[0].mxu0
  %v914 = vadd.f32 %v161, %v913
  %v915 = vpop.f32.mrb[0].mxu0
  %916 = vmatprep.mubr.f32.mxu0 0.0
  %917 = vmatmul.mubr.f32.gmra.mrb[0].mxu0 %v345
  %v918 = vpop.f32.mrb[0].mxu0
  %v919 = vadd.f32 %v161, %v918
  %v920 = vpop.f32.mrb[0].mxu0
  %921 = vmatprep.mubr.f32.mxu0 0.0
  %922 = vmatmul.mubr.f32.gmra.mrb[0].mxu0 %v348
  %v923 = vpop.f32.mrb[0].mxu0
  %v924 = vadd.f32 %v161, %v923
  %v925 = vpop.f32.mrb[0].mxu0
  %926 = vmatprep.mubr.f32.mxu0 0.0
  %927 = vmatmul.mubr.f32.gmra.mrb[0].mxu0 %v351
  %v928 = vpop.f32.mrb[0].mxu0
  %v929 = vadd.f32 %v161, %v928
  %v930 = vpop.f32.mrb[0].mxu0
  %931 = vmatprep.mubr.f32.mxu0 0.0
  %932 = vmatmul.mubr.f32.gmra.mrb[0].mxu0 %v354
  %v933 = vpop.f32.mrb[0].mxu0
  %v934 = vadd.f32 %v161, %v933
  %v935 = vpop.f32.mrb[0].mxu0
  %936 = vmatprep.mubr.f32.mxu0 0.0
  %937 = vmatmul.mubr.f32.gmra.mrb[0].mxu0 %v357
  %v938 = vpop.f32.mrb[0].mxu0
  %v939 = vadd.f32 %v161, %v938
  %v940 = vpop.f32.mrb[0].mxu0
  %941 = vmatprep.mubr.f32.mxu0 0.0
  %942 = vmatmul.mubr.f32.gmra.mrb[0].mxu0 %v360
  %v943 = vpop.f32.mrb[0].mxu0
  %v944 = vadd.f32 %v161, %v943
  %v945 = vpop.f32.mrb[0].mxu0
  %946 = vmatprep.mubr.f32.mxu0 0.0
  %947 = vmatmul.mubr.f32.gmra.mrb[0].mxu0 %v363
  %v948 = vpop.f32.mrb[0].mxu0
  %v949 = vadd.f32 %v161, %v948
  %v950 = vpop.f32.mrb[0].mxu0
  %951 = vmatprep.mubr.f32.mxu0 0.0
  %952 = vmatmul.mubr.f32.gmra.mrb[0].mxu0 %v366
  %v953 = vpop.f32.mrb[0].mxu0
  %v954 = vadd.f32 %v161, %v953
  %v955 = vpop.f32.mrb[0].mxu0
  %956 = vmatprep.mubr.f32.mxu0 0.0
  %957 = vmatmul.mubr.f32.gmra.mrb[0].mxu0 %v369
  %v958 = vpop.f32.mrb[0].mxu0
  %v959 = vadd.f32 %v161, %v958
  %v960 = vpop.f32.mrb[0].mxu0
  %961 = vmatprep.mubr.f32.mxu0 0.0
  %962 = vmatmul.mubr.f32.gmra.mrb[0].mxu0 %v372
  %v963 = vpop.f32.mrb[0].mxu0
  %v964 = vadd.f32 %v161, %v963
  %v965 = vpop.f32.mrb[0].mxu0
  %966 = vmatprep.mubr.f32.mxu0 0.0
  %967 = vmatmul.mubr.f32.gmra.mrb[0].mxu0 %v375
  %v968 = vpop.f32.mrb[0].mxu0
  %v969 = vadd.f32 %v161, %v968
  %v970 = vpop.f32.mrb[0].mxu0
  %971 = vmatprep.mubr.f32.mxu0 0.0
  %972 = vmatmul.mubr.f32.gmra.mrb[0].mxu0 %v378
  %v973 = vpop.f32.mrb[0].mxu0
  %v974 = vadd.f32 %v161, %v973
  %v975 = vpop.f32.mrb[0].mxu0
  %976 = vmatprep.mubr.f32.mxu0 0.0
  %977 = vmatmul.mubr.f32.gmra.mrb[0].mxu0 %v381
  %v978 = vpop.f32.mrb[0].mxu0
  %v979 = vadd.f32 %v161, %v978
  %v980 = vpop.f32.mrb[0].mxu0
  %981 = vmatprep.mubr.f32.mxu0 0.0
  %982 = vmatmul.mubr.f32.gmra.mrb[0].mxu0 %v384
  %v983 = vpop.f32.mrb[0].mxu0
  %v984 = vadd.f32 %v161, %v983
  %v985 = vpop.f32.mrb[0].mxu0
  %986 = vmatprep.mubr.f32.mxu0 0.0
  %987 = vmatmul.mubr.f32.gmra.mrb[0].mxu0 %v387
  %v988 = vpop.f32.mrb[0].mxu0
  %v989 = vadd.f32 %v161, %v988
  %v990 = vpop.f32.mrb[0].mxu0
  %991 = vmatprep.mubr.f32.mxu0 0.0
  %992 = vmatmul.mubr.f32.gmra.mrb[0].mxu0 %v390
  %v993 = vpop.f32.mrb[0].mxu0
  %v994 = vadd.f32 %v161, %v993
  %v995 = vpop.f32.mrb[0].mxu0
  %996 = vmatprep.mubr.f32.mxu0 0.0
  %997 = vmatmul.mubr.f32.gmra.mrb[0].mxu0 %v393
  %v998 = vpop.f32.mrb[0].mxu0
  %v999 = vadd.f32 %v161, %v998
  %v1000 = vpop.f32.mrb[0].mxu0
  %1001 = vmatprep.mubr.f32.mxu0 0.0
  %1002 = vmatmul.mubr.f32.gmra.mrb[0].mxu0 %v396
  %v1003 = vpop.f32.mrb[0].mxu0
  %v1004 = vadd.f32 %v161, %v1003
  %v1005 = vpop.f32.mrb[0].mxu0
  %1006 = vmatprep.mubr.f32.mxu0 0.0
  %1007 = vmatmul.mubr.f32.gmra.mrb[0].mxu0 %v399
  %v1008 = vpop.f32.mrb[0].mxu0
  %v1009 = vadd.f32 %v161, %v1008
  %v1010 = vpop.f32.mrb[0].mxu0
  %1011 = vmatprep.mubr.f32.mxu0 0.0
  %1012 = vmatmul.mubr.f32.gmra.mrb[0].mxu0 %v402
  %v1013 = vpop.f32.mrb[0].mxu0
  %v1014 = vadd.f32 %v161, %v1013
  %v1015 = vpop.f32.mrb[0].mxu0
  %1016 = vmatprep.mubr.f32.mxu0 0.0
  %1017 = vmatmul.mubr.f32.gmra.mrb[0].mxu0 %v405
  %v1018 = vpop.f32.mrb[0].mxu0
  %v1019 = vadd.f32 %v161, %v1018
  %v1020 = vpop.f32.mrb[0].mxu0
  %1021 = vmatprep.mubr.f32.mxu0 0.0
  %1022 = vmatmul.mubr.f32.gmra.mrb[0].mxu0 %v408
  %v1023 = vpop.f32.mrb[0].mxu0
  %v1024 = vadd.f32 %v161, %v1023
  %v1025 = vpop.f32.mrb[0].mxu0
  %1026 = vmatprep.mubr.f32.mxu0 0.0
  %1027 = vmatmul.mubr.f32.gmra.mrb[0].mxu0 %v411
  %v1028 = vpop.f32.mrb[0].mxu0
  %v1029 = vadd.f32 %v161, %v1028
  %v1030 = vpop.f32.mrb[0].mxu0
  %1031 = vmatprep.mubr.f32.mxu0 0.0
  %1032 = vmatmul.mubr.f32.gmra.mrb[0].mxu0 %v414
  %v1033 = vpop.f32.mrb[0].mxu0
  %v1034 = vadd.f32 %v161, %v1033
  %v1035 = vpop.f32.mrb[0].mxu0
  %1036 = vmatprep.mubr.f32.mxu0 0.0
  %1037 = vmatmul.mubr.f32.gmra.mrb[0].mxu0 %v417
  %v1038 = vpop.f32.mrb[0].mxu0
  %v1039 = vadd.f32 %v161, %v1038
  %v1040 = vpop.f32.mrb[0].mxu0
  %1041 = vmatprep.mubr.f32.mxu0 0.0
  %1042 = vmatmul.mubr.f32.gmra.mrb[0].mxu0 %v420
  %v1043 = vpop.f32.mrb[0].mxu0
  %v1044 = vadd.f32 %v161, %v1043
  %v1045 = vpop.f32.mrb[0].mxu0
  %1046 = vmatprep.mubr.f32.mxu0 0.0
  %1047 = vmatmul.mubr.f32.gmra.mrb[0].mxu0 %v423
  %v1048 = vpop.f32.mrb[0].mxu0
  %v1049 = vadd.f32 %v161, %v1048
  %v1050 = vpop.f32.mrb[0].mxu0
  %1051 = vmatprep.mubr.f32.mxu0 0.0
  %1052 = vmatmul.mubr.f32.gmra.mrb[0].mxu0 %v426
  %v1053 = vpop.f32.mrb[0].mxu0
  %v1054 = vadd.f32 %v161, %v1053
  %v1055 = vpop.f32.mrb[0].mxu0
  %1056 = vmatprep.mubr.f32.mxu0 0.0
  %1057 = vmatmul.mubr.f32.gmra.mrb[0].mxu0 %v429
  %v1058 = vpop.f32.mrb[0].mxu0
  %v1059 = vadd.f32 %v161, %v1058
  %v1060 = vpop.f32.mrb[0].mxu0
  %1061 = vmatprep.mubr.f32.mxu0 0.0
  %1062 = vmatmul.mubr.f32.gmra.mrb[0].mxu0 %v432
  %v1063 = vpop.f32.mrb[0].mxu0
  %v1064 = vadd.f32 %v161, %v1063
  %v1065 = vpop.f32.mrb[0].mxu0
  %1066 = vmatprep.mubr.f32.mxu0 0.0
  %1067 = vmatmul.mubr.f32.gmra.mrb[0].mxu0 %v435
  %v1068 = vpop.f32.mrb[0].mxu0
  %v1069 = vadd.f32 %v161, %v1068
  %v1070 = vpop.f32.mrb[0].mxu0
  %1071 = vmatprep.mubr.f32.mxu0 0.0
  %1072 = vmatmul.mubr.f32.gmra.mrb[0].mxu0 %v438
  %v1073 = vpop.f32.mrb[0].mxu0
  %v1074 = vadd.f32 %v161, %v1073
  %v1075 = vpop.f32.mrb[0].mxu0
  %1076 = vmatprep.mubr.f32.mxu0 0.0
  %1077 = vmatmul.mubr.f32.gmra.mrb[0].mxu0 %v441
  %v1078 = vpop.f32.mrb[0].mxu0
  %v1079 = vadd.f32 %v161, %v1078
  %v1080 = vpop.f32.mrb[0].mxu0
  %1081 = vmatprep.mubr.f32.mxu0 0.0
  %1082 = vmatmul.mubr.f32.gmra.mrb[0].mxu0 %v444
  %v1083 = vpop.f32.mrb[0].mxu0
  %v1084 = vadd.f32 %v161, %v1083
  %v1085 = vpop.f32.mrb[0].mxu0
  %1086 = vmatprep.mubr.f32.mxu0 0.0
  %1087 = vmatmul.mubr.f32.gmra.mrb[0].mxu0 %v447
  %v1088 = vpop.f32.mrb[0].mxu0
  %v1089 = vadd.f32 %v161, %v1088
  %v1090 = vpop.f32.mrb[0].mxu0
  %1091 = vmatprep.mubr.f32.mxu0 0.0
  %1092 = vmatmul.mubr.f32.gmra.mrb[0].mxu0 %v450
  %v1093 = vpop.f32.mrb[0].mxu0
  %v1094 = vadd.f32 %v161, %v1093
  %v1095 = vpop.f32.mrb[0].mxu0
  %1096 = vmatprep.mubr.f32.mxu0 0.0
  %1097 = vmatmul.mubr.f32.gmra.mrb[0].mxu0 %v453
  %v1098 = vpop.f32.mrb[0].mxu0
  %v1099 = vadd.f32 %v161, %v1098
  %v1100 = vpop.f32.mrb[0].mxu0
  %1101 = vmatprep.mubr.f32.mxu0 0.0
  %1102 = vmatmul.mubr.f32.gmra.mrb[0].mxu0 %v456
  %v1103 = vpop.f32.mrb[0].mxu0
  %v1104 = vadd.f32 %v161, %v1103
  %v1105 = vpop.f32.mrb[0].mxu0
  %1106 = vmatprep.mubr.f32.mxu0 0.0
  %1107 = vmatmul.mubr.f32.gmra.mrb[0].mxu0 %v459
  %v1108 = vpop.f32.mrb[0].mxu0
  %v1109 = vadd.f32 %v161, %v1108
  %v1110 = vpop.f32.mrb[0].mxu0
  %1111 = vmatprep.mubr.f32.mxu0 0.0
  %1112 = vmatmul.mubr.f32.gmra.mrb[0].mxu0 %v462
  %v1113 = vpop.f32.mrb[0].mxu0
  %v1114 = vadd.f32 %v161, %v1113
  %v1115 = vpop.f32.mrb[0].mxu0
  %1116 = vmatprep.mubr.f32.mxu0 0.0
  %1117 = vmatmul.mubr.f32.gmra.mrb[0].mxu0 %v465
  %v1118 = vpop.f32.mrb[0].mxu0
  %v1119 = vadd.f32 %v161, %v1118
  %v1120 = vpop.f32.mrb[0].mxu0
  %1121 = vmatprep.mubr.f32.mxu0 0.0
  %1122 = vmatmul.mubr.f32.gmra.mrb[0].mxu0 %v468
  %v1123 = vpop.f32.mrb[0].mxu0
  %v1124 = vadd.f32 %v161, %v1123
  %v1125 = vpop.f32.mrb[0].mxu0
  %1126 = vmatprep.mubr.f32.mxu0 0.0
  %1127 = vmatmul.mubr.f32.gmra.mrb[0].mxu0 %v471
  %v1128 = vpop.f32.mrb[0].mxu0
  %v1129 = vadd.f32 %v161, %v1128
  %v1130 = vpop.f32.mrb[0].mxu0
  %1131 = vmatprep.mubr.f32.mxu0 0.0
  %1132 = vmatmul.mubr.f32.gmra.mrb[0].mxu0 %v474
  %v1133 = vpop.f32.mrb[0].mxu0
  %v1134 = vadd.f32 %v161, %v1133
  %v1135 = vpop.f32.mrb[0].mxu0
  %1136 = vmatprep.mubr.f32.mxu0 0.0
  %1137 = vmatmul.mubr.f32.gmra.mrb[0].mxu0 %v477
  %v1138 = vpop.f32.mrb[0].mxu0
  %v1139 = vadd.f32 %v161, %v1138
  %v1140 = vpop.f32.mrb[0].mxu0
  %1141 = vmatprep.mubr.f32.mxu0 0.0
  %1142 = vmatmul.mubr.f32.gmra.mrb[0].mxu0 %v480
  %v1143 = vpop.f32.mrb[0].mxu0
  %v1144 = vadd.f32 %v161, %v1143
  %v1145 = vpop.f32.mrb[0].mxu0
  %1146 = vmatprep.mubr.f32.mxu0 0.0
  %1147 = vmatmul.mubr.f32.gmra.mrb[0].mxu0 %v483
  %v1148 = vpop.f32.mrb[0].mxu0
  %v1149 = vadd.f32 %v161, %v1148
  %v1150 = vpop.f32.mrb[0].mxu0
  %1151 = vmatprep.mubr.f32.mxu0 0.0
  %1152 = vmatmul.mubr.f32.gmra.mrb[0].mxu0 %v486
  %v1153 = vpop.f32.mrb[0].mxu0
  %v1154 = vadd.f32 %v161, %v1153
  %v1155 = vpop.f32.mrb[0].mxu0
  %1156 = vmatprep.mubr.f32.mxu0 0.0
  %1157 = vmatmul.mubr.f32.gmra.mrb[0].mxu0 %v489
  %v1158 = vpop.f32.mrb[0].mxu0
  %v1159 = vadd.f32 %v161, %v1158
  %v1160 = vpop.f32.mrb[0].mxu0
  %1161 = vmatprep.mubr.f32.mxu0 0.0
  %1162 = vmatmul.mubr.f32.gmra.mrb[0].mxu0 %v492
  %v1163 = vpop.f32.mrb[0].mxu0
  %v1164 = vadd.f32 %v161, %v1163
  %v1165 = vpop.f32.mrb[0].mxu0
  %1166 = vmatprep.mubr.f32.mxu0 0.0
  %1167 = vmatmul.mubr.f32.gmra.mrb[0].mxu0 %v495
  %v1168 = vpop.f32.mrb[0].mxu0
  %v1169 = vadd.f32 %v161, %v1168
  %v1170 = vpop.f32.mrb[0].mxu0
  %1171 = vmatprep.mubr.f32.mxu0 0.0
  %1172 = vmatmul.mubr.f32.gmra.mrb[0].mxu0 %v498
  %v1173 = vpop.f32.mrb[0].mxu0
  %v1174 = vadd.f32 %v161, %v1173
  %v1175 = vpop.f32.mrb[0].mxu0
  %1176 = vmatprep.mubr.f32.mxu0 0.0
  %1177 = vmatmul.mubr.f32.gmra.mrb[0].mxu0 %v501
  %v1178 = vpop.f32.mrb[0].mxu0
  %v1179 = vadd.f32 %v161, %v1178
  %v1180 = vpop.f32.mrb[0].mxu0
  %1181 = vmatprep.mubr.f32.mxu0 0.0
  %1182 = vmatmul.mubr.f32.gmra.mrb[0].mxu0 %v504
  %v1183 = vpop.f32.mrb[0].mxu0
  %v1184 = vadd.f32 %v161, %v1183
  %v1185 = vpop.f32.mrb[0].mxu0
  %1186 = vmatprep.mubr.f32.mxu0 0.0
  %1187 = vmatmul.mubr.f32.gmra.mrb[0].mxu0 %v507
  %v1188 = vpop.f32.mrb[0].mxu0
  %v1189 = vadd.f32 %v161, %v1188
  %v1190 = vpop.f32.mrb[0].mxu0
  %1191 = vmatprep.mubr.f32.mxu0 0.0
  %1192 = vmatmul.mubr.f32.gmra.mrb[0].mxu0 %v510
  %v1193 = vpop.f32.mrb[0].mxu0
  %v1194 = vadd.f32 %v161, %v1193
  %v1195 = vpop.f32.mrb[0].mxu0
  %1196 = vmatprep.mubr.f32.mxu0 0.0
  %1197 = vmatmul.mubr.f32.gmra.mrb[0].mxu0 %v513
  %v1198 = vpop.f32.mrb[0].mxu0
  %v1199 = vadd.f32 %v161, %v1198
  %v1200 = vpop.f32.mrb[0].mxu0
  %1201 = vmatprep.mubr.f32.mxu0 0.0
  %1202 = vmatmul.mubr.f32.gmra.mrb[0].mxu0 %v516
  %v1203 = vpop.f32.mrb[0].mxu0
  %v1204 = vadd.f32 %v161, %v1203
  %v1205 = vpop.f32.mrb[0].mxu0
  %1206 = vmatprep.mubr.f32.mxu0 0.0
  %1207 = vmatmul.mubr.f32.gmra.mrb[0].mxu0 %v519
  %v1208 = vpop.f32.mrb[0].mxu0
  %v1209 = vadd.f32 %v161, %v1208
  %v1210 = vpop.f32.mrb[0].mxu0
  %1211 = vmatprep.mubr.f32.mxu0 0.0
  %1212 = vmatmul.mubr.f32.gmra.mrb[0].mxu0 %v522
  %v1213 = vpop.f32.mrb[0].mxu0
  %v1214 = vadd.f32 %v161, %v1213
  %v1215 = vpop.f32.mrb[0].mxu0
  %1216 = vmatprep.mubr.f32.mxu0 0.0
  %1217 = vmatmul.mubr.f32.gmra.mrb[0].mxu0 %v525
  %v1218 = vpop.f32.mrb[0].mxu0
  %v1219 = vadd.f32 %v161, %v1218
  %v1220 = vpop.f32.mrb[0].mxu0
  %1221 = vmatprep.mubr.f32.mxu0 0.0
  %1222 = vmatmul.mubr.f32.gmra.mrb[0].mxu0 %v528
  %v1223 = vpop.f32.mrb[0].mxu0
  %v1224 = vadd.f32 %v161, %v1223
  %v1225 = vpop.f32.mrb[0].mxu0
  %1226 = vmatprep.mubr.f32.mxu0 0.0
  %1227 = vmatmul.mubr.f32.gmra.mrb[0].mxu0 %v531
  %v1228 = vpop.f32.mrb[0].mxu0
  %v1229 = vadd.f32 %v161, %v1228
  %v1230 = vpop.f32.mrb[0].mxu0
  %1231 = vmatprep.mubr.f32.mxu0 0.0
  %1232 = vmatmul.mubr.f32.gmra.mrb[0].mxu0 %v534
  %v1233 = vpop.f32.mrb[0].mxu0
  %v1234 = vadd.f32 %v161, %v1233
  %v1235 = vpop.f32.mrb[0].mxu0
  %1236 = vmatprep.mubr.f32.mxu0 0.0
  %1237 = vmatmul.mubr.f32.gmra.mrb[0].mxu0 %v537
  %v1238 = vpop.f32.mrb[0].mxu0
  %v1239 = vadd.f32 %v161, %v1238
  %v1240 = vpop.f32.mrb[0].mxu0
  %1241 = vmatprep.mubr.f32.mxu0 0.0
  %1242 = vmatmul.mubr.f32.gmra.mrb[0].mxu0 %v540
  %v1243 = vpop.f32.mrb[0].mxu0
  %v1244 = vadd.f32 %v161, %v1243
  %v1245 = vpop.f32.mrb[0].mxu0
  %1246 = vmatprep.mubr.f32.mxu0 0.0
  %1247 = vmatmul.mubr.f32.gmra.mrb[0].mxu0 %v543
  %v1248 = vpop.f32.mrb[0].mxu0
  %v1249 = vadd.f32 %v161, %v1248
  %v1250 = vpop.f32.mrb[0].mxu0
  %1251 = vmatprep.mubr.f32.mxu0 0.0
  %1252 = vmatmul.mubr.f32.gmra.mrb[0].mxu0 %v546
  %v1253 = vpop.f32.mrb[0].mxu0
  %v1254 = vadd.f32 %v161, %v1253
  %v1255 = vpop.f32.mrb[0].mxu0
  %1256 = vdwg.mxu0
  %v1257 = vmax.f32 %v619, 0.0
  %v1258 = vmax.f32 %v624, 0.0
  %v1259 = vmax.f32 %v629, 0.0
  %v1260 = vmax.f32 %v634, 0.0
  %v1261 = vmax.f32 %v639, 0.0
  %v1262 = vmax.f32 %v644, 0.0
  %v1263 = vmax.f32 %v649, 0.0
  %v1264 = vmax.f32 %v654, 0.0
  %v1265 = vmax.f32 %v659, 0.0
  %v1266 = vmax.f32 %v664, 0.0
  %v1267 = vmax.f32 %v669, 0.0
  %v1268 = vmax.f32 %v674, 0.0
  %v1269 = vmax.f32 %v679, 0.0
  %v1270 = vmax.f32 %v684, 0.0
  %v1271 = vmax.f32 %v689, 0.0
  %v1272 = vmax.f32 %v694, 0.0
  %v1273 = vmax.f32 %v699, 0.0
  %v1274 = vmax.f32 %v704, 0.0
  %v1275 = vmax.f32 %v709, 0.0
  %v1276 = vmax.f32 %v714, 0.0
  %v1277 = vmax.f32 %v719, 0.0
  %v1278 = vmax.f32 %v724, 0.0
  %v1279 = vmax.f32 %v729, 0.0
  %v1280 = vmax.f32 %v734, 0.0
  %v1281 = vmax.f32 %v739, 0.0
  %v1282 = vmax.f32 %v744, 0.0
  %v1283 = vmax.f32 %v749, 0.0
  %v1284 = vmax.f32 %v754, 0.0
  %v1285 = vmax.f32 %v759, 0.0
  %v1286 = vmax.f32 %v764, 0.0
  %v1287 = vmax.f32 %v769, 0.0
  %v1288 = vmax.f32 %v774, 0.0
  %v1289 = vmax.f32 %v779, 0.0
  %v1290 = vmax.f32 %v784, 0.0
  %v1291 = vmax.f32 %v789, 0.0
  %v1292 = vmax.f32 %v794, 0.0
  %v1293 = vmax.f32 %v799, 0.0
  %v1294 = vmax.f32 %v804, 0.0
  %v1295 = vmax.f32 %v809, 0.0
  %v1296 = vmax.f32 %v814, 0.0
  %v1297 = vmax.f32 %v819, 0.0
  %v1298 = vmax.f32 %v824, 0.0
  %v1299 = vmax.f32 %v829, 0.0
  %v1300 = vmax.f32 %v834, 0.0
  %v1301 = vmax.f32 %v839, 0.0
  %v1302 = vmax.f32 %v844, 0.0
  %v1303 = vmax.f32 %v849, 0.0
  %v1304 = vmax.f32 %v854, 0.0
  %v1305 = vmax.f32 %v859, 0.0
  %v1306 = vmax.f32 %v864, 0.0
  %v1307 = vmax.f32 %v869, 0.0
  %v1308 = vmax.f32 %v874, 0.0
  %v1309 = vmax.f32 %v879, 0.0
  %v1310 = vmax.f32 %v884, 0.0
  %v1311 = vmax.f32 %v889, 0.0
  %v1312 = vmax.f32 %v894, 0.0
  %v1313 = vmax.f32 %v899, 0.0
  %v1314 = vmax.f32 %v904, 0.0
  %v1315 = vmax.f32 %v909, 0.0
  %v1316 = vmax.f32 %v914, 0.0
  %v1317 = vmax.f32 %v919, 0.0
  %v1318 = vmax.f32 %v924, 0.0
  %v1319 = vmax.f32 %v929, 0.0
  %v1320 = vmax.f32 %v934, 0.0
  %v1321 = vmax.f32 %v939, 0.0
  %v1322 = vmax.f32 %v944, 0.0
  %v1323 = vmax.f32 %v949, 0.0
  %v1324 = vmax.f32 %v954, 0.0
  %v1325 = vmax.f32 %v959, 0.0
  %v1326 = vmax.f32 %v964, 0.0
  %v1327 = vmax.f32 %v969, 0.0
  %v1328 = vmax.f32 %v974, 0.0
  %v1329 = vmax.f32 %v979, 0.0
  %v1330 = vmax.f32 %v984, 0.0
  %v1331 = vmax.f32 %v989, 0.0
  %v1332 = vmax.f32 %v994, 0.0
  %v1333 = vmax.f32 %v999, 0.0
  %v1334 = vmax.f32 %v1004, 0.0
  %v1335 = vmax.f32 %v1009, 0.0
  %v1336 = vmax.f32 %v1014, 0.0
  %v1337 = vmax.f32 %v1019, 0.0
  %v1338 = vmax.f32 %v1024, 0.0
  %v1339 = vmax.f32 %v1029, 0.0
  %v1340 = vmax.f32 %v1034, 0.0
  %v1341 = vmax.f32 %v1039, 0.0
  %v1342 = vmax.f32 %v1044, 0.0
  %v1343 = vmax.f32 %v1049, 0.0
  %v1344 = vmax.f32 %v1054, 0.0
  %v1345 = vmax.f32 %v1059, 0.0
  %v1346 = vmax.f32 %v1064, 0.0
  %v1347 = vmax.f32 %v1069, 0.0
  %v1348 = vmax.f32 %v1074, 0.0
  %v1349 = vmax.f32 %v1079, 0.0
  %v1350 = vmax.f32 %v1084, 0.0
  %v1351 = vmax.f32 %v1089, 0.0
  %v1352 = vmax.f32 %v1094, 0.0
  %v1353 = vmax.f32 %v1099, 0.0
  %v1354 = vmax.f32 %v1104, 0.0
  %v1355 = vmax.f32 %v1109, 0.0
  %v1356 = vmax.f32 %v1114, 0.0
  %v1357 = vmax.f32 %v1119, 0.0
  %v1358 = vmax.f32 %v1124, 0.0
  %v1359 = vmax.f32 %v1129, 0.0
  %v1360 = vmax.f32 %v1134, 0.0
  %v1361 = vmax.f32 %v1139, 0.0
  %v1362 = vmax.f32 %v1144, 0.0
  %v1363 = vmax.f32 %v1149, 0.0
  %v1364 = vmax.f32 %v1154, 0.0
  %v1365 = vmax.f32 %v1159, 0.0
  %v1366 = vmax.f32 %v1164, 0.0
  %v1367 = vmax.f32 %v1169, 0.0
  %v1368 = vmax.f32 %v1174, 0.0
  %v1369 = vmax.f32 %v1179, 0.0
  %v1370 = vmax.f32 %v1184, 0.0
  %v1371 = vmax.f32 %v1189, 0.0
  %v1372 = vmax.f32 %v1194, 0.0
  %v1373 = vmax.f32 %v1199, 0.0
  %v1374 = vmax.f32 %v1204, 0.0
  %v1375 = vmax.f32 %v1209, 0.0
  %v1376 = vmax.f32 %v1214, 0.0
  %v1377 = vmax.f32 %v1219, 0.0
  %v1378 = vmax.f32 %v1224, 0.0
  %v1379 = vmax.f32 %v1229, 0.0
  %v1380 = vmax.f32 %v1234, 0.0
  %v1381 = vmax.f32 %v1239, 0.0
  %v1382 = vmax.f32 %v1244, 0.0
  %v1383 = vmax.f32 %v1249, 0.0
  %v1384 = vmax.f32 %v1254, 0.0
  %vm1385 = vcmask 130048
  %1386 = vst.msk [vmem:[%s3] sm:$0xff] %vm1385, %v1257
  %1387 = vst.msk [vmem:[%s3 + $0x8] sm:$0xff] %vm1385, %v1258
  %1388 = vst.msk [vmem:[%s3 + $0x10] sm:$0xff] %vm1385, %v1259
  %1389 = vst.msk [vmem:[%s3 + $0x18] sm:$0xff] %vm1385, %v1260
  %1390 = vst.msk [vmem:[%s3 + $0x20] sm:$0xff] %vm1385, %v1261
  %1391 = vst.msk [vmem:[%s3 + $0x28] sm:$0xff] %vm1385, %v1262
  %1392 = vst.msk [vmem:[%s3 + $0x30] sm:$0xff] %vm1385, %v1263
  %1393 = vst.msk [vmem:[%s3 + $0x38] sm:$0xff] %vm1385, %v1264
  %1394 = vst.msk [vmem:[%s3 + $0x40] sm:$0xff] %vm1385, %v1265
  %1395 = vst.msk [vmem:[%s3 + $0x48] sm:$0xff] %vm1385, %v1266
  %1396 = vst.msk [vmem:[%s3 + $0x50] sm:$0xff] %vm1385, %v1267
  %1397 = vst.msk [vmem:[%s3 + $0x58] sm:$0xff] %vm1385, %v1268
  %1398 = vst.msk [vmem:[%s3 + $0x60] sm:$0xff] %vm1385, %v1269
  %1399 = vst.msk [vmem:[%s3 + $0x68] sm:$0xff] %vm1385, %v1270
  %1400 = vst.msk [vmem:[%s3 + $0x70] sm:$0xff] %vm1385, %v1271
  %1401 = vst.msk [vmem:[%s3 + $0x78] sm:$0xff] %vm1385, %v1272
  %1402 = vst.msk [vmem:[%s3 + $0x80] sm:$0xff] %vm1385, %v1273
  %1403 = vst.msk [vmem:[%s3 + $0x88] sm:$0xff] %vm1385, %v1274
  %1404 = vst.msk [vmem:[%s3 + $0x90] sm:$0xff] %vm1385, %v1275
  %1405 = vst.msk [vmem:[%s3 + $0x98] sm:$0xff] %vm1385, %v1276
  %1406 = vst.msk [vmem:[%s3 + $0xa0] sm:$0xff] %vm1385, %v1277
  %1407 = vst.msk [vmem:[%s3 + $0xa8] sm:$0xff] %vm1385, %v1278
  %1408 = vst.msk [vmem:[%s3 + $0xb0] sm:$0xff] %vm1385, %v1279
  %1409 = vst.msk [vmem:[%s3 + $0xb8] sm:$0xff] %vm1385, %v1280
  %1410 = vst.msk [vmem:[%s3 + $0xc0] sm:$0xff] %vm1385, %v1281
  %1411 = vst.msk [vmem:[%s3 + $0xc8] sm:$0xff] %vm1385, %v1282
  %1412 = vst.msk [vmem:[%s3 + $0xd0] sm:$0xff] %vm1385, %v1283
  %1413 = vst.msk [vmem:[%s3 + $0xd8] sm:$0xff] %vm1385, %v1284
  %1414 = vst.msk [vmem:[%s3 + $0xe0] sm:$0xff] %vm1385, %v1285
  %1415 = vst.msk [vmem:[%s3 + $0xe8] sm:$0xff] %vm1385, %v1286
  %1416 = vst.msk [vmem:[%s3 + $0xf0] sm:$0xff] %vm1385, %v1287
  %1417 = vst.msk [vmem:[%s3 + $0xf8] sm:$0xff] %vm1385, %v1288
  %1418 = vst.msk [vmem:[%s3 + $0x100] sm:$0xff] %vm1385, %v1289
  %1419 = vst.msk [vmem:[%s3 + $0x108] sm:$0xff] %vm1385, %v1290
  %1420 = vst.msk [vmem:[%s3 + $0x110] sm:$0xff] %vm1385, %v1291
  %1421 = vst.msk [vmem:[%s3 + $0x118] sm:$0xff] %vm1385, %v1292
  %1422 = vst.msk [vmem:[%s3 + $0x120] sm:$0xff] %vm1385, %v1293
  %1423 = vst.msk [vmem:[%s3 + $0x128] sm:$0xff] %vm1385, %v1294
  %1424 = vst.msk [vmem:[%s3 + $0x130] sm:$0xff] %vm1385, %v1295
  %1425 = vst.msk [vmem:[%s3 + $0x138] sm:$0xff] %vm1385, %v1296
  %1426 = vst.msk [vmem:[%s3 + $0x140] sm:$0xff] %vm1385, %v1297
  %1427 = vst.msk [vmem:[%s3 + $0x148] sm:$0xff] %vm1385, %v1298
  %1428 = vst.msk [vmem:[%s3 + $0x150] sm:$0xff] %vm1385, %v1299
  %1429 = vst.msk [vmem:[%s3 + $0x158] sm:$0xff] %vm1385, %v1300
  %1430 = vst.msk [vmem:[%s3 + $0x160] sm:$0xff] %vm1385, %v1301
  %1431 = vst.msk [vmem:[%s3 + $0x168] sm:$0xff] %vm1385, %v1302
  %1432 = vst.msk [vmem:[%s3 + $0x170] sm:$0xff] %vm1385, %v1303
  %1433 = vst.msk [vmem:[%s3 + $0x178] sm:$0xff] %vm1385, %v1304
  %1434 = vst.msk [vmem:[%s3 + $0x180] sm:$0xff] %vm1385, %v1305
  %1435 = vst.msk [vmem:[%s3 + $0x188] sm:$0xff] %vm1385, %v1306
  %1436 = vst.msk [vmem:[%s3 + $0x190] sm:$0xff] %vm1385, %v1307
  %1437 = vst.msk [vmem:[%s3 + $0x198] sm:$0xff] %vm1385, %v1308
  %1438 = vst.msk [vmem:[%s3 + $0x1a0] sm:$0xff] %vm1385, %v1309
  %1439 = vst.msk [vmem:[%s3 + $0x1a8] sm:$0xff] %vm1385, %v1310
  %1440 = vst.msk [vmem:[%s3 + $0x1b0] sm:$0xff] %vm1385, %v1311
  %1441 = vst.msk [vmem:[%s3 + $0x1b8] sm:$0xff] %vm1385, %v1312
  %1442 = vst.msk [vmem:[%s3 + $0x1c0] sm:$0xff] %vm1385, %v1313
  %1443 = vst.msk [vmem:[%s3 + $0x1c8] sm:$0xff] %vm1385, %v1314
  %1444 = vst.msk [vmem:[%s3 + $0x1d0] sm:$0xff] %vm1385, %v1315
  %1445 = vst.msk [vmem:[%s3 + $0x1d8] sm:$0xff] %vm1385, %v1316
  %1446 = vst.msk [vmem:[%s3 + $0x1e0] sm:$0xff] %vm1385, %v1317
  %1447 = vst.msk [vmem:[%s3 + $0x1e8] sm:$0xff] %vm1385, %v1318
  %1448 = vst.msk [vmem:[%s3 + $0x1f0] sm:$0xff] %vm1385, %v1319
  %1449 = vst.msk [vmem:[%s3 + $0x1f8] sm:$0xff] %vm1385, %v1320
  %1450 = vst.msk [vmem:[%s3 + $0x200] sm:$0xff] %vm1385, %v1321
  %1451 = vst.msk [vmem:[%s3 + $0x208] sm:$0xff] %vm1385, %v1322
  %1452 = vst.msk [vmem:[%s3 + $0x210] sm:$0xff] %vm1385, %v1323
  %1453 = vst.msk [vmem:[%s3 + $0x218] sm:$0xff] %vm1385, %v1324
  %1454 = vst.msk [vmem:[%s3 + $0x220] sm:$0xff] %vm1385, %v1325
  %1455 = vst.msk [vmem:[%s3 + $0x228] sm:$0xff] %vm1385, %v1326
  %1456 = vst.msk [vmem:[%s3 + $0x230] sm:$0xff] %vm1385, %v1327
  %1457 = vst.msk [vmem:[%s3 + $0x238] sm:$0xff] %vm1385, %v1328
  %1458 = vst.msk [vmem:[%s3 + $0x240] sm:$0xff] %vm1385, %v1329
  %1459 = vst.msk [vmem:[%s3 + $0x248] sm:$0xff] %vm1385, %v1330
  %1460 = vst.msk [vmem:[%s3 + $0x250] sm:$0xff] %vm1385, %v1331
  %1461 = vst.msk [vmem:[%s3 + $0x258] sm:$0xff] %vm1385, %v1332
  %1462 = vst.msk [vmem:[%s3 + $0x260] sm:$0xff] %vm1385, %v1333
  %1463 = vst.msk [vmem:[%s3 + $0x268] sm:$0xff] %vm1385, %v1334
  %1464 = vst.msk [vmem:[%s3 + $0x270] sm:$0xff] %vm1385, %v1335
  %1465 = vst.msk [vmem:[%s3 + $0x278] sm:$0xff] %vm1385, %v1336
  %1466 = vst.msk [vmem:[%s3 + $0x280] sm:$0xff] %vm1385, %v1337
  %1467 = vst.msk [vmem:[%s3 + $0x288] sm:$0xff] %vm1385, %v1338
  %1468 = vst.msk [vmem:[%s3 + $0x290] sm:$0xff] %vm1385, %v1339
  %1469 = vst.msk [vmem:[%s3 + $0x298] sm:$0xff] %vm1385, %v1340
  %1470 = vst.msk [vmem:[%s3 + $0x2a0] sm:$0xff] %vm1385, %v1341
  %1471 = vst.msk [vmem:[%s3 + $0x2a8] sm:$0xff] %vm1385, %v1342
  %1472 = vst.msk [vmem:[%s3 + $0x2b0] sm:$0xff] %vm1385, %v1343
  %1473 = vst.msk [vmem:[%s3 + $0x2b8] sm:$0xff] %vm1385, %v1344
  %1474 = vst.msk [vmem:[%s3 + $0x2c0] sm:$0xff] %vm1385, %v1345
  %1475 = vst.msk [vmem:[%s3 + $0x2c8] sm:$0xff] %vm1385, %v1346
  %1476 = vst.msk [vmem:[%s3 + $0x2d0] sm:$0xff] %vm1385, %v1347
  %1477 = vst.msk [vmem:[%s3 + $0x2d8] sm:$0xff] %vm1385, %v1348
  %1478 = vst.msk [vmem:[%s3 + $0x2e0] sm:$0xff] %vm1385, %v1349
  %1479 = vst.msk [vmem:[%s3 + $0x2e8] sm:$0xff] %vm1385, %v1350
  %1480 = vst.msk [vmem:[%s3 + $0x2f0] sm:$0xff] %vm1385, %v1351
  %1481 = vst.msk [vmem:[%s3 + $0x2f8] sm:$0xff] %vm1385, %v1352
  %1482 = vst.msk [vmem:[%s3 + $0x300] sm:$0xff] %vm1385, %v1353
  %1483 = vst.msk [vmem:[%s3 + $0x308] sm:$0xff] %vm1385, %v1354
  %1484 = vst.msk [vmem:[%s3 + $0x310] sm:$0xff] %vm1385, %v1355
  %1485 = vst.msk [vmem:[%s3 + $0x318] sm:$0xff] %vm1385, %v1356
  %1486 = vst.msk [vmem:[%s3 + $0x320] sm:$0xff] %vm1385, %v1357
  %1487 = vst.msk [vmem:[%s3 + $0x328] sm:$0xff] %vm1385, %v1358
  %1488 = vst.msk [vmem:[%s3 + $0x330] sm:$0xff] %vm1385, %v1359
  %1489 = vst.msk [vmem:[%s3 + $0x338] sm:$0xff] %vm1385, %v1360
  %1490 = vst.msk [vmem:[%s3 + $0x340] sm:$0xff] %vm1385, %v1361
  %1491 = vst.msk [vmem:[%s3 + $0x348] sm:$0xff] %vm1385, %v1362
  %1492 = vst.msk [vmem:[%s3 + $0x350] sm:$0xff] %vm1385, %v1363
  %1493 = vst.msk [vmem:[%s3 + $0x358] sm:$0xff] %vm1385, %v1364
  %1494 = vst.msk [vmem:[%s3 + $0x360] sm:$0xff] %vm1385, %v1365
  %1495 = vst.msk [vmem:[%s3 + $0x368] sm:$0xff] %vm1385, %v1366
  %1496 = vst.msk [vmem:[%s3 + $0x370] sm:$0xff] %vm1385, %v1367
  %1497 = vst.msk [vmem:[%s3 + $0x378] sm:$0xff] %vm1385, %v1368
  %1498 = vst.msk [vmem:[%s3 + $0x380] sm:$0xff] %vm1385, %v1369
  %1499 = vst.msk [vmem:[%s3 + $0x388] sm:$0xff] %vm1385, %v1370
  %1500 = vst.msk [vmem:[%s3 + $0x390] sm:$0xff] %vm1385, %v1371
  %1501 = vst.msk [vmem:[%s3 + $0x398] sm:$0xff] %vm1385, %v1372
  %1502 = vst.msk [vmem:[%s3 + $0x3a0] sm:$0xff] %vm1385, %v1373
  %1503 = vst.msk [vmem:[%s3 + $0x3a8] sm:$0xff] %vm1385, %v1374
  %1504 = vst.msk [vmem:[%s3 + $0x3b0] sm:$0xff] %vm1385, %v1375
  %1505 = vst.msk [vmem:[%s3 + $0x3b8] sm:$0xff] %vm1385, %v1376
  %1506 = vst.msk [vmem:[%s3 + $0x3c0] sm:$0xff] %vm1385, %v1377
  %1507 = vst.msk [vmem:[%s3 + $0x3c8] sm:$0xff] %vm1385, %v1378
  %1508 = vst.msk [vmem:[%s3 + $0x3d0] sm:$0xff] %vm1385, %v1379
  %1509 = vst.msk [vmem:[%s3 + $0x3d8] sm:$0xff] %vm1385, %v1380
  %1510 = vst.msk [vmem:[%s3 + $0x3e0] sm:$0xff] %vm1385, %v1381
  %1511 = vst.msk [vmem:[%s3 + $0x3e8] sm:$0xff] %vm1385, %v1382
  %1512 = vst.msk [vmem:[%s3 + $0x3f0] sm:$0xff] %vm1385, %v1383
  %1513 = vst.msk [vmem:[%s3 + $0x3f8] sm:$0xff] %vm1385, %v1384
  // Predicated region
  $region14: #{vae_forward.20} parent=0 // pred_check
    _
  $region15: #{vae_forward.20} parent=0 // pred_check_branch
    %1515 = sbr.rel (0) target = $region17
  $region16: #{vae_forward.20} parent=0 // pred_region
    _
  $region17: #{vae_forward.20} parent=0 // pred_fallthru
    _
  // Predicated region
  $region18: #{vae_forward.20} parent=0 // pred_check
    _
  $region19: #{vae_forward.20} parent=0 // pred_check_branch
    %1517 = sbr.rel (0) target = $region21
  $region20: #{vae_forward.20} parent=0 // pred_region
    _
  $region21: #{vae_forward.20} parent=0 // pred_fallthru
    _

// kernel: vae_forward.21
$region0: #{vae_forward.21}
  #allocation0 [shape = 'u32[]', space=smem, size = 0x4, offset = 0x4, fixed_abs, tag = 'smem constant byte address 0x4 - core index']
  #allocation1 [shape = 'u32[144,128]{1,0:T(1,128)}', space=vmem, size = 0x12000, scoped, tag = 'internal scratch']
  %s0 = inlined_call_operand.vmem [shape: f32[8192,54], index: 0, kind: input, shape index: {}]
  %s1 = inlined_call_operand.vmem [shape: f32[54,8], index: 1, kind: input, shape index: {}]
  %s2 = inlined_call_operand.vmem [shape: f32[1,8], index: 2, kind: input, shape index: {}]
  %s3 = inlined_call_operand.vmem [shape: f32[8,8192], index: 3, kind: output, shape index: {}]
  %s4 = sld [smem:[#allocation0]]
  $region45: #{vae_forward.21} parent=0
    _
  %s6 = ssub.s32 1, %s4
  %s7 = scalar_select 0, %s6, %s4
  loop: start=0, step=1, limit=6
  $region2: #{vae_forward.21} parent=0 // loop_pre_header
    _
  $region3: #{vae_forward.21} parent=0 // loop_header
    %s9 = sphi 0, %s13
    %p10 = scmp.ge.s32.totalorder %s9, 6
    %s19 = sphi 0, %s21
    %s22 = sphi 0, %s19
    %s23 = sphi 0, %s22
    %s39 = sphi 0, %s23
    %s43 = sphi 0, %s43
    %s45 = sphi 0, %s43
    %s46 = sphi 0, %s45
    %s60 = sphi 0, %s46
    %s64 = sphi 0, %s64
    %s66 = sphi 0, %s64
    %s67 = sphi 0, %s66
    %s81 = sphi 0, %s67
    %s87 = sphi 0, %s89
    %s90 = sphi 0, %s87
    %s91 = sphi 0, %s90
    %s107 = sphi 0, %s91
  $region4: #{vae_forward.21} parent=0 // loop_header_branch
    %12 = sbr.rel (%p10) target = $region8
  $region5: #{vae_forward.21} parent=0 // loop_body
    %s14 = ssub.s32 %s9, 1
    %s15 = ssub.s32 %s9, 2
    %s16 = sadd.s32 %s9, 1
    %s17 = ssub.s32 %s9, %s16
    %p18 = scmp.eq.s32.totalorder %s17, 0
    %s20 = sadd.s32 %s19, 1
    %s21 = scalar_select %p18, %s19, %s20
    %p24 = pneg %p18
    %p25 = scmp.eq.s32.totalorder %s9, 3
    %p26 = por %p24, %p25
    %p27 = scmp.ne.s32.totalorder %s19, %s22
    %p28 = scmp.eq.s32.totalorder %s9, 0
    %p29 = por %p27, %p28
    %p30 = scmp.ne.s32.totalorder %s19, %s22
    %p31 = scmp.eq.s32.totalorder %s14, 3
    %p32 = por %p30, %p31
    %p33 = scmp.ne.s32.totalorder %s22, %s23
    %p34 = scmp.eq.s32.totalorder %s14, 0
    %p35 = por %p33, %p34
    %p36 = scmp.ne.s32.totalorder %s22, %s23
    %p37 = scmp.eq.s32.totalorder %s15, 3
    %p38 = por %p36, %p37
    %p40 = scmp.ne.s32.totalorder %s23, %s39
    %p41 = scmp.eq.s32.totalorder %s15, 0
    %p42 = por %p40, %p41
    %s44 = sadd.s32 %s43, 1
    %p47 = scmp.eq.s32.totalorder %s9, 3
    %p48 = scmp.ne.s32.totalorder %s43, %s45
    %p49 = scmp.eq.s32.totalorder %s9, 0
    %p50 = por %p48, %p49
    %p51 = scmp.ne.s32.totalorder %s43, %s45
    %p52 = scmp.eq.s32.totalorder %s14, 3
    %p53 = por %p51, %p52
    %p54 = scmp.ne.s32.totalorder %s45, %s46
    %p55 = scmp.eq.s32.totalorder %s14, 0
    %p56 = por %p54, %p55
    %p57 = scmp.ne.s32.totalorder %s45, %s46
    %p58 = scmp.eq.s32.totalorder %s15, 3
    %p59 = por %p57, %p58
    %p61 = scmp.ne.s32.totalorder %s46, %s60
    %p62 = scmp.eq.s32.totalorder %s15, 0
    %p63 = por %p61, %p62
    %s65 = sadd.s32 %s64, 1
    %p68 = scmp.eq.s32.totalorder %s9, 3
    %p69 = scmp.ne.s32.totalorder %s64, %s66
    %p70 = scmp.eq.s32.totalorder %s9, 0
    %p71 = por %p69, %p70
    %p72 = scmp.ne.s32.totalorder %s64, %s66
    %p73 = scmp.eq.s32.totalorder %s14, 3
    %p74 = por %p72, %p73
    %p75 = scmp.ne.s32.totalorder %s66, %s67
    %p76 = scmp.eq.s32.totalorder %s14, 0
    %p77 = por %p75, %p76
    %p78 = scmp.ne.s32.totalorder %s66, %s67
    %p79 = scmp.eq.s32.totalorder %s15, 3
    %p80 = por %p78, %p79
    %p82 = scmp.ne.s32.totalorder %s67, %s81
    %p83 = scmp.eq.s32.totalorder %s15, 0
    %p84 = por %p82, %p83
    %s85 = ssub.s32 %s9, %s16
    %p86 = scmp.eq.s32.totalorder %s85, 0
    %s88 = sadd.s32 %s87, 1
    %s89 = scalar_select %p86, %s87, %s88
    %p92 = pneg %p86
    %p93 = scmp.eq.s32.totalorder %s9, 3
    %p94 = por %p92, %p93
    %p95 = scmp.ne.s32.totalorder %s87, %s90
    %p96 = scmp.eq.s32.totalorder %s9, 0
    %p97 = por %p95, %p96
    %p98 = scmp.ne.s32.totalorder %s87, %s90
    %p99 = scmp.eq.s32.totalorder %s14, 3
    %p100 = por %p98, %p99
    %p101 = scmp.ne.s32.totalorder %s90, %s91
    %p102 = scmp.eq.s32.totalorder %s14, 0
    %p103 = por %p101, %p102
    %p104 = scmp.ne.s32.totalorder %s90, %s91
    %p105 = scmp.eq.s32.totalorder %s15, 3
    %p106 = por %p104, %p105
    %p108 = scmp.ne.s32.totalorder %s91, %s107
    %p109 = scmp.eq.s32.totalorder %s15, 0
    %p110 = por %p108, %p109
    %p111 = scmp.le.s32.totalorder 1, %s9
    %p112 = scmp.lt.s32.totalorder %s9, 5
    %p113 = pnand %p111, %p112
    %p114 = pneg %p113
    // Predicated region
    $region9: #{vae_forward.21} parent=5 // pred_check
      _
    $region10: #{vae_forward.21} parent=5 // pred_check_branch
      %116 = sbr.rel (%p113) target = $region12
    $region11: #{vae_forward.21} parent=5 // pred_region
      %s117 = ssub.s32 %s9, 1
      // Predicated region
      $region13: #{vae_forward.21} parent=11 // pred_check
        %p118 = pneg %p56
      $region14: #{vae_forward.21} parent=11 // pred_check_branch
        %120 = sbr.rel (%p118) target = $region16
      $region15: #{vae_forward.21} parent=11 // pred_region
        _
      $region16: #{vae_forward.21} parent=11 // pred_fallthru
        _
      // Predicated region
      $region17: #{vae_forward.21} parent=11 // pred_check
        %p121 = pneg %p77
      $region18: #{vae_forward.21} parent=11 // pred_check_branch
        %123 = sbr.rel (%p121) target = $region20
      $region19: #{vae_forward.21} parent=11 // pred_region
        _
      $region20: #{vae_forward.21} parent=11 // pred_fallthru
        _
    $region12: #{vae_forward.21} parent=5 // pred_fallthru
      _
    %p124 = scmp.lt.s32.totalorder %s9, 4
    // Predicated region
    $region21: #{vae_forward.21} parent=5 // pred_check
      %p125 = pneg %p124
    $region22: #{vae_forward.21} parent=5 // pred_check_branch
      %127 = sbr.rel (%p125) target = $region24
    $region23: #{vae_forward.21} parent=5 // pred_region
      // Predicated region
      $region25: #{vae_forward.21} parent=23 // pred_check
        %p128 = pneg %p29
      $region26: #{vae_forward.21} parent=23 // pred_check_branch
        %130 = sbr.rel (%p128) target = $region28
      $region27: #{vae_forward.21} parent=23 // pred_region
        %s131 = smul.u32 256, %s9
        %p132 = scmp.lt.s32.totalorder %s131, 1023
        %s133 = scalar_select %p132, %s131, 1023
        %s134 = smul.addr %s133, 8
        %s135 = scalar_lea.vmem %s0, %s134
        %s136 = smul.u32 256, %s9
      $region28: #{vae_forward.21} parent=23 // pred_fallthru
        _
    $region24: #{vae_forward.21} parent=5 // pred_fallthru
      _
    %p137 = scmp.le.s32.totalorder 1, %s9
    %p138 = scmp.lt.s32.totalorder %s9, 5
    %p139 = pnand %p137, %p138
    %p140 = pneg %p139
    // Predicated region
    $region29: #{vae_forward.21} parent=5 // pred_check
      _
    $region30: #{vae_forward.21} parent=5 // pred_check_branch
      %142 = sbr.rel (%p139) target = $region32
    $region31: #{vae_forward.21} parent=5 // pred_region
      %s143 = ssub.s32 %s9, 1
      %s144 = smul.u32 256, %s14
      %p145 = scmp.lt.s32.totalorder %s144, 1023
      %s146 = scalar_select %p145, %s144, 1023
      %s147 = smul.addr %s146, 8
      %s148 = scalar_lea.vmem %s0, %s147
      %p149 = pneg %p35
      %p150 = pneg %p32
      %p151 = pneg %p56
      %p152 = pneg %p53
      %p153 = pneg %p77
      %p154 = pneg %p74
      %p155 = pneg %p103
      %p156 = pneg %p100
      %s157 = smul.u32 16, %s14
      %p158 = scmp.lt.s32.totalorder %s157, 63
      %s159 = scalar_select %p158, %s157, 63
      %s160 = smul.addr %s159, 8
      %s161 = scalar_lea.vmem %s3, %s160
      %s162 = smul.u32 256, %s14
      %p163 = scmp.lt.s32.totalorder %s162, 1023
      %s164 = scalar_select %p163, %s162, 1023
      %s165 = smul.addr %s164, 8
      %s166 = scalar_lea.vmem %s0, %s165
      %s167 = smul.u32 256, %s14
      %s168 = smul.u32 16, %s14
      %p169 = scmp.lt.s32.totalorder %s168, 63
      %s170 = scalar_select %p169, %s168, 63
      %s171 = smul.addr %s170, 8
      %s172 = scalar_lea.vmem %s3, %s171
      %s173 = smul.u32 16, %s14
      %v174 = vld [vmem:[%s166] sm:$0xff]
      %v175 = vld [vmem:[%s166 + $0x8] sm:$0xff]
      %v176 = vld [vmem:[%s166 + $0x10] sm:$0xff]
      %v177 = vld [vmem:[%s166 + $0x18] sm:$0xff]
      %v178 = vld [vmem:[%s166 + $0x20] sm:$0xff]
      %v179 = vld [vmem:[%s166 + $0x28] sm:$0xff]
      %v180 = vld [vmem:[%s166 + $0x30] sm:$0xff]
      %v181 = vld [vmem:[%s166 + $0x38] sm:$0xff]
      %v182 = vld [vmem:[%s166 + $0x40] sm:$0xff]
      %v183 = vld [vmem:[%s166 + $0x48] sm:$0xff]
      %v184 = vld [vmem:[%s166 + $0x50] sm:$0xff]
      %v185 = vld [vmem:[%s166 + $0x58] sm:$0xff]
      %v186 = vld [vmem:[%s166 + $0x60] sm:$0xff]
      %v187 = vld [vmem:[%s166 + $0x68] sm:$0xff]
      %v188 = vld [vmem:[%s166 + $0x70] sm:$0xff]
      %v189 = vld [vmem:[%s166 + $0x78] sm:$0xff]
      %v190 = vld [vmem:[%s166 + $0x80] sm:$0xff]
      %v191 = vld [vmem:[%s166 + $0x88] sm:$0xff]
      %v192 = vld [vmem:[%s166 + $0x90] sm:$0xff]
      %v193 = vld [vmem:[%s166 + $0x98] sm:$0xff]
      %v194 = vld [vmem:[%s166 + $0xa0] sm:$0xff]
      %v195 = vld [vmem:[%s166 + $0xa8] sm:$0xff]
      %v196 = vld [vmem:[%s166 + $0xb0] sm:$0xff]
      %v197 = vld [vmem:[%s166 + $0xb8] sm:$0xff]
      %v198 = vld [vmem:[%s166 + $0xc0] sm:$0xff]
      %v199 = vld [vmem:[%s166 + $0xc8] sm:$0xff]
      %v200 = vld [vmem:[%s166 + $0xd0] sm:$0xff]
      %v201 = vld [vmem:[%s166 + $0xd8] sm:$0xff]
      %v202 = vld [vmem:[%s166 + $0xe0] sm:$0xff]
      %v203 = vld [vmem:[%s166 + $0xe8] sm:$0xff]
      %v204 = vld [vmem:[%s166 + $0xf0] sm:$0xff]
      %v205 = vld [vmem:[%s166 + $0xf8] sm:$0xff]
      %v206 = vld [vmem:[%s166 + $0x100] sm:$0xff]
      %v207 = vld [vmem:[%s166 + $0x108] sm:$0xff]
      %v208 = vld [vmem:[%s166 + $0x110] sm:$0xff]
      %v209 = vld [vmem:[%s166 + $0x118] sm:$0xff]
      %v210 = vld [vmem:[%s166 + $0x120] sm:$0xff]
      %v211 = vld [vmem:[%s166 + $0x128] sm:$0xff]
      %v212 = vld [vmem:[%s166 + $0x130] sm:$0xff]
      %v213 = vld [vmem:[%s166 + $0x138] sm:$0xff]
      %v214 = vld [vmem:[%s166 + $0x140] sm:$0xff]
      %v215 = vld [vmem:[%s166 + $0x148] sm:$0xff]
      %v216 = vld [vmem:[%s166 + $0x150] sm:$0xff]
      %v217 = vld [vmem:[%s166 + $0x158] sm:$0xff]
      %v218 = vld [vmem:[%s166 + $0x160] sm:$0xff]
      %v219 = vld [vmem:[%s166 + $0x168] sm:$0xff]
      %v220 = vld [vmem:[%s166 + $0x170] sm:$0xff]
      %v221 = vld [vmem:[%s166 + $0x178] sm:$0xff]
      %v222 = vld [vmem:[%s166 + $0x180] sm:$0xff]
      %v223 = vld [vmem:[%s166 + $0x188] sm:$0xff]
      %v224 = vld [vmem:[%s166 + $0x190] sm:$0xff]
      %v225 = vld [vmem:[%s166 + $0x198] sm:$0xff]
      %v226 = vld [vmem:[%s166 + $0x1a0] sm:$0xff]
      %v227 = vld [vmem:[%s166 + $0x1a8] sm:$0xff]
      %v228 = vld [vmem:[%s166 + $0x1b0] sm:$0xff]
      %v229 = vld [vmem:[%s166 + $0x1b8] sm:$0xff]
      %v230 = vld [vmem:[%s166 + $0x1c0] sm:$0xff]
      %v231 = vld [vmem:[%s166 + $0x1c8] sm:$0xff]
      %v232 = vld [vmem:[%s166 + $0x1d0] sm:$0xff]
      %v233 = vld [vmem:[%s166 + $0x1d8] sm:$0xff]
      %v234 = vld [vmem:[%s166 + $0x1e0] sm:$0xff]
      %v235 = vld [vmem:[%s166 + $0x1e8] sm:$0xff]
      %v236 = vld [vmem:[%s166 + $0x1f0] sm:$0xff]
      %v237 = vld [vmem:[%s166 + $0x1f8] sm:$0xff]
      %v238 = vld [vmem:[%s166 + $0x200] sm:$0xff]
      %v239 = vld [vmem:[%s166 + $0x208] sm:$0xff]
      %v240 = vld [vmem:[%s166 + $0x210] sm:$0xff]
      %v241 = vld [vmem:[%s166 + $0x218] sm:$0xff]
      %v242 = vld [vmem:[%s166 + $0x220] sm:$0xff]
      %v243 = vld [vmem:[%s166 + $0x228] sm:$0xff]
      %v244 = vld [vmem:[%s166 + $0x230] sm:$0xff]
      %v245 = vld [vmem:[%s166 + $0x238] sm:$0xff]
      %v246 = vld [vmem:[%s166 + $0x240] sm:$0xff]
      %v247 = vld [vmem:[%s166 + $0x248] sm:$0xff]
      %v248 = vld [vmem:[%s166 + $0x250] sm:$0xff]
      %v249 = vld [vmem:[%s166 + $0x258] sm:$0xff]
      %v250 = vld [vmem:[%s166 + $0x260] sm:$0xff]
      %v251 = vld [vmem:[%s166 + $0x268] sm:$0xff]
      %v252 = vld [vmem:[%s166 + $0x270] sm:$0xff]
      %v253 = vld [vmem:[%s166 + $0x278] sm:$0xff]
      %v254 = vld [vmem:[%s166 + $0x280] sm:$0xff]
      %v255 = vld [vmem:[%s166 + $0x288] sm:$0xff]
      %v256 = vld [vmem:[%s166 + $0x290] sm:$0xff]
      %v257 = vld [vmem:[%s166 + $0x298] sm:$0xff]
      %v258 = vld [vmem:[%s166 + $0x2a0] sm:$0xff]
      %v259 = vld [vmem:[%s166 + $0x2a8] sm:$0xff]
      %v260 = vld [vmem:[%s166 + $0x2b0] sm:$0xff]
      %v261 = vld [vmem:[%s166 + $0x2b8] sm:$0xff]
      %v262 = vld [vmem:[%s166 + $0x2c0] sm:$0xff]
      %v263 = vld [vmem:[%s166 + $0x2c8] sm:$0xff]
      %v264 = vld [vmem:[%s166 + $0x2d0] sm:$0xff]
      %v265 = vld [vmem:[%s166 + $0x2d8] sm:$0xff]
      %v266 = vld [vmem:[%s166 + $0x2e0] sm:$0xff]
      %v267 = vld [vmem:[%s166 + $0x2e8] sm:$0xff]
      %v268 = vld [vmem:[%s166 + $0x2f0] sm:$0xff]
      %v269 = vld [vmem:[%s166 + $0x2f8] sm:$0xff]
      %v270 = vld [vmem:[%s166 + $0x300] sm:$0xff]
      %v271 = vld [vmem:[%s166 + $0x308] sm:$0xff]
      %v272 = vld [vmem:[%s166 + $0x310] sm:$0xff]
      %v273 = vld [vmem:[%s166 + $0x318] sm:$0xff]
      %v274 = vld [vmem:[%s166 + $0x320] sm:$0xff]
      %v275 = vld [vmem:[%s166 + $0x328] sm:$0xff]
      %v276 = vld [vmem:[%s166 + $0x330] sm:$0xff]
      %v277 = vld [vmem:[%s166 + $0x338] sm:$0xff]
      %v278 = vld [vmem:[%s166 + $0x340] sm:$0xff]
      %v279 = vld [vmem:[%s166 + $0x348] sm:$0xff]
      %v280 = vld [vmem:[%s166 + $0x350] sm:$0xff]
      %v281 = vld [vmem:[%s166 + $0x358] sm:$0xff]
      %v282 = vld [vmem:[%s166 + $0x360] sm:$0xff]
      %v283 = vld [vmem:[%s166 + $0x368] sm:$0xff]
      %v284 = vld [vmem:[%s166 + $0x370] sm:$0xff]
      %v285 = vld [vmem:[%s166 + $0x378] sm:$0xff]
      %v286 = vld [vmem:[%s166 + $0x380] sm:$0xff]
      %v287 = vld [vmem:[%s166 + $0x388] sm:$0xff]
      %v288 = vld [vmem:[%s166 + $0x390] sm:$0xff]
      %v289 = vld [vmem:[%s166 + $0x398] sm:$0xff]
      %v290 = vld [vmem:[%s166 + $0x3a0] sm:$0xff]
      %v291 = vld [vmem:[%s166 + $0x3a8] sm:$0xff]
      %v292 = vld [vmem:[%s166 + $0x3b0] sm:$0xff]
      %v293 = vld [vmem:[%s166 + $0x3b8] sm:$0xff]
      %v294 = vld [vmem:[%s166 + $0x3c0] sm:$0xff]
      %v295 = vld [vmem:[%s166 + $0x3c8] sm:$0xff]
      %v296 = vld [vmem:[%s166 + $0x3d0] sm:$0xff]
      %v297 = vld [vmem:[%s166 + $0x3d8] sm:$0xff]
      %v298 = vld [vmem:[%s166 + $0x3e0] sm:$0xff]
      %v299 = vld [vmem:[%s166 + $0x3e8] sm:$0xff]
      %v300 = vld [vmem:[%s166 + $0x3f0] sm:$0xff]
      %v301 = vld [vmem:[%s166 + $0x3f8] sm:$0xff]
      %v302 = vld [vmem:[%s166 + $0x400] sm:$0xff]
      %v303 = vld [vmem:[%s166 + $0x408] sm:$0xff]
      %v304 = vld [vmem:[%s166 + $0x410] sm:$0xff]
      %v305 = vld [vmem:[%s166 + $0x418] sm:$0xff]
      %v306 = vld [vmem:[%s166 + $0x420] sm:$0xff]
      %v307 = vld [vmem:[%s166 + $0x428] sm:$0xff]
      %v308 = vld [vmem:[%s166 + $0x430] sm:$0xff]
      %v309 = vld [vmem:[%s166 + $0x438] sm:$0xff]
      %v310 = vld [vmem:[%s166 + $0x440] sm:$0xff]
      %v311 = vld [vmem:[%s166 + $0x448] sm:$0xff]
      %v312 = vld [vmem:[%s166 + $0x450] sm:$0xff]
      %v313 = vld [vmem:[%s166 + $0x458] sm:$0xff]
      %v314 = vld [vmem:[%s166 + $0x460] sm:$0xff]
      %v315 = vld [vmem:[%s166 + $0x468] sm:$0xff]
      %v316 = vld [vmem:[%s166 + $0x470] sm:$0xff]
      %v317 = vld [vmem:[%s166 + $0x478] sm:$0xff]
      %v318 = vld [vmem:[%s166 + $0x480] sm:$0xff]
      %v319 = vld [vmem:[%s166 + $0x488] sm:$0xff]
      %v320 = vld [vmem:[%s166 + $0x490] sm:$0xff]
      %v321 = vld [vmem:[%s166 + $0x498] sm:$0xff]
      %v322 = vld [vmem:[%s166 + $0x4a0] sm:$0xff]
      %v323 = vld [vmem:[%s166 + $0x4a8] sm:$0xff]
      %v324 = vld [vmem:[%s166 + $0x4b0] sm:$0xff]
      %v325 = vld [vmem:[%s166 + $0x4b8] sm:$0xff]
      %v326 = vld [vmem:[%s166 + $0x4c0] sm:$0xff]
      %v327 = vld [vmem:[%s166 + $0x4c8] sm:$0xff]
      %v328 = vld [vmem:[%s166 + $0x4d0] sm:$0xff]
      %v329 = vld [vmem:[%s166 + $0x4d8] sm:$0xff]
      %v330 = vld [vmem:[%s166 + $0x4e0] sm:$0xff]
      %v331 = vld [vmem:[%s166 + $0x4e8] sm:$0xff]
      %v332 = vld [vmem:[%s166 + $0x4f0] sm:$0xff]
      %v333 = vld [vmem:[%s166 + $0x4f8] sm:$0xff]
      %v334 = vld [vmem:[%s166 + $0x500] sm:$0xff]
      %v335 = vld [vmem:[%s166 + $0x508] sm:$0xff]
      %v336 = vld [vmem:[%s166 + $0x510] sm:$0xff]
      %v337 = vld [vmem:[%s166 + $0x518] sm:$0xff]
      %v338 = vld [vmem:[%s166 + $0x520] sm:$0xff]
      %v339 = vld [vmem:[%s166 + $0x528] sm:$0xff]
      %v340 = vld [vmem:[%s166 + $0x530] sm:$0xff]
      %v341 = vld [vmem:[%s166 + $0x538] sm:$0xff]
      %v342 = vld [vmem:[%s166 + $0x540] sm:$0xff]
      %v343 = vld [vmem:[%s166 + $0x548] sm:$0xff]
      %v344 = vld [vmem:[%s166 + $0x550] sm:$0xff]
      %v345 = vld [vmem:[%s166 + $0x558] sm:$0xff]
      %v346 = vld [vmem:[%s166 + $0x560] sm:$0xff]
      %v347 = vld [vmem:[%s166 + $0x568] sm:$0xff]
      %v348 = vld [vmem:[%s166 + $0x570] sm:$0xff]
      %v349 = vld [vmem:[%s166 + $0x578] sm:$0xff]
      %v350 = vld [vmem:[%s166 + $0x580] sm:$0xff]
      %v351 = vld [vmem:[%s166 + $0x588] sm:$0xff]
      %v352 = vld [vmem:[%s166 + $0x590] sm:$0xff]
      %v353 = vld [vmem:[%s166 + $0x598] sm:$0xff]
      %v354 = vld [vmem:[%s166 + $0x5a0] sm:$0xff]
      %v355 = vld [vmem:[%s166 + $0x5a8] sm:$0xff]
      %v356 = vld [vmem:[%s166 + $0x5b0] sm:$0xff]
      %v357 = vld [vmem:[%s166 + $0x5b8] sm:$0xff]
      %v358 = vld [vmem:[%s166 + $0x5c0] sm:$0xff]
      %v359 = vld [vmem:[%s166 + $0x5c8] sm:$0xff]
      %v360 = vld [vmem:[%s166 + $0x5d0] sm:$0xff]
      %v361 = vld [vmem:[%s166 + $0x5d8] sm:$0xff]
      %v362 = vld [vmem:[%s166 + $0x5e0] sm:$0xff]
      %v363 = vld [vmem:[%s166 + $0x5e8] sm:$0xff]
      %v364 = vld [vmem:[%s166 + $0x5f0] sm:$0xff]
      %v365 = vld [vmem:[%s166 + $0x5f8] sm:$0xff]
      %v366 = vld [vmem:[%s166 + $0x600] sm:$0xff]
      %v367 = vld [vmem:[%s166 + $0x608] sm:$0xff]
      %v368 = vld [vmem:[%s166 + $0x610] sm:$0xff]
      %v369 = vld [vmem:[%s166 + $0x618] sm:$0xff]
      %v370 = vld [vmem:[%s166 + $0x620] sm:$0xff]
      %v371 = vld [vmem:[%s166 + $0x628] sm:$0xff]
      %v372 = vld [vmem:[%s166 + $0x630] sm:$0xff]
      %v373 = vld [vmem:[%s166 + $0x638] sm:$0xff]
      %v374 = vld [vmem:[%s166 + $0x640] sm:$0xff]
      %v375 = vld [vmem:[%s166 + $0x648] sm:$0xff]
      %v376 = vld [vmem:[%s166 + $0x650] sm:$0xff]
      %v377 = vld [vmem:[%s166 + $0x658] sm:$0xff]
      %v378 = vld [vmem:[%s166 + $0x660] sm:$0xff]
      %v379 = vld [vmem:[%s166 + $0x668] sm:$0xff]
      %v380 = vld [vmem:[%s166 + $0x670] sm:$0xff]
      %v381 = vld [vmem:[%s166 + $0x678] sm:$0xff]
      %v382 = vld [vmem:[%s166 + $0x680] sm:$0xff]
      %v383 = vld [vmem:[%s166 + $0x688] sm:$0xff]
      %v384 = vld [vmem:[%s166 + $0x690] sm:$0xff]
      %v385 = vld [vmem:[%s166 + $0x698] sm:$0xff]
      %v386 = vld [vmem:[%s166 + $0x6a0] sm:$0xff]
      %v387 = vld [vmem:[%s166 + $0x6a8] sm:$0xff]
      %v388 = vld [vmem:[%s166 + $0x6b0] sm:$0xff]
      %v389 = vld [vmem:[%s166 + $0x6b8] sm:$0xff]
      %v390 = vld [vmem:[%s166 + $0x6c0] sm:$0xff]
      %v391 = vld [vmem:[%s166 + $0x6c8] sm:$0xff]
      %v392 = vld [vmem:[%s166 + $0x6d0] sm:$0xff]
      %v393 = vld [vmem:[%s166 + $0x6d8] sm:$0xff]
      %v394 = vld [vmem:[%s166 + $0x6e0] sm:$0xff]
      %v395 = vld [vmem:[%s166 + $0x6e8] sm:$0xff]
      %v396 = vld [vmem:[%s166 + $0x6f0] sm:$0xff]
      %v397 = vld [vmem:[%s166 + $0x6f8] sm:$0xff]
      %v398 = vld [vmem:[%s166 + $0x700] sm:$0xff]
      %v399 = vld [vmem:[%s166 + $0x708] sm:$0xff]
      %v400 = vld [vmem:[%s166 + $0x710] sm:$0xff]
      %v401 = vld [vmem:[%s166 + $0x718] sm:$0xff]
      %v402 = vld [vmem:[%s166 + $0x720] sm:$0xff]
      %v403 = vld [vmem:[%s166 + $0x728] sm:$0xff]
      %v404 = vld [vmem:[%s166 + $0x730] sm:$0xff]
      %v405 = vld [vmem:[%s166 + $0x738] sm:$0xff]
      %v406 = vld [vmem:[%s166 + $0x740] sm:$0xff]
      %v407 = vld [vmem:[%s166 + $0x748] sm:$0xff]
      %v408 = vld [vmem:[%s166 + $0x750] sm:$0xff]
      %v409 = vld [vmem:[%s166 + $0x758] sm:$0xff]
      %v410 = vld [vmem:[%s166 + $0x760] sm:$0xff]
      %v411 = vld [vmem:[%s166 + $0x768] sm:$0xff]
      %v412 = vld [vmem:[%s166 + $0x770] sm:$0xff]
      %v413 = vld [vmem:[%s166 + $0x778] sm:$0xff]
      %v414 = vld [vmem:[%s166 + $0x780] sm:$0xff]
      %v415 = vld [vmem:[%s166 + $0x788] sm:$0xff]
      %v416 = vld [vmem:[%s166 + $0x790] sm:$0xff]
      %v417 = vld [vmem:[%s166 + $0x798] sm:$0xff]
      %v418 = vld [vmem:[%s166 + $0x7a0] sm:$0xff]
      %v419 = vld [vmem:[%s166 + $0x7a8] sm:$0xff]
      %v420 = vld [vmem:[%s166 + $0x7b0] sm:$0xff]
      %v421 = vld [vmem:[%s166 + $0x7b8] sm:$0xff]
      %v422 = vld [vmem:[%s166 + $0x7c0] sm:$0xff]
      %v423 = vld [vmem:[%s166 + $0x7c8] sm:$0xff]
      %v424 = vld [vmem:[%s166 + $0x7d0] sm:$0xff]
      %v425 = vld [vmem:[%s166 + $0x7d8] sm:$0xff]
      %v426 = vld [vmem:[%s166 + $0x7e0] sm:$0xff]
      %v427 = vld [vmem:[%s166 + $0x7e8] sm:$0xff]
      %v428 = vld [vmem:[%s166 + $0x7f0] sm:$0xff]
      %v429 = vld [vmem:[%s166 + $0x7f8] sm:$0xff]
      %v430 = vld [vmem:[%s1] sm:$0xff]
      %v431 = vld [vmem:[%s1 + $0x8] sm:$0xff]
      %v432 = vld [vmem:[%s1 + $0x10] sm:$0xff]
      %v433 = vld [vmem:[%s1 + $0x18] sm:$0xff]
      %v434 = vld [vmem:[%s1 + $0x20] sm:$0xff]
      %v435 = vld [vmem:[%s1 + $0x28] sm:$0xff]
      %v436 = vld [vmem:[%s1 + $0x30] sm:$0x3f]
      %v437 = vld [vmem:[%s2] sm:$0x1]
      %v439 = vlaneseq
      %v440 = vshrl.u32 %v439, 7
      %v441 = vsub.s32 0, %v440
      %v442 = vrot.slane %v437, %v441
      %vm444 = vcmask 441344
      %v446 = vsel %vm444, %v174, 0
      %v449 = vsel %vm444, %v175, 0
      %v452 = vsel %vm444, %v176, 0
      %v455 = vsel %vm444, %v177, 0
      %v458 = vsel %vm444, %v178, 0
      %v461 = vsel %vm444, %v179, 0
      %v464 = vsel %vm444, %v180, 0
      %v467 = vsel %vm444, %v181, 0
      %v470 = vsel %vm444, %v182, 0
      %v473 = vsel %vm444, %v183, 0
      %v476 = vsel %vm444, %v184, 0
      %v479 = vsel %vm444, %v185, 0
      %v482 = vsel %vm444, %v186, 0
      %v485 = vsel %vm444, %v187, 0
      %v488 = vsel %vm444, %v188, 0
      %v491 = vsel %vm444, %v189, 0
      %v494 = vsel %vm444, %v190, 0
      %v497 = vsel %vm444, %v191, 0
      %v500 = vsel %vm444, %v192, 0
      %v503 = vsel %vm444, %v193, 0
      %v506 = vsel %vm444, %v194, 0
      %v509 = vsel %vm444, %v195, 0
      %v512 = vsel %vm444, %v196, 0
      %v515 = vsel %vm444, %v197, 0
      %v518 = vsel %vm444, %v198, 0
      %v521 = vsel %vm444, %v199, 0
      %v524 = vsel %vm444, %v200, 0
      %v527 = vsel %vm444, %v201, 0
      %v530 = vsel %vm444, %v202, 0
      %v533 = vsel %vm444, %v203, 0
      %v536 = vsel %vm444, %v204, 0
      %v539 = vsel %vm444, %v205, 0
      %v542 = vsel %vm444, %v206, 0
      %v545 = vsel %vm444, %v207, 0
      %v548 = vsel %vm444, %v208, 0
      %v551 = vsel %vm444, %v209, 0
      %v554 = vsel %vm444, %v210, 0
      %v557 = vsel %vm444, %v211, 0
      %v560 = vsel %vm444, %v212, 0
      %v563 = vsel %vm444, %v213, 0
      %v566 = vsel %vm444, %v214, 0
      %v569 = vsel %vm444, %v215, 0
      %v572 = vsel %vm444, %v216, 0
      %v575 = vsel %vm444, %v217, 0
      %v578 = vsel %vm444, %v218, 0
      %v581 = vsel %vm444, %v219, 0
      %v584 = vsel %vm444, %v220, 0
      %v587 = vsel %vm444, %v221, 0
      %v590 = vsel %vm444, %v222, 0
      %v593 = vsel %vm444, %v223, 0
      %v596 = vsel %vm444, %v224, 0
      %v599 = vsel %vm444, %v225, 0
      %v602 = vsel %vm444, %v226, 0
      %v605 = vsel %vm444, %v227, 0
      %v608 = vsel %vm444, %v228, 0
      %v611 = vsel %vm444, %v229, 0
      %v614 = vsel %vm444, %v230, 0
      %v617 = vsel %vm444, %v231, 0
      %v620 = vsel %vm444, %v232, 0
      %v623 = vsel %vm444, %v233, 0
      %v626 = vsel %vm444, %v234, 0
      %v629 = vsel %vm444, %v235, 0
      %v632 = vsel %vm444, %v236, 0
      %v635 = vsel %vm444, %v237, 0
      %v638 = vsel %vm444, %v238, 0
      %v641 = vsel %vm444, %v239, 0
      %v644 = vsel %vm444, %v240, 0
      %v647 = vsel %vm444, %v241, 0
      %v650 = vsel %vm444, %v242, 0
      %v653 = vsel %vm444, %v243, 0
      %v656 = vsel %vm444, %v244, 0
      %v659 = vsel %vm444, %v245, 0
      %v662 = vsel %vm444, %v246, 0
      %v665 = vsel %vm444, %v247, 0
      %v668 = vsel %vm444, %v248, 0
      %v671 = vsel %vm444, %v249, 0
      %v674 = vsel %vm444, %v250, 0
      %v677 = vsel %vm444, %v251, 0
      %v680 = vsel %vm444, %v252, 0
      %v683 = vsel %vm444, %v253, 0
      %v686 = vsel %vm444, %v254, 0
      %v689 = vsel %vm444, %v255, 0
      %v692 = vsel %vm444, %v256, 0
      %v695 = vsel %vm444, %v257, 0
      %v698 = vsel %vm444, %v258, 0
      %v701 = vsel %vm444, %v259, 0
      %v704 = vsel %vm444, %v260, 0
      %v707 = vsel %vm444, %v261, 0
      %v710 = vsel %vm444, %v262, 0
      %v713 = vsel %vm444, %v263, 0
      %v716 = vsel %vm444, %v264, 0
      %v719 = vsel %vm444, %v265, 0
      %v722 = vsel %vm444, %v266, 0
      %v725 = vsel %vm444, %v267, 0
      %v728 = vsel %vm444, %v268, 0
      %v731 = vsel %vm444, %v269, 0
      %v734 = vsel %vm444, %v270, 0
      %v737 = vsel %vm444, %v271, 0
      %v740 = vsel %vm444, %v272, 0
      %v743 = vsel %vm444, %v273, 0
      %v746 = vsel %vm444, %v274, 0
      %v749 = vsel %vm444, %v275, 0
      %v752 = vsel %vm444, %v276, 0
      %v755 = vsel %vm444, %v277, 0
      %v758 = vsel %vm444, %v278, 0
      %v761 = vsel %vm444, %v279, 0
      %v764 = vsel %vm444, %v280, 0
      %v767 = vsel %vm444, %v281, 0
      %v770 = vsel %vm444, %v282, 0
      %v773 = vsel %vm444, %v283, 0
      %v776 = vsel %vm444, %v284, 0
      %v779 = vsel %vm444, %v285, 0
      %v782 = vsel %vm444, %v286, 0
      %v785 = vsel %vm444, %v287, 0
      %v788 = vsel %vm444, %v288, 0
      %v791 = vsel %vm444, %v289, 0
      %v794 = vsel %vm444, %v290, 0
      %v797 = vsel %vm444, %v291, 0
      %v800 = vsel %vm444, %v292, 0
      %v803 = vsel %vm444, %v293, 0
      %v806 = vsel %vm444, %v294, 0
      %v809 = vsel %vm444, %v295, 0
      %v812 = vsel %vm444, %v296, 0
      %v815 = vsel %vm444, %v297, 0
      %v818 = vsel %vm444, %v298, 0
      %v821 = vsel %vm444, %v299, 0
      %v824 = vsel %vm444, %v300, 0
      %v827 = vsel %vm444, %v301, 0
      %v830 = vsel %vm444, %v302, 0
      %v833 = vsel %vm444, %v303, 0
      %v836 = vsel %vm444, %v304, 0
      %v839 = vsel %vm444, %v305, 0
      %v842 = vsel %vm444, %v306, 0
      %v845 = vsel %vm444, %v307, 0
      %v848 = vsel %vm444, %v308, 0
      %v851 = vsel %vm444, %v309, 0
      %v854 = vsel %vm444, %v310, 0
      %v857 = vsel %vm444, %v311, 0
      %v860 = vsel %vm444, %v312, 0
      %v863 = vsel %vm444, %v313, 0
      %v866 = vsel %vm444, %v314, 0
      %v869 = vsel %vm444, %v315, 0
      %v872 = vsel %vm444, %v316, 0
      %v875 = vsel %vm444, %v317, 0
      %v878 = vsel %vm444, %v318, 0
      %v881 = vsel %vm444, %v319, 0
      %v884 = vsel %vm444, %v320, 0
      %v887 = vsel %vm444, %v321, 0
      %v890 = vsel %vm444, %v322, 0
      %v893 = vsel %vm444, %v323, 0
      %v896 = vsel %vm444, %v324, 0
      %v899 = vsel %vm444, %v325, 0
      %v902 = vsel %vm444, %v326, 0
      %v905 = vsel %vm444, %v327, 0
      %v908 = vsel %vm444, %v328, 0
      %v911 = vsel %vm444, %v329, 0
      %v914 = vsel %vm444, %v330, 0
      %v917 = vsel %vm444, %v331, 0
      %v920 = vsel %vm444, %v332, 0
      %v923 = vsel %vm444, %v333, 0
      %v926 = vsel %vm444, %v334, 0
      %v929 = vsel %vm444, %v335, 0
      %v932 = vsel %vm444, %v336, 0
      %v935 = vsel %vm444, %v337, 0
      %v938 = vsel %vm444, %v338, 0
      %v941 = vsel %vm444, %v339, 0
      %v944 = vsel %vm444, %v340, 0
      %v947 = vsel %vm444, %v341, 0
      %v950 = vsel %vm444, %v342, 0
      %v953 = vsel %vm444, %v343, 0
      %v956 = vsel %vm444, %v344, 0
      %v959 = vsel %vm444, %v345, 0
      %v962 = vsel %vm444, %v346, 0
      %v965 = vsel %vm444, %v347, 0
      %v968 = vsel %vm444, %v348, 0
      %v971 = vsel %vm444, %v349, 0
      %v974 = vsel %vm444, %v350, 0
      %v977 = vsel %vm444, %v351, 0
      %v980 = vsel %vm444, %v352, 0
      %v983 = vsel %vm444, %v353, 0
      %v986 = vsel %vm444, %v354, 0
      %v989 = vsel %vm444, %v355, 0
      %v992 = vsel %vm444, %v356, 0
      %v995 = vsel %vm444, %v357, 0
      %v998 = vsel %vm444, %v358, 0
      %v1001 = vsel %vm444, %v359, 0
      %v1004 = vsel %vm444, %v360, 0
      %v1007 = vsel %vm444, %v361, 0
      %v1010 = vsel %vm444, %v362, 0
      %v1013 = vsel %vm444, %v363, 0
      %v1016 = vsel %vm444, %v364, 0
      %v1019 = vsel %vm444, %v365, 0
      %v1022 = vsel %vm444, %v366, 0
      %v1025 = vsel %vm444, %v367, 0
      %v1028 = vsel %vm444, %v368, 0
      %v1031 = vsel %vm444, %v369, 0
      %v1034 = vsel %vm444, %v370, 0
      %v1037 = vsel %vm444, %v371, 0
      %v1040 = vsel %vm444, %v372, 0
      %v1043 = vsel %vm444, %v373, 0
      %v1046 = vsel %vm444, %v374, 0
      %v1049 = vsel %vm444, %v375, 0
      %v1052 = vsel %vm444, %v376, 0
      %v1055 = vsel %vm444, %v377, 0
      %v1058 = vsel %vm444, %v378, 0
      %v1061 = vsel %vm444, %v379, 0
      %v1064 = vsel %vm444, %v380, 0
      %v1067 = vsel %vm444, %v381, 0
      %v1070 = vsel %vm444, %v382, 0
      %v1073 = vsel %vm444, %v383, 0
      %v1076 = vsel %vm444, %v384, 0
      %v1079 = vsel %vm444, %v385, 0
      %v1082 = vsel %vm444, %v386, 0
      %v1085 = vsel %vm444, %v387, 0
      %v1088 = vsel %vm444, %v388, 0
      %v1091 = vsel %vm444, %v389, 0
      %v1094 = vsel %vm444, %v390, 0
      %v1097 = vsel %vm444, %v391, 0
      %v1100 = vsel %vm444, %v392, 0
      %v1103 = vsel %vm444, %v393, 0
      %v1106 = vsel %vm444, %v394, 0
      %v1109 = vsel %vm444, %v395, 0
      %v1112 = vsel %vm444, %v396, 0
      %v1115 = vsel %vm444, %v397, 0
      %v1118 = vsel %vm444, %v398, 0
      %v1121 = vsel %vm444, %v399, 0
      %v1124 = vsel %vm444, %v400, 0
      %v1127 = vsel %vm444, %v401, 0
      %v1130 = vsel %vm444, %v402, 0
      %v1133 = vsel %vm444, %v403, 0
      %v1136 = vsel %vm444, %v404, 0
      %v1139 = vsel %vm444, %v405, 0
      %v1142 = vsel %vm444, %v406, 0
      %v1145 = vsel %vm444, %v407, 0
      %v1148 = vsel %vm444, %v408, 0
      %v1151 = vsel %vm444, %v409, 0
      %v1154 = vsel %vm444, %v410, 0
      %v1157 = vsel %vm444, %v411, 0
      %v1160 = vsel %vm444, %v412, 0
      %v1163 = vsel %vm444, %v413, 0
      %v1166 = vsel %vm444, %v414, 0
      %v1169 = vsel %vm444, %v415, 0
      %v1172 = vsel %vm444, %v416, 0
      %v1175 = vsel %vm444, %v417, 0
      %v1178 = vsel %vm444, %v418, 0
      %v1181 = vsel %vm444, %v419, 0
      %v1184 = vsel %vm444, %v420, 0
      %v1187 = vsel %vm444, %v421, 0
      %v1190 = vsel %vm444, %v422, 0
      %v1193 = vsel %vm444, %v423, 0
      %v1196 = vsel %vm444, %v424, 0
      %v1199 = vsel %vm444, %v425, 0
      %v1202 = vsel %vm444, %v426, 0
      %v1205 = vsel %vm444, %v427, 0
      %v1208 = vsel %vm444, %v428, 0
      %v1211 = vsel %vm444, %v429, 0
      %vm1213 = vcmask 1045504
      %v1215 = vsel %vm1213, %v436, 0
      %1217 = vmatprep.subr.mxu0 0.0
      %1218 = vmatpush1.msra.mxu0 %v430
      %1219 = vmatprep.subr.mxu0 0.0
      %1220 = vmatpush1.msra.mxu0 %v431
      %1221 = vmatprep.subr.mxu0 0.0
      %1222 = vmatpush1.msra.mxu0 %v432
      %1223 = vmatprep.subr.mxu0 0.0
      %1224 = vmatpush1.msra.mxu0 %v433
      %1225 = vmatprep.subr.mxu0 0.0
      %1226 = vmatpush1.msra.mxu0 %v434
      %1227 = vmatprep.subr.mxu0 0.0
      %1228 = vmatpush1.msra.mxu0 %v435
      %1229 = vmatprep.subr.mxu0 0.0
      %1230 = vmatpush1.msra.mxu0 %v1215
      %1231 = vmatprep.subr.mxu0 0.0
      %1232 = vmatpush1.msra.mxu0 0.0
      %1233 = vmatprep.subr.mxu0 0.0
      %1234 = vmatpush1.msra.mxu0 0.0
      %1235 = vmatprep.subr.mxu0 0.0
      %1236 = vmatpush1.msra.mxu0 0.0
      %1237 = vmatprep.subr.mxu0 0.0
      %1238 = vmatpush1.msra.mxu0 0.0
      %1239 = vmatprep.subr.mxu0 0.0
      %1240 = vmatpush1.msra.mxu0 0.0
      %1241 = vmatprep.subr.mxu0 0.0
      %1242 = vmatpush1.msra.mxu0 0.0
      %1243 = vmatprep.subr.mxu0 0.0
      %1244 = vmatpush1.msra.mxu0 0.0
      %1245 = vmatprep.subr.mxu0 0.0
      %1246 = vmatpush1.msra.mxu0 0.0
      %1247 = vmatprep.subr.mxu0 0.0
      %1248 = vmatpush1.msra.mxu0 0.0
      %1249 = vmatprep.subr.mxu0 0.0
      %1250 = vmatpush1.msra.mxu0 0.0
      %1251 = vmatprep.subr.mxu0 0.0
      %1252 = vmatpush1.msra.mxu0 0.0
      %1253 = vmatprep.subr.mxu0 0.0
      %1254 = vmatpush1.msra.mxu0 0.0
      %1255 = vmatprep.subr.mxu0 0.0
      %1256 = vmatpush1.msra.mxu0 0.0
      %1257 = vmatprep.subr.mxu0 0.0
      %1258 = vmatpush1.msra.mxu0 0.0
      %1259 = vmatprep.subr.mxu0 0.0
      %1260 = vmatpush1.msra.mxu0 0.0
      %1261 = vmatprep.subr.mxu0 0.0
      %1262 = vmatpush1.msra.mxu0 0.0
      %1263 = vmatprep.subr.mxu0 0.0
      %1264 = vmatpush1.msra.mxu0 0.0
      %1265 = vmatprep.subr.mxu0 0.0
      %1266 = vmatpush1.msra.mxu0 0.0
      %1267 = vmatprep.subr.mxu0 0.0
      %1268 = vmatpush1.msra.mxu0 0.0
      %1269 = vmatprep.subr.mxu0 0.0
      %1270 = vmatpush1.msra.mxu0 0.0
      %1271 = vmatprep.subr.mxu0 0.0
      %1272 = vmatpush1.msra.mxu0 0.0
      %1273 = vmatprep.subr.mxu0 0.0
      %1274 = vmatpush1.msra.mxu0 0.0
      %1275 = vmatprep.subr.mxu0 0.0
      %1276 = vmatpush1.msra.mxu0 0.0
      %1277 = vmatprep.subr.mxu0 0.0
      %1278 = vmatpush1.msra.mxu0 0.0
      %1279 = vmatprep.subr.mxu0 0.0
      %1280 = vmatpush1.msra.mxu0 0.0
      %1281 = vmatprep.mubr.f32.mxu0 0.0
      %1282 = vmatmul.mubr.f32.gmra.mrb[0].mxu0 %v446
      %v1283 = vpop.f32.mrb[0].mxu0
      %v1284 = vadd.f32 %v442, %v1283
      %v1285 = vpop.f32.mrb[0].mxu0
      %1286 = vmatprep.mubr.f32.mxu0 0.0
      %1287 = vmatmul.mubr.f32.gmra.mrb[0].mxu0 %v449
      %v1288 = vpop.f32.mrb[0].mxu0
      %v1289 = vadd.f32 %v442, %v1288
      %v1290 = vpop.f32.mrb[0].mxu0
      %1291 = vmatprep.mubr.f32.mxu0 0.0
      %1292 = vmatmul.mubr.f32.gmra.mrb[0].mxu0 %v452
      %v1293 = vpop.f32.mrb[0].mxu0
      %v1294 = vadd.f32 %v442, %v1293
      %v1295 = vpop.f32.mrb[0].mxu0
      %1296 = vmatprep.mubr.f32.mxu0 0.0
      %1297 = vmatmul.mubr.f32.gmra.mrb[0].mxu0 %v455
      %v1298 = vpop.f32.mrb[0].mxu0
      %v1299 = vadd.f32 %v442, %v1298
      %v1300 = vpop.f32.mrb[0].mxu0
      %1301 = vmatprep.mubr.f32.mxu0 0.0
      %1302 = vmatmul.mubr.f32.gmra.mrb[0].mxu0 %v458
      %v1303 = vpop.f32.mrb[0].mxu0
      %v1304 = vadd.f32 %v442, %v1303
      %v1305 = vpop.f32.mrb[0].mxu0
      %1306 = vmatprep.mubr.f32.mxu0 0.0
      %1307 = vmatmul.mubr.f32.gmra.mrb[0].mxu0 %v461
      %v1308 = vpop.f32.mrb[0].mxu0
      %v1309 = vadd.f32 %v442, %v1308
      %v1310 = vpop.f32.mrb[0].mxu0
      %1311 = vmatprep.mubr.f32.mxu0 0.0
      %1312 = vmatmul.mubr.f32.gmra.mrb[0].mxu0 %v464
      %v1313 = vpop.f32.mrb[0].mxu0
      %v1314 = vadd.f32 %v442, %v1313
      %v1315 = vpop.f32.mrb[0].mxu0
      %1316 = vmatprep.mubr.f32.mxu0 0.0
      %1317 = vmatmul.mubr.f32.gmra.mrb[0].mxu0 %v467
      %v1318 = vpop.f32.mrb[0].mxu0
      %v1319 = vadd.f32 %v442, %v1318
      %v1320 = vpop.f32.mrb[0].mxu0
      %1321 = vmatprep.mubr.f32.mxu0 0.0
      %1322 = vmatmul.mubr.f32.gmra.mrb[0].mxu0 %v470
      %v1323 = vpop.f32.mrb[0].mxu0
      %v1324 = vadd.f32 %v442, %v1323
      %v1325 = vpop.f32.mrb[0].mxu0
      %1326 = vmatprep.mubr.f32.mxu0 0.0
      %1327 = vmatmul.mubr.f32.gmra.mrb[0].mxu0 %v473
      %v1328 = vpop.f32.mrb[0].mxu0
      %v1329 = vadd.f32 %v442, %v1328
      %v1330 = vpop.f32.mrb[0].mxu0
      %1331 = vmatprep.mubr.f32.mxu0 0.0
      %1332 = vmatmul.mubr.f32.gmra.mrb[0].mxu0 %v476
      %v1333 = vpop.f32.mrb[0].mxu0
      %v1334 = vadd.f32 %v442, %v1333
      %v1335 = vpop.f32.mrb[0].mxu0
      %1336 = vmatprep.mubr.f32.mxu0 0.0
      %1337 = vmatmul.mubr.f32.gmra.mrb[0].mxu0 %v479
      %v1338 = vpop.f32.mrb[0].mxu0
      %v1339 = vadd.f32 %v442, %v1338
      %v1340 = vpop.f32.mrb[0].mxu0
      %1341 = vmatprep.mubr.f32.mxu0 0.0
      %1342 = vmatmul.mubr.f32.gmra.mrb[0].mxu0 %v482
      %v1343 = vpop.f32.mrb[0].mxu0
      %v1344 = vadd.f32 %v442, %v1343
      %v1345 = vpop.f32.mrb[0].mxu0
      %1346 = vmatprep.mubr.f32.mxu0 0.0
      %1347 = vmatmul.mubr.f32.gmra.mrb[0].mxu0 %v485
      %v1348 = vpop.f32.mrb[0].mxu0
      %v1349 = vadd.f32 %v442, %v1348
      %v1350 = vpop.f32.mrb[0].mxu0
      %1351 = vmatprep.mubr.f32.mxu0 0.0
      %1352 = vmatmul.mubr.f32.gmra.mrb[0].mxu0 %v488
      %v1353 = vpop.f32.mrb[0].mxu0
      %v1354 = vadd.f32 %v442, %v1353
      %v1355 = vpop.f32.mrb[0].mxu0
      %1356 = vmatprep.mubr.f32.mxu0 0.0
      %1357 = vmatmul.mubr.f32.gmra.mrb[0].mxu0 %v491
      %v1358 = vpop.f32.mrb[0].mxu0
      %v1359 = vadd.f32 %v442, %v1358
      %v1360 = vpop.f32.mrb[0].mxu0
      %1361 = vmatprep.mubr.f32.mxu0 0.0
      %1362 = vmatmul.mubr.f32.gmra.mrb[0].mxu0 %v494
      %v1363 = vpop.f32.mrb[0].mxu0
      %v1364 = vadd.f32 %v442, %v1363
      %v1365 = vpop.f32.mrb[0].mxu0
      %1366 = vmatprep.mubr.f32.mxu0 0.0
      %1367 = vmatmul.mubr.f32.gmra.mrb[0].mxu0 %v497
      %v1368 = vpop.f32.mrb[0].mxu0
      %v1369 = vadd.f32 %v442, %v1368
      %v1370 = vpop.f32.mrb[0].mxu0
      %1371 = vmatprep.mubr.f32.mxu0 0.0
      %1372 = vmatmul.mubr.f32.gmra.mrb[0].mxu0 %v500
      %v1373 = vpop.f32.mrb[0].mxu0
      %v1374 = vadd.f32 %v442, %v1373
      %v1375 = vpop.f32.mrb[0].mxu0
      %1376 = vmatprep.mubr.f32.mxu0 0.0
      %1377 = vmatmul.mubr.f32.gmra.mrb[0].mxu0 %v503
      %v1378 = vpop.f32.mrb[0].mxu0
      %v1379 = vadd.f32 %v442, %v1378
      %v1380 = vpop.f32.mrb[0].mxu0
      %1381 = vmatprep.mubr.f32.mxu0 0.0
      %1382 = vmatmul.mubr.f32.gmra.mrb[0].mxu0 %v506
      %v1383 = vpop.f32.mrb[0].mxu0
      %v1384 = vadd.f32 %v442, %v1383
      %v1385 = vpop.f32.mrb[0].mxu0
      %1386 = vmatprep.mubr.f32.mxu0 0.0
      %1387 = vmatmul.mubr.f32.gmra.mrb[0].mxu0 %v509
      %v1388 = vpop.f32.mrb[0].mxu0
      %v1389 = vadd.f32 %v442, %v1388
      %v1390 = vpop.f32.mrb[0].mxu0
      %1391 = vmatprep.mubr.f32.mxu0 0.0
      %1392 = vmatmul.mubr.f32.gmra.mrb[0].mxu0 %v512
      %v1393 = vpop.f32.mrb[0].mxu0
      %v1394 = vadd.f32 %v442, %v1393
      %v1395 = vpop.f32.mrb[0].mxu0
      %1396 = vmatprep.mubr.f32.mxu0 0.0
      %1397 = vmatmul.mubr.f32.gmra.mrb[0].mxu0 %v515
      %v1398 = vpop.f32.mrb[0].mxu0
      %v1399 = vadd.f32 %v442, %v1398
      %v1400 = vpop.f32.mrb[0].mxu0
      %1401 = vmatprep.mubr.f32.mxu0 0.0
      %1402 = vmatmul.mubr.f32.gmra.mrb[0].mxu0 %v518
      %v1403 = vpop.f32.mrb[0].mxu0
      %v1404 = vadd.f32 %v442, %v1403
      %v1405 = vpop.f32.mrb[0].mxu0
      %1406 = vmatprep.mubr.f32.mxu0 0.0
      %1407 = vmatmul.mubr.f32.gmra.mrb[0].mxu0 %v521
      %v1408 = vpop.f32.mrb[0].mxu0
      %v1409 = vadd.f32 %v442, %v1408
      %v1410 = vpop.f32.mrb[0].mxu0
      %1411 = vmatprep.mubr.f32.mxu0 0.0
      %1412 = vmatmul.mubr.f32.gmra.mrb[0].mxu0 %v524
      %v1413 = vpop.f32.mrb[0].mxu0
      %v1414 = vadd.f32 %v442, %v1413
      %v1415 = vpop.f32.mrb[0].mxu0
      %1416 = vmatprep.mubr.f32.mxu0 0.0
      %1417 = vmatmul.mubr.f32.gmra.mrb[0].mxu0 %v527
      %v1418 = vpop.f32.mrb[0].mxu0
      %v1419 = vadd.f32 %v442, %v1418
      %v1420 = vpop.f32.mrb[0].mxu0
      %1421 = vmatprep.mubr.f32.mxu0 0.0
      %1422 = vmatmul.mubr.f32.gmra.mrb[0].mxu0 %v530
      %v1423 = vpop.f32.mrb[0].mxu0
      %v1424 = vadd.f32 %v442, %v1423
      %v1425 = vpop.f32.mrb[0].mxu0
      %1426 = vmatprep.mubr.f32.mxu0 0.0
      %1427 = vmatmul.mubr.f32.gmra.mrb[0].mxu0 %v533
      %v1428 = vpop.f32.mrb[0].mxu0
      %v1429 = vadd.f32 %v442, %v1428
      %v1430 = vpop.f32.mrb[0].mxu0
      %1431 = vmatprep.mubr.f32.mxu0 0.0
      %1432 = vmatmul.mubr.f32.gmra.mrb[0].mxu0 %v536
      %v1433 = vpop.f32.mrb[0].mxu0
      %v1434 = vadd.f32 %v442, %v1433
      %v1435 = vpop.f32.mrb[0].mxu0
      %1436 = vmatprep.mubr.f32.mxu0 0.0
      %1437 = vmatmul.mubr.f32.gmra.mrb[0].mxu0 %v539
      %v1438 = vpop.f32.mrb[0].mxu0
      %v1439 = vadd.f32 %v442, %v1438
      %v1440 = vpop.f32.mrb[0].mxu0
      %1441 = vmatprep.mubr.f32.mxu0 0.0
      %1442 = vmatmul.mubr.f32.gmra.mrb[0].mxu0 %v542
      %v1443 = vpop.f32.mrb[0].mxu0
      %v1444 = vadd.f32 %v442, %v1443
      %v1445 = vpop.f32.mrb[0].mxu0
      %1446 = vmatprep.mubr.f32.mxu0 0.0
      %1447 = vmatmul.mubr.f32.gmra.mrb[0].mxu0 %v545
      %v1448 = vpop.f32.mrb[0].mxu0
      %v1449 = vadd.f32 %v442, %v1448
      %v1450 = vpop.f32.mrb[0].mxu0
      %1451 = vmatprep.mubr.f32.mxu0 0.0
      %1452 = vmatmul.mubr.f32.gmra.mrb[0].mxu0 %v548
      %v1453 = vpop.f32.mrb[0].mxu0
      %v1454 = vadd.f32 %v442, %v1453
      %v1455 = vpop.f32.mrb[0].mxu0
      %1456 = vmatprep.mubr.f32.mxu0 0.0
      %1457 = vmatmul.mubr.f32.gmra.mrb[0].mxu0 %v551
      %v1458 = vpop.f32.mrb[0].mxu0
      %v1459 = vadd.f32 %v442, %v1458
      %v1460 = vpop.f32.mrb[0].mxu0
      %1461 = vmatprep.mubr.f32.mxu0 0.0
      %1462 = vmatmul.mubr.f32.gmra.mrb[0].mxu0 %v554
      %v1463 = vpop.f32.mrb[0].mxu0
      %v1464 = vadd.f32 %v442, %v1463
      %v1465 = vpop.f32.mrb[0].mxu0
      %1466 = vmatprep.mubr.f32.mxu0 0.0
      %1467 = vmatmul.mubr.f32.gmra.mrb[0].mxu0 %v557
      %v1468 = vpop.f32.mrb[0].mxu0
      %v1469 = vadd.f32 %v442, %v1468
      %v1470 = vpop.f32.mrb[0].mxu0
      %1471 = vmatprep.mubr.f32.mxu0 0.0
      %1472 = vmatmul.mubr.f32.gmra.mrb[0].mxu0 %v560
      %v1473 = vpop.f32.mrb[0].mxu0
      %v1474 = vadd.f32 %v442, %v1473
      %v1475 = vpop.f32.mrb[0].mxu0
      %1476 = vmatprep.mubr.f32.mxu0 0.0
      %1477 = vmatmul.mubr.f32.gmra.mrb[0].mxu0 %v563
      %v1478 = vpop.f32.mrb[0].mxu0
      %v1479 = vadd.f32 %v442, %v1478
      %v1480 = vpop.f32.mrb[0].mxu0
      %1481 = vmatprep.mubr.f32.mxu0 0.0
      %1482 = vmatmul.mubr.f32.gmra.mrb[0].mxu0 %v566
      %v1483 = vpop.f32.mrb[0].mxu0
      %v1484 = vadd.f32 %v442, %v1483
      %v1485 = vpop.f32.mrb[0].mxu0
      %1486 = vmatprep.mubr.f32.mxu0 0.0
      %1487 = vmatmul.mubr.f32.gmra.mrb[0].mxu0 %v569
      %v1488 = vpop.f32.mrb[0].mxu0
      %v1489 = vadd.f32 %v442, %v1488
      %v1490 = vpop.f32.mrb[0].mxu0
      %1491 = vmatprep.mubr.f32.mxu0 0.0
      %1492 = vmatmul.mubr.f32.gmra.mrb[0].mxu0 %v572
      %v1493 = vpop.f32.mrb[0].mxu0
      %v1494 = vadd.f32 %v442, %v1493
      %v1495 = vpop.f32.mrb[0].mxu0
      %1496 = vmatprep.mubr.f32.mxu0 0.0
      %1497 = vmatmul.mubr.f32.gmra.mrb[0].mxu0 %v575
      %v1498 = vpop.f32.mrb[0].mxu0
      %v1499 = vadd.f32 %v442, %v1498
      %v1500 = vpop.f32.mrb[0].mxu0
      %1501 = vmatprep.mubr.f32.mxu0 0.0
      %1502 = vmatmul.mubr.f32.gmra.mrb[0].mxu0 %v578
      %v1503 = vpop.f32.mrb[0].mxu0
      %v1504 = vadd.f32 %v442, %v1503
      %v1505 = vpop.f32.mrb[0].mxu0
      %1506 = vmatprep.mubr.f32.mxu0 0.0
      %1507 = vmatmul.mubr.f32.gmra.mrb[0].mxu0 %v581
      %v1508 = vpop.f32.mrb[0].mxu0
      %v1509 = vadd.f32 %v442, %v1508
      %v1510 = vpop.f32.mrb[0].mxu0
      %1511 = vmatprep.mubr.f32.mxu0 0.0
      %1512 = vmatmul.mubr.f32.gmra.mrb[0].mxu0 %v584
      %v1513 = vpop.f32.mrb[0].mxu0
      %v1514 = vadd.f32 %v442, %v1513
      %v1515 = vpop.f32.mrb[0].mxu0
      %1516 = vmatprep.mubr.f32.mxu0 0.0
      %1517 = vmatmul.mubr.f32.gmra.mrb[0].mxu0 %v587
      %v1518 = vpop.f32.mrb[0].mxu0
      %v1519 = vadd.f32 %v442, %v1518
      %v1520 = vpop.f32.mrb[0].mxu0
      %1521 = vmatprep.mubr.f32.mxu0 0.0
      %1522 = vmatmul.mubr.f32.gmra.mrb[0].mxu0 %v590
      %v1523 = vpop.f32.mrb[0].mxu0
      %v1524 = vadd.f32 %v442, %v1523
      %v1525 = vpop.f32.mrb[0].mxu0
      %1526 = vmatprep.mubr.f32.mxu0 0.0
      %1527 = vmatmul.mubr.f32.gmra.mrb[0].mxu0 %v593
      %v1528 = vpop.f32.mrb[0].mxu0
      %v1529 = vadd.f32 %v442, %v1528
      %v1530 = vpop.f32.mrb[0].mxu0
      %1531 = vmatprep.mubr.f32.mxu0 0.0
      %1532 = vmatmul.mubr.f32.gmra.mrb[0].mxu0 %v596
      %v1533 = vpop.f32.mrb[0].mxu0
      %v1534 = vadd.f32 %v442, %v1533
      %v1535 = vpop.f32.mrb[0].mxu0
      %1536 = vmatprep.mubr.f32.mxu0 0.0
      %1537 = vmatmul.mubr.f32.gmra.mrb[0].mxu0 %v599
      %v1538 = vpop.f32.mrb[0].mxu0
      %v1539 = vadd.f32 %v442, %v1538
      %v1540 = vpop.f32.mrb[0].mxu0
      %1541 = vmatprep.mubr.f32.mxu0 0.0
      %1542 = vmatmul.mubr.f32.gmra.mrb[0].mxu0 %v602
      %v1543 = vpop.f32.mrb[0].mxu0
      %v1544 = vadd.f32 %v442, %v1543
      %v1545 = vpop.f32.mrb[0].mxu0
      %1546 = vmatprep.mubr.f32.mxu0 0.0
      %1547 = vmatmul.mubr.f32.gmra.mrb[0].mxu0 %v605
      %v1548 = vpop.f32.mrb[0].mxu0
      %v1549 = vadd.f32 %v442, %v1548
      %v1550 = vpop.f32.mrb[0].mxu0
      %1551 = vmatprep.mubr.f32.mxu0 0.0
      %1552 = vmatmul.mubr.f32.gmra.mrb[0].mxu0 %v608
      %v1553 = vpop.f32.mrb[0].mxu0
      %v1554 = vadd.f32 %v442, %v1553
      %v1555 = vpop.f32.mrb[0].mxu0
      %1556 = vmatprep.mubr.f32.mxu0 0.0
      %1557 = vmatmul.mubr.f32.gmra.mrb[0].mxu0 %v611
      %v1558 = vpop.f32.mrb[0].mxu0
      %v1559 = vadd.f32 %v442, %v1558
      %v1560 = vpop.f32.mrb[0].mxu0
      %1561 = vmatprep.mubr.f32.mxu0 0.0
      %1562 = vmatmul.mubr.f32.gmra.mrb[0].mxu0 %v614
      %v1563 = vpop.f32.mrb[0].mxu0
      %v1564 = vadd.f32 %v442, %v1563
      %v1565 = vpop.f32.mrb[0].mxu0
      %1566 = vmatprep.mubr.f32.mxu0 0.0
      %1567 = vmatmul.mubr.f32.gmra.mrb[0].mxu0 %v617
      %v1568 = vpop.f32.mrb[0].mxu0
      %v1569 = vadd.f32 %v442, %v1568
      %v1570 = vpop.f32.mrb[0].mxu0
      %1571 = vmatprep.mubr.f32.mxu0 0.0
      %1572 = vmatmul.mubr.f32.gmra.mrb[0].mxu0 %v620
      %v1573 = vpop.f32.mrb[0].mxu0
      %v1574 = vadd.f32 %v442, %v1573
      %v1575 = vpop.f32.mrb[0].mxu0
      %1576 = vmatprep.mubr.f32.mxu0 0.0
      %1577 = vmatmul.mubr.f32.gmra.mrb[0].mxu0 %v623
      %v1578 = vpop.f32.mrb[0].mxu0
      %v1579 = vadd.f32 %v442, %v1578
      %v1580 = vpop.f32.mrb[0].mxu0
      %1581 = vmatprep.mubr.f32.mxu0 0.0
      %1582 = vmatmul.mubr.f32.gmra.mrb[0].mxu0 %v626
      %v1583 = vpop.f32.mrb[0].mxu0
      %v1584 = vadd.f32 %v442, %v1583
      %v1585 = vpop.f32.mrb[0].mxu0
      %1586 = vmatprep.mubr.f32.mxu0 0.0
      %1587 = vmatmul.mubr.f32.gmra.mrb[0].mxu0 %v629
      %v1588 = vpop.f32.mrb[0].mxu0
      %v1589 = vadd.f32 %v442, %v1588
      %v1590 = vpop.f32.mrb[0].mxu0
      %1591 = vmatprep.mubr.f32.mxu0 0.0
      %1592 = vmatmul.mubr.f32.gmra.mrb[0].mxu0 %v632
      %v1593 = vpop.f32.mrb[0].mxu0
      %v1594 = vadd.f32 %v442, %v1593
      %v1595 = vpop.f32.mrb[0].mxu0
      %1596 = vmatprep.mubr.f32.mxu0 0.0
      %1597 = vmatmul.mubr.f32.gmra.mrb[0].mxu0 %v635
      %v1598 = vpop.f32.mrb[0].mxu0
      %v1599 = vadd.f32 %v442, %v1598
      %v1600 = vpop.f32.mrb[0].mxu0
      %1601 = vmatprep.mubr.f32.mxu0 0.0
      %1602 = vmatmul.mubr.f32.gmra.mrb[0].mxu0 %v638
      %v1603 = vpop.f32.mrb[0].mxu0
      %v1604 = vadd.f32 %v442, %v1603
      %v1605 = vpop.f32.mrb[0].mxu0
      %1606 = vmatprep.mubr.f32.mxu0 0.0
      %1607 = vmatmul.mubr.f32.gmra.mrb[0].mxu0 %v641
      %v1608 = vpop.f32.mrb[0].mxu0
      %v1609 = vadd.f32 %v442, %v1608
      %v1610 = vpop.f32.mrb[0].mxu0
      %1611 = vmatprep.mubr.f32.mxu0 0.0
      %1612 = vmatmul.mubr.f32.gmra.mrb[0].mxu0 %v644
      %v1613 = vpop.f32.mrb[0].mxu0
      %v1614 = vadd.f32 %v442, %v1613
      %v1615 = vpop.f32.mrb[0].mxu0
      %1616 = vmatprep.mubr.f32.mxu0 0.0
      %1617 = vmatmul.mubr.f32.gmra.mrb[0].mxu0 %v647
      %v1618 = vpop.f32.mrb[0].mxu0
      %v1619 = vadd.f32 %v442, %v1618
      %v1620 = vpop.f32.mrb[0].mxu0
      %1621 = vmatprep.mubr.f32.mxu0 0.0
      %1622 = vmatmul.mubr.f32.gmra.mrb[0].mxu0 %v650
      %v1623 = vpop.f32.mrb[0].mxu0
      %v1624 = vadd.f32 %v442, %v1623
      %v1625 = vpop.f32.mrb[0].mxu0
      %1626 = vmatprep.mubr.f32.mxu0 0.0
      %1627 = vmatmul.mubr.f32.gmra.mrb[0].mxu0 %v653
      %v1628 = vpop.f32.mrb[0].mxu0
      %v1629 = vadd.f32 %v442, %v1628
      %v1630 = vpop.f32.mrb[0].mxu0
      %1631 = vmatprep.mubr.f32.mxu0 0.0
      %1632 = vmatmul.mubr.f32.gmra.mrb[0].mxu0 %v656
      %v1633 = vpop.f32.mrb[0].mxu0
      %v1634 = vadd.f32 %v442, %v1633
      %v1635 = vpop.f32.mrb[0].mxu0
      %1636 = vmatprep.mubr.f32.mxu0 0.0
      %1637 = vmatmul.mubr.f32.gmra.mrb[0].mxu0 %v659
      %v1638 = vpop.f32.mrb[0].mxu0
      %v1639 = vadd.f32 %v442, %v1638
      %v1640 = vpop.f32.mrb[0].mxu0
      %1641 = vmatprep.mubr.f32.mxu0 0.0
      %1642 = vmatmul.mubr.f32.gmra.mrb[0].mxu0 %v662
      %v1643 = vpop.f32.mrb[0].mxu0
      %v1644 = vadd.f32 %v442, %v1643
      %v1645 = vpop.f32.mrb[0].mxu0
      %1646 = vmatprep.mubr.f32.mxu0 0.0
      %1647 = vmatmul.mubr.f32.gmra.mrb[0].mxu0 %v665
      %v1648 = vpop.f32.mrb[0].mxu0
      %v1649 = vadd.f32 %v442, %v1648
      %v1650 = vpop.f32.mrb[0].mxu0
      %1651 = vmatprep.mubr.f32.mxu0 0.0
      %1652 = vmatmul.mubr.f32.gmra.mrb[0].mxu0 %v668
      %v1653 = vpop.f32.mrb[0].mxu0
      %v1654 = vadd.f32 %v442, %v1653
      %v1655 = vpop.f32.mrb[0].mxu0
      %1656 = vmatprep.mubr.f32.mxu0 0.0
      %1657 = vmatmul.mubr.f32.gmra.mrb[0].mxu0 %v671
      %v1658 = vpop.f32.mrb[0].mxu0
      %v1659 = vadd.f32 %v442, %v1658
      %v1660 = vpop.f32.mrb[0].mxu0
      %1661 = vmatprep.mubr.f32.mxu0 0.0
      %1662 = vmatmul.mubr.f32.gmra.mrb[0].mxu0 %v674
      %v1663 = vpop.f32.mrb[0].mxu0
      %v1664 = vadd.f32 %v442, %v1663
      %v1665 = vpop.f32.mrb[0].mxu0
      %1666 = vmatprep.mubr.f32.mxu0 0.0
      %1667 = vmatmul.mubr.f32.gmra.mrb[0].mxu0 %v677
      %v1668 = vpop.f32.mrb[0].mxu0
      %v1669 = vadd.f32 %v442, %v1668
      %v1670 = vpop.f32.mrb[0].mxu0
      %1671 = vmatprep.mubr.f32.mxu0 0.0
      %1672 = vmatmul.mubr.f32.gmra.mrb[0].mxu0 %v680
      %v1673 = vpop.f32.mrb[0].mxu0
      %v1674 = vadd.f32 %v442, %v1673
      %v1675 = vpop.f32.mrb[0].mxu0
      %1676 = vmatprep.mubr.f32.mxu0 0.0
      %1677 = vmatmul.mubr.f32.gmra.mrb[0].mxu0 %v683
      %v1678 = vpop.f32.mrb[0].mxu0
      %v1679 = vadd.f32 %v442, %v1678
      %v1680 = vpop.f32.mrb[0].mxu0
      %1681 = vmatprep.mubr.f32.mxu0 0.0
      %1682 = vmatmul.mubr.f32.gmra.mrb[0].mxu0 %v686
      %v1683 = vpop.f32.mrb[0].mxu0
      %v1684 = vadd.f32 %v442, %v1683
      %v1685 = vpop.f32.mrb[0].mxu0
      %1686 = vmatprep.mubr.f32.mxu0 0.0
      %1687 = vmatmul.mubr.f32.gmra.mrb[0].mxu0 %v689
      %v1688 = vpop.f32.mrb[0].mxu0
      %v1689 = vadd.f32 %v442, %v1688
      %v1690 = vpop.f32.mrb[0].mxu0
      %1691 = vmatprep.mubr.f32.mxu0 0.0
      %1692 = vmatmul.mubr.f32.gmra.mrb[0].mxu0 %v692
      %v1693 = vpop.f32.mrb[0].mxu0
      %v1694 = vadd.f32 %v442, %v1693
      %v1695 = vpop.f32.mrb[0].mxu0
      %1696 = vmatprep.mubr.f32.mxu0 0.0
      %1697 = vmatmul.mubr.f32.gmra.mrb[0].mxu0 %v695
      %v1698 = vpop.f32.mrb[0].mxu0
      %v1699 = vadd.f32 %v442, %v1698
      %v1700 = vpop.f32.mrb[0].mxu0
      %1701 = vmatprep.mubr.f32.mxu0 0.0
      %1702 = vmatmul.mubr.f32.gmra.mrb[0].mxu0 %v698
      %v1703 = vpop.f32.mrb[0].mxu0
      %v1704 = vadd.f32 %v442, %v1703
      %v1705 = vpop.f32.mrb[0].mxu0
      %1706 = vmatprep.mubr.f32.mxu0 0.0
      %1707 = vmatmul.mubr.f32.gmra.mrb[0].mxu0 %v701
      %v1708 = vpop.f32.mrb[0].mxu0
      %v1709 = vadd.f32 %v442, %v1708
      %v1710 = vpop.f32.mrb[0].mxu0
      %1711 = vmatprep.mubr.f32.mxu0 0.0
      %1712 = vmatmul.mubr.f32.gmra.mrb[0].mxu0 %v704
      %v1713 = vpop.f32.mrb[0].mxu0
      %v1714 = vadd.f32 %v442, %v1713
      %v1715 = vpop.f32.mrb[0].mxu0
      %1716 = vmatprep.mubr.f32.mxu0 0.0
      %1717 = vmatmul.mubr.f32.gmra.mrb[0].mxu0 %v707
      %v1718 = vpop.f32.mrb[0].mxu0
      %v1719 = vadd.f32 %v442, %v1718
      %v1720 = vpop.f32.mrb[0].mxu0
      %1721 = vmatprep.mubr.f32.mxu0 0.0
      %1722 = vmatmul.mubr.f32.gmra.mrb[0].mxu0 %v710
      %v1723 = vpop.f32.mrb[0].mxu0
      %v1724 = vadd.f32 %v442, %v1723
      %v1725 = vpop.f32.mrb[0].mxu0
      %1726 = vmatprep.mubr.f32.mxu0 0.0
      %1727 = vmatmul.mubr.f32.gmra.mrb[0].mxu0 %v713
      %v1728 = vpop.f32.mrb[0].mxu0
      %v1729 = vadd.f32 %v442, %v1728
      %v1730 = vpop.f32.mrb[0].mxu0
      %1731 = vmatprep.mubr.f32.mxu0 0.0
      %1732 = vmatmul.mubr.f32.gmra.mrb[0].mxu0 %v716
      %v1733 = vpop.f32.mrb[0].mxu0
      %v1734 = vadd.f32 %v442, %v1733
      %v1735 = vpop.f32.mrb[0].mxu0
      %1736 = vmatprep.mubr.f32.mxu0 0.0
      %1737 = vmatmul.mubr.f32.gmra.mrb[0].mxu0 %v719
      %v1738 = vpop.f32.mrb[0].mxu0
      %v1739 = vadd.f32 %v442, %v1738
      %v1740 = vpop.f32.mrb[0].mxu0
      %1741 = vmatprep.mubr.f32.mxu0 0.0
      %1742 = vmatmul.mubr.f32.gmra.mrb[0].mxu0 %v722
      %v1743 = vpop.f32.mrb[0].mxu0
      %v1744 = vadd.f32 %v442, %v1743
      %v1745 = vpop.f32.mrb[0].mxu0
      %1746 = vmatprep.mubr.f32.mxu0 0.0
      %1747 = vmatmul.mubr.f32.gmra.mrb[0].mxu0 %v725
      %v1748 = vpop.f32.mrb[0].mxu0
      %v1749 = vadd.f32 %v442, %v1748
      %v1750 = vpop.f32.mrb[0].mxu0
      %1751 = vmatprep.mubr.f32.mxu0 0.0
      %1752 = vmatmul.mubr.f32.gmra.mrb[0].mxu0 %v728
      %v1753 = vpop.f32.mrb[0].mxu0
      %v1754 = vadd.f32 %v442, %v1753
      %v1755 = vpop.f32.mrb[0].mxu0
      %1756 = vmatprep.mubr.f32.mxu0 0.0
      %1757 = vmatmul.mubr.f32.gmra.mrb[0].mxu0 %v731
      %v1758 = vpop.f32.mrb[0].mxu0
      %v1759 = vadd.f32 %v442, %v1758
      %v1760 = vpop.f32.mrb[0].mxu0
      %1761 = vmatprep.mubr.f32.mxu0 0.0
      %1762 = vmatmul.mubr.f32.gmra.mrb[0].mxu0 %v734
      %v1763 = vpop.f32.mrb[0].mxu0
      %v1764 = vadd.f32 %v442, %v1763
      %v1765 = vpop.f32.mrb[0].mxu0
      %1766 = vmatprep.mubr.f32.mxu0 0.0
      %1767 = vmatmul.mubr.f32.gmra.mrb[0].mxu0 %v737
      %v1768 = vpop.f32.mrb[0].mxu0
      %v1769 = vadd.f32 %v442, %v1768
      %v1770 = vpop.f32.mrb[0].mxu0
      %1771 = vmatprep.mubr.f32.mxu0 0.0
      %1772 = vmatmul.mubr.f32.gmra.mrb[0].mxu0 %v740
      %v1773 = vpop.f32.mrb[0].mxu0
      %v1774 = vadd.f32 %v442, %v1773
      %v1775 = vpop.f32.mrb[0].mxu0
      %1776 = vmatprep.mubr.f32.mxu0 0.0
      %1777 = vmatmul.mubr.f32.gmra.mrb[0].mxu0 %v743
      %v1778 = vpop.f32.mrb[0].mxu0
      %v1779 = vadd.f32 %v442, %v1778
      %v1780 = vpop.f32.mrb[0].mxu0
      %1781 = vmatprep.mubr.f32.mxu0 0.0
      %1782 = vmatmul.mubr.f32.gmra.mrb[0].mxu0 %v746
      %v1783 = vpop.f32.mrb[0].mxu0
      %v1784 = vadd.f32 %v442, %v1783
      %v1785 = vpop.f32.mrb[0].mxu0
      %1786 = vmatprep.mubr.f32.mxu0 0.0
      %1787 = vmatmul.mubr.f32.gmra.mrb[0].mxu0 %v749
      %v1788 = vpop.f32.mrb[0].mxu0
      %v1789 = vadd.f32 %v442, %v1788
      %v1790 = vpop.f32.mrb[0].mxu0
      %1791 = vmatprep.mubr.f32.mxu0 0.0
      %1792 = vmatmul.mubr.f32.gmra.mrb[0].mxu0 %v752
      %v1793 = vpop.f32.mrb[0].mxu0
      %v1794 = vadd.f32 %v442, %v1793
      %v1795 = vpop.f32.mrb[0].mxu0
      %1796 = vmatprep.mubr.f32.mxu0 0.0
      %1797 = vmatmul.mubr.f32.gmra.mrb[0].mxu0 %v755
      %v1798 = vpop.f32.mrb[0].mxu0
      %v1799 = vadd.f32 %v442, %v1798
      %v1800 = vpop.f32.mrb[0].mxu0
      %1801 = vmatprep.mubr.f32.mxu0 0.0
      %1802 = vmatmul.mubr.f32.gmra.mrb[0].mxu0 %v758
      %v1803 = vpop.f32.mrb[0].mxu0
      %v1804 = vadd.f32 %v442, %v1803
      %v1805 = vpop.f32.mrb[0].mxu0
      %1806 = vmatprep.mubr.f32.mxu0 0.0
      %1807 = vmatmul.mubr.f32.gmra.mrb[0].mxu0 %v761
      %v1808 = vpop.f32.mrb[0].mxu0
      %v1809 = vadd.f32 %v442, %v1808
      %v1810 = vpop.f32.mrb[0].mxu0
      %1811 = vmatprep.mubr.f32.mxu0 0.0
      %1812 = vmatmul.mubr.f32.gmra.mrb[0].mxu0 %v764
      %v1813 = vpop.f32.mrb[0].mxu0
      %v1814 = vadd.f32 %v442, %v1813
      %v1815 = vpop.f32.mrb[0].mxu0
      %1816 = vmatprep.mubr.f32.mxu0 0.0
      %1817 = vmatmul.mubr.f32.gmra.mrb[0].mxu0 %v767
      %v1818 = vpop.f32.mrb[0].mxu0
      %v1819 = vadd.f32 %v442, %v1818
      %v1820 = vpop.f32.mrb[0].mxu0
      %1821 = vmatprep.mubr.f32.mxu0 0.0
      %1822 = vmatmul.mubr.f32.gmra.mrb[0].mxu0 %v770
      %v1823 = vpop.f32.mrb[0].mxu0
      %v1824 = vadd.f32 %v442, %v1823
      %v1825 = vpop.f32.mrb[0].mxu0
      %1826 = vmatprep.mubr.f32.mxu0 0.0
      %1827 = vmatmul.mubr.f32.gmra.mrb[0].mxu0 %v773
      %v1828 = vpop.f32.mrb[0].mxu0
      %v1829 = vadd.f32 %v442, %v1828
      %v1830 = vpop.f32.mrb[0].mxu0
      %1831 = vmatprep.mubr.f32.mxu0 0.0
      %1832 = vmatmul.mubr.f32.gmra.mrb[0].mxu0 %v776
      %v1833 = vpop.f32.mrb[0].mxu0
      %v1834 = vadd.f32 %v442, %v1833
      %v1835 = vpop.f32.mrb[0].mxu0
      %1836 = vmatprep.mubr.f32.mxu0 0.0
      %1837 = vmatmul.mubr.f32.gmra.mrb[0].mxu0 %v779
      %v1838 = vpop.f32.mrb[0].mxu0
      %v1839 = vadd.f32 %v442, %v1838
      %v1840 = vpop.f32.mrb[0].mxu0
      %1841 = vmatprep.mubr.f32.mxu0 0.0
      %1842 = vmatmul.mubr.f32.gmra.mrb[0].mxu0 %v782
      %v1843 = vpop.f32.mrb[0].mxu0
      %v1844 = vadd.f32 %v442, %v1843
      %v1845 = vpop.f32.mrb[0].mxu0
      %1846 = vmatprep.mubr.f32.mxu0 0.0
      %1847 = vmatmul.mubr.f32.gmra.mrb[0].mxu0 %v785
      %v1848 = vpop.f32.mrb[0].mxu0
      %v1849 = vadd.f32 %v442, %v1848
      %v1850 = vpop.f32.mrb[0].mxu0
      %1851 = vmatprep.mubr.f32.mxu0 0.0
      %1852 = vmatmul.mubr.f32.gmra.mrb[0].mxu0 %v788
      %v1853 = vpop.f32.mrb[0].mxu0
      %v1854 = vadd.f32 %v442, %v1853
      %v1855 = vpop.f32.mrb[0].mxu0
      %1856 = vmatprep.mubr.f32.mxu0 0.0
      %1857 = vmatmul.mubr.f32.gmra.mrb[0].mxu0 %v791
      %v1858 = vpop.f32.mrb[0].mxu0
      %v1859 = vadd.f32 %v442, %v1858
      %v1860 = vpop.f32.mrb[0].mxu0
      %1861 = vmatprep.mubr.f32.mxu0 0.0
      %1862 = vmatmul.mubr.f32.gmra.mrb[0].mxu0 %v794
      %v1863 = vpop.f32.mrb[0].mxu0
      %v1864 = vadd.f32 %v442, %v1863
      %v1865 = vpop.f32.mrb[0].mxu0
      %1866 = vmatprep.mubr.f32.mxu0 0.0
      %1867 = vmatmul.mubr.f32.gmra.mrb[0].mxu0 %v797
      %v1868 = vpop.f32.mrb[0].mxu0
      %v1869 = vadd.f32 %v442, %v1868
      %v1870 = vpop.f32.mrb[0].mxu0
      %1871 = vmatprep.mubr.f32.mxu0 0.0
      %1872 = vmatmul.mubr.f32.gmra.mrb[0].mxu0 %v800
      %v1873 = vpop.f32.mrb[0].mxu0
      %v1874 = vadd.f32 %v442, %v1873
      %v1875 = vpop.f32.mrb[0].mxu0
      %1876 = vmatprep.mubr.f32.mxu0 0.0
      %1877 = vmatmul.mubr.f32.gmra.mrb[0].mxu0 %v803
      %v1878 = vpop.f32.mrb[0].mxu0
      %v1879 = vadd.f32 %v442, %v1878
      %v1880 = vpop.f32.mrb[0].mxu0
      %1881 = vmatprep.mubr.f32.mxu0 0.0
      %1882 = vmatmul.mubr.f32.gmra.mrb[0].mxu0 %v806
      %v1883 = vpop.f32.mrb[0].mxu0
      %v1884 = vadd.f32 %v442, %v1883
      %v1885 = vpop.f32.mrb[0].mxu0
      %1886 = vmatprep.mubr.f32.mxu0 0.0
      %1887 = vmatmul.mubr.f32.gmra.mrb[0].mxu0 %v809
      %v1888 = vpop.f32.mrb[0].mxu0
      %v1889 = vadd.f32 %v442, %v1888
      %v1890 = vpop.f32.mrb[0].mxu0
      %1891 = vmatprep.mubr.f32.mxu0 0.0
      %1892 = vmatmul.mubr.f32.gmra.mrb[0].mxu0 %v812
      %v1893 = vpop.f32.mrb[0].mxu0
      %v1894 = vadd.f32 %v442, %v1893
      %v1895 = vpop.f32.mrb[0].mxu0
      %1896 = vmatprep.mubr.f32.mxu0 0.0
      %1897 = vmatmul.mubr.f32.gmra.mrb[0].mxu0 %v815
      %v1898 = vpop.f32.mrb[0].mxu0
      %v1899 = vadd.f32 %v442, %v1898
      %v1900 = vpop.f32.mrb[0].mxu0
      %1901 = vmatprep.mubr.f32.mxu0 0.0
      %1902 = vmatmul.mubr.f32.gmra.mrb[0].mxu0 %v818
      %v1903 = vpop.f32.mrb[0].mxu0
      %v1904 = vadd.f32 %v442, %v1903
      %v1905 = vpop.f32.mrb[0].mxu0
      %1906 = vmatprep.mubr.f32.mxu0 0.0
      %1907 = vmatmul.mubr.f32.gmra.mrb[0].mxu0 %v821
      %v1908 = vpop.f32.mrb[0].mxu0
      %v1909 = vadd.f32 %v442, %v1908
      %v1910 = vpop.f32.mrb[0].mxu0
      %1911 = vmatprep.mubr.f32.mxu0 0.0
      %1912 = vmatmul.mubr.f32.gmra.mrb[0].mxu0 %v824
      %v1913 = vpop.f32.mrb[0].mxu0
      %v1914 = vadd.f32 %v442, %v1913
      %v1915 = vpop.f32.mrb[0].mxu0
      %1916 = vmatprep.mubr.f32.mxu0 0.0
      %1917 = vmatmul.mubr.f32.gmra.mrb[0].mxu0 %v827
      %v1918 = vpop.f32.mrb[0].mxu0
      %v1919 = vadd.f32 %v442, %v1918
      %v1920 = vpop.f32.mrb[0].mxu0
      %1921 = vmatprep.mubr.f32.mxu0 0.0
      %1922 = vmatmul.mubr.f32.gmra.mrb[0].mxu0 %v830
      %v1923 = vpop.f32.mrb[0].mxu0
      %v1924 = vadd.f32 %v442, %v1923
      %v1925 = vpop.f32.mrb[0].mxu0
      %1926 = vmatprep.mubr.f32.mxu0 0.0
      %1927 = vmatmul.mubr.f32.gmra.mrb[0].mxu0 %v833
      %v1928 = vpop.f32.mrb[0].mxu0
      %v1929 = vadd.f32 %v442, %v1928
      %v1930 = vpop.f32.mrb[0].mxu0
      %1931 = vmatprep.mubr.f32.mxu0 0.0
      %1932 = vmatmul.mubr.f32.gmra.mrb[0].mxu0 %v836
      %v1933 = vpop.f32.mrb[0].mxu0
      %v1934 = vadd.f32 %v442, %v1933
      %v1935 = vpop.f32.mrb[0].mxu0
      %1936 = vmatprep.mubr.f32.mxu0 0.0
      %1937 = vmatmul.mubr.f32.gmra.mrb[0].mxu0 %v839
      %v1938 = vpop.f32.mrb[0].mxu0
      %v1939 = vadd.f32 %v442, %v1938
      %v1940 = vpop.f32.mrb[0].mxu0
      %1941 = vmatprep.mubr.f32.mxu0 0.0
      %1942 = vmatmul.mubr.f32.gmra.mrb[0].mxu0 %v842
      %v1943 = vpop.f32.mrb[0].mxu0
      %v1944 = vadd.f32 %v442, %v1943
      %v1945 = vpop.f32.mrb[0].mxu0
      %1946 = vmatprep.mubr.f32.mxu0 0.0
      %1947 = vmatmul.mubr.f32.gmra.mrb[0].mxu0 %v845
      %v1948 = vpop.f32.mrb[0].mxu0
      %v1949 = vadd.f32 %v442, %v1948
      %v1950 = vpop.f32.mrb[0].mxu0
      %1951 = vmatprep.mubr.f32.mxu0 0.0
      %1952 = vmatmul.mubr.f32.gmra.mrb[0].mxu0 %v848
      %v1953 = vpop.f32.mrb[0].mxu0
      %v1954 = vadd.f32 %v442, %v1953
      %v1955 = vpop.f32.mrb[0].mxu0
      %1956 = vmatprep.mubr.f32.mxu0 0.0
      %1957 = vmatmul.mubr.f32.gmra.mrb[0].mxu0 %v851
      %v1958 = vpop.f32.mrb[0].mxu0
      %v1959 = vadd.f32 %v442, %v1958
      %v1960 = vpop.f32.mrb[0].mxu0
      %1961 = vmatprep.mubr.f32.mxu0 0.0
      %1962 = vmatmul.mubr.f32.gmra.mrb[0].mxu0 %v854
      %v1963 = vpop.f32.mrb[0].mxu0
      %v1964 = vadd.f32 %v442, %v1963
      %v1965 = vpop.f32.mrb[0].mxu0
      %1966 = vmatprep.mubr.f32.mxu0 0.0
      %1967 = vmatmul.mubr.f32.gmra.mrb[0].mxu0 %v857
      %v1968 = vpop.f32.mrb[0].mxu0
      %v1969 = vadd.f32 %v442, %v1968
      %v1970 = vpop.f32.mrb[0].mxu0
      %1971 = vmatprep.mubr.f32.mxu0 0.0
      %1972 = vmatmul.mubr.f32.gmra.mrb[0].mxu0 %v860
      %v1973 = vpop.f32.mrb[0].mxu0
      %v1974 = vadd.f32 %v442, %v1973
      %v1975 = vpop.f32.mrb[0].mxu0
      %1976 = vmatprep.mubr.f32.mxu0 0.0
      %1977 = vmatmul.mubr.f32.gmra.mrb[0].mxu0 %v863
      %v1978 = vpop.f32.mrb[0].mxu0
      %v1979 = vadd.f32 %v442, %v1978
      %v1980 = vpop.f32.mrb[0].mxu0
      %1981 = vmatprep.mubr.f32.mxu0 0.0
      %1982 = vmatmul.mubr.f32.gmra.mrb[0].mxu0 %v866
      %v1983 = vpop.f32.mrb[0].mxu0
      %v1984 = vadd.f32 %v442, %v1983
      %v1985 = vpop.f32.mrb[0].mxu0
      %1986 = vmatprep.mubr.f32.mxu0 0.0
      %1987 = vmatmul.mubr.f32.gmra.mrb[0].mxu0 %v869
      %v1988 = vpop.f32.mrb[0].mxu0
      %v1989 = vadd.f32 %v442, %v1988
      %v1990 = vpop.f32.mrb[0].mxu0
      %1991 = vmatprep.mubr.f32.mxu0 0.0
      %1992 = vmatmul.mubr.f32.gmra.mrb[0].mxu0 %v872
      %v1993 = vpop.f32.mrb[0].mxu0
      %v1994 = vadd.f32 %v442, %v1993
      %v1995 = vpop.f32.mrb[0].mxu0
      %1996 = vmatprep.mubr.f32.mxu0 0.0
      %1997 = vmatmul.mubr.f32.gmra.mrb[0].mxu0 %v875
      %v1998 = vpop.f32.mrb[0].mxu0
      %v1999 = vadd.f32 %v442, %v1998
      %v2000 = vpop.f32.mrb[0].mxu0
      %2001 = vmatprep.mubr.f32.mxu0 0.0
      %2002 = vmatmul.mubr.f32.gmra.mrb[0].mxu0 %v878
      %v2003 = vpop.f32.mrb[0].mxu0
      %v2004 = vadd.f32 %v442, %v2003
      %v2005 = vpop.f32.mrb[0].mxu0
      %2006 = vmatprep.mubr.f32.mxu0 0.0
      %2007 = vmatmul.mubr.f32.gmra.mrb[0].mxu0 %v881
      %v2008 = vpop.f32.mrb[0].mxu0
      %v2009 = vadd.f32 %v442, %v2008
      %v2010 = vpop.f32.mrb[0].mxu0
      %2011 = vmatprep.mubr.f32.mxu0 0.0
      %2012 = vmatmul.mubr.f32.gmra.mrb[0].mxu0 %v884
      %v2013 = vpop.f32.mrb[0].mxu0
      %v2014 = vadd.f32 %v442, %v2013
      %v2015 = vpop.f32.mrb[0].mxu0
      %2016 = vmatprep.mubr.f32.mxu0 0.0
      %2017 = vmatmul.mubr.f32.gmra.mrb[0].mxu0 %v887
      %v2018 = vpop.f32.mrb[0].mxu0
      %v2019 = vadd.f32 %v442, %v2018
      %v2020 = vpop.f32.mrb[0].mxu0
      %2021 = vmatprep.mubr.f32.mxu0 0.0
      %2022 = vmatmul.mubr.f32.gmra.mrb[0].mxu0 %v890
      %v2023 = vpop.f32.mrb[0].mxu0
      %v2024 = vadd.f32 %v442, %v2023
      %v2025 = vpop.f32.mrb[0].mxu0
      %2026 = vmatprep.mubr.f32.mxu0 0.0
      %2027 = vmatmul.mubr.f32.gmra.mrb[0].mxu0 %v893
      %v2028 = vpop.f32.mrb[0].mxu0
      %v2029 = vadd.f32 %v442, %v2028
      %v2030 = vpop.f32.mrb[0].mxu0
      %2031 = vmatprep.mubr.f32.mxu0 0.0
      %2032 = vmatmul.mubr.f32.gmra.mrb[0].mxu0 %v896
      %v2033 = vpop.f32.mrb[0].mxu0
      %v2034 = vadd.f32 %v442, %v2033
      %v2035 = vpop.f32.mrb[0].mxu0
      %2036 = vmatprep.mubr.f32.mxu0 0.0
      %2037 = vmatmul.mubr.f32.gmra.mrb[0].mxu0 %v899
      %v2038 = vpop.f32.mrb[0].mxu0
      %v2039 = vadd.f32 %v442, %v2038
      %v2040 = vpop.f32.mrb[0].mxu0
      %2041 = vmatprep.mubr.f32.mxu0 0.0
      %2042 = vmatmul.mubr.f32.gmra.mrb[0].mxu0 %v902
      %v2043 = vpop.f32.mrb[0].mxu0
      %v2044 = vadd.f32 %v442, %v2043
      %v2045 = vpop.f32.mrb[0].mxu0
      %2046 = vmatprep.mubr.f32.mxu0 0.0
      %2047 = vmatmul.mubr.f32.gmra.mrb[0].mxu0 %v905
      %v2048 = vpop.f32.mrb[0].mxu0
      %v2049 = vadd.f32 %v442, %v2048
      %v2050 = vpop.f32.mrb[0].mxu0
      %2051 = vmatprep.mubr.f32.mxu0 0.0
      %2052 = vmatmul.mubr.f32.gmra.mrb[0].mxu0 %v908
      %v2053 = vpop.f32.mrb[0].mxu0
      %v2054 = vadd.f32 %v442, %v2053
      %v2055 = vpop.f32.mrb[0].mxu0
      %2056 = vmatprep.mubr.f32.mxu0 0.0
      %2057 = vmatmul.mubr.f32.gmra.mrb[0].mxu0 %v911
      %v2058 = vpop.f32.mrb[0].mxu0
      %v2059 = vadd.f32 %v442, %v2058
      %v2060 = vpop.f32.mrb[0].mxu0
      %2061 = vmatprep.mubr.f32.mxu0 0.0
      %2062 = vmatmul.mubr.f32.gmra.mrb[0].mxu0 %v914
      %v2063 = vpop.f32.mrb[0].mxu0
      %v2064 = vadd.f32 %v442, %v2063
      %v2065 = vpop.f32.mrb[0].mxu0
      %2066 = vmatprep.mubr.f32.mxu0 0.0
      %2067 = vmatmul.mubr.f32.gmra.mrb[0].mxu0 %v917
      %v2068 = vpop.f32.mrb[0].mxu0
      %v2069 = vadd.f32 %v442, %v2068
      %v2070 = vpop.f32.mrb[0].mxu0
      %2071 = vmatprep.mubr.f32.mxu0 0.0
      %2072 = vmatmul.mubr.f32.gmra.mrb[0].mxu0 %v920
      %v2073 = vpop.f32.mrb[0].mxu0
      %v2074 = vadd.f32 %v442, %v2073
      %v2075 = vpop.f32.mrb[0].mxu0
      %2076 = vmatprep.mubr.f32.mxu0 0.0
      %2077 = vmatmul.mubr.f32.gmra.mrb[0].mxu0 %v923
      %v2078 = vpop.f32.mrb[0].mxu0
      %v2079 = vadd.f32 %v442, %v2078
      %v2080 = vpop.f32.mrb[0].mxu0
      %2081 = vmatprep.mubr.f32.mxu0 0.0
      %2082 = vmatmul.mubr.f32.gmra.mrb[0].mxu0 %v926
      %v2083 = vpop.f32.mrb[0].mxu0
      %v2084 = vadd.f32 %v442, %v2083
      %v2085 = vpop.f32.mrb[0].mxu0
      %2086 = vmatprep.mubr.f32.mxu0 0.0
      %2087 = vmatmul.mubr.f32.gmra.mrb[0].mxu0 %v929
      %v2088 = vpop.f32.mrb[0].mxu0
      %v2089 = vadd.f32 %v442, %v2088
      %v2090 = vpop.f32.mrb[0].mxu0
      %2091 = vmatprep.mubr.f32.mxu0 0.0
      %2092 = vmatmul.mubr.f32.gmra.mrb[0].mxu0 %v932
      %v2093 = vpop.f32.mrb[0].mxu0
      %v2094 = vadd.f32 %v442, %v2093
      %v2095 = vpop.f32.mrb[0].mxu0
      %2096 = vmatprep.mubr.f32.mxu0 0.0
      %2097 = vmatmul.mubr.f32.gmra.mrb[0].mxu0 %v935
      %v2098 = vpop.f32.mrb[0].mxu0
      %v2099 = vadd.f32 %v442, %v2098
      %v2100 = vpop.f32.mrb[0].mxu0
      %2101 = vmatprep.mubr.f32.mxu0 0.0
      %2102 = vmatmul.mubr.f32.gmra.mrb[0].mxu0 %v938
      %v2103 = vpop.f32.mrb[0].mxu0
      %v2104 = vadd.f32 %v442, %v2103
      %v2105 = vpop.f32.mrb[0].mxu0
      %2106 = vmatprep.mubr.f32.mxu0 0.0
      %2107 = vmatmul.mubr.f32.gmra.mrb[0].mxu0 %v941
      %v2108 = vpop.f32.mrb[0].mxu0
      %v2109 = vadd.f32 %v442, %v2108
      %v2110 = vpop.f32.mrb[0].mxu0
      %2111 = vmatprep.mubr.f32.mxu0 0.0
      %2112 = vmatmul.mubr.f32.gmra.mrb[0].mxu0 %v944
      %v2113 = vpop.f32.mrb[0].mxu0
      %v2114 = vadd.f32 %v442, %v2113
      %v2115 = vpop.f32.mrb[0].mxu0
      %2116 = vmatprep.mubr.f32.mxu0 0.0
      %2117 = vmatmul.mubr.f32.gmra.mrb[0].mxu0 %v947
      %v2118 = vpop.f32.mrb[0].mxu0
      %v2119 = vadd.f32 %v442, %v2118
      %v2120 = vpop.f32.mrb[0].mxu0
      %2121 = vmatprep.mubr.f32.mxu0 0.0
      %2122 = vmatmul.mubr.f32.gmra.mrb[0].mxu0 %v950
      %v2123 = vpop.f32.mrb[0].mxu0
      %v2124 = vadd.f32 %v442, %v2123
      %v2125 = vpop.f32.mrb[0].mxu0
      %2126 = vmatprep.mubr.f32.mxu0 0.0
      %2127 = vmatmul.mubr.f32.gmra.mrb[0].mxu0 %v953
      %v2128 = vpop.f32.mrb[0].mxu0
      %v2129 = vadd.f32 %v442, %v2128
      %v2130 = vpop.f32.mrb[0].mxu0
      %2131 = vmatprep.mubr.f32.mxu0 0.0
      %2132 = vmatmul.mubr.f32.gmra.mrb[0].mxu0 %v956
      %v2133 = vpop.f32.mrb[0].mxu0
      %v2134 = vadd.f32 %v442, %v2133
      %v2135 = vpop.f32.mrb[0].mxu0
      %2136 = vmatprep.mubr.f32.mxu0 0.0
      %2137 = vmatmul.mubr.f32.gmra.mrb[0].mxu0 %v959
      %v2138 = vpop.f32.mrb[0].mxu0
      %v2139 = vadd.f32 %v442, %v2138
      %v2140 = vpop.f32.mrb[0].mxu0
      %2141 = vmatprep.mubr.f32.mxu0 0.0
      %2142 = vmatmul.mubr.f32.gmra.mrb[0].mxu0 %v962
      %v2143 = vpop.f32.mrb[0].mxu0
      %v2144 = vadd.f32 %v442, %v2143
      %v2145 = vpop.f32.mrb[0].mxu0
      %2146 = vmatprep.mubr.f32.mxu0 0.0
      %2147 = vmatmul.mubr.f32.gmra.mrb[0].mxu0 %v965
      %v2148 = vpop.f32.mrb[0].mxu0
      %v2149 = vadd.f32 %v442, %v2148
      %v2150 = vpop.f32.mrb[0].mxu0
      %2151 = vmatprep.mubr.f32.mxu0 0.0
      %2152 = vmatmul.mubr.f32.gmra.mrb[0].mxu0 %v968
      %v2153 = vpop.f32.mrb[0].mxu0
      %v2154 = vadd.f32 %v442, %v2153
      %v2155 = vpop.f32.mrb[0].mxu0
      %2156 = vmatprep.mubr.f32.mxu0 0.0
      %2157 = vmatmul.mubr.f32.gmra.mrb[0].mxu0 %v971
      %v2158 = vpop.f32.mrb[0].mxu0
      %v2159 = vadd.f32 %v442, %v2158
      %v2160 = vpop.f32.mrb[0].mxu0
      %2161 = vmatprep.mubr.f32.mxu0 0.0
      %2162 = vmatmul.mubr.f32.gmra.mrb[0].mxu0 %v974
      %v2163 = vpop.f32.mrb[0].mxu0
      %v2164 = vadd.f32 %v442, %v2163
      %v2165 = vpop.f32.mrb[0].mxu0
      %2166 = vmatprep.mubr.f32.mxu0 0.0
      %2167 = vmatmul.mubr.f32.gmra.mrb[0].mxu0 %v977
      %v2168 = vpop.f32.mrb[0].mxu0
      %v2169 = vadd.f32 %v442, %v2168
      %v2170 = vpop.f32.mrb[0].mxu0
      %2171 = vmatprep.mubr.f32.mxu0 0.0
      %2172 = vmatmul.mubr.f32.gmra.mrb[0].mxu0 %v980
      %v2173 = vpop.f32.mrb[0].mxu0
      %v2174 = vadd.f32 %v442, %v2173
      %v2175 = vpop.f32.mrb[0].mxu0
      %2176 = vmatprep.mubr.f32.mxu0 0.0
      %2177 = vmatmul.mubr.f32.gmra.mrb[0].mxu0 %v983
      %v2178 = vpop.f32.mrb[0].mxu0
      %v2179 = vadd.f32 %v442, %v2178
      %v2180 = vpop.f32.mrb[0].mxu0
      %2181 = vmatprep.mubr.f32.mxu0 0.0
      %2182 = vmatmul.mubr.f32.gmra.mrb[0].mxu0 %v986
      %v2183 = vpop.f32.mrb[0].mxu0
      %v2184 = vadd.f32 %v442, %v2183
      %v2185 = vpop.f32.mrb[0].mxu0
      %2186 = vmatprep.mubr.f32.mxu0 0.0
      %2187 = vmatmul.mubr.f32.gmra.mrb[0].mxu0 %v989
      %v2188 = vpop.f32.mrb[0].mxu0
      %v2189 = vadd.f32 %v442, %v2188
      %v2190 = vpop.f32.mrb[0].mxu0
      %2191 = vmatprep.mubr.f32.mxu0 0.0
      %2192 = vmatmul.mubr.f32.gmra.mrb[0].mxu0 %v992
      %v2193 = vpop.f32.mrb[0].mxu0
      %v2194 = vadd.f32 %v442, %v2193
      %v2195 = vpop.f32.mrb[0].mxu0
      %2196 = vmatprep.mubr.f32.mxu0 0.0
      %2197 = vmatmul.mubr.f32.gmra.mrb[0].mxu0 %v995
      %v2198 = vpop.f32.mrb[0].mxu0
      %v2199 = vadd.f32 %v442, %v2198
      %v2200 = vpop.f32.mrb[0].mxu0
      %2201 = vmatprep.mubr.f32.mxu0 0.0
      %2202 = vmatmul.mubr.f32.gmra.mrb[0].mxu0 %v998
      %v2203 = vpop.f32.mrb[0].mxu0
      %v2204 = vadd.f32 %v442, %v2203
      %v2205 = vpop.f32.mrb[0].mxu0
      %2206 = vmatprep.mubr.f32.mxu0 0.0
      %2207 = vmatmul.mubr.f32.gmra.mrb[0].mxu0 %v1001
      %v2208 = vpop.f32.mrb[0].mxu0
      %v2209 = vadd.f32 %v442, %v2208
      %v2210 = vpop.f32.mrb[0].mxu0
      %2211 = vmatprep.mubr.f32.mxu0 0.0
      %2212 = vmatmul.mubr.f32.gmra.mrb[0].mxu0 %v1004
      %v2213 = vpop.f32.mrb[0].mxu0
      %v2214 = vadd.f32 %v442, %v2213
      %v2215 = vpop.f32.mrb[0].mxu0
      %2216 = vmatprep.mubr.f32.mxu0 0.0
      %2217 = vmatmul.mubr.f32.gmra.mrb[0].mxu0 %v1007
      %v2218 = vpop.f32.mrb[0].mxu0
      %v2219 = vadd.f32 %v442, %v2218
      %v2220 = vpop.f32.mrb[0].mxu0
      %2221 = vmatprep.mubr.f32.mxu0 0.0
      %2222 = vmatmul.mubr.f32.gmra.mrb[0].mxu0 %v1010
      %v2223 = vpop.f32.mrb[0].mxu0
      %v2224 = vadd.f32 %v442, %v2223
      %v2225 = vpop.f32.mrb[0].mxu0
      %2226 = vmatprep.mubr.f32.mxu0 0.0
      %2227 = vmatmul.mubr.f32.gmra.mrb[0].mxu0 %v1013
      %v2228 = vpop.f32.mrb[0].mxu0
      %v2229 = vadd.f32 %v442, %v2228
      %v2230 = vpop.f32.mrb[0].mxu0
      %2231 = vmatprep.mubr.f32.mxu0 0.0
      %2232 = vmatmul.mubr.f32.gmra.mrb[0].mxu0 %v1016
      %v2233 = vpop.f32.mrb[0].mxu0
      %v2234 = vadd.f32 %v442, %v2233
      %v2235 = vpop.f32.mrb[0].mxu0
      %2236 = vmatprep.mubr.f32.mxu0 0.0
      %2237 = vmatmul.mubr.f32.gmra.mrb[0].mxu0 %v1019
      %v2238 = vpop.f32.mrb[0].mxu0
      %v2239 = vadd.f32 %v442, %v2238
      %v2240 = vpop.f32.mrb[0].mxu0
      %2241 = vmatprep.mubr.f32.mxu0 0.0
      %2242 = vmatmul.mubr.f32.gmra.mrb[0].mxu0 %v1022
      %v2243 = vpop.f32.mrb[0].mxu0
      %v2244 = vadd.f32 %v442, %v2243
      %v2245 = vpop.f32.mrb[0].mxu0
      %2246 = vmatprep.mubr.f32.mxu0 0.0
      %2247 = vmatmul.mubr.f32.gmra.mrb[0].mxu0 %v1025
      %v2248 = vpop.f32.mrb[0].mxu0
      %v2249 = vadd.f32 %v442, %v2248
      %v2250 = vpop.f32.mrb[0].mxu0
      %2251 = vmatprep.mubr.f32.mxu0 0.0
      %2252 = vmatmul.mubr.f32.gmra.mrb[0].mxu0 %v1028
      %v2253 = vpop.f32.mrb[0].mxu0
      %v2254 = vadd.f32 %v442, %v2253
      %v2255 = vpop.f32.mrb[0].mxu0
      %2256 = vmatprep.mubr.f32.mxu0 0.0
      %2257 = vmatmul.mubr.f32.gmra.mrb[0].mxu0 %v1031
      %v2258 = vpop.f32.mrb[0].mxu0
      %v2259 = vadd.f32 %v442, %v2258
      %v2260 = vpop.f32.mrb[0].mxu0
      %2261 = vmatprep.mubr.f32.mxu0 0.0
      %2262 = vmatmul.mubr.f32.gmra.mrb[0].mxu0 %v1034
      %v2263 = vpop.f32.mrb[0].mxu0
      %v2264 = vadd.f32 %v442, %v2263
      %v2265 = vpop.f32.mrb[0].mxu0
      %2266 = vmatprep.mubr.f32.mxu0 0.0
      %2267 = vmatmul.mubr.f32.gmra.mrb[0].mxu0 %v1037
      %v2268 = vpop.f32.mrb[0].mxu0
      %v2269 = vadd.f32 %v442, %v2268
      %v2270 = vpop.f32.mrb[0].mxu0
      %2271 = vmatprep.mubr.f32.mxu0 0.0
      %2272 = vmatmul.mubr.f32.gmra.mrb[0].mxu0 %v1040
      %v2273 = vpop.f32.mrb[0].mxu0
      %v2274 = vadd.f32 %v442, %v2273
      %v2275 = vpop.f32.mrb[0].mxu0
      %2276 = vmatprep.mubr.f32.mxu0 0.0
      %2277 = vmatmul.mubr.f32.gmra.mrb[0].mxu0 %v1043
      %v2278 = vpop.f32.mrb[0].mxu0
      %v2279 = vadd.f32 %v442, %v2278
      %v2280 = vpop.f32.mrb[0].mxu0
      %2281 = vmatprep.mubr.f32.mxu0 0.0
      %2282 = vmatmul.mubr.f32.gmra.mrb[0].mxu0 %v1046
      %v2283 = vpop.f32.mrb[0].mxu0
      %v2284 = vadd.f32 %v442, %v2283
      %v2285 = vpop.f32.mrb[0].mxu0
      %2286 = vmatprep.mubr.f32.mxu0 0.0
      %2287 = vmatmul.mubr.f32.gmra.mrb[0].mxu0 %v1049
      %v2288 = vpop.f32.mrb[0].mxu0
      %v2289 = vadd.f32 %v442, %v2288
      %v2290 = vpop.f32.mrb[0].mxu0
      %2291 = vmatprep.mubr.f32.mxu0 0.0
      %2292 = vmatmul.mubr.f32.gmra.mrb[0].mxu0 %v1052
      %v2293 = vpop.f32.mrb[0].mxu0
      %v2294 = vadd.f32 %v442, %v2293
      %v2295 = vpop.f32.mrb[0].mxu0
      %2296 = vmatprep.mubr.f32.mxu0 0.0
      %2297 = vmatmul.mubr.f32.gmra.mrb[0].mxu0 %v1055
      %v2298 = vpop.f32.mrb[0].mxu0
      %v2299 = vadd.f32 %v442, %v2298
      %v2300 = vpop.f32.mrb[0].mxu0
      %2301 = vmatprep.mubr.f32.mxu0 0.0
      %2302 = vmatmul.mubr.f32.gmra.mrb[0].mxu0 %v1058
      %v2303 = vpop.f32.mrb[0].mxu0
      %v2304 = vadd.f32 %v442, %v2303
      %v2305 = vpop.f32.mrb[0].mxu0
      %2306 = vmatprep.mubr.f32.mxu0 0.0
      %2307 = vmatmul.mubr.f32.gmra.mrb[0].mxu0 %v1061
      %v2308 = vpop.f32.mrb[0].mxu0
      %v2309 = vadd.f32 %v442, %v2308
      %v2310 = vpop.f32.mrb[0].mxu0
      %2311 = vmatprep.mubr.f32.mxu0 0.0
      %2312 = vmatmul.mubr.f32.gmra.mrb[0].mxu0 %v1064
      %v2313 = vpop.f32.mrb[0].mxu0
      %v2314 = vadd.f32 %v442, %v2313
      %v2315 = vpop.f32.mrb[0].mxu0
      %2316 = vmatprep.mubr.f32.mxu0 0.0
      %2317 = vmatmul.mubr.f32.gmra.mrb[0].mxu0 %v1067
      %v2318 = vpop.f32.mrb[0].mxu0
      %v2319 = vadd.f32 %v442, %v2318
      %v2320 = vpop.f32.mrb[0].mxu0
      %2321 = vmatprep.mubr.f32.mxu0 0.0
      %2322 = vmatmul.mubr.f32.gmra.mrb[0].mxu0 %v1070
      %v2323 = vpop.f32.mrb[0].mxu0
      %v2324 = vadd.f32 %v442, %v2323
      %v2325 = vpop.f32.mrb[0].mxu0
      %2326 = vmatprep.mubr.f32.mxu0 0.0
      %2327 = vmatmul.mubr.f32.gmra.mrb[0].mxu0 %v1073
      %v2328 = vpop.f32.mrb[0].mxu0
      %v2329 = vadd.f32 %v442, %v2328
      %v2330 = vpop.f32.mrb[0].mxu0
      %2331 = vmatprep.mubr.f32.mxu0 0.0
      %2332 = vmatmul.mubr.f32.gmra.mrb[0].mxu0 %v1076
      %v2333 = vpop.f32.mrb[0].mxu0
      %v2334 = vadd.f32 %v442, %v2333
      %v2335 = vpop.f32.mrb[0].mxu0
      %2336 = vmatprep.mubr.f32.mxu0 0.0
      %2337 = vmatmul.mubr.f32.gmra.mrb[0].mxu0 %v1079
      %v2338 = vpop.f32.mrb[0].mxu0
      %v2339 = vadd.f32 %v442, %v2338
      %v2340 = vpop.f32.mrb[0].mxu0
      %2341 = vmatprep.mubr.f32.mxu0 0.0
      %2342 = vmatmul.mubr.f32.gmra.mrb[0].mxu0 %v1082
      %v2343 = vpop.f32.mrb[0].mxu0
      %v2344 = vadd.f32 %v442, %v2343
      %v2345 = vpop.f32.mrb[0].mxu0
      %2346 = vmatprep.mubr.f32.mxu0 0.0
      %2347 = vmatmul.mubr.f32.gmra.mrb[0].mxu0 %v1085
      %v2348 = vpop.f32.mrb[0].mxu0
      %v2349 = vadd.f32 %v442, %v2348
      %v2350 = vpop.f32.mrb[0].mxu0
      %2351 = vmatprep.mubr.f32.mxu0 0.0
      %2352 = vmatmul.mubr.f32.gmra.mrb[0].mxu0 %v1088
      %v2353 = vpop.f32.mrb[0].mxu0
      %v2354 = vadd.f32 %v442, %v2353
      %v2355 = vpop.f32.mrb[0].mxu0
      %2356 = vmatprep.mubr.f32.mxu0 0.0
      %2357 = vmatmul.mubr.f32.gmra.mrb[0].mxu0 %v1091
      %v2358 = vpop.f32.mrb[0].mxu0
      %v2359 = vadd.f32 %v442, %v2358
      %v2360 = vpop.f32.mrb[0].mxu0
      %2361 = vmatprep.mubr.f32.mxu0 0.0
      %2362 = vmatmul.mubr.f32.gmra.mrb[0].mxu0 %v1094
      %v2363 = vpop.f32.mrb[0].mxu0
      %v2364 = vadd.f32 %v442, %v2363
      %v2365 = vpop.f32.mrb[0].mxu0
      %2366 = vmatprep.mubr.f32.mxu0 0.0
      %2367 = vmatmul.mubr.f32.gmra.mrb[0].mxu0 %v1097
      %v2368 = vpop.f32.mrb[0].mxu0
      %v2369 = vadd.f32 %v442, %v2368
      %v2370 = vpop.f32.mrb[0].mxu0
      %2371 = vmatprep.mubr.f32.mxu0 0.0
      %2372 = vmatmul.mubr.f32.gmra.mrb[0].mxu0 %v1100
      %v2373 = vpop.f32.mrb[0].mxu0
      %v2374 = vadd.f32 %v442, %v2373
      %v2375 = vpop.f32.mrb[0].mxu0
      %2376 = vmatprep.mubr.f32.mxu0 0.0
      %2377 = vmatmul.mubr.f32.gmra.mrb[0].mxu0 %v1103
      %v2378 = vpop.f32.mrb[0].mxu0
      %v2379 = vadd.f32 %v442, %v2378
      %v2380 = vpop.f32.mrb[0].mxu0
      %2381 = vmatprep.mubr.f32.mxu0 0.0
      %2382 = vmatmul.mubr.f32.gmra.mrb[0].mxu0 %v1106
      %v2383 = vpop.f32.mrb[0].mxu0
      %v2384 = vadd.f32 %v442, %v2383
      %v2385 = vpop.f32.mrb[0].mxu0
      %2386 = vmatprep.mubr.f32.mxu0 0.0
      %2387 = vmatmul.mubr.f32.gmra.mrb[0].mxu0 %v1109
      %v2388 = vpop.f32.mrb[0].mxu0
      %v2389 = vadd.f32 %v442, %v2388
      %v2390 = vpop.f32.mrb[0].mxu0
      %2391 = vmatprep.mubr.f32.mxu0 0.0
      %2392 = vmatmul.mubr.f32.gmra.mrb[0].mxu0 %v1112
      %v2393 = vpop.f32.mrb[0].mxu0
      %v2394 = vadd.f32 %v442, %v2393
      %v2395 = vpop.f32.mrb[0].mxu0
      %2396 = vmatprep.mubr.f32.mxu0 0.0
      %2397 = vmatmul.mubr.f32.gmra.mrb[0].mxu0 %v1115
      %v2398 = vpop.f32.mrb[0].mxu0
      %v2399 = vadd.f32 %v442, %v2398
      %v2400 = vpop.f32.mrb[0].mxu0
      %2401 = vmatprep.mubr.f32.mxu0 0.0
      %2402 = vmatmul.mubr.f32.gmra.mrb[0].mxu0 %v1118
      %v2403 = vpop.f32.mrb[0].mxu0
      %v2404 = vadd.f32 %v442, %v2403
      %v2405 = vpop.f32.mrb[0].mxu0
      %2406 = vmatprep.mubr.f32.mxu0 0.0
      %2407 = vmatmul.mubr.f32.gmra.mrb[0].mxu0 %v1121
      %v2408 = vpop.f32.mrb[0].mxu0
      %v2409 = vadd.f32 %v442, %v2408
      %v2410 = vpop.f32.mrb[0].mxu0
      %2411 = vmatprep.mubr.f32.mxu0 0.0
      %2412 = vmatmul.mubr.f32.gmra.mrb[0].mxu0 %v1124
      %v2413 = vpop.f32.mrb[0].mxu0
      %v2414 = vadd.f32 %v442, %v2413
      %v2415 = vpop.f32.mrb[0].mxu0
      %2416 = vmatprep.mubr.f32.mxu0 0.0
      %2417 = vmatmul.mubr.f32.gmra.mrb[0].mxu0 %v1127
      %v2418 = vpop.f32.mrb[0].mxu0
      %v2419 = vadd.f32 %v442, %v2418
      %v2420 = vpop.f32.mrb[0].mxu0
      %2421 = vmatprep.mubr.f32.mxu0 0.0
      %2422 = vmatmul.mubr.f32.gmra.mrb[0].mxu0 %v1130
      %v2423 = vpop.f32.mrb[0].mxu0
      %v2424 = vadd.f32 %v442, %v2423
      %v2425 = vpop.f32.mrb[0].mxu0
      %2426 = vmatprep.mubr.f32.mxu0 0.0
      %2427 = vmatmul.mubr.f32.gmra.mrb[0].mxu0 %v1133
      %v2428 = vpop.f32.mrb[0].mxu0
      %v2429 = vadd.f32 %v442, %v2428
      %v2430 = vpop.f32.mrb[0].mxu0
      %2431 = vmatprep.mubr.f32.mxu0 0.0
      %2432 = vmatmul.mubr.f32.gmra.mrb[0].mxu0 %v1136
      %v2433 = vpop.f32.mrb[0].mxu0
      %v2434 = vadd.f32 %v442, %v2433
      %v2435 = vpop.f32.mrb[0].mxu0
      %2436 = vmatprep.mubr.f32.mxu0 0.0
      %2437 = vmatmul.mubr.f32.gmra.mrb[0].mxu0 %v1139
      %v2438 = vpop.f32.mrb[0].mxu0
      %v2439 = vadd.f32 %v442, %v2438
      %v2440 = vpop.f32.mrb[0].mxu0
      %2441 = vmatprep.mubr.f32.mxu0 0.0
      %2442 = vmatmul.mubr.f32.gmra.mrb[0].mxu0 %v1142
      %v2443 = vpop.f32.mrb[0].mxu0
      %v2444 = vadd.f32 %v442, %v2443
      %v2445 = vpop.f32.mrb[0].mxu0
      %2446 = vmatprep.mubr.f32.mxu0 0.0
      %2447 = vmatmul.mubr.f32.gmra.mrb[0].mxu0 %v1145
      %v2448 = vpop.f32.mrb[0].mxu0
      %v2449 = vadd.f32 %v442, %v2448
      %v2450 = vpop.f32.mrb[0].mxu0
      %2451 = vmatprep.mubr.f32.mxu0 0.0
      %2452 = vmatmul.mubr.f32.gmra.mrb[0].mxu0 %v1148
      %v2453 = vpop.f32.mrb[0].mxu0
      %v2454 = vadd.f32 %v442, %v2453
      %v2455 = vpop.f32.mrb[0].mxu0
      %2456 = vmatprep.mubr.f32.mxu0 0.0
      %2457 = vmatmul.mubr.f32.gmra.mrb[0].mxu0 %v1151
      %v2458 = vpop.f32.mrb[0].mxu0
      %v2459 = vadd.f32 %v442, %v2458
      %v2460 = vpop.f32.mrb[0].mxu0
      %2461 = vmatprep.mubr.f32.mxu0 0.0
      %2462 = vmatmul.mubr.f32.gmra.mrb[0].mxu0 %v1154
      %v2463 = vpop.f32.mrb[0].mxu0
      %v2464 = vadd.f32 %v442, %v2463
      %v2465 = vpop.f32.mrb[0].mxu0
      %2466 = vmatprep.mubr.f32.mxu0 0.0
      %2467 = vmatmul.mubr.f32.gmra.mrb[0].mxu0 %v1157
      %v2468 = vpop.f32.mrb[0].mxu0
      %v2469 = vadd.f32 %v442, %v2468
      %v2470 = vpop.f32.mrb[0].mxu0
      %2471 = vmatprep.mubr.f32.mxu0 0.0
      %2472 = vmatmul.mubr.f32.gmra.mrb[0].mxu0 %v1160
      %v2473 = vpop.f32.mrb[0].mxu0
      %v2474 = vadd.f32 %v442, %v2473
      %v2475 = vpop.f32.mrb[0].mxu0
      %2476 = vmatprep.mubr.f32.mxu0 0.0
      %2477 = vmatmul.mubr.f32.gmra.mrb[0].mxu0 %v1163
      %v2478 = vpop.f32.mrb[0].mxu0
      %v2479 = vadd.f32 %v442, %v2478
      %v2480 = vpop.f32.mrb[0].mxu0
      %2481 = vmatprep.mubr.f32.mxu0 0.0
      %2482 = vmatmul.mubr.f32.gmra.mrb[0].mxu0 %v1166
      %v2483 = vpop.f32.mrb[0].mxu0
      %v2484 = vadd.f32 %v442, %v2483
      %v2485 = vpop.f32.mrb[0].mxu0
      %2486 = vmatprep.mubr.f32.mxu0 0.0
      %2487 = vmatmul.mubr.f32.gmra.mrb[0].mxu0 %v1169
      %v2488 = vpop.f32.mrb[0].mxu0
      %v2489 = vadd.f32 %v442, %v2488
      %v2490 = vpop.f32.mrb[0].mxu0
      %2491 = vmatprep.mubr.f32.mxu0 0.0
      %2492 = vmatmul.mubr.f32.gmra.mrb[0].mxu0 %v1172
      %v2493 = vpop.f32.mrb[0].mxu0
      %v2494 = vadd.f32 %v442, %v2493
      %v2495 = vpop.f32.mrb[0].mxu0
      %2496 = vmatprep.mubr.f32.mxu0 0.0
      %2497 = vmatmul.mubr.f32.gmra.mrb[0].mxu0 %v1175
      %v2498 = vpop.f32.mrb[0].mxu0
      %v2499 = vadd.f32 %v442, %v2498
      %v2500 = vpop.f32.mrb[0].mxu0
      %2501 = vmatprep.mubr.f32.mxu0 0.0
      %2502 = vmatmul.mubr.f32.gmra.mrb[0].mxu0 %v1178
      %v2503 = vpop.f32.mrb[0].mxu0
      %v2504 = vadd.f32 %v442, %v2503
      %v2505 = vpop.f32.mrb[0].mxu0
      %2506 = vmatprep.mubr.f32.mxu0 0.0
      %2507 = vmatmul.mubr.f32.gmra.mrb[0].mxu0 %v1181
      %v2508 = vpop.f32.mrb[0].mxu0
      %v2509 = vadd.f32 %v442, %v2508
      %v2510 = vpop.f32.mrb[0].mxu0
      %2511 = vmatprep.mubr.f32.mxu0 0.0
      %2512 = vmatmul.mubr.f32.gmra.mrb[0].mxu0 %v1184
      %v2513 = vpop.f32.mrb[0].mxu0
      %v2514 = vadd.f32 %v442, %v2513
      %v2515 = vpop.f32.mrb[0].mxu0
      %2516 = vmatprep.mubr.f32.mxu0 0.0
      %2517 = vmatmul.mubr.f32.gmra.mrb[0].mxu0 %v1187
      %v2518 = vpop.f32.mrb[0].mxu0
      %v2519 = vadd.f32 %v442, %v2518
      %v2520 = vpop.f32.mrb[0].mxu0
      %2521 = vmatprep.mubr.f32.mxu0 0.0
      %2522 = vmatmul.mubr.f32.gmra.mrb[0].mxu0 %v1190
      %v2523 = vpop.f32.mrb[0].mxu0
      %v2524 = vadd.f32 %v442, %v2523
      %v2525 = vpop.f32.mrb[0].mxu0
      %2526 = vmatprep.mubr.f32.mxu0 0.0
      %2527 = vmatmul.mubr.f32.gmra.mrb[0].mxu0 %v1193
      %v2528 = vpop.f32.mrb[0].mxu0
      %v2529 = vadd.f32 %v442, %v2528
      %v2530 = vpop.f32.mrb[0].mxu0
      %2531 = vmatprep.mubr.f32.mxu0 0.0
      %2532 = vmatmul.mubr.f32.gmra.mrb[0].mxu0 %v1196
      %v2533 = vpop.f32.mrb[0].mxu0
      %v2534 = vadd.f32 %v442, %v2533
      %v2535 = vpop.f32.mrb[0].mxu0
      %2536 = vmatprep.mubr.f32.mxu0 0.0
      %2537 = vmatmul.mubr.f32.gmra.mrb[0].mxu0 %v1199
      %v2538 = vpop.f32.mrb[0].mxu0
      %v2539 = vadd.f32 %v442, %v2538
      %v2540 = vpop.f32.mrb[0].mxu0
      %2541 = vmatprep.mubr.f32.mxu0 0.0
      %2542 = vmatmul.mubr.f32.gmra.mrb[0].mxu0 %v1202
      %v2543 = vpop.f32.mrb[0].mxu0
      %v2544 = vadd.f32 %v442, %v2543
      %v2545 = vpop.f32.mrb[0].mxu0
      %2546 = vmatprep.mubr.f32.mxu0 0.0
      %2547 = vmatmul.mubr.f32.gmra.mrb[0].mxu0 %v1205
      %v2548 = vpop.f32.mrb[0].mxu0
      %v2549 = vadd.f32 %v442, %v2548
      %v2550 = vpop.f32.mrb[0].mxu0
      %2551 = vmatprep.mubr.f32.mxu0 0.0
      %2552 = vmatmul.mubr.f32.gmra.mrb[0].mxu0 %v1208
      %v2553 = vpop.f32.mrb[0].mxu0
      %v2554 = vadd.f32 %v442, %v2553
      %v2555 = vpop.f32.mrb[0].mxu0
      %2556 = vmatprep.mubr.f32.mxu0 0.0
      %2557 = vmatmul.mubr.f32.gmra.mrb[0].mxu0 %v1211
      %v2558 = vpop.f32.mrb[0].mxu0
      %v2559 = vadd.f32 %v442, %v2558
      %v2560 = vpop.f32.mrb[0].mxu0
      %2561 = vdwg.mxu0
      %v2562 = vxor.u32 %v1284, 2147483648
      %v2563 = vxor.u32 %v1289, 2147483648
      %v2564 = vxor.u32 %v1294, 2147483648
      %v2565 = vxor.u32 %v1299, 2147483648
      %v2566 = vxor.u32 %v1304, 2147483648
      %v2567 = vxor.u32 %v1309, 2147483648
      %v2568 = vxor.u32 %v1314, 2147483648
      %v2569 = vxor.u32 %v1319, 2147483648
      %v2570 = vxor.u32 %v1324, 2147483648
      %v2571 = vxor.u32 %v1329, 2147483648
      %v2572 = vxor.u32 %v1334, 2147483648
      %v2573 = vxor.u32 %v1339, 2147483648
      %v2574 = vxor.u32 %v1344, 2147483648
      %v2575 = vxor.u32 %v1349, 2147483648
      %v2576 = vxor.u32 %v1354, 2147483648
      %v2577 = vxor.u32 %v1359, 2147483648
      %v2578 = vxor.u32 %v1364, 2147483648
      %v2579 = vxor.u32 %v1369, 2147483648
      %v2580 = vxor.u32 %v1374, 2147483648
      %v2581 = vxor.u32 %v1379, 2147483648
      %v2582 = vxor.u32 %v1384, 2147483648
      %v2583 = vxor.u32 %v1389, 2147483648
      %v2584 = vxor.u32 %v1394, 2147483648
      %v2585 = vxor.u32 %v1399, 2147483648
      %v2586 = vxor.u32 %v1404, 2147483648
      %v2587 = vxor.u32 %v1409, 2147483648
      %v2588 = vxor.u32 %v1414, 2147483648
      %v2589 = vxor.u32 %v1419, 2147483648
      %v2590 = vxor.u32 %v1424, 2147483648
      %v2591 = vxor.u32 %v1429, 2147483648
      %v2592 = vxor.u32 %v1434, 2147483648
      %v2593 = vxor.u32 %v1439, 2147483648
      %v2594 = vxor.u32 %v1444, 2147483648
      %v2595 = vxor.u32 %v1449, 2147483648
      %v2596 = vxor.u32 %v1454, 2147483648
      %v2597 = vxor.u32 %v1459, 2147483648
      %v2598 = vxor.u32 %v1464, 2147483648
      %v2599 = vxor.u32 %v1469, 2147483648
      %v2600 = vxor.u32 %v1474, 2147483648
      %v2601 = vxor.u32 %v1479, 2147483648
      %v2602 = vxor.u32 %v1484, 2147483648
      %v2603 = vxor.u32 %v1489, 2147483648
      %v2604 = vxor.u32 %v1494, 2147483648
      %v2605 = vxor.u32 %v1499, 2147483648
      %v2606 = vxor.u32 %v1504, 2147483648
      %v2607 = vxor.u32 %v1509, 2147483648
      %v2608 = vxor.u32 %v1514, 2147483648
      %v2609 = vxor.u32 %v1519, 2147483648
      %v2610 = vxor.u32 %v1524, 2147483648
      %v2611 = vxor.u32 %v1529, 2147483648
      %v2612 = vxor.u32 %v1534, 2147483648
      %v2613 = vxor.u32 %v1539, 2147483648
      %v2614 = vxor.u32 %v1544, 2147483648
      %v2615 = vxor.u32 %v1549, 2147483648
      %v2616 = vxor.u32 %v1554, 2147483648
      %v2617 = vxor.u32 %v1559, 2147483648
      %v2618 = vxor.u32 %v1564, 2147483648
      %v2619 = vxor.u32 %v1569, 2147483648
      %v2620 = vxor.u32 %v1574, 2147483648
      %v2621 = vxor.u32 %v1579, 2147483648
      %v2622 = vxor.u32 %v1584, 2147483648
      %v2623 = vxor.u32 %v1589, 2147483648
      %v2624 = vxor.u32 %v1594, 2147483648
      %v2625 = vxor.u32 %v1599, 2147483648
      %v2626 = vxor.u32 %v1604, 2147483648
      %v2627 = vxor.u32 %v1609, 2147483648
      %v2628 = vxor.u32 %v1614, 2147483648
      %v2629 = vxor.u32 %v1619, 2147483648
      %v2630 = vxor.u32 %v1624, 2147483648
      %v2631 = vxor.u32 %v1629, 2147483648
      %v2632 = vxor.u32 %v1634, 2147483648
      %v2633 = vxor.u32 %v1639, 2147483648
      %v2634 = vxor.u32 %v1644, 2147483648
      %v2635 = vxor.u32 %v1649, 2147483648
      %v2636 = vxor.u32 %v1654, 2147483648
      %v2637 = vxor.u32 %v1659, 2147483648
      %v2638 = vxor.u32 %v1664, 2147483648
      %v2639 = vxor.u32 %v1669, 2147483648
      %v2640 = vxor.u32 %v1674, 2147483648
      %v2641 = vxor.u32 %v1679, 2147483648
      %v2642 = vxor.u32 %v1684, 2147483648
      %v2643 = vxor.u32 %v1689, 2147483648
      %v2644 = vxor.u32 %v1694, 2147483648
      %v2645 = vxor.u32 %v1699, 2147483648
      %v2646 = vxor.u32 %v1704, 2147483648
      %v2647 = vxor.u32 %v1709, 2147483648
      %v2648 = vxor.u32 %v1714, 2147483648
      %v2649 = vxor.u32 %v1719, 2147483648
      %v2650 = vxor.u32 %v1724, 2147483648
      %v2651 = vxor.u32 %v1729, 2147483648
      %v2652 = vxor.u32 %v1734, 2147483648
      %v2653 = vxor.u32 %v1739, 2147483648
      %v2654 = vxor.u32 %v1744, 2147483648
      %v2655 = vxor.u32 %v1749, 2147483648
      %v2656 = vxor.u32 %v1754, 2147483648
      %v2657 = vxor.u32 %v1759, 2147483648
      %v2658 = vxor.u32 %v1764, 2147483648
      %v2659 = vxor.u32 %v1769, 2147483648
      %v2660 = vxor.u32 %v1774, 2147483648
      %v2661 = vxor.u32 %v1779, 2147483648
      %v2662 = vxor.u32 %v1784, 2147483648
      %v2663 = vxor.u32 %v1789, 2147483648
      %v2664 = vxor.u32 %v1794, 2147483648
      %v2665 = vxor.u32 %v1799, 2147483648
      %v2666 = vxor.u32 %v1804, 2147483648
      %v2667 = vxor.u32 %v1809, 2147483648
      %v2668 = vxor.u32 %v1814, 2147483648
      %v2669 = vxor.u32 %v1819, 2147483648
      %v2670 = vxor.u32 %v1824, 2147483648
      %v2671 = vxor.u32 %v1829, 2147483648
      %v2672 = vxor.u32 %v1834, 2147483648
      %v2673 = vxor.u32 %v1839, 2147483648
      %v2674 = vxor.u32 %v1844, 2147483648
      %v2675 = vxor.u32 %v1849, 2147483648
      %v2676 = vxor.u32 %v1854, 2147483648
      %v2677 = vxor.u32 %v1859, 2147483648
      %v2678 = vxor.u32 %v1864, 2147483648
      %v2679 = vxor.u32 %v1869, 2147483648
      %v2680 = vxor.u32 %v1874, 2147483648
      %v2681 = vxor.u32 %v1879, 2147483648
      %v2682 = vxor.u32 %v1884, 2147483648
      %v2683 = vxor.u32 %v1889, 2147483648
      %v2684 = vxor.u32 %v1894, 2147483648
      %v2685 = vxor.u32 %v1899, 2147483648
      %v2686 = vxor.u32 %v1904, 2147483648
      %v2687 = vxor.u32 %v1909, 2147483648
      %v2688 = vxor.u32 %v1914, 2147483648
      %v2689 = vxor.u32 %v1919, 2147483648
      %v2690 = vxor.u32 %v1924, 2147483648
      %v2691 = vxor.u32 %v1929, 2147483648
      %v2692 = vxor.u32 %v1934, 2147483648
      %v2693 = vxor.u32 %v1939, 2147483648
      %v2694 = vxor.u32 %v1944, 2147483648
      %v2695 = vxor.u32 %v1949, 2147483648
      %v2696 = vxor.u32 %v1954, 2147483648
      %v2697 = vxor.u32 %v1959, 2147483648
      %v2698 = vxor.u32 %v1964, 2147483648
      %v2699 = vxor.u32 %v1969, 2147483648
      %v2700 = vxor.u32 %v1974, 2147483648
      %v2701 = vxor.u32 %v1979, 2147483648
      %v2702 = vxor.u32 %v1984, 2147483648
      %v2703 = vxor.u32 %v1989, 2147483648
      %v2704 = vxor.u32 %v1994, 2147483648
      %v2705 = vxor.u32 %v1999, 2147483648
      %v2706 = vxor.u32 %v2004, 2147483648
      %v2707 = vxor.u32 %v2009, 2147483648
      %v2708 = vxor.u32 %v2014, 2147483648
      %v2709 = vxor.u32 %v2019, 2147483648
      %v2710 = vxor.u32 %v2024, 2147483648
      %v2711 = vxor.u32 %v2029, 2147483648
      %v2712 = vxor.u32 %v2034, 2147483648
      %v2713 = vxor.u32 %v2039, 2147483648
      %v2714 = vxor.u32 %v2044, 2147483648
      %v2715 = vxor.u32 %v2049, 2147483648
      %v2716 = vxor.u32 %v2054, 2147483648
      %v2717 = vxor.u32 %v2059, 2147483648
      %v2718 = vxor.u32 %v2064, 2147483648
      %v2719 = vxor.u32 %v2069, 2147483648
      %v2720 = vxor.u32 %v2074, 2147483648
      %v2721 = vxor.u32 %v2079, 2147483648
      %v2722 = vxor.u32 %v2084, 2147483648
      %v2723 = vxor.u32 %v2089, 2147483648
      %v2724 = vxor.u32 %v2094, 2147483648
      %v2725 = vxor.u32 %v2099, 2147483648
      %v2726 = vxor.u32 %v2104, 2147483648
      %v2727 = vxor.u32 %v2109, 2147483648
      %v2728 = vxor.u32 %v2114, 2147483648
      %v2729 = vxor.u32 %v2119, 2147483648
      %v2730 = vxor.u32 %v2124, 2147483648
      %v2731 = vxor.u32 %v2129, 2147483648
      %v2732 = vxor.u32 %v2134, 2147483648
      %v2733 = vxor.u32 %v2139, 2147483648
      %v2734 = vxor.u32 %v2144, 2147483648
      %v2735 = vxor.u32 %v2149, 2147483648
      %v2736 = vxor.u32 %v2154, 2147483648
      %v2737 = vxor.u32 %v2159, 2147483648
      %v2738 = vxor.u32 %v2164, 2147483648
      %v2739 = vxor.u32 %v2169, 2147483648
      %v2740 = vxor.u32 %v2174, 2147483648
      %v2741 = vxor.u32 %v2179, 2147483648
      %v2742 = vxor.u32 %v2184, 2147483648
      %v2743 = vxor.u32 %v2189, 2147483648
      %v2744 = vxor.u32 %v2194, 2147483648
      %v2745 = vxor.u32 %v2199, 2147483648
      %v2746 = vxor.u32 %v2204, 2147483648
      %v2747 = vxor.u32 %v2209, 2147483648
      %v2748 = vxor.u32 %v2214, 2147483648
      %v2749 = vxor.u32 %v2219, 2147483648
      %v2750 = vxor.u32 %v2224, 2147483648
      %v2751 = vxor.u32 %v2229, 2147483648
      %v2752 = vxor.u32 %v2234, 2147483648
      %v2753 = vxor.u32 %v2239, 2147483648
      %v2754 = vxor.u32 %v2244, 2147483648
      %v2755 = vxor.u32 %v2249, 2147483648
      %v2756 = vxor.u32 %v2254, 2147483648
      %v2757 = vxor.u32 %v2259, 2147483648
      %v2758 = vxor.u32 %v2264, 2147483648
      %v2759 = vxor.u32 %v2269, 2147483648
      %v2760 = vxor.u32 %v2274, 2147483648
      %v2761 = vxor.u32 %v2279, 2147483648
      %v2762 = vxor.u32 %v2284, 2147483648
      %v2763 = vxor.u32 %v2289, 2147483648
      %v2764 = vxor.u32 %v2294, 2147483648
      %v2765 = vxor.u32 %v2299, 2147483648
      %v2766 = vxor.u32 %v2304, 2147483648
      %v2767 = vxor.u32 %v2309, 2147483648
      %v2768 = vxor.u32 %v2314, 2147483648
      %v2769 = vxor.u32 %v2319, 2147483648
      %v2770 = vxor.u32 %v2324, 2147483648
      %v2771 = vxor.u32 %v2329, 2147483648
      %v2772 = vxor.u32 %v2334, 2147483648
      %v2773 = vxor.u32 %v2339, 2147483648
      %v2774 = vxor.u32 %v2344, 2147483648
      %v2775 = vxor.u32 %v2349, 2147483648
      %v2776 = vxor.u32 %v2354, 2147483648
      %v2777 = vxor.u32 %v2359, 2147483648
      %v2778 = vxor.u32 %v2364, 2147483648
      %v2779 = vxor.u32 %v2369, 2147483648
      %v2780 = vxor.u32 %v2374, 2147483648
      %v2781 = vxor.u32 %v2379, 2147483648
      %v2782 = vxor.u32 %v2384, 2147483648
      %v2783 = vxor.u32 %v2389, 2147483648
      %v2784 = vxor.u32 %v2394, 2147483648
      %v2785 = vxor.u32 %v2399, 2147483648
      %v2786 = vxor.u32 %v2404, 2147483648
      %v2787 = vxor.u32 %v2409, 2147483648
      %v2788 = vxor.u32 %v2414, 2147483648
      %v2789 = vxor.u32 %v2419, 2147483648
      %v2790 = vxor.u32 %v2424, 2147483648
      %v2791 = vxor.u32 %v2429, 2147483648
      %v2792 = vxor.u32 %v2434, 2147483648
      %v2793 = vxor.u32 %v2439, 2147483648
      %v2794 = vxor.u32 %v2444, 2147483648
      %v2795 = vxor.u32 %v2449, 2147483648
      %v2796 = vxor.u32 %v2454, 2147483648
      %v2797 = vxor.u32 %v2459, 2147483648
      %v2798 = vxor.u32 %v2464, 2147483648
      %v2799 = vxor.u32 %v2469, 2147483648
      %v2800 = vxor.u32 %v2474, 2147483648
      %v2801 = vxor.u32 %v2479, 2147483648
      %v2802 = vxor.u32 %v2484, 2147483648
      %v2803 = vxor.u32 %v2489, 2147483648
      %v2804 = vxor.u32 %v2494, 2147483648
      %v2805 = vxor.u32 %v2499, 2147483648
      %v2806 = vxor.u32 %v2504, 2147483648
      %v2807 = vxor.u32 %v2509, 2147483648
      %v2808 = vxor.u32 %v2514, 2147483648
      %v2809 = vxor.u32 %v2519, 2147483648
      %v2810 = vxor.u32 %v2524, 2147483648
      %v2811 = vxor.u32 %v2529, 2147483648
      %v2812 = vxor.u32 %v2534, 2147483648
      %v2813 = vxor.u32 %v2539, 2147483648
      %v2814 = vxor.u32 %v2544, 2147483648
      %v2815 = vxor.u32 %v2549, 2147483648
      %v2816 = vxor.u32 %v2554, 2147483648
      %v2817 = vxor.u32 %v2559, 2147483648
      %v2818 = vmul.f32 %v2562, 1.442695
      %v2819 = vpow.pop %v2818
      %v2820 = vmul.f32 %v2563, 1.442695
      %v2821 = vpow.pop %v2820
      %v2822 = vmul.f32 %v2564, 1.442695
      %v2823 = vpow.pop %v2822
      %v2824 = vmul.f32 %v2565, 1.442695
      %v2825 = vpow.pop %v2824
      %v2826 = vmul.f32 %v2566, 1.442695
      %v2827 = vpow.pop %v2826
      %v2828 = vmul.f32 %v2567, 1.442695
      %v2829 = vpow.pop %v2828
      %v2830 = vmul.f32 %v2568, 1.442695
      %v2831 = vpow.pop %v2830
      %v2832 = vmul.f32 %v2569, 1.442695
      %v2833 = vpow.pop %v2832
      %v2834 = vmul.f32 %v2570, 1.442695
      %v2835 = vpow.pop %v2834
      %v2836 = vmul.f32 %v2571, 1.442695
      %v2837 = vpow.pop %v2836
      %v2838 = vmul.f32 %v2572, 1.442695
      %v2839 = vpow.pop %v2838
      %v2840 = vmul.f32 %v2573, 1.442695
      %v2841 = vpow.pop %v2840
      %v2842 = vmul.f32 %v2574, 1.442695
      %v2843 = vpow.pop %v2842
      %v2844 = vmul.f32 %v2575, 1.442695
      %v2845 = vpow.pop %v2844
      %v2846 = vmul.f32 %v2576, 1.442695
      %v2847 = vpow.pop %v2846
      %v2848 = vmul.f32 %v2577, 1.442695
      %v2849 = vpow.pop %v2848
      %v2850 = vmul.f32 %v2578, 1.442695
      %v2851 = vpow.pop %v2850
      %v2852 = vmul.f32 %v2579, 1.442695
      %v2853 = vpow.pop %v2852
      %v2854 = vmul.f32 %v2580, 1.442695
      %v2855 = vpow.pop %v2854
      %v2856 = vmul.f32 %v2581, 1.442695
      %v2857 = vpow.pop %v2856
      %v2858 = vmul.f32 %v2582, 1.442695
      %v2859 = vpow.pop %v2858
      %v2860 = vmul.f32 %v2583, 1.442695
      %v2861 = vpow.pop %v2860
      %v2862 = vmul.f32 %v2584, 1.442695
      %v2863 = vpow.pop %v2862
      %v2864 = vmul.f32 %v2585, 1.442695
      %v2865 = vpow.pop %v2864
      %v2866 = vmul.f32 %v2586, 1.442695
      %v2867 = vpow.pop %v2866
      %v2868 = vmul.f32 %v2587, 1.442695
      %v2869 = vpow.pop %v2868
      %v2870 = vmul.f32 %v2588, 1.442695
      %v2871 = vpow.pop %v2870
      %v2872 = vmul.f32 %v2589, 1.442695
      %v2873 = vpow.pop %v2872
      %v2874 = vmul.f32 %v2590, 1.442695
      %v2875 = vpow.pop %v2874
      %v2876 = vmul.f32 %v2591, 1.442695
      %v2877 = vpow.pop %v2876
      %v2878 = vmul.f32 %v2592, 1.442695
      %v2879 = vpow.pop %v2878
      %v2880 = vmul.f32 %v2593, 1.442695
      %v2881 = vpow.pop %v2880
      %v2882 = vmul.f32 %v2594, 1.442695
      %v2883 = vpow.pop %v2882
      %v2884 = vmul.f32 %v2595, 1.442695
      %v2885 = vpow.pop %v2884
      %v2886 = vmul.f32 %v2596, 1.442695
      %v2887 = vpow.pop %v2886
      %v2888 = vmul.f32 %v2597, 1.442695
      %v2889 = vpow.pop %v2888
      %v2890 = vmul.f32 %v2598, 1.442695
      %v2891 = vpow.pop %v2890
      %v2892 = vmul.f32 %v2599, 1.442695
      %v2893 = vpow.pop %v2892
      %v2894 = vmul.f32 %v2600, 1.442695
      %v2895 = vpow.pop %v2894
      %v2896 = vmul.f32 %v2601, 1.442695
      %v2897 = vpow.pop %v2896
      %v2898 = vmul.f32 %v2602, 1.442695
      %v2899 = vpow.pop %v2898
      %v2900 = vmul.f32 %v2603, 1.442695
      %v2901 = vpow.pop %v2900
      %v2902 = vmul.f32 %v2604, 1.442695
      %v2903 = vpow.pop %v2902
      %v2904 = vmul.f32 %v2605, 1.442695
      %v2905 = vpow.pop %v2904
      %v2906 = vmul.f32 %v2606, 1.442695
      %v2907 = vpow.pop %v2906
      %v2908 = vmul.f32 %v2607, 1.442695
      %v2909 = vpow.pop %v2908
      %v2910 = vmul.f32 %v2608, 1.442695
      %v2911 = vpow.pop %v2910
      %v2912 = vmul.f32 %v2609, 1.442695
      %v2913 = vpow.pop %v2912
      %v2914 = vmul.f32 %v2610, 1.442695
      %v2915 = vpow.pop %v2914
      %v2916 = vmul.f32 %v2611, 1.442695
      %v2917 = vpow.pop %v2916
      %v2918 = vmul.f32 %v2612, 1.442695
      %v2919 = vpow.pop %v2918
      %v2920 = vmul.f32 %v2613, 1.442695
      %v2921 = vpow.pop %v2920
      %v2922 = vmul.f32 %v2614, 1.442695
      %v2923 = vpow.pop %v2922
      %v2924 = vmul.f32 %v2615, 1.442695
      %v2925 = vpow.pop %v2924
      %v2926 = vmul.f32 %v2616, 1.442695
      %v2927 = vpow.pop %v2926
      %v2928 = vmul.f32 %v2617, 1.442695
      %v2929 = vpow.pop %v2928
      %v2930 = vmul.f32 %v2618, 1.442695
      %v2931 = vpow.pop %v2930
      %v2932 = vmul.f32 %v2619, 1.442695
      %v2933 = vpow.pop %v2932
      %v2934 = vmul.f32 %v2620, 1.442695
      %v2935 = vpow.pop %v2934
      %v2936 = vmul.f32 %v2621, 1.442695
      %v2937 = vpow.pop %v2936
      %v2938 = vmul.f32 %v2622, 1.442695
      %v2939 = vpow.pop %v2938
      %v2940 = vmul.f32 %v2623, 1.442695
      %v2941 = vpow.pop %v2940
      %v2942 = vmul.f32 %v2624, 1.442695
      %v2943 = vpow.pop %v2942
      %v2944 = vmul.f32 %v2625, 1.442695
      %v2945 = vpow.pop %v2944
      %v2946 = vmul.f32 %v2626, 1.442695
      %v2947 = vpow.pop %v2946
      %v2948 = vmul.f32 %v2627, 1.442695
      %v2949 = vpow.pop %v2948
      %v2950 = vmul.f32 %v2628, 1.442695
      %v2951 = vpow.pop %v2950
      %v2952 = vmul.f32 %v2629, 1.442695
      %v2953 = vpow.pop %v2952
      %v2954 = vmul.f32 %v2630, 1.442695
      %v2955 = vpow.pop %v2954
      %v2956 = vmul.f32 %v2631, 1.442695
      %v2957 = vpow.pop %v2956
      %v2958 = vmul.f32 %v2632, 1.442695
      %v2959 = vpow.pop %v2958
      %v2960 = vmul.f32 %v2633, 1.442695
      %v2961 = vpow.pop %v2960
      %v2962 = vmul.f32 %v2634, 1.442695
      %v2963 = vpow.pop %v2962
      %v2964 = vmul.f32 %v2635, 1.442695
      %v2965 = vpow.pop %v2964
      %v2966 = vmul.f32 %v2636, 1.442695
      %v2967 = vpow.pop %v2966
      %v2968 = vmul.f32 %v2637, 1.442695
      %v2969 = vpow.pop %v2968
      %v2970 = vmul.f32 %v2638, 1.442695
      %v2971 = vpow.pop %v2970
      %v2972 = vmul.f32 %v2639, 1.442695
      %v2973 = vpow.pop %v2972
      %v2974 = vmul.f32 %v2640, 1.442695
      %v2975 = vpow.pop %v2974
      %v2976 = vmul.f32 %v2641, 1.442695
      %v2977 = vpow.pop %v2976
      %v2978 = vmul.f32 %v2642, 1.442695
      %v2979 = vpow.pop %v2978
      %v2980 = vmul.f32 %v2643, 1.442695
      %v2981 = vpow.pop %v2980
      %v2982 = vmul.f32 %v2644, 1.442695
      %v2983 = vpow.pop %v2982
      %v2984 = vmul.f32 %v2645, 1.442695
      %v2985 = vpow.pop %v2984
      %v2986 = vmul.f32 %v2646, 1.442695
      %v2987 = vpow.pop %v2986
      %v2988 = vmul.f32 %v2647, 1.442695
      %v2989 = vpow.pop %v2988
      %v2990 = vmul.f32 %v2648, 1.442695
      %v2991 = vpow.pop %v2990
      %v2992 = vmul.f32 %v2649, 1.442695
      %v2993 = vpow.pop %v2992
      %v2994 = vmul.f32 %v2650, 1.442695
      %v2995 = vpow.pop %v2994
      %v2996 = vmul.f32 %v2651, 1.442695
      %v2997 = vpow.pop %v2996
      %v2998 = vmul.f32 %v2652, 1.442695
      %v2999 = vpow.pop %v2998
      %v3000 = vmul.f32 %v2653, 1.442695
      %v3001 = vpow.pop %v3000
      %v3002 = vmul.f32 %v2654, 1.442695
      %v3003 = vpow.pop %v3002
      %v3004 = vmul.f32 %v2655, 1.442695
      %v3005 = vpow.pop %v3004
      %v3006 = vmul.f32 %v2656, 1.442695
      %v3007 = vpow.pop %v3006
      %v3008 = vmul.f32 %v2657, 1.442695
      %v3009 = vpow.pop %v3008
      %v3010 = vmul.f32 %v2658, 1.442695
      %v3011 = vpow.pop %v3010
      %v3012 = vmul.f32 %v2659, 1.442695
      %v3013 = vpow.pop %v3012
      %v3014 = vmul.f32 %v2660, 1.442695
      %v3015 = vpow.pop %v3014
      %v3016 = vmul.f32 %v2661, 1.442695
      %v3017 = vpow.pop %v3016
      %v3018 = vmul.f32 %v2662, 1.442695
      %v3019 = vpow.pop %v3018
      %v3020 = vmul.f32 %v2663, 1.442695
      %v3021 = vpow.pop %v3020
      %v3022 = vmul.f32 %v2664, 1.442695
      %v3023 = vpow.pop %v3022
      %v3024 = vmul.f32 %v2665, 1.442695
      %v3025 = vpow.pop %v3024
      %v3026 = vmul.f32 %v2666, 1.442695
      %v3027 = vpow.pop %v3026
      %v3028 = vmul.f32 %v2667, 1.442695
      %v3029 = vpow.pop %v3028
      %v3030 = vmul.f32 %v2668, 1.442695
      %v3031 = vpow.pop %v3030
      %v3032 = vmul.f32 %v2669, 1.442695
      %v3033 = vpow.pop %v3032
      %v3034 = vmul.f32 %v2670, 1.442695
      %v3035 = vpow.pop %v3034
      %v3036 = vmul.f32 %v2671, 1.442695
      %v3037 = vpow.pop %v3036
      %v3038 = vmul.f32 %v2672, 1.442695
      %v3039 = vpow.pop %v3038
      %v3040 = vmul.f32 %v2673, 1.442695
      %v3041 = vpow.pop %v3040
      %v3042 = vmul.f32 %v2674, 1.442695
      %v3043 = vpow.pop %v3042
      %v3044 = vmul.f32 %v2675, 1.442695
      %v3045 = vpow.pop %v3044
      %v3046 = vmul.f32 %v2676, 1.442695
      %v3047 = vpow.pop %v3046
      %v3048 = vmul.f32 %v2677, 1.442695
      %v3049 = vpow.pop %v3048
      %v3050 = vmul.f32 %v2678, 1.442695
      %v3051 = vpow.pop %v3050
      %v3052 = vmul.f32 %v2679, 1.442695
      %v3053 = vpow.pop %v3052
      %v3054 = vmul.f32 %v2680, 1.442695
      %v3055 = vpow.pop %v3054
      %v3056 = vmul.f32 %v2681, 1.442695
      %v3057 = vpow.pop %v3056
      %v3058 = vmul.f32 %v2682, 1.442695
      %v3059 = vpow.pop %v3058
      %v3060 = vmul.f32 %v2683, 1.442695
      %v3061 = vpow.pop %v3060
      %v3062 = vmul.f32 %v2684, 1.442695
      %v3063 = vpow.pop %v3062
      %v3064 = vmul.f32 %v2685, 1.442695
      %v3065 = vpow.pop %v3064
      %v3066 = vmul.f32 %v2686, 1.442695
      %v3067 = vpow.pop %v3066
      %v3068 = vmul.f32 %v2687, 1.442695
      %v3069 = vpow.pop %v3068
      %v3070 = vmul.f32 %v2688, 1.442695
      %v3071 = vpow.pop %v3070
      %v3072 = vmul.f32 %v2689, 1.442695
      %v3073 = vpow.pop %v3072
      %v3074 = vmul.f32 %v2690, 1.442695
      %v3075 = vpow.pop %v3074
      %v3076 = vmul.f32 %v2691, 1.442695
      %v3077 = vpow.pop %v3076
      %v3078 = vmul.f32 %v2692, 1.442695
      %v3079 = vpow.pop %v3078
      %v3080 = vmul.f32 %v2693, 1.442695
      %v3081 = vpow.pop %v3080
      %v3082 = vmul.f32 %v2694, 1.442695
      %v3083 = vpow.pop %v3082
      %v3084 = vmul.f32 %v2695, 1.442695
      %v3085 = vpow.pop %v3084
      %v3086 = vmul.f32 %v2696, 1.442695
      %v3087 = vpow.pop %v3086
      %v3088 = vmul.f32 %v2697, 1.442695
      %v3089 = vpow.pop %v3088
      %v3090 = vmul.f32 %v2698, 1.442695
      %v3091 = vpow.pop %v3090
      %v3092 = vmul.f32 %v2699, 1.442695
      %v3093 = vpow.pop %v3092
      %v3094 = vmul.f32 %v2700, 1.442695
      %v3095 = vpow.pop %v3094
      %v3096 = vmul.f32 %v2701, 1.442695
      %v3097 = vpow.pop %v3096
      %v3098 = vmul.f32 %v2702, 1.442695
      %v3099 = vpow.pop %v3098
      %v3100 = vmul.f32 %v2703, 1.442695
      %v3101 = vpow.pop %v3100
      %v3102 = vmul.f32 %v2704, 1.442695
      %v3103 = vpow.pop %v3102
      %v3104 = vmul.f32 %v2705, 1.442695
      %v3105 = vpow.pop %v3104
      %v3106 = vmul.f32 %v2706, 1.442695
      %v3107 = vpow.pop %v3106
      %v3108 = vmul.f32 %v2707, 1.442695
      %v3109 = vpow.pop %v3108
      %v3110 = vmul.f32 %v2708, 1.442695
      %v3111 = vpow.pop %v3110
      %v3112 = vmul.f32 %v2709, 1.442695
      %v3113 = vpow.pop %v3112
      %v3114 = vmul.f32 %v2710, 1.442695
      %v3115 = vpow.pop %v3114
      %v3116 = vmul.f32 %v2711, 1.442695
      %v3117 = vpow.pop %v3116
      %v3118 = vmul.f32 %v2712, 1.442695
      %v3119 = vpow.pop %v3118
      %v3120 = vmul.f32 %v2713, 1.442695
      %v3121 = vpow.pop %v3120
      %v3122 = vmul.f32 %v2714, 1.442695
      %v3123 = vpow.pop %v3122
      %v3124 = vmul.f32 %v2715, 1.442695
      %v3125 = vpow.pop %v3124
      %v3126 = vmul.f32 %v2716, 1.442695
      %v3127 = vpow.pop %v3126
      %v3128 = vmul.f32 %v2717, 1.442695
      %v3129 = vpow.pop %v3128
      %v3130 = vmul.f32 %v2718, 1.442695
      %v3131 = vpow.pop %v3130
      %v3132 = vmul.f32 %v2719, 1.442695
      %v3133 = vpow.pop %v3132
      %v3134 = vmul.f32 %v2720, 1.442695
      %v3135 = vpow.pop %v3134
      %v3136 = vmul.f32 %v2721, 1.442695
      %v3137 = vpow.pop %v3136
      %v3138 = vmul.f32 %v2722, 1.442695
      %v3139 = vpow.pop %v3138
      %v3140 = vmul.f32 %v2723, 1.442695
      %v3141 = vpow.pop %v3140
      %v3142 = vmul.f32 %v2724, 1.442695
      %v3143 = vpow.pop %v3142
      %v3144 = vmul.f32 %v2725, 1.442695
      %v3145 = vpow.pop %v3144
      %v3146 = vmul.f32 %v2726, 1.442695
      %v3147 = vpow.pop %v3146
      %v3148 = vmul.f32 %v2727, 1.442695
      %v3149 = vpow.pop %v3148
      %v3150 = vmul.f32 %v2728, 1.442695
      %v3151 = vpow.pop %v3150
      %v3152 = vmul.f32 %v2729, 1.442695
      %v3153 = vpow.pop %v3152
      %v3154 = vmul.f32 %v2730, 1.442695
      %v3155 = vpow.pop %v3154
      %v3156 = vmul.f32 %v2731, 1.442695
      %v3157 = vpow.pop %v3156
      %v3158 = vmul.f32 %v2732, 1.442695
      %v3159 = vpow.pop %v3158
      %v3160 = vmul.f32 %v2733, 1.442695
      %v3161 = vpow.pop %v3160
      %v3162 = vmul.f32 %v2734, 1.442695
      %v3163 = vpow.pop %v3162
      %v3164 = vmul.f32 %v2735, 1.442695
      %v3165 = vpow.pop %v3164
      %v3166 = vmul.f32 %v2736, 1.442695
      %v3167 = vpow.pop %v3166
      %v3168 = vmul.f32 %v2737, 1.442695
      %v3169 = vpow.pop %v3168
      %v3170 = vmul.f32 %v2738, 1.442695
      %v3171 = vpow.pop %v3170
      %v3172 = vmul.f32 %v2739, 1.442695
      %v3173 = vpow.pop %v3172
      %v3174 = vmul.f32 %v2740, 1.442695
      %v3175 = vpow.pop %v3174
      %v3176 = vmul.f32 %v2741, 1.442695
      %v3177 = vpow.pop %v3176
      %v3178 = vmul.f32 %v2742, 1.442695
      %v3179 = vpow.pop %v3178
      %v3180 = vmul.f32 %v2743, 1.442695
      %v3181 = vpow.pop %v3180
      %v3182 = vmul.f32 %v2744, 1.442695
      %v3183 = vpow.pop %v3182
      %v3184 = vmul.f32 %v2745, 1.442695
      %v3185 = vpow.pop %v3184
      %v3186 = vmul.f32 %v2746, 1.442695
      %v3187 = vpow.pop %v3186
      %v3188 = vmul.f32 %v2747, 1.442695
      %v3189 = vpow.pop %v3188
      %v3190 = vmul.f32 %v2748, 1.442695
      %v3191 = vpow.pop %v3190
      %v3192 = vmul.f32 %v2749, 1.442695
      %v3193 = vpow.pop %v3192
      %v3194 = vmul.f32 %v2750, 1.442695
      %v3195 = vpow.pop %v3194
      %v3196 = vmul.f32 %v2751, 1.442695
      %v3197 = vpow.pop %v3196
      %v3198 = vmul.f32 %v2752, 1.442695
      %v3199 = vpow.pop %v3198
      %v3200 = vmul.f32 %v2753, 1.442695
      %v3201 = vpow.pop %v3200
      %v3202 = vmul.f32 %v2754, 1.442695
      %v3203 = vpow.pop %v3202
      %v3204 = vmul.f32 %v2755, 1.442695
      %v3205 = vpow.pop %v3204
      %v3206 = vmul.f32 %v2756, 1.442695
      %v3207 = vpow.pop %v3206
      %v3208 = vmul.f32 %v2757, 1.442695
      %v3209 = vpow.pop %v3208
      %v3210 = vmul.f32 %v2758, 1.442695
      %v3211 = vpow.pop %v3210
      %v3212 = vmul.f32 %v2759, 1.442695
      %v3213 = vpow.pop %v3212
      %v3214 = vmul.f32 %v2760, 1.442695
      %v3215 = vpow.pop %v3214
      %v3216 = vmul.f32 %v2761, 1.442695
      %v3217 = vpow.pop %v3216
      %v3218 = vmul.f32 %v2762, 1.442695
      %v3219 = vpow.pop %v3218
      %v3220 = vmul.f32 %v2763, 1.442695
      %v3221 = vpow.pop %v3220
      %v3222 = vmul.f32 %v2764, 1.442695
      %v3223 = vpow.pop %v3222
      %v3224 = vmul.f32 %v2765, 1.442695
      %v3225 = vpow.pop %v3224
      %v3226 = vmul.f32 %v2766, 1.442695
      %v3227 = vpow.pop %v3226
      %v3228 = vmul.f32 %v2767, 1.442695
      %v3229 = vpow.pop %v3228
      %v3230 = vmul.f32 %v2768, 1.442695
      %v3231 = vpow.pop %v3230
      %v3232 = vmul.f32 %v2769, 1.442695
      %v3233 = vpow.pop %v3232
      %v3234 = vmul.f32 %v2770, 1.442695
      %v3235 = vpow.pop %v3234
      %v3236 = vmul.f32 %v2771, 1.442695
      %v3237 = vpow.pop %v3236
      %v3238 = vmul.f32 %v2772, 1.442695
      %v3239 = vpow.pop %v3238
      %v3240 = vmul.f32 %v2773, 1.442695
      %v3241 = vpow.pop %v3240
      %v3242 = vmul.f32 %v2774, 1.442695
      %v3243 = vpow.pop %v3242
      %v3244 = vmul.f32 %v2775, 1.442695
      %v3245 = vpow.pop %v3244
      %v3246 = vmul.f32 %v2776, 1.442695
      %v3247 = vpow.pop %v3246
      %v3248 = vmul.f32 %v2777, 1.442695
      %v3249 = vpow.pop %v3248
      %v3250 = vmul.f32 %v2778, 1.442695
      %v3251 = vpow.pop %v3250
      %v3252 = vmul.f32 %v2779, 1.442695
      %v3253 = vpow.pop %v3252
      %v3254 = vmul.f32 %v2780, 1.442695
      %v3255 = vpow.pop %v3254
      %v3256 = vmul.f32 %v2781, 1.442695
      %v3257 = vpow.pop %v3256
      %v3258 = vmul.f32 %v2782, 1.442695
      %v3259 = vpow.pop %v3258
      %v3260 = vmul.f32 %v2783, 1.442695
      %v3261 = vpow.pop %v3260
      %v3262 = vmul.f32 %v2784, 1.442695
      %v3263 = vpow.pop %v3262
      %v3264 = vmul.f32 %v2785, 1.442695
      %v3265 = vpow.pop %v3264
      %v3266 = vmul.f32 %v2786, 1.442695
      %v3267 = vpow.pop %v3266
      %v3268 = vmul.f32 %v2787, 1.442695
      %v3269 = vpow.pop %v3268
      %v3270 = vmul.f32 %v2788, 1.442695
      %v3271 = vpow.pop %v3270
      %v3272 = vmul.f32 %v2789, 1.442695
      %v3273 = vpow.pop %v3272
      %v3274 = vmul.f32 %v2790, 1.442695
      %v3275 = vpow.pop %v3274
      %v3276 = vmul.f32 %v2791, 1.442695
      %v3277 = vpow.pop %v3276
      %v3278 = vmul.f32 %v2792, 1.442695
      %v3279 = vpow.pop %v3278
      %v3280 = vmul.f32 %v2793, 1.442695
      %v3281 = vpow.pop %v3280
      %v3282 = vmul.f32 %v2794, 1.442695
      %v3283 = vpow.pop %v3282
      %v3284 = vmul.f32 %v2795, 1.442695
      %v3285 = vpow.pop %v3284
      %v3286 = vmul.f32 %v2796, 1.442695
      %v3287 = vpow.pop %v3286
      %v3288 = vmul.f32 %v2797, 1.442695
      %v3289 = vpow.pop %v3288
      %v3290 = vmul.f32 %v2798, 1.442695
      %v3291 = vpow.pop %v3290
      %v3292 = vmul.f32 %v2799, 1.442695
      %v3293 = vpow.pop %v3292
      %v3294 = vmul.f32 %v2800, 1.442695
      %v3295 = vpow.pop %v3294
      %v3296 = vmul.f32 %v2801, 1.442695
      %v3297 = vpow.pop %v3296
      %v3298 = vmul.f32 %v2802, 1.442695
      %v3299 = vpow.pop %v3298
      %v3300 = vmul.f32 %v2803, 1.442695
      %v3301 = vpow.pop %v3300
      %v3302 = vmul.f32 %v2804, 1.442695
      %v3303 = vpow.pop %v3302
      %v3304 = vmul.f32 %v2805, 1.442695
      %v3305 = vpow.pop %v3304
      %v3306 = vmul.f32 %v2806, 1.442695
      %v3307 = vpow.pop %v3306
      %v3308 = vmul.f32 %v2807, 1.442695
      %v3309 = vpow.pop %v3308
      %v3310 = vmul.f32 %v2808, 1.442695
      %v3311 = vpow.pop %v3310
      %v3312 = vmul.f32 %v2809, 1.442695
      %v3313 = vpow.pop %v3312
      %v3314 = vmul.f32 %v2810, 1.442695
      %v3315 = vpow.pop %v3314
      %v3316 = vmul.f32 %v2811, 1.442695
      %v3317 = vpow.pop %v3316
      %v3318 = vmul.f32 %v2812, 1.442695
      %v3319 = vpow.pop %v3318
      %v3320 = vmul.f32 %v2813, 1.442695
      %v3321 = vpow.pop %v3320
      %v3322 = vmul.f32 %v2814, 1.442695
      %v3323 = vpow.pop %v3322
      %v3324 = vmul.f32 %v2815, 1.442695
      %v3325 = vpow.pop %v3324
      %v3326 = vmul.f32 %v2816, 1.442695
      %v3327 = vpow.pop %v3326
      %v3328 = vmul.f32 %v2817, 1.442695
      %v3329 = vpow.pop %v3328
      %v3330 = vadd.f32 %v2819, 1.0
      %v3331 = vadd.f32 %v2821, 1.0
      %v3332 = vadd.f32 %v2823, 1.0
      %v3333 = vadd.f32 %v2825, 1.0
      %v3334 = vadd.f32 %v2827, 1.0
      %v3335 = vadd.f32 %v2829, 1.0
      %v3336 = vadd.f32 %v2831, 1.0
      %v3337 = vadd.f32 %v2833, 1.0
      %v3338 = vadd.f32 %v2835, 1.0
      %v3339 = vadd.f32 %v2837, 1.0
      %v3340 = vadd.f32 %v2839, 1.0
      %v3341 = vadd.f32 %v2841, 1.0
      %v3342 = vadd.f32 %v2843, 1.0
      %v3343 = vadd.f32 %v2845, 1.0
      %v3344 = vadd.f32 %v2847, 1.0
      %v3345 = vadd.f32 %v2849, 1.0
      %v3346 = vadd.f32 %v2851, 1.0
      %v3347 = vadd.f32 %v2853, 1.0
      %v3348 = vadd.f32 %v2855, 1.0
      %v3349 = vadd.f32 %v2857, 1.0
      %v3350 = vadd.f32 %v2859, 1.0
      %v3351 = vadd.f32 %v2861, 1.0
      %v3352 = vadd.f32 %v2863, 1.0
      %v3353 = vadd.f32 %v2865, 1.0
      %v3354 = vadd.f32 %v2867, 1.0
      %v3355 = vadd.f32 %v2869, 1.0
      %v3356 = vadd.f32 %v2871, 1.0
      %v3357 = vadd.f32 %v2873, 1.0
      %v3358 = vadd.f32 %v2875, 1.0
      %v3359 = vadd.f32 %v2877, 1.0
      %v3360 = vadd.f32 %v2879, 1.0
      %v3361 = vadd.f32 %v2881, 1.0
      %v3362 = vadd.f32 %v2883, 1.0
      %v3363 = vadd.f32 %v2885, 1.0
      %v3364 = vadd.f32 %v2887, 1.0
      %v3365 = vadd.f32 %v2889, 1.0
      %v3366 = vadd.f32 %v2891, 1.0
      %v3367 = vadd.f32 %v2893, 1.0
      %v3368 = vadd.f32 %v2895, 1.0
      %v3369 = vadd.f32 %v2897, 1.0
      %v3370 = vadd.f32 %v2899, 1.0
      %v3371 = vadd.f32 %v2901, 1.0
      %v3372 = vadd.f32 %v2903, 1.0
      %v3373 = vadd.f32 %v2905, 1.0
      %v3374 = vadd.f32 %v2907, 1.0
      %v3375 = vadd.f32 %v2909, 1.0
      %v3376 = vadd.f32 %v2911, 1.0
      %v3377 = vadd.f32 %v2913, 1.0
      %v3378 = vadd.f32 %v2915, 1.0
      %v3379 = vadd.f32 %v2917, 1.0
      %v3380 = vadd.f32 %v2919, 1.0
      %v3381 = vadd.f32 %v2921, 1.0
      %v3382 = vadd.f32 %v2923, 1.0
      %v3383 = vadd.f32 %v2925, 1.0
      %v3384 = vadd.f32 %v2927, 1.0
      %v3385 = vadd.f32 %v2929, 1.0
      %v3386 = vadd.f32 %v2931, 1.0
      %v3387 = vadd.f32 %v2933, 1.0
      %v3388 = vadd.f32 %v2935, 1.0
      %v3389 = vadd.f32 %v2937, 1.0
      %v3390 = vadd.f32 %v2939, 1.0
      %v3391 = vadd.f32 %v2941, 1.0
      %v3392 = vadd.f32 %v2943, 1.0
      %v3393 = vadd.f32 %v2945, 1.0
      %v3394 = vadd.f32 %v2947, 1.0
      %v3395 = vadd.f32 %v2949, 1.0
      %v3396 = vadd.f32 %v2951, 1.0
      %v3397 = vadd.f32 %v2953, 1.0
      %v3398 = vadd.f32 %v2955, 1.0
      %v3399 = vadd.f32 %v2957, 1.0
      %v3400 = vadd.f32 %v2959, 1.0
      %v3401 = vadd.f32 %v2961, 1.0
      %v3402 = vadd.f32 %v2963, 1.0
      %v3403 = vadd.f32 %v2965, 1.0
      %v3404 = vadd.f32 %v2967, 1.0
      %v3405 = vadd.f32 %v2969, 1.0
      %v3406 = vadd.f32 %v2971, 1.0
      %v3407 = vadd.f32 %v2973, 1.0
      %v3408 = vadd.f32 %v2975, 1.0
      %v3409 = vadd.f32 %v2977, 1.0
      %v3410 = vadd.f32 %v2979, 1.0
      %v3411 = vadd.f32 %v2981, 1.0
      %v3412 = vadd.f32 %v2983, 1.0
      %v3413 = vadd.f32 %v2985, 1.0
      %v3414 = vadd.f32 %v2987, 1.0
      %v3415 = vadd.f32 %v2989, 1.0
      %v3416 = vadd.f32 %v2991, 1.0
      %v3417 = vadd.f32 %v2993, 1.0
      %v3418 = vadd.f32 %v2995, 1.0
      %v3419 = vadd.f32 %v2997, 1.0
      %v3420 = vadd.f32 %v2999, 1.0
      %v3421 = vadd.f32 %v3001, 1.0
      %v3422 = vadd.f32 %v3003, 1.0
      %v3423 = vadd.f32 %v3005, 1.0
      %v3424 = vadd.f32 %v3007, 1.0
      %v3425 = vadd.f32 %v3009, 1.0
      %v3426 = vadd.f32 %v3011, 1.0
      %v3427 = vadd.f32 %v3013, 1.0
      %v3428 = vadd.f32 %v3015, 1.0
      %v3429 = vadd.f32 %v3017, 1.0
      %v3430 = vadd.f32 %v3019, 1.0
      %v3431 = vadd.f32 %v3021, 1.0
      %v3432 = vadd.f32 %v3023, 1.0
      %v3433 = vadd.f32 %v3025, 1.0
      %v3434 = vadd.f32 %v3027, 1.0
      %v3435 = vadd.f32 %v3029, 1.0
      %v3436 = vadd.f32 %v3031, 1.0
      %v3437 = vadd.f32 %v3033, 1.0
      %v3438 = vadd.f32 %v3035, 1.0
      %v3439 = vadd.f32 %v3037, 1.0
      %v3440 = vadd.f32 %v3039, 1.0
      %v3441 = vadd.f32 %v3041, 1.0
      %v3442 = vadd.f32 %v3043, 1.0
      %v3443 = vadd.f32 %v3045, 1.0
      %v3444 = vadd.f32 %v3047, 1.0
      %v3445 = vadd.f32 %v3049, 1.0
      %v3446 = vadd.f32 %v3051, 1.0
      %v3447 = vadd.f32 %v3053, 1.0
      %v3448 = vadd.f32 %v3055, 1.0
      %v3449 = vadd.f32 %v3057, 1.0
      %v3450 = vadd.f32 %v3059, 1.0
      %v3451 = vadd.f32 %v3061, 1.0
      %v3452 = vadd.f32 %v3063, 1.0
      %v3453 = vadd.f32 %v3065, 1.0
      %v3454 = vadd.f32 %v3067, 1.0
      %v3455 = vadd.f32 %v3069, 1.0
      %v3456 = vadd.f32 %v3071, 1.0
      %v3457 = vadd.f32 %v3073, 1.0
      %v3458 = vadd.f32 %v3075, 1.0
      %v3459 = vadd.f32 %v3077, 1.0
      %v3460 = vadd.f32 %v3079, 1.0
      %v3461 = vadd.f32 %v3081, 1.0
      %v3462 = vadd.f32 %v3083, 1.0
      %v3463 = vadd.f32 %v3085, 1.0
      %v3464 = vadd.f32 %v3087, 1.0
      %v3465 = vadd.f32 %v3089, 1.0
      %v3466 = vadd.f32 %v3091, 1.0
      %v3467 = vadd.f32 %v3093, 1.0
      %v3468 = vadd.f32 %v3095, 1.0
      %v3469 = vadd.f32 %v3097, 1.0
      %v3470 = vadd.f32 %v3099, 1.0
      %v3471 = vadd.f32 %v3101, 1.0
      %v3472 = vadd.f32 %v3103, 1.0
      %v3473 = vadd.f32 %v3105, 1.0
      %v3474 = vadd.f32 %v3107, 1.0
      %v3475 = vadd.f32 %v3109, 1.0
      %v3476 = vadd.f32 %v3111, 1.0
      %v3477 = vadd.f32 %v3113, 1.0
      %v3478 = vadd.f32 %v3115, 1.0
      %v3479 = vadd.f32 %v3117, 1.0
      %v3480 = vadd.f32 %v3119, 1.0
      %v3481 = vadd.f32 %v3121, 1.0
      %v3482 = vadd.f32 %v3123, 1.0
      %v3483 = vadd.f32 %v3125, 1.0
      %v3484 = vadd.f32 %v3127, 1.0
      %v3485 = vadd.f32 %v3129, 1.0
      %v3486 = vadd.f32 %v3131, 1.0
      %v3487 = vadd.f32 %v3133, 1.0
      %v3488 = vadd.f32 %v3135, 1.0
      %v3489 = vadd.f32 %v3137, 1.0
      %v3490 = vadd.f32 %v3139, 1.0
      %v3491 = vadd.f32 %v3141, 1.0
      %v3492 = vadd.f32 %v3143, 1.0
      %v3493 = vadd.f32 %v3145, 1.0
      %v3494 = vadd.f32 %v3147, 1.0
      %v3495 = vadd.f32 %v3149, 1.0
      %v3496 = vadd.f32 %v3151, 1.0
      %v3497 = vadd.f32 %v3153, 1.0
      %v3498 = vadd.f32 %v3155, 1.0
      %v3499 = vadd.f32 %v3157, 1.0
      %v3500 = vadd.f32 %v3159, 1.0
      %v3501 = vadd.f32 %v3161, 1.0
      %v3502 = vadd.f32 %v3163, 1.0
      %v3503 = vadd.f32 %v3165, 1.0
      %v3504 = vadd.f32 %v3167, 1.0
      %v3505 = vadd.f32 %v3169, 1.0
      %v3506 = vadd.f32 %v3171, 1.0
      %v3507 = vadd.f32 %v3173, 1.0
      %v3508 = vadd.f32 %v3175, 1.0
      %v3509 = vadd.f32 %v3177, 1.0
      %v3510 = vadd.f32 %v3179, 1.0
      %v3511 = vadd.f32 %v3181, 1.0
      %v3512 = vadd.f32 %v3183, 1.0
      %v3513 = vadd.f32 %v3185, 1.0
      %v3514 = vadd.f32 %v3187, 1.0
      %v3515 = vadd.f32 %v3189, 1.0
      %v3516 = vadd.f32 %v3191, 1.0
      %v3517 = vadd.f32 %v3193, 1.0
      %v3518 = vadd.f32 %v3195, 1.0
      %v3519 = vadd.f32 %v3197, 1.0
      %v3520 = vadd.f32 %v3199, 1.0
      %v3521 = vadd.f32 %v3201, 1.0
      %v3522 = vadd.f32 %v3203, 1.0
      %v3523 = vadd.f32 %v3205, 1.0
      %v3524 = vadd.f32 %v3207, 1.0
      %v3525 = vadd.f32 %v3209, 1.0
      %v3526 = vadd.f32 %v3211, 1.0
      %v3527 = vadd.f32 %v3213, 1.0
      %v3528 = vadd.f32 %v3215, 1.0
      %v3529 = vadd.f32 %v3217, 1.0
      %v3530 = vadd.f32 %v3219, 1.0
      %v3531 = vadd.f32 %v3221, 1.0
      %v3532 = vadd.f32 %v3223, 1.0
      %v3533 = vadd.f32 %v3225, 1.0
      %v3534 = vadd.f32 %v3227, 1.0
      %v3535 = vadd.f32 %v3229, 1.0
      %v3536 = vadd.f32 %v3231, 1.0
      %v3537 = vadd.f32 %v3233, 1.0
      %v3538 = vadd.f32 %v3235, 1.0
      %v3539 = vadd.f32 %v3237, 1.0
      %v3540 = vadd.f32 %v3239, 1.0
      %v3541 = vadd.f32 %v3241, 1.0
      %v3542 = vadd.f32 %v3243, 1.0
      %v3543 = vadd.f32 %v3245, 1.0
      %v3544 = vadd.f32 %v3247, 1.0
      %v3545 = vadd.f32 %v3249, 1.0
      %v3546 = vadd.f32 %v3251, 1.0
      %v3547 = vadd.f32 %v3253, 1.0
      %v3548 = vadd.f32 %v3255, 1.0
      %v3549 = vadd.f32 %v3257, 1.0
      %v3550 = vadd.f32 %v3259, 1.0
      %v3551 = vadd.f32 %v3261, 1.0
      %v3552 = vadd.f32 %v3263, 1.0
      %v3553 = vadd.f32 %v3265, 1.0
      %v3554 = vadd.f32 %v3267, 1.0
      %v3555 = vadd.f32 %v3269, 1.0
      %v3556 = vadd.f32 %v3271, 1.0
      %v3557 = vadd.f32 %v3273, 1.0
      %v3558 = vadd.f32 %v3275, 1.0
      %v3559 = vadd.f32 %v3277, 1.0
      %v3560 = vadd.f32 %v3279, 1.0
      %v3561 = vadd.f32 %v3281, 1.0
      %v3562 = vadd.f32 %v3283, 1.0
      %v3563 = vadd.f32 %v3285, 1.0
      %v3564 = vadd.f32 %v3287, 1.0
      %v3565 = vadd.f32 %v3289, 1.0
      %v3566 = vadd.f32 %v3291, 1.0
      %v3567 = vadd.f32 %v3293, 1.0
      %v3568 = vadd.f32 %v3295, 1.0
      %v3569 = vadd.f32 %v3297, 1.0
      %v3570 = vadd.f32 %v3299, 1.0
      %v3571 = vadd.f32 %v3301, 1.0
      %v3572 = vadd.f32 %v3303, 1.0
      %v3573 = vadd.f32 %v3305, 1.0
      %v3574 = vadd.f32 %v3307, 1.0
      %v3575 = vadd.f32 %v3309, 1.0
      %v3576 = vadd.f32 %v3311, 1.0
      %v3577 = vadd.f32 %v3313, 1.0
      %v3578 = vadd.f32 %v3315, 1.0
      %v3579 = vadd.f32 %v3317, 1.0
      %v3580 = vadd.f32 %v3319, 1.0
      %v3581 = vadd.f32 %v3321, 1.0
      %v3582 = vadd.f32 %v3323, 1.0
      %v3583 = vadd.f32 %v3325, 1.0
      %v3584 = vadd.f32 %v3327, 1.0
      %v3585 = vadd.f32 %v3329, 1.0
      %v3586 = vrcp.pop %v3330
      %v3587 = vmul.f32 1.0, %v3586
      %v3588 = vrcp.pop %v3331
      %v3589 = vmul.f32 1.0, %v3588
      %v3590 = vrcp.pop %v3332
      %v3591 = vmul.f32 1.0, %v3590
      %v3592 = vrcp.pop %v3333
      %v3593 = vmul.f32 1.0, %v3592
      %v3594 = vrcp.pop %v3334
      %v3595 = vmul.f32 1.0, %v3594
      %v3596 = vrcp.pop %v3335
      %v3597 = vmul.f32 1.0, %v3596
      %v3598 = vrcp.pop %v3336
      %v3599 = vmul.f32 1.0, %v3598
      %v3600 = vrcp.pop %v3337
      %v3601 = vmul.f32 1.0, %v3600
      %v3602 = vrcp.pop %v3338
      %v3603 = vmul.f32 1.0, %v3602
      %v3604 = vrcp.pop %v3339
      %v3605 = vmul.f32 1.0, %v3604
      %v3606 = vrcp.pop %v3340
      %v3607 = vmul.f32 1.0, %v3606
      %v3608 = vrcp.pop %v3341
      %v3609 = vmul.f32 1.0, %v3608
      %v3610 = vrcp.pop %v3342
      %v3611 = vmul.f32 1.0, %v3610
      %v3612 = vrcp.pop %v3343
      %v3613 = vmul.f32 1.0, %v3612
      %v3614 = vrcp.pop %v3344
      %v3615 = vmul.f32 1.0, %v3614
      %v3616 = vrcp.pop %v3345
      %v3617 = vmul.f32 1.0, %v3616
      %v3618 = vrcp.pop %v3346
      %v3619 = vmul.f32 1.0, %v3618
      %v3620 = vrcp.pop %v3347
      %v3621 = vmul.f32 1.0, %v3620
      %v3622 = vrcp.pop %v3348
      %v3623 = vmul.f32 1.0, %v3622
      %v3624 = vrcp.pop %v3349
      %v3625 = vmul.f32 1.0, %v3624
      %v3626 = vrcp.pop %v3350
      %v3627 = vmul.f32 1.0, %v3626
      %v3628 = vrcp.pop %v3351
      %v3629 = vmul.f32 1.0, %v3628
      %v3630 = vrcp.pop %v3352
      %v3631 = vmul.f32 1.0, %v3630
      %v3632 = vrcp.pop %v3353
      %v3633 = vmul.f32 1.0, %v3632
      %v3634 = vrcp.pop %v3354
      %v3635 = vmul.f32 1.0, %v3634
      %v3636 = vrcp.pop %v3355
      %v3637 = vmul.f32 1.0, %v3636
      %v3638 = vrcp.pop %v3356
      %v3639 = vmul.f32 1.0, %v3638
      %v3640 = vrcp.pop %v3357
      %v3641 = vmul.f32 1.0, %v3640
      %v3642 = vrcp.pop %v3358
      %v3643 = vmul.f32 1.0, %v3642
      %v3644 = vrcp.pop %v3359
      %v3645 = vmul.f32 1.0, %v3644
      %v3646 = vrcp.pop %v3360
      %v3647 = vmul.f32 1.0, %v3646
      %v3648 = vrcp.pop %v3361
      %v3649 = vmul.f32 1.0, %v3648
      %v3650 = vrcp.pop %v3362
      %v3651 = vmul.f32 1.0, %v3650
      %v3652 = vrcp.pop %v3363
      %v3653 = vmul.f32 1.0, %v3652
      %v3654 = vrcp.pop %v3364
      %v3655 = vmul.f32 1.0, %v3654
      %v3656 = vrcp.pop %v3365
      %v3657 = vmul.f32 1.0, %v3656
      %v3658 = vrcp.pop %v3366
      %v3659 = vmul.f32 1.0, %v3658
      %v3660 = vrcp.pop %v3367
      %v3661 = vmul.f32 1.0, %v3660
      %v3662 = vrcp.pop %v3368
      %v3663 = vmul.f32 1.0, %v3662
      %v3664 = vrcp.pop %v3369
      %v3665 = vmul.f32 1.0, %v3664
      %v3666 = vrcp.pop %v3370
      %v3667 = vmul.f32 1.0, %v3666
      %v3668 = vrcp.pop %v3371
      %v3669 = vmul.f32 1.0, %v3668
      %v3670 = vrcp.pop %v3372
      %v3671 = vmul.f32 1.0, %v3670
      %v3672 = vrcp.pop %v3373
      %v3673 = vmul.f32 1.0, %v3672
      %v3674 = vrcp.pop %v3374
      %v3675 = vmul.f32 1.0, %v3674
      %v3676 = vrcp.pop %v3375
      %v3677 = vmul.f32 1.0, %v3676
      %v3678 = vrcp.pop %v3376
      %v3679 = vmul.f32 1.0, %v3678
      %v3680 = vrcp.pop %v3377
      %v3681 = vmul.f32 1.0, %v3680
      %v3682 = vrcp.pop %v3378
      %v3683 = vmul.f32 1.0, %v3682
      %v3684 = vrcp.pop %v3379
      %v3685 = vmul.f32 1.0, %v3684
      %v3686 = vrcp.pop %v3380
      %v3687 = vmul.f32 1.0, %v3686
      %v3688 = vrcp.pop %v3381
      %v3689 = vmul.f32 1.0, %v3688
      %v3690 = vrcp.pop %v3382
      %v3691 = vmul.f32 1.0, %v3690
      %v3692 = vrcp.pop %v3383
      %v3693 = vmul.f32 1.0, %v3692
      %v3694 = vrcp.pop %v3384
      %v3695 = vmul.f32 1.0, %v3694
      %v3696 = vrcp.pop %v3385
      %v3697 = vmul.f32 1.0, %v3696
      %v3698 = vrcp.pop %v3386
      %v3699 = vmul.f32 1.0, %v3698
      %v3700 = vrcp.pop %v3387
      %v3701 = vmul.f32 1.0, %v3700
      %v3702 = vrcp.pop %v3388
      %v3703 = vmul.f32 1.0, %v3702
      %v3704 = vrcp.pop %v3389
      %v3705 = vmul.f32 1.0, %v3704
      %v3706 = vrcp.pop %v3390
      %v3707 = vmul.f32 1.0, %v3706
      %v3708 = vrcp.pop %v3391
      %v3709 = vmul.f32 1.0, %v3708
      %v3710 = vrcp.pop %v3392
      %v3711 = vmul.f32 1.0, %v3710
      %v3712 = vrcp.pop %v3393
      %v3713 = vmul.f32 1.0, %v3712
      %v3714 = vrcp.pop %v3394
      %v3715 = vmul.f32 1.0, %v3714
      %v3716 = vrcp.pop %v3395
      %v3717 = vmul.f32 1.0, %v3716
      %v3718 = vrcp.pop %v3396
      %v3719 = vmul.f32 1.0, %v3718
      %v3720 = vrcp.pop %v3397
      %v3721 = vmul.f32 1.0, %v3720
      %v3722 = vrcp.pop %v3398
      %v3723 = vmul.f32 1.0, %v3722
      %v3724 = vrcp.pop %v3399
      %v3725 = vmul.f32 1.0, %v3724
      %v3726 = vrcp.pop %v3400
      %v3727 = vmul.f32 1.0, %v3726
      %v3728 = vrcp.pop %v3401
      %v3729 = vmul.f32 1.0, %v3728
      %v3730 = vrcp.pop %v3402
      %v3731 = vmul.f32 1.0, %v3730
      %v3732 = vrcp.pop %v3403
      %v3733 = vmul.f32 1.0, %v3732
      %v3734 = vrcp.pop %v3404
      %v3735 = vmul.f32 1.0, %v3734
      %v3736 = vrcp.pop %v3405
      %v3737 = vmul.f32 1.0, %v3736
      %v3738 = vrcp.pop %v3406
      %v3739 = vmul.f32 1.0, %v3738
      %v3740 = vrcp.pop %v3407
      %v3741 = vmul.f32 1.0, %v3740
      %v3742 = vrcp.pop %v3408
      %v3743 = vmul.f32 1.0, %v3742
      %v3744 = vrcp.pop %v3409
      %v3745 = vmul.f32 1.0, %v3744
      %v3746 = vrcp.pop %v3410
      %v3747 = vmul.f32 1.0, %v3746
      %v3748 = vrcp.pop %v3411
      %v3749 = vmul.f32 1.0, %v3748
      %v3750 = vrcp.pop %v3412
      %v3751 = vmul.f32 1.0, %v3750
      %v3752 = vrcp.pop %v3413
      %v3753 = vmul.f32 1.0, %v3752
      %v3754 = vrcp.pop %v3414
      %v3755 = vmul.f32 1.0, %v3754
      %v3756 = vrcp.pop %v3415
      %v3757 = vmul.f32 1.0, %v3756
      %v3758 = vrcp.pop %v3416
      %v3759 = vmul.f32 1.0, %v3758
      %v3760 = vrcp.pop %v3417
      %v3761 = vmul.f32 1.0, %v3760
      %v3762 = vrcp.pop %v3418
      %v3763 = vmul.f32 1.0, %v3762
      %v3764 = vrcp.pop %v3419
      %v3765 = vmul.f32 1.0, %v3764
      %v3766 = vrcp.pop %v3420
      %v3767 = vmul.f32 1.0, %v3766
      %v3768 = vrcp.pop %v3421
      %v3769 = vmul.f32 1.0, %v3768
      %v3770 = vrcp.pop %v3422
      %v3771 = vmul.f32 1.0, %v3770
      %v3772 = vrcp.pop %v3423
      %v3773 = vmul.f32 1.0, %v3772
      %v3774 = vrcp.pop %v3424
      %v3775 = vmul.f32 1.0, %v3774
      %v3776 = vrcp.pop %v3425
      %v3777 = vmul.f32 1.0, %v3776
      %v3778 = vrcp.pop %v3426
      %v3779 = vmul.f32 1.0, %v3778
      %v3780 = vrcp.pop %v3427
      %v3781 = vmul.f32 1.0, %v3780
      %v3782 = vrcp.pop %v3428
      %v3783 = vmul.f32 1.0, %v3782
      %v3784 = vrcp.pop %v3429
      %v3785 = vmul.f32 1.0, %v3784
      %v3786 = vrcp.pop %v3430
      %v3787 = vmul.f32 1.0, %v3786
      %v3788 = vrcp.pop %v3431
      %v3789 = vmul.f32 1.0, %v3788
      %v3790 = vrcp.pop %v3432
      %v3791 = vmul.f32 1.0, %v3790
      %v3792 = vrcp.pop %v3433
      %v3793 = vmul.f32 1.0, %v3792
      %v3794 = vrcp.pop %v3434
      %v3795 = vmul.f32 1.0, %v3794
      %v3796 = vrcp.pop %v3435
      %v3797 = vmul.f32 1.0, %v3796
      %v3798 = vrcp.pop %v3436
      %v3799 = vmul.f32 1.0, %v3798
      %v3800 = vrcp.pop %v3437
      %v3801 = vmul.f32 1.0, %v3800
      %v3802 = vrcp.pop %v3438
      %v3803 = vmul.f32 1.0, %v3802
      %v3804 = vrcp.pop %v3439
      %v3805 = vmul.f32 1.0, %v3804
      %v3806 = vrcp.pop %v3440
      %v3807 = vmul.f32 1.0, %v3806
      %v3808 = vrcp.pop %v3441
      %v3809 = vmul.f32 1.0, %v3808
      %v3810 = vrcp.pop %v3442
      %v3811 = vmul.f32 1.0, %v3810
      %v3812 = vrcp.pop %v3443
      %v3813 = vmul.f32 1.0, %v3812
      %v3814 = vrcp.pop %v3444
      %v3815 = vmul.f32 1.0, %v3814
      %v3816 = vrcp.pop %v3445
      %v3817 = vmul.f32 1.0, %v3816
      %v3818 = vrcp.pop %v3446
      %v3819 = vmul.f32 1.0, %v3818
      %v3820 = vrcp.pop %v3447
      %v3821 = vmul.f32 1.0, %v3820
      %v3822 = vrcp.pop %v3448
      %v3823 = vmul.f32 1.0, %v3822
      %v3824 = vrcp.pop %v3449
      %v3825 = vmul.f32 1.0, %v3824
      %v3826 = vrcp.pop %v3450
      %v3827 = vmul.f32 1.0, %v3826
      %v3828 = vrcp.pop %v3451
      %v3829 = vmul.f32 1.0, %v3828
      %v3830 = vrcp.pop %v3452
      %v3831 = vmul.f32 1.0, %v3830
      %v3832 = vrcp.pop %v3453
      %v3833 = vmul.f32 1.0, %v3832
      %v3834 = vrcp.pop %v3454
      %v3835 = vmul.f32 1.0, %v3834
      %v3836 = vrcp.pop %v3455
      %v3837 = vmul.f32 1.0, %v3836
      %v3838 = vrcp.pop %v3456
      %v3839 = vmul.f32 1.0, %v3838
      %v3840 = vrcp.pop %v3457
      %v3841 = vmul.f32 1.0, %v3840
      %v3842 = vrcp.pop %v3458
      %v3843 = vmul.f32 1.0, %v3842
      %v3844 = vrcp.pop %v3459
      %v3845 = vmul.f32 1.0, %v3844
      %v3846 = vrcp.pop %v3460
      %v3847 = vmul.f32 1.0, %v3846
      %v3848 = vrcp.pop %v3461
      %v3849 = vmul.f32 1.0, %v3848
      %v3850 = vrcp.pop %v3462
      %v3851 = vmul.f32 1.0, %v3850
      %v3852 = vrcp.pop %v3463
      %v3853 = vmul.f32 1.0, %v3852
      %v3854 = vrcp.pop %v3464
      %v3855 = vmul.f32 1.0, %v3854
      %v3856 = vrcp.pop %v3465
      %v3857 = vmul.f32 1.0, %v3856
      %v3858 = vrcp.pop %v3466
      %v3859 = vmul.f32 1.0, %v3858
      %v3860 = vrcp.pop %v3467
      %v3861 = vmul.f32 1.0, %v3860
      %v3862 = vrcp.pop %v3468
      %v3863 = vmul.f32 1.0, %v3862
      %v3864 = vrcp.pop %v3469
      %v3865 = vmul.f32 1.0, %v3864
      %v3866 = vrcp.pop %v3470
      %v3867 = vmul.f32 1.0, %v3866
      %v3868 = vrcp.pop %v3471
      %v3869 = vmul.f32 1.0, %v3868
      %v3870 = vrcp.pop %v3472
      %v3871 = vmul.f32 1.0, %v3870
      %v3872 = vrcp.pop %v3473
      %v3873 = vmul.f32 1.0, %v3872
      %v3874 = vrcp.pop %v3474
      %v3875 = vmul.f32 1.0, %v3874
      %v3876 = vrcp.pop %v3475
      %v3877 = vmul.f32 1.0, %v3876
      %v3878 = vrcp.pop %v3476
      %v3879 = vmul.f32 1.0, %v3878
      %v3880 = vrcp.pop %v3477
      %v3881 = vmul.f32 1.0, %v3880
      %v3882 = vrcp.pop %v3478
      %v3883 = vmul.f32 1.0, %v3882
      %v3884 = vrcp.pop %v3479
      %v3885 = vmul.f32 1.0, %v3884
      %v3886 = vrcp.pop %v3480
      %v3887 = vmul.f32 1.0, %v3886
      %v3888 = vrcp.pop %v3481
      %v3889 = vmul.f32 1.0, %v3888
      %v3890 = vrcp.pop %v3482
      %v3891 = vmul.f32 1.0, %v3890
      %v3892 = vrcp.pop %v3483
      %v3893 = vmul.f32 1.0, %v3892
      %v3894 = vrcp.pop %v3484
      %v3895 = vmul.f32 1.0, %v3894
      %v3896 = vrcp.pop %v3485
      %v3897 = vmul.f32 1.0, %v3896
      %v3898 = vrcp.pop %v3486
      %v3899 = vmul.f32 1.0, %v3898
      %v3900 = vrcp.pop %v3487
      %v3901 = vmul.f32 1.0, %v3900
      %v3902 = vrcp.pop %v3488
      %v3903 = vmul.f32 1.0, %v3902
      %v3904 = vrcp.pop %v3489
      %v3905 = vmul.f32 1.0, %v3904
      %v3906 = vrcp.pop %v3490
      %v3907 = vmul.f32 1.0, %v3906
      %v3908 = vrcp.pop %v3491
      %v3909 = vmul.f32 1.0, %v3908
      %v3910 = vrcp.pop %v3492
      %v3911 = vmul.f32 1.0, %v3910
      %v3912 = vrcp.pop %v3493
      %v3913 = vmul.f32 1.0, %v3912
      %v3914 = vrcp.pop %v3494
      %v3915 = vmul.f32 1.0, %v3914
      %v3916 = vrcp.pop %v3495
      %v3917 = vmul.f32 1.0, %v3916
      %v3918 = vrcp.pop %v3496
      %v3919 = vmul.f32 1.0, %v3918
      %v3920 = vrcp.pop %v3497
      %v3921 = vmul.f32 1.0, %v3920
      %v3922 = vrcp.pop %v3498
      %v3923 = vmul.f32 1.0, %v3922
      %v3924 = vrcp.pop %v3499
      %v3925 = vmul.f32 1.0, %v3924
      %v3926 = vrcp.pop %v3500
      %v3927 = vmul.f32 1.0, %v3926
      %v3928 = vrcp.pop %v3501
      %v3929 = vmul.f32 1.0, %v3928
      %v3930 = vrcp.pop %v3502
      %v3931 = vmul.f32 1.0, %v3930
      %v3932 = vrcp.pop %v3503
      %v3933 = vmul.f32 1.0, %v3932
      %v3934 = vrcp.pop %v3504
      %v3935 = vmul.f32 1.0, %v3934
      %v3936 = vrcp.pop %v3505
      %v3937 = vmul.f32 1.0, %v3936
      %v3938 = vrcp.pop %v3506
      %v3939 = vmul.f32 1.0, %v3938
      %v3940 = vrcp.pop %v3507
      %v3941 = vmul.f32 1.0, %v3940
      %v3942 = vrcp.pop %v3508
      %v3943 = vmul.f32 1.0, %v3942
      %v3944 = vrcp.pop %v3509
      %v3945 = vmul.f32 1.0, %v3944
      %v3946 = vrcp.pop %v3510
      %v3947 = vmul.f32 1.0, %v3946
      %v3948 = vrcp.pop %v3511
      %v3949 = vmul.f32 1.0, %v3948
      %v3950 = vrcp.pop %v3512
      %v3951 = vmul.f32 1.0, %v3950
      %v3952 = vrcp.pop %v3513
      %v3953 = vmul.f32 1.0, %v3952
      %v3954 = vrcp.pop %v3514
      %v3955 = vmul.f32 1.0, %v3954
      %v3956 = vrcp.pop %v3515
      %v3957 = vmul.f32 1.0, %v3956
      %v3958 = vrcp.pop %v3516
      %v3959 = vmul.f32 1.0, %v3958
      %v3960 = vrcp.pop %v3517
      %v3961 = vmul.f32 1.0, %v3960
      %v3962 = vrcp.pop %v3518
      %v3963 = vmul.f32 1.0, %v3962
      %v3964 = vrcp.pop %v3519
      %v3965 = vmul.f32 1.0, %v3964
      %v3966 = vrcp.pop %v3520
      %v3967 = vmul.f32 1.0, %v3966
      %v3968 = vrcp.pop %v3521
      %v3969 = vmul.f32 1.0, %v3968
      %v3970 = vrcp.pop %v3522
      %v3971 = vmul.f32 1.0, %v3970
      %v3972 = vrcp.pop %v3523
      %v3973 = vmul.f32 1.0, %v3972
      %v3974 = vrcp.pop %v3524
      %v3975 = vmul.f32 1.0, %v3974
      %v3976 = vrcp.pop %v3525
      %v3977 = vmul.f32 1.0, %v3976
      %v3978 = vrcp.pop %v3526
      %v3979 = vmul.f32 1.0, %v3978
      %v3980 = vrcp.pop %v3527
      %v3981 = vmul.f32 1.0, %v3980
      %v3982 = vrcp.pop %v3528
      %v3983 = vmul.f32 1.0, %v3982
      %v3984 = vrcp.pop %v3529
      %v3985 = vmul.f32 1.0, %v3984
      %v3986 = vrcp.pop %v3530
      %v3987 = vmul.f32 1.0, %v3986
      %v3988 = vrcp.pop %v3531
      %v3989 = vmul.f32 1.0, %v3988
      %v3990 = vrcp.pop %v3532
      %v3991 = vmul.f32 1.0, %v3990
      %v3992 = vrcp.pop %v3533
      %v3993 = vmul.f32 1.0, %v3992
      %v3994 = vrcp.pop %v3534
      %v3995 = vmul.f32 1.0, %v3994
      %v3996 = vrcp.pop %v3535
      %v3997 = vmul.f32 1.0, %v3996
      %v3998 = vrcp.pop %v3536
      %v3999 = vmul.f32 1.0, %v3998
      %v4000 = vrcp.pop %v3537
      %v4001 = vmul.f32 1.0, %v4000
      %v4002 = vrcp.pop %v3538
      %v4003 = vmul.f32 1.0, %v4002
      %v4004 = vrcp.pop %v3539
      %v4005 = vmul.f32 1.0, %v4004
      %v4006 = vrcp.pop %v3540
      %v4007 = vmul.f32 1.0, %v4006
      %v4008 = vrcp.pop %v3541
      %v4009 = vmul.f32 1.0, %v4008
      %v4010 = vrcp.pop %v3542
      %v4011 = vmul.f32 1.0, %v4010
      %v4012 = vrcp.pop %v3543
      %v4013 = vmul.f32 1.0, %v4012
      %v4014 = vrcp.pop %v3544
      %v4015 = vmul.f32 1.0, %v4014
      %v4016 = vrcp.pop %v3545
      %v4017 = vmul.f32 1.0, %v4016
      %v4018 = vrcp.pop %v3546
      %v4019 = vmul.f32 1.0, %v4018
      %v4020 = vrcp.pop %v3547
      %v4021 = vmul.f32 1.0, %v4020
      %v4022 = vrcp.pop %v3548
      %v4023 = vmul.f32 1.0, %v4022
      %v4024 = vrcp.pop %v3549
      %v4025 = vmul.f32 1.0, %v4024
      %v4026 = vrcp.pop %v3550
      %v4027 = vmul.f32 1.0, %v4026
      %v4028 = vrcp.pop %v3551
      %v4029 = vmul.f32 1.0, %v4028
      %v4030 = vrcp.pop %v3552
      %v4031 = vmul.f32 1.0, %v4030
      %v4032 = vrcp.pop %v3553
      %v4033 = vmul.f32 1.0, %v4032
      %v4034 = vrcp.pop %v3554
      %v4035 = vmul.f32 1.0, %v4034
      %v4036 = vrcp.pop %v3555
      %v4037 = vmul.f32 1.0, %v4036
      %v4038 = vrcp.pop %v3556
      %v4039 = vmul.f32 1.0, %v4038
      %v4040 = vrcp.pop %v3557
      %v4041 = vmul.f32 1.0, %v4040
      %v4042 = vrcp.pop %v3558
      %v4043 = vmul.f32 1.0, %v4042
      %v4044 = vrcp.pop %v3559
      %v4045 = vmul.f32 1.0, %v4044
      %v4046 = vrcp.pop %v3560
      %v4047 = vmul.f32 1.0, %v4046
      %v4048 = vrcp.pop %v3561
      %v4049 = vmul.f32 1.0, %v4048
      %v4050 = vrcp.pop %v3562
      %v4051 = vmul.f32 1.0, %v4050
      %v4052 = vrcp.pop %v3563
      %v4053 = vmul.f32 1.0, %v4052
      %v4054 = vrcp.pop %v3564
      %v4055 = vmul.f32 1.0, %v4054
      %v4056 = vrcp.pop %v3565
      %v4057 = vmul.f32 1.0, %v4056
      %v4058 = vrcp.pop %v3566
      %v4059 = vmul.f32 1.0, %v4058
      %v4060 = vrcp.pop %v3567
      %v4061 = vmul.f32 1.0, %v4060
      %v4062 = vrcp.pop %v3568
      %v4063 = vmul.f32 1.0, %v4062
      %v4064 = vrcp.pop %v3569
      %v4065 = vmul.f32 1.0, %v4064
      %v4066 = vrcp.pop %v3570
      %v4067 = vmul.f32 1.0, %v4066
      %v4068 = vrcp.pop %v3571
      %v4069 = vmul.f32 1.0, %v4068
      %v4070 = vrcp.pop %v3572
      %v4071 = vmul.f32 1.0, %v4070
      %v4072 = vrcp.pop %v3573
      %v4073 = vmul.f32 1.0, %v4072
      %v4074 = vrcp.pop %v3574
      %v4075 = vmul.f32 1.0, %v4074
      %v4076 = vrcp.pop %v3575
      %v4077 = vmul.f32 1.0, %v4076
      %v4078 = vrcp.pop %v3576
      %v4079 = vmul.f32 1.0, %v4078
      %v4080 = vrcp.pop %v3577
      %v4081 = vmul.f32 1.0, %v4080
      %v4082 = vrcp.pop %v3578
      %v4083 = vmul.f32 1.0, %v4082
      %v4084 = vrcp.pop %v3579
      %v4085 = vmul.f32 1.0, %v4084
      %v4086 = vrcp.pop %v3580
      %v4087 = vmul.f32 1.0, %v4086
      %v4088 = vrcp.pop %v3581
      %v4089 = vmul.f32 1.0, %v4088
      %v4090 = vrcp.pop %v3582
      %v4091 = vmul.f32 1.0, %v4090
      %v4092 = vrcp.pop %v3583
      %v4093 = vmul.f32 1.0, %v4092
      %v4094 = vrcp.pop %v3584
      %v4095 = vmul.f32 1.0, %v4094
      %v4096 = vrcp.pop %v3585
      %v4097 = vmul.f32 1.0, %v4096
      %4098 = vxpose.xlu0.b32.start [1/16] %v3587, 128
      %4099 = vxpose.xlu0.b32.cont [2/16] %v3589, 128
      %4100 = vxpose.xlu0.b32.cont [3/16] %v3591, 128
      %4101 = vxpose.xlu0.b32.cont [4/16] %v3593, 128
      %4102 = vxpose.xlu0.b32.cont [5/16] %v3595, 128
      %4103 = vxpose.xlu0.b32.cont [6/16] %v3597, 128
      %4104 = vxpose.xlu0.b32.cont [7/16] %v3599, 128
      %4105 = vxpose.xlu0.b32.cont [8/16] %v3601, 128
      %4106 = vxpose.xlu0.b32.cont [9/16] %v3603, 128
      %4107 = vxpose.xlu0.b32.cont [10/16] %v3605, 128
      %4108 = vxpose.xlu0.b32.cont [11/16] %v3607, 128
      %4109 = vxpose.xlu0.b32.cont [12/16] %v3609, 128
      %4110 = vxpose.xlu0.b32.cont [13/16] %v3611, 128
      %4111 = vxpose.xlu0.b32.cont [14/16] %v3613, 128
      %4112 = vxpose.xlu0.b32.cont [15/16] %v3615, 128
      %4113 = vxpose.xlu0.b32.end [16/16] %v3617, 128
      %v4114 = vpop.trf.xlu0
      %v4115 = vpop.trf.xlu0
      %v4116 = vpop.trf.xlu0
      %v4117 = vpop.trf.xlu0
      %v4118 = vpop.trf.xlu0
      %v4119 = vpop.trf.xlu0
      %v4120 = vpop.trf.xlu0
      %v4121 = vpop.trf.xlu0
      %v4122 = vpop.trf.xlu0
      %v4123 = vpop.trf.xlu0
      %v4124 = vpop.trf.xlu0
      %v4125 = vpop.trf.xlu0
      %v4126 = vpop.trf.xlu0
      %v4127 = vpop.trf.xlu0
      %v4128 = vpop.trf.xlu0
      %v4129 = vpop.trf.xlu0
      %4130 = vxpose.xlu0.b32.start [1/16] %v3619, 128
      %4131 = vxpose.xlu0.b32.cont [2/16] %v3621, 128
      %4132 = vxpose.xlu0.b32.cont [3/16] %v3623, 128
      %4133 = vxpose.xlu0.b32.cont [4/16] %v3625, 128
      %4134 = vxpose.xlu0.b32.cont [5/16] %v3627, 128
      %4135 = vxpose.xlu0.b32.cont [6/16] %v3629, 128
      %4136 = vxpose.xlu0.b32.cont [7/16] %v3631, 128
      %4137 = vxpose.xlu0.b32.cont [8/16] %v3633, 128
      %4138 = vxpose.xlu0.b32.cont [9/16] %v3635, 128
      %4139 = vxpose.xlu0.b32.cont [10/16] %v3637, 128
      %4140 = vxpose.xlu0.b32.cont [11/16] %v3639, 128
      %4141 = vxpose.xlu0.b32.cont [12/16] %v3641, 128
      %4142 = vxpose.xlu0.b32.cont [13/16] %v3643, 128
      %4143 = vxpose.xlu0.b32.cont [14/16] %v3645, 128
      %4144 = vxpose.xlu0.b32.cont [15/16] %v3647, 128
      %4145 = vxpose.xlu0.b32.end [16/16] %v3649, 128
      %v4146 = vpop.trf.xlu0
      %v4147 = vpop.trf.xlu0
      %v4148 = vpop.trf.xlu0
      %v4149 = vpop.trf.xlu0
      %v4150 = vpop.trf.xlu0
      %v4151 = vpop.trf.xlu0
      %v4152 = vpop.trf.xlu0
      %v4153 = vpop.trf.xlu0
      %v4154 = vpop.trf.xlu0
      %v4155 = vpop.trf.xlu0
      %v4156 = vpop.trf.xlu0
      %v4157 = vpop.trf.xlu0
      %v4158 = vpop.trf.xlu0
      %v4159 = vpop.trf.xlu0
      %v4160 = vpop.trf.xlu0
      %v4161 = vpop.trf.xlu0
      %4162 = vxpose.xlu0.b32.start [1/16] %v3651, 128
      %4163 = vxpose.xlu0.b32.cont [2/16] %v3653, 128
      %4164 = vxpose.xlu0.b32.cont [3/16] %v3655, 128
      %4165 = vxpose.xlu0.b32.cont [4/16] %v3657, 128
      %4166 = vxpose.xlu0.b32.cont [5/16] %v3659, 128
      %4167 = vxpose.xlu0.b32.cont [6/16] %v3661, 128
      %4168 = vxpose.xlu0.b32.cont [7/16] %v3663, 128
      %4169 = vxpose.xlu0.b32.cont [8/16] %v3665, 128
      %4170 = vxpose.xlu0.b32.cont [9/16] %v3667, 128
      %4171 = vxpose.xlu0.b32.cont [10/16] %v3669, 128
      %4172 = vxpose.xlu0.b32.cont [11/16] %v3671, 128
      %4173 = vxpose.xlu0.b32.cont [12/16] %v3673, 128
      %4174 = vxpose.xlu0.b32.cont [13/16] %v3675, 128
      %4175 = vxpose.xlu0.b32.cont [14/16] %v3677, 128
      %4176 = vxpose.xlu0.b32.cont [15/16] %v3679, 128
      %4177 = vxpose.xlu0.b32.end [16/16] %v3681, 128
      %v4178 = vpop.trf.xlu0
      %v4179 = vpop.trf.xlu0
      %v4180 = vpop.trf.xlu0
      %v4181 = vpop.trf.xlu0
      %v4182 = vpop.trf.xlu0
      %v4183 = vpop.trf.xlu0
      %v4184 = vpop.trf.xlu0
      %v4185 = vpop.trf.xlu0
      %v4186 = vpop.trf.xlu0
      %v4187 = vpop.trf.xlu0
      %v4188 = vpop.trf.xlu0
      %v4189 = vpop.trf.xlu0
      %v4190 = vpop.trf.xlu0
      %v4191 = vpop.trf.xlu0
      %v4192 = vpop.trf.xlu0
      %v4193 = vpop.trf.xlu0
      %4194 = vxpose.xlu0.b32.start [1/16] %v3683, 128
      %4195 = vxpose.xlu0.b32.cont [2/16] %v3685, 128
      %4196 = vxpose.xlu0.b32.cont [3/16] %v3687, 128
      %4197 = vxpose.xlu0.b32.cont [4/16] %v3689, 128
      %4198 = vxpose.xlu0.b32.cont [5/16] %v3691, 128
      %4199 = vxpose.xlu0.b32.cont [6/16] %v3693, 128
      %4200 = vxpose.xlu0.b32.cont [7/16] %v3695, 128
      %4201 = vxpose.xlu0.b32.cont [8/16] %v3697, 128
      %4202 = vxpose.xlu0.b32.cont [9/16] %v3699, 128
      %4203 = vxpose.xlu0.b32.cont [10/16] %v3701, 128
      %4204 = vxpose.xlu0.b32.cont [11/16] %v3703, 128
      %4205 = vxpose.xlu0.b32.cont [12/16] %v3705, 128
      %4206 = vxpose.xlu0.b32.cont [13/16] %v3707, 128
      %4207 = vxpose.xlu0.b32.cont [14/16] %v3709, 128
      %4208 = vxpose.xlu0.b32.cont [15/16] %v3711, 128
      %4209 = vxpose.xlu0.b32.end [16/16] %v3713, 128
      %v4210 = vpop.trf.xlu0
      %v4211 = vpop.trf.xlu0
      %v4212 = vpop.trf.xlu0
      %v4213 = vpop.trf.xlu0
      %v4214 = vpop.trf.xlu0
      %v4215 = vpop.trf.xlu0
      %v4216 = vpop.trf.xlu0
      %v4217 = vpop.trf.xlu0
      %v4218 = vpop.trf.xlu0
      %v4219 = vpop.trf.xlu0
      %v4220 = vpop.trf.xlu0
      %v4221 = vpop.trf.xlu0
      %v4222 = vpop.trf.xlu0
      %v4223 = vpop.trf.xlu0
      %v4224 = vpop.trf.xlu0
      %v4225 = vpop.trf.xlu0
      %4226 = vxpose.xlu0.b32.start [1/16] %v3715, 128
      %4227 = vxpose.xlu0.b32.cont [2/16] %v3717, 128
      %4228 = vxpose.xlu0.b32.cont [3/16] %v3719, 128
      %4229 = vxpose.xlu0.b32.cont [4/16] %v3721, 128
      %4230 = vxpose.xlu0.b32.cont [5/16] %v3723, 128
      %4231 = vxpose.xlu0.b32.cont [6/16] %v3725, 128
      %4232 = vxpose.xlu0.b32.cont [7/16] %v3727, 128
      %4233 = vxpose.xlu0.b32.cont [8/16] %v3729, 128
      %4234 = vxpose.xlu0.b32.cont [9/16] %v3731, 128
      %4235 = vxpose.xlu0.b32.cont [10/16] %v3733, 128
      %4236 = vxpose.xlu0.b32.cont [11/16] %v3735, 128
      %4237 = vxpose.xlu0.b32.cont [12/16] %v3737, 128
      %4238 = vxpose.xlu0.b32.cont [13/16] %v3739, 128
      %4239 = vxpose.xlu0.b32.cont [14/16] %v3741, 128
      %4240 = vxpose.xlu0.b32.cont [15/16] %v3743, 128
      %4241 = vxpose.xlu0.b32.end [16/16] %v3745, 128
      %v4242 = vpop.trf.xlu0
      %v4243 = vpop.trf.xlu0
      %v4244 = vpop.trf.xlu0
      %v4245 = vpop.trf.xlu0
      %v4246 = vpop.trf.xlu0
      %v4247 = vpop.trf.xlu0
      %v4248 = vpop.trf.xlu0
      %v4249 = vpop.trf.xlu0
      %v4250 = vpop.trf.xlu0
      %v4251 = vpop.trf.xlu0
      %v4252 = vpop.trf.xlu0
      %v4253 = vpop.trf.xlu0
      %v4254 = vpop.trf.xlu0
      %v4255 = vpop.trf.xlu0
      %v4256 = vpop.trf.xlu0
      %v4257 = vpop.trf.xlu0
      %4258 = vxpose.xlu0.b32.start [1/16] %v3747, 128
      %4259 = vxpose.xlu0.b32.cont [2/16] %v3749, 128
      %4260 = vxpose.xlu0.b32.cont [3/16] %v3751, 128
      %4261 = vxpose.xlu0.b32.cont [4/16] %v3753, 128
      %4262 = vxpose.xlu0.b32.cont [5/16] %v3755, 128
      %4263 = vxpose.xlu0.b32.cont [6/16] %v3757, 128
      %4264 = vxpose.xlu0.b32.cont [7/16] %v3759, 128
      %4265 = vxpose.xlu0.b32.cont [8/16] %v3761, 128
      %4266 = vxpose.xlu0.b32.cont [9/16] %v3763, 128
      %4267 = vxpose.xlu0.b32.cont [10/16] %v3765, 128
      %4268 = vxpose.xlu0.b32.cont [11/16] %v3767, 128
      %4269 = vxpose.xlu0.b32.cont [12/16] %v3769, 128
      %4270 = vxpose.xlu0.b32.cont [13/16] %v3771, 128
      %4271 = vxpose.xlu0.b32.cont [14/16] %v3773, 128
      %4272 = vxpose.xlu0.b32.cont [15/16] %v3775, 128
      %4273 = vxpose.xlu0.b32.end [16/16] %v3777, 128
      %v4274 = vpop.trf.xlu0
      %v4275 = vpop.trf.xlu0
      %v4276 = vpop.trf.xlu0
      %v4277 = vpop.trf.xlu0
      %v4278 = vpop.trf.xlu0
      %v4279 = vpop.trf.xlu0
      %v4280 = vpop.trf.xlu0
      %v4281 = vpop.trf.xlu0
      %v4282 = vpop.trf.xlu0
      %v4283 = vpop.trf.xlu0
      %v4284 = vpop.trf.xlu0
      %v4285 = vpop.trf.xlu0
      %v4286 = vpop.trf.xlu0
      %v4287 = vpop.trf.xlu0
      %v4288 = vpop.trf.xlu0
      %v4289 = vpop.trf.xlu0
      %4290 = vxpose.xlu0.b32.start [1/16] %v3779, 128
      %4291 = vxpose.xlu0.b32.cont [2/16] %v3781, 128
      %4292 = vxpose.xlu0.b32.cont [3/16] %v3783, 128
      %4293 = vxpose.xlu0.b32.cont [4/16] %v3785, 128
      %4294 = vxpose.xlu0.b32.cont [5/16] %v3787, 128
      %4295 = vxpose.xlu0.b32.cont [6/16] %v3789, 128
      %4296 = vxpose.xlu0.b32.cont [7/16] %v3791, 128
      %4297 = vxpose.xlu0.b32.cont [8/16] %v3793, 128
      %4298 = vxpose.xlu0.b32.cont [9/16] %v3795, 128
      %4299 = vxpose.xlu0.b32.cont [10/16] %v3797, 128
      %4300 = vxpose.xlu0.b32.cont [11/16] %v3799, 128
      %4301 = vxpose.xlu0.b32.cont [12/16] %v3801, 128
      %4302 = vxpose.xlu0.b32.cont [13/16] %v3803, 128
      %4303 = vxpose.xlu0.b32.cont [14/16] %v3805, 128
      %4304 = vxpose.xlu0.b32.cont [15/16] %v3807, 128
      %4305 = vxpose.xlu0.b32.end [16/16] %v3809, 128
      %v4306 = vpop.trf.xlu0
      %v4307 = vpop.trf.xlu0
      %v4308 = vpop.trf.xlu0
      %v4309 = vpop.trf.xlu0
      %v4310 = vpop.trf.xlu0
      %v4311 = vpop.trf.xlu0
      %v4312 = vpop.trf.xlu0
      %v4313 = vpop.trf.xlu0
      %v4314 = vpop.trf.xlu0
      %v4315 = vpop.trf.xlu0
      %v4316 = vpop.trf.xlu0
      %v4317 = vpop.trf.xlu0
      %v4318 = vpop.trf.xlu0
      %v4319 = vpop.trf.xlu0
      %v4320 = vpop.trf.xlu0
      %v4321 = vpop.trf.xlu0
      %4322 = vxpose.xlu0.b32.start [1/16] %v3811, 128
      %4323 = vxpose.xlu0.b32.cont [2/16] %v3813, 128
      %4324 = vxpose.xlu0.b32.cont [3/16] %v3815, 128
      %4325 = vxpose.xlu0.b32.cont [4/16] %v3817, 128
      %4326 = vxpose.xlu0.b32.cont [5/16] %v3819, 128
      %4327 = vxpose.xlu0.b32.cont [6/16] %v3821, 128
      %4328 = vxpose.xlu0.b32.cont [7/16] %v3823, 128
      %4329 = vxpose.xlu0.b32.cont [8/16] %v3825, 128
      %4330 = vxpose.xlu0.b32.cont [9/16] %v3827, 128
      %4331 = vxpose.xlu0.b32.cont [10/16] %v3829, 128
      %4332 = vxpose.xlu0.b32.cont [11/16] %v3831, 128
      %4333 = vxpose.xlu0.b32.cont [12/16] %v3833, 128
      %4334 = vxpose.xlu0.b32.cont [13/16] %v3835, 128
      %4335 = vxpose.xlu0.b32.cont [14/16] %v3837, 128
      %4336 = vxpose.xlu0.b32.cont [15/16] %v3839, 128
      %4337 = vxpose.xlu0.b32.end [16/16] %v3841, 128
      %v4338 = vpop.trf.xlu0
      %v4339 = vpop.trf.xlu0
      %v4340 = vpop.trf.xlu0
      %v4341 = vpop.trf.xlu0
      %v4342 = vpop.trf.xlu0
      %v4343 = vpop.trf.xlu0
      %v4344 = vpop.trf.xlu0
      %v4345 = vpop.trf.xlu0
      %v4346 = vpop.trf.xlu0
      %v4347 = vpop.trf.xlu0
      %v4348 = vpop.trf.xlu0
      %v4349 = vpop.trf.xlu0
      %v4350 = vpop.trf.xlu0
      %v4351 = vpop.trf.xlu0
      %v4352 = vpop.trf.xlu0
      %v4353 = vpop.trf.xlu0
      %4354 = vxpose.xlu0.b32.start [1/16] %v3843, 128
      %4355 = vxpose.xlu0.b32.cont [2/16] %v3845, 128
      %4356 = vxpose.xlu0.b32.cont [3/16] %v3847, 128
      %4357 = vxpose.xlu0.b32.cont [4/16] %v3849, 128
      %4358 = vxpose.xlu0.b32.cont [5/16] %v3851, 128
      %4359 = vxpose.xlu0.b32.cont [6/16] %v3853, 128
      %4360 = vxpose.xlu0.b32.cont [7/16] %v3855, 128
      %4361 = vxpose.xlu0.b32.cont [8/16] %v3857, 128
      %4362 = vxpose.xlu0.b32.cont [9/16] %v3859, 128
      %4363 = vxpose.xlu0.b32.cont [10/16] %v3861, 128
      %4364 = vxpose.xlu0.b32.cont [11/16] %v3863, 128
      %4365 = vxpose.xlu0.b32.cont [12/16] %v3865, 128
      %4366 = vxpose.xlu0.b32.cont [13/16] %v3867, 128
      %4367 = vxpose.xlu0.b32.cont [14/16] %v3869, 128
      %4368 = vxpose.xlu0.b32.cont [15/16] %v3871, 128
      %4369 = vxpose.xlu0.b32.end [16/16] %v3873, 128
      %v4370 = vpop.trf.xlu0
      %v4371 = vpop.trf.xlu0
      %v4372 = vpop.trf.xlu0
      %v4373 = vpop.trf.xlu0
      %v4374 = vpop.trf.xlu0
      %v4375 = vpop.trf.xlu0
      %v4376 = vpop.trf.xlu0
      %v4377 = vpop.trf.xlu0
      %v4378 = vpop.trf.xlu0
      %v4379 = vpop.trf.xlu0
      %v4380 = vpop.trf.xlu0
      %v4381 = vpop.trf.xlu0
      %v4382 = vpop.trf.xlu0
      %v4383 = vpop.trf.xlu0
      %v4384 = vpop.trf.xlu0
      %v4385 = vpop.trf.xlu0
      %4386 = vxpose.xlu0.b32.start [1/16] %v3875, 128
      %4387 = vxpose.xlu0.b32.cont [2/16] %v3877, 128
      %4388 = vxpose.xlu0.b32.cont [3/16] %v3879, 128
      %4389 = vxpose.xlu0.b32.cont [4/16] %v3881, 128
      %4390 = vxpose.xlu0.b32.cont [5/16] %v3883, 128
      %4391 = vxpose.xlu0.b32.cont [6/16] %v3885, 128
      %4392 = vxpose.xlu0.b32.cont [7/16] %v3887, 128
      %4393 = vxpose.xlu0.b32.cont [8/16] %v3889, 128
      %4394 = vxpose.xlu0.b32.cont [9/16] %v3891, 128
      %4395 = vxpose.xlu0.b32.cont [10/16] %v3893, 128
      %4396 = vxpose.xlu0.b32.cont [11/16] %v3895, 128
      %4397 = vxpose.xlu0.b32.cont [12/16] %v3897, 128
      %4398 = vxpose.xlu0.b32.cont [13/16] %v3899, 128
      %4399 = vxpose.xlu0.b32.cont [14/16] %v3901, 128
      %4400 = vxpose.xlu0.b32.cont [15/16] %v3903, 128
      %4401 = vxpose.xlu0.b32.end [16/16] %v3905, 128
      %v4402 = vpop.trf.xlu0
      %v4403 = vpop.trf.xlu0
      %v4404 = vpop.trf.xlu0
      %v4405 = vpop.trf.xlu0
      %v4406 = vpop.trf.xlu0
      %v4407 = vpop.trf.xlu0
      %v4408 = vpop.trf.xlu0
      %v4409 = vpop.trf.xlu0
      %v4410 = vpop.trf.xlu0
      %v4411 = vpop.trf.xlu0
      %v4412 = vpop.trf.xlu0
      %v4413 = vpop.trf.xlu0
      %v4414 = vpop.trf.xlu0
      %v4415 = vpop.trf.xlu0
      %v4416 = vpop.trf.xlu0
      %v4417 = vpop.trf.xlu0
      %4418 = vxpose.xlu0.b32.start [1/16] %v3907, 128
      %4419 = vxpose.xlu0.b32.cont [2/16] %v3909, 128
      %4420 = vxpose.xlu0.b32.cont [3/16] %v3911, 128
      %4421 = vxpose.xlu0.b32.cont [4/16] %v3913, 128
      %4422 = vxpose.xlu0.b32.cont [5/16] %v3915, 128
      %4423 = vxpose.xlu0.b32.cont [6/16] %v3917, 128
      %4424 = vxpose.xlu0.b32.cont [7/16] %v3919, 128
      %4425 = vxpose.xlu0.b32.cont [8/16] %v3921, 128
      %4426 = vxpose.xlu0.b32.cont [9/16] %v3923, 128
      %4427 = vxpose.xlu0.b32.cont [10/16] %v3925, 128
      %4428 = vxpose.xlu0.b32.cont [11/16] %v3927, 128
      %4429 = vxpose.xlu0.b32.cont [12/16] %v3929, 128
      %4430 = vxpose.xlu0.b32.cont [13/16] %v3931, 128
      %4431 = vxpose.xlu0.b32.cont [14/16] %v3933, 128
      %4432 = vxpose.xlu0.b32.cont [15/16] %v3935, 128
      %4433 = vxpose.xlu0.b32.end [16/16] %v3937, 128
      %v4434 = vpop.trf.xlu0
      %v4435 = vpop.trf.xlu0
      %v4436 = vpop.trf.xlu0
      %v4437 = vpop.trf.xlu0
      %v4438 = vpop.trf.xlu0
      %v4439 = vpop.trf.xlu0
      %v4440 = vpop.trf.xlu0
      %v4441 = vpop.trf.xlu0
      %v4442 = vpop.trf.xlu0
      %v4443 = vpop.trf.xlu0
      %v4444 = vpop.trf.xlu0
      %v4445 = vpop.trf.xlu0
      %v4446 = vpop.trf.xlu0
      %v4447 = vpop.trf.xlu0
      %v4448 = vpop.trf.xlu0
      %v4449 = vpop.trf.xlu0
      %4450 = vxpose.xlu0.b32.start [1/16] %v3939, 128
      %4451 = vxpose.xlu0.b32.cont [2/16] %v3941, 128
      %4452 = vxpose.xlu0.b32.cont [3/16] %v3943, 128
      %4453 = vxpose.xlu0.b32.cont [4/16] %v3945, 128
      %4454 = vxpose.xlu0.b32.cont [5/16] %v3947, 128
      %4455 = vxpose.xlu0.b32.cont [6/16] %v3949, 128
      %4456 = vxpose.xlu0.b32.cont [7/16] %v3951, 128
      %4457 = vxpose.xlu0.b32.cont [8/16] %v3953, 128
      %4458 = vxpose.xlu0.b32.cont [9/16] %v3955, 128
      %4459 = vxpose.xlu0.b32.cont [10/16] %v3957, 128
      %4460 = vxpose.xlu0.b32.cont [11/16] %v3959, 128
      %4461 = vxpose.xlu0.b32.cont [12/16] %v3961, 128
      %4462 = vxpose.xlu0.b32.cont [13/16] %v3963, 128
      %4463 = vxpose.xlu0.b32.cont [14/16] %v3965, 128
      %4464 = vxpose.xlu0.b32.cont [15/16] %v3967, 128
      %4465 = vxpose.xlu0.b32.end [16/16] %v3969, 128
      %v4466 = vpop.trf.xlu0
      %v4467 = vpop.trf.xlu0
      %v4468 = vpop.trf.xlu0
      %v4469 = vpop.trf.xlu0
      %v4470 = vpop.trf.xlu0
      %v4471 = vpop.trf.xlu0
      %v4472 = vpop.trf.xlu0
      %v4473 = vpop.trf.xlu0
      %v4474 = vpop.trf.xlu0
      %v4475 = vpop.trf.xlu0
      %v4476 = vpop.trf.xlu0
      %v4477 = vpop.trf.xlu0
      %v4478 = vpop.trf.xlu0
      %v4479 = vpop.trf.xlu0
      %v4480 = vpop.trf.xlu0
      %v4481 = vpop.trf.xlu0
      %4482 = vxpose.xlu0.b32.start [1/16] %v3971, 128
      %4483 = vxpose.xlu0.b32.cont [2/16] %v3973, 128
      %4484 = vxpose.xlu0.b32.cont [3/16] %v3975, 128
      %4485 = vxpose.xlu0.b32.cont [4/16] %v3977, 128
      %4486 = vxpose.xlu0.b32.cont [5/16] %v3979, 128
      %4487 = vxpose.xlu0.b32.cont [6/16] %v3981, 128
      %4488 = vxpose.xlu0.b32.cont [7/16] %v3983, 128
      %4489 = vxpose.xlu0.b32.cont [8/16] %v3985, 128
      %4490 = vxpose.xlu0.b32.cont [9/16] %v3987, 128
      %4491 = vxpose.xlu0.b32.cont [10/16] %v3989, 128
      %4492 = vxpose.xlu0.b32.cont [11/16] %v3991, 128
      %4493 = vxpose.xlu0.b32.cont [12/16] %v3993, 128
      %4494 = vxpose.xlu0.b32.cont [13/16] %v3995, 128
      %4495 = vxpose.xlu0.b32.cont [14/16] %v3997, 128
      %4496 = vxpose.xlu0.b32.cont [15/16] %v3999, 128
      %4497 = vxpose.xlu0.b32.end [16/16] %v4001, 128
      %v4498 = vpop.trf.xlu0
      %v4499 = vpop.trf.xlu0
      %v4500 = vpop.trf.xlu0
      %v4501 = vpop.trf.xlu0
      %v4502 = vpop.trf.xlu0
      %v4503 = vpop.trf.xlu0
      %v4504 = vpop.trf.xlu0
      %v4505 = vpop.trf.xlu0
      %v4506 = vpop.trf.xlu0
      %v4507 = vpop.trf.xlu0
      %v4508 = vpop.trf.xlu0
      %v4509 = vpop.trf.xlu0
      %v4510 = vpop.trf.xlu0
      %v4511 = vpop.trf.xlu0
      %v4512 = vpop.trf.xlu0
      %v4513 = vpop.trf.xlu0
      %4514 = vxpose.xlu0.b32.start [1/16] %v4003, 128
      %4515 = vxpose.xlu0.b32.cont [2/16] %v4005, 128
      %4516 = vxpose.xlu0.b32.cont [3/16] %v4007, 128
      %4517 = vxpose.xlu0.b32.cont [4/16] %v4009, 128
      %4518 = vxpose.xlu0.b32.cont [5/16] %v4011, 128
      %4519 = vxpose.xlu0.b32.cont [6/16] %v4013, 128
      %4520 = vxpose.xlu0.b32.cont [7/16] %v4015, 128
      %4521 = vxpose.xlu0.b32.cont [8/16] %v4017, 128
      %4522 = vxpose.xlu0.b32.cont [9/16] %v4019, 128
      %4523 = vxpose.xlu0.b32.cont [10/16] %v4021, 128
      %4524 = vxpose.xlu0.b32.cont [11/16] %v4023, 128
      %4525 = vxpose.xlu0.b32.cont [12/16] %v4025, 128
      %4526 = vxpose.xlu0.b32.cont [13/16] %v4027, 128
      %4527 = vxpose.xlu0.b32.cont [14/16] %v4029, 128
      %4528 = vxpose.xlu0.b32.cont [15/16] %v4031, 128
      %4529 = vxpose.xlu0.b32.end [16/16] %v4033, 128
      %v4530 = vpop.trf.xlu0
      %v4531 = vpop.trf.xlu0
      %v4532 = vpop.trf.xlu0
      %v4533 = vpop.trf.xlu0
      %v4534 = vpop.trf.xlu0
      %v4535 = vpop.trf.xlu0
      %v4536 = vpop.trf.xlu0
      %v4537 = vpop.trf.xlu0
      %v4538 = vpop.trf.xlu0
      %v4539 = vpop.trf.xlu0
      %v4540 = vpop.trf.xlu0
      %v4541 = vpop.trf.xlu0
      %v4542 = vpop.trf.xlu0
      %v4543 = vpop.trf.xlu0
      %v4544 = vpop.trf.xlu0
      %v4545 = vpop.trf.xlu0
      %4546 = vxpose.xlu0.b32.start [1/16] %v4035, 128
      %4547 = vxpose.xlu0.b32.cont [2/16] %v4037, 128
      %4548 = vxpose.xlu0.b32.cont [3/16] %v4039, 128
      %4549 = vxpose.xlu0.b32.cont [4/16] %v4041, 128
      %4550 = vxpose.xlu0.b32.cont [5/16] %v4043, 128
      %4551 = vxpose.xlu0.b32.cont [6/16] %v4045, 128
      %4552 = vxpose.xlu0.b32.cont [7/16] %v4047, 128
      %4553 = vxpose.xlu0.b32.cont [8/16] %v4049, 128
      %4554 = vxpose.xlu0.b32.cont [9/16] %v4051, 128
      %4555 = vxpose.xlu0.b32.cont [10/16] %v4053, 128
      %4556 = vxpose.xlu0.b32.cont [11/16] %v4055, 128
      %4557 = vxpose.xlu0.b32.cont [12/16] %v4057, 128
      %4558 = vxpose.xlu0.b32.cont [13/16] %v4059, 128
      %4559 = vxpose.xlu0.b32.cont [14/16] %v4061, 128
      %4560 = vxpose.xlu0.b32.cont [15/16] %v4063, 128
      %4561 = vxpose.xlu0.b32.end [16/16] %v4065, 128
      %v4562 = vpop.trf.xlu0
      %v4563 = vpop.trf.xlu0
      %v4564 = vpop.trf.xlu0
      %v4565 = vpop.trf.xlu0
      %v4566 = vpop.trf.xlu0
      %v4567 = vpop.trf.xlu0
      %v4568 = vpop.trf.xlu0
      %v4569 = vpop.trf.xlu0
      %v4570 = vpop.trf.xlu0
      %v4571 = vpop.trf.xlu0
      %v4572 = vpop.trf.xlu0
      %v4573 = vpop.trf.xlu0
      %v4574 = vpop.trf.xlu0
      %v4575 = vpop.trf.xlu0
      %v4576 = vpop.trf.xlu0
      %v4577 = vpop.trf.xlu0
      %4578 = vxpose.xlu0.b32.start [1/16] %v4067, 128
      %4579 = vxpose.xlu0.b32.cont [2/16] %v4069, 128
      %4580 = vxpose.xlu0.b32.cont [3/16] %v4071, 128
      %4581 = vxpose.xlu0.b32.cont [4/16] %v4073, 128
      %4582 = vxpose.xlu0.b32.cont [5/16] %v4075, 128
      %4583 = vxpose.xlu0.b32.cont [6/16] %v4077, 128
      %4584 = vxpose.xlu0.b32.cont [7/16] %v4079, 128
      %4585 = vxpose.xlu0.b32.cont [8/16] %v4081, 128
      %4586 = vxpose.xlu0.b32.cont [9/16] %v4083, 128
      %4587 = vxpose.xlu0.b32.cont [10/16] %v4085, 128
      %4588 = vxpose.xlu0.b32.cont [11/16] %v4087, 128
      %4589 = vxpose.xlu0.b32.cont [12/16] %v4089, 128
      %4590 = vxpose.xlu0.b32.cont [13/16] %v4091, 128
      %4591 = vxpose.xlu0.b32.cont [14/16] %v4093, 128
      %4592 = vxpose.xlu0.b32.cont [15/16] %v4095, 128
      %4593 = vxpose.xlu0.b32.end [16/16] %v4097, 128
      %v4594 = vpop.trf.xlu0
      %v4595 = vpop.trf.xlu0
      %v4596 = vpop.trf.xlu0
      %v4597 = vpop.trf.xlu0
      %v4598 = vpop.trf.xlu0
      %v4599 = vpop.trf.xlu0
      %v4600 = vpop.trf.xlu0
      %v4601 = vpop.trf.xlu0
      %v4602 = vpop.trf.xlu0
      %v4603 = vpop.trf.xlu0
      %v4604 = vpop.trf.xlu0
      %v4605 = vpop.trf.xlu0
      %v4606 = vpop.trf.xlu0
      %v4607 = vpop.trf.xlu0
      %v4608 = vpop.trf.xlu0
      %v4609 = vpop.trf.xlu0
      %4610 = vst [vmem:[%s172] sm:$0xff] %v4114
      %4611 = vst [vmem:[%s172 + $0x8] sm:$0xff] %v4146
      %4612 = vst [vmem:[%s172 + $0x10] sm:$0xff] %v4178
      %4613 = vst [vmem:[%s172 + $0x18] sm:$0xff] %v4210
      %4614 = vst [vmem:[%s172 + $0x20] sm:$0xff] %v4242
      %4615 = vst [vmem:[%s172 + $0x28] sm:$0xff] %v4274
      %4616 = vst [vmem:[%s172 + $0x30] sm:$0xff] %v4306
      %4617 = vst [vmem:[%s172 + $0x38] sm:$0xff] %v4338
      %4618 = vst [vmem:[%s172 + $0x40] sm:$0xff] %v4370
      %4619 = vst [vmem:[%s172 + $0x48] sm:$0xff] %v4402
      %4620 = vst [vmem:[%s172 + $0x50] sm:$0xff] %v4434
      %4621 = vst [vmem:[%s172 + $0x58] sm:$0xff] %v4466
      %4622 = vst [vmem:[%s172 + $0x60] sm:$0xff] %v4498
      %4623 = vst [vmem:[%s172 + $0x68] sm:$0xff] %v4530
      %4624 = vst [vmem:[%s172 + $0x70] sm:$0xff] %v4562
      %4625 = vst [vmem:[%s172 + $0x78] sm:$0xff] %v4594
      %s4626 = smul.u32 16, %s14
      %p4627 = scmp.lt.s32.totalorder %s4626, 63
      %s4628 = scalar_select %p4627, %s4626, 63
      %s4629 = smul.addr %s4628, 8
      %s4630 = scalar_lea.vmem %s3, %s4629
      // Predicated region
      $region33: #{vae_forward.21} parent=31 // pred_check
        %p4631 = pneg %p100
      $region34: #{vae_forward.21} parent=31 // pred_check_branch
        %4633 = sbr.rel (%p4631) target = $region36
      $region35: #{vae_forward.21} parent=31 // pred_region
        %s4634 = smul.u32 16, %s14
      $region36: #{vae_forward.21} parent=31 // pred_fallthru
        _
    $region32: #{vae_forward.21} parent=5 // pred_fallthru
      _
    %p4635 = scmp.le.s32.totalorder 2, %s9
    // Predicated region
    $region37: #{vae_forward.21} parent=5 // pred_check
      %p4636 = pneg %p4635
    $region38: #{vae_forward.21} parent=5 // pred_check_branch
      %4638 = sbr.rel (%p4636) target = $region40
    $region39: #{vae_forward.21} parent=5 // pred_region
      %s4639 = ssub.s32 %s9, 2
      // Predicated region
      $region41: #{vae_forward.21} parent=39 // pred_check
        %p4640 = pneg %p106
      $region42: #{vae_forward.21} parent=39 // pred_check_branch
        %4642 = sbr.rel (%p4640) target = $region44
      $region43: #{vae_forward.21} parent=39 // pred_region
        %s4643 = smul.u32 16, %s15
        %p4644 = scmp.lt.s32.totalorder %s4643, 63
        %s4645 = scalar_select %p4644, %s4643, 63
        %s4646 = smul.addr %s4645, 8
        %s4647 = scalar_lea.vmem %s3, %s4646
      $region44: #{vae_forward.21} parent=39 // pred_fallthru
        _
    $region40: #{vae_forward.21} parent=5 // pred_fallthru
      _
  $region6: #{vae_forward.21} parent=0 // loop_footer
    %s13 = sadd.s32 1, %s9
  $region7: #{vae_forward.21} parent=0 // loop_footer_branch
    %8 = sbr.rel target = $region3
  $region8: #{vae_forward.21} parent=0 // loop_exit
    _

</llo_original>
